<compile_context>
chip_gen: v7x
topology: tpu7x:2x2x1
jax: 0.10.0
libtpu: 0.0.40
codegen_flags: <defaults>
</compile_context>

<pallas_src>
import math

import numpy as np

import jax
import jax.numpy as jnp
from jax.experimental import pallas as pl
from jax.experimental.pallas import tpu as pltpu


_MXU_DTYPE = jnp.bfloat16  # matmul operand dtype (accumulation / epilogue stay f32)

# (C_in, C_out, K, stride, padding) per layer.  Layers 1-3 carry BatchNorm + ReLU,
# the final layer is ConvTranspose1d -> Sigmoid.
_LAYERS_BN = [
    (128, 128, 8, 4, 1),   # sepconv_trans_15 / _25
    (128, 64, 8, 1, 4),    # sepconv_trans_16 / _26
    (64, 64, 25, 6, 4),    # sepconv_trans_17 / _27
]
_FINAL = (64, 1, 50, 6, 13)  # trans_18 / _28 + sigmoid


def _round_up(a, b):
    return (a + b - 1) // b * b


def _vmem_budget_bytes():
    """Per-grid-step live-block budget; conservative across v5e/v6e/v7x."""
    try:
        cap = pltpu.get_tpu_info().vmem_capacity_bytes
        return max(2 << 20, min(8 << 20, cap // 16))
    except Exception:
        return 4 << 20


def _pick_tile(nb, rows_per_sample, c_in, n_out, budget):
    """Largest divisor of nb whose per-step footprint fits; keep >=2 grid steps."""
    def footprint(tn):
        m = tn * rows_per_sample
        # double-buffered f32 input + f32 output + accumulation temporaries
        return m * c_in * 4 * 2 + m * n_out * 4 * 2 + m * n_out * 4 * 2
    divisors = [t for t in range(1, nb + 1) if nb % t == 0]
    fitting = [t for t in divisors if footprint(t) <= budget] or [1]
    tn = max(fitting)
    if tn == nb and nb > 1:           # leave >=2 parallel grid steps for megacore
        smaller = [t for t in fitting if t < nb]
        if smaller:
            tn = max(smaller)
    return tn


def _make_layer_kernel(n_taps, m_rows, act):
    """Sliding-window-of-matmuls kernel with fused folded-BN scale/bias + activation."""

    def kernel(x_ref, w_ref, scale_ref, bias_ref, y_ref):
        # x_ref      : (1, m_rows + tail, C_in)  f32 (padded activations)
        # w_ref      : (n_taps, C_in, N)         bf16 polyphase / block-diag weights
        # scale/bias : (1, N)                    f32 folded conv-bias + BatchNorm
        # y_ref      : (1, m_rows, N)            f32
        # Tap 0 initializes with '=' (no zero-init pass); destination is always the
        # full aligned block (MRB-friendly accumulation on v7x).
        xw = x_ref[0, 0:m_rows, :].astype(_MXU_DTYPE)
        z = jnp.dot(xw, w_ref[0], preferred_element_type=jnp.float32)
        for j in range(1, n_taps):  # n_taps <= 8 -> short static unroll
            xw = x_ref[0, j:j + m_rows, :].astype(_MXU_DTYPE)
            z = z + jnp.dot(xw, w_ref[j], preferred_element_type=jnp.float32)
        z = z * scale_ref[...] + bias_ref[...]
        if act == "relu":
            z = jnp.maximum(z, 0.0)
        y_ref[0] = z.astype(y_ref.dtype)

    return kernel


def _sliding_matmul(x, w, scale, bias, *, act, min_rows):
    """For every sample nb and every row q in [0, P_s):

         y[nb, q, :] = act((sum_{j} x0[nb, q - j, :] @ w[n_taps-1-j]) * scale + bias)

    where x0 is x zero-extended outside [0, L_in).  Rows q >= min_rows are junk and
    are cropped by the caller.  All block shapes obey the (8,128) rule; all matmul
    destinations are full aligned blocks.
    """
    nb, l_in, c_in = x.shape
    n_taps, _, n_out = w.shape
    p_s = _round_up(max(min_rows, l_in) + n_taps - 1, 8)   # per-sample row pitch
    tail = _round_up(n_taps - 1, 8)                        # per-tile zero tail
    tn = _pick_tile(nb, p_s, c_in, n_out, _vmem_budget_bytes())
    ntiles = nb // tn
    m_rows = tn * p_s

    # Per-sample layout: [n_taps-1 zero rows][x][zeros up to p_s].  The per-tile zero
    # tail keeps the shifted windows of the last sample inside the tile's block; the
    # only cross-sample reads land in the next sample's leading zeros and feed junk
    # rows that are cropped afterwards.
    xp = jnp.pad(x.astype(jnp.float32),
                 ((0, 0), (n_taps - 1, p_s - l_in - (n_taps - 1)), (0, 0)))
    xp = xp.reshape(ntiles, m_rows, c_in)
    if tail:
        xp = jnp.pad(xp, ((0, 0), (0, tail), (0, 0)))

    y = pl.pallas_call(
        _make_layer_kernel(n_taps, m_rows, act),
        out_shape=jax.ShapeDtypeStruct((ntiles, m_rows, n_out), jnp.float32),
        grid=(ntiles,),
        in_specs=[
            pl.BlockSpec((1, m_rows + tail, c_in), lambda n: (n, 0, 0)),
            pl.BlockSpec((n_taps, c_in, n_out), lambda n: (0, 0, 0)),
            pl.BlockSpec((1, n_out), lambda n: (0, 0)),
            pl.BlockSpec((1, n_out), lambda n: (0, 0)),
        ],
        out_specs=pl.BlockSpec((1, m_rows, n_out), lambda n: (n, 0, 0)),
        compiler_params=pltpu.CompilerParams(dimension_semantics=("parallel",)),
    )(xp, w, scale.reshape(1, n_out), bias.reshape(1, n_out))
    return y.reshape(nb, p_s, n_out)


def init_params(key):
    """Both branches' parameters packed block-diagonally (EEG first, then EOG)."""
    keys = jax.random.split(key, 4)
    layer_params = []
    for (cin, cout, k_sz, s, _p), kk in zip(_LAYERS_BN, keys[:3]):
        kw, kb = jax.random.split(kk)
        bound = 1.0 / math.sqrt(cin * k_sz)
        w = np.asarray(jax.random.uniform(kw, (2, cin, cout, k_sz), jnp.float32,
                                          -bound, bound))
        b = np.asarray(jax.random.uniform(kb, (2, cout), jnp.float32, -bound, bound))
        # Eval-mode BatchNorm1d (default running stats) folded with the conv bias.
        gamma = np.ones((2, cout), np.float32)
        beta = np.zeros((2, cout), np.float32)
        r_mean = np.zeros((2, cout), np.float32)
        r_var = np.ones((2, cout), np.float32)
        sc = gamma / np.sqrt(r_var + 1e-5)
        bi = beta + (b - r_mean) * sc

        n_taps = -(-k_sz // s)  # ceil(K / stride)
        # Polyphase, branch-packed, block-diagonal weights:
        #   wp[jp, br*cin + ci, phi, br*cout + co] = w[br, ci, co, phi + (n_taps-1-jp)*s]
        wp = np.zeros((n_taps, 2 * cin, s, 2 * cout), np.float32)
        for jp in range(n_taps):
            j = n_taps - 1 - jp
            for phi in range(s):
                k = phi + j * s
                if k < k_sz:
                    for br in range(2):
                        wp[jp, br * cin:(br + 1) * cin, phi,
                           br * cout:(br + 1) * cout] = w[br, :, :, k]
        wp = wp.reshape(n_taps, 2 * cin, s * 2 * cout)
        lane_scale = np.tile(np.concatenate([sc[0], sc[1]]), s)   # lane = phase-major
        lane_bias = np.tile(np.concatenate([bi[0], bi[1]]), s)
        layer_params.append((jnp.asarray(wp, _MXU_DTYPE),
                             jnp.asarray(lane_scale, jnp.float32),
                             jnp.asarray(lane_bias, jnp.float32)))

    # Final 64->1 layer: taps go on the MXU lane axis (54 columns per branch), both
    # branches block-diagonal -> a single dense (128, 128) weight matrix.
    cin, cout, k_sz, s, _p = _FINAL
    kw, kb = jax.random.split(keys[3])
    bound = 1.0 / math.sqrt(cin * k_sz)
    w = np.asarray(jax.random.uniform(kw, (2, cin, cout, k_sz), jnp.float32,
                                      -bound, bound))
    b = np.asarray(jax.random.uniform(kb, (2, cout), jnp.float32, -bound, bound))
    n_taps = -(-k_sz // s)            # 9
    kpad = n_taps * s                 # 54
    w4 = np.zeros((2 * cin, 128), np.float32)
    for br in range(2):
        w4[br * cin:(br + 1) * cin, br * kpad: br * kpad + k_sz] = w[br, :, 0, :]
    final_params = (jnp.asarray(w4[None], _MXU_DTYPE),       # (1, 128, 128)
                    jnp.asarray(b[:, 0], jnp.float32))       # (2,) per-branch bias
    return {"layers": layer_params, "final": final_params}


def multi_decoder_forward(x_eeg, x_eog, params):
    """x_eeg, x_eog: (bs, 128, d)  ->  two arrays of shape (bs//25, 25, 1, 144*d+120)."""
    bs, c, _d = x_eeg.shape
    assert c == 128 and bs % 25 == 0

    # Pack both branches channels-last: (bs, d, 256) = [EEG 128 | EOG 128].
    x = jnp.concatenate([jnp.transpose(x_eeg, (0, 2, 1)),
                         jnp.transpose(x_eog, (0, 2, 1))], axis=-1)

    # Layers 1-3: polyphase ConvTranspose1d + folded BN + ReLU (both branches packed).
    for (cin, cout, k_sz, s, p), (w, scale, bias) in zip(_LAYERS_BN, params["layers"]):
        l_in = x.shape[1]
        l_out = (l_in - 1) * s - 2 * p + k_sz
        q_rows = (l_out + p - 1) // s + 1      # polyphase grid rows needed per sample
        y = _sliding_matmul(x, w, scale, bias, act="relu", min_rows=q_rows)
        # (Nb, P_s, s*2*cout) --free reshape--> (Nb, P_s*s, 2*cout), crop head/tail.
        p_s = y.shape[1]
        x = y.reshape(bs, p_s * s, 2 * cout)[:, p:p + l_out, :]

    # Final layer: ConvTranspose1d(64->1, K=50, s=6, p=13) + Sigmoid.
    cin, cout, k_sz, s, p = _FINAL
    n_taps = -(-k_sz // s)
    kpad = n_taps * s
    w4, b4 = params["final"]
    l3 = x.shape[1]
    l4 = (l3 - 1) * s - 2 * p + k_sz
    partial = _sliding_matmul(x, w4,
                              jnp.ones((128,), jnp.float32),
                              jnp.zeros((128,), jnp.float32),
                              act="none", min_rows=l3)[:, :l3, :]   # (bs, l3, 128)

    outs = []
    for br in range(2):
        # (bs, l3, 54) -> (bs, l3, 9 taps, 6 phases); tiny XLA overlap-add (hop = 6).
        pb = partial[:, :, br * kpad:(br + 1) * kpad].reshape(bs, l3, n_taps, s)
        rows = l3 + n_taps - 1
        acc = jnp.zeros((bs, rows, s), jnp.float32)
        for j in range(n_taps):
            acc = acc.at[:, j:j + l3, :].add(pb[:, :, j, :])
        yb = acc.reshape(bs, rows * s)[:, p:p + l4]
        yb = jax.nn.sigmoid(yb + b4[br])
        outs.append(yb.reshape(bs // 25, 25, 1, l4))
    return outs[0], outs[1]


if __name__ == "__main__":
    bs, c, d = 25, 128, 2                     # smallest bs allowed by view(-1, 25, ...)
    key = jax.random.PRNGKey(0)
    k1, k2, kp = jax.random.split(key, 3)
    x_eeg = jax.random.normal(k1, (bs, c, d), jnp.float32)
    x_eog = jax.random.normal(k2, (bs, c, d), jnp.float32)
    params = init_params(kp)

    fwd = jax.jit(multi_decoder_forward)
    y_eeg, y_eog = fwd(x_eeg, x_eog, params)
    jax.block_until_ready((y_eeg, y_eog))

    L4 = 144 * d + 120
    assert y_eeg.shape == (bs // 25, 25, 1, L4), y_eeg.shape
    assert y_eog.shape == (bs // 25, 25, 1, L4), y_eog.shape
    assert bool(jnp.all(jnp.isfinite(y_eeg))) and bool(jnp.all(jnp.isfinite(y_eog)))
    print("KERNEL_OK")
</pallas_src>

<mosaic_0001>
module attributes {stable_mosaic.version = 11 : i64} {
  func.func @kernel(%arg0: i32, %arg1: memref<1x48x256xf32, #tpu.memory_space<vmem>>, %arg2: memref<2x256x1024xbf16, #tpu.memory_space<vmem>>, %arg3: memref<1x1024xf32, #tpu.memory_space<vmem>>, %arg4: memref<1x1024xf32, #tpu.memory_space<vmem>>, %arg5: memref<1x40x1024xf32, #tpu.memory_space<vmem>>) attributes {dimension_semantics = [#tpu.dimension_semantics<parallel>], iteration_bounds = array<i64: 5>, scalar_prefetch = 0 : i64, scratch_operands = 0 : i64, tpu.core_type = #tpu.core_type<tc>, window_params = [{transform_indices = @transform_0, window_bounds = array<i64: 1, 48, 256>}, {pipeline_mode = #tpu.pipeline_mode<synchronous>, transform_indices = @transform_1, window_bounds = array<i64: 2, 256, 1024>}, {pipeline_mode = #tpu.pipeline_mode<synchronous>, transform_indices = @transform_2, window_bounds = array<i64: 1, 1024>}, {pipeline_mode = #tpu.pipeline_mode<synchronous>, transform_indices = @transform_3, window_bounds = array<i64: 1, 1024>}, {transform_indices = @transform_4, window_bounds = array<i64: 1, 40, 1024>}]} {
    %c0 = arith.constant 0 : index
    %c0_0 = arith.constant 0 : index
    %c0_1 = arith.constant 0 : index
    %0 = vector.load %arg1[%c0, %c0_0, %c0_1] : memref<1x48x256xf32, #tpu.memory_space<vmem>>, vector<1x40x256xf32>
    %1 = vector.shape_cast %0 : vector<1x40x256xf32> to vector<40x256xf32>
    %2 = arith.truncf %1 : vector<40x256xf32> to vector<40x256xbf16>
    %c0_2 = arith.constant 0 : index
    %c0_3 = arith.constant 0 : index
    %c0_4 = arith.constant 0 : index
    %3 = vector.load %arg2[%c0_2, %c0_3, %c0_4] : memref<2x256x1024xbf16, #tpu.memory_space<vmem>>, vector<1x256x1024xbf16>
    %4 = vector.shape_cast %3 : vector<1x256x1024xbf16> to vector<256x1024xbf16>
    %cst = arith.constant dense<0.000000e+00> : vector<40x1024xf32>
    %5 = tpu.matmul %2, %4, %cst {dimension_numbers = #tpu.dot_dimension_numbers<[1], [0], [0], [1], [0, 0, 1, 1], [], []>} : vector<40x256xbf16>, vector<256x1024xbf16>, vector<40x1024xf32> -> vector<40x1024xf32>
    %c0_5 = arith.constant 0 : index
    %c1 = arith.constant 1 : index
    %c0_6 = arith.constant 0 : index
    %6 = vector.load %arg1[%c0_5, %c1, %c0_6] : memref<1x48x256xf32, #tpu.memory_space<vmem>>, vector<1x40x256xf32>
    %7 = vector.shape_cast %6 : vector<1x40x256xf32> to vector<40x256xf32>
    %8 = arith.truncf %7 : vector<40x256xf32> to vector<40x256xbf16>
    %c1_7 = arith.constant 1 : index
    %c0_8 = arith.constant 0 : index
    %c0_9 = arith.constant 0 : index
    %9 = vector.load %arg2[%c1_7, %c0_8, %c0_9] : memref<2x256x1024xbf16, #tpu.memory_space<vmem>>, vector<1x256x1024xbf16>
    %10 = vector.shape_cast %9 : vector<1x256x1024xbf16> to vector<256x1024xbf16>
    %cst_10 = arith.constant dense<0.000000e+00> : vector<40x1024xf32>
    %11 = tpu.matmul %8, %10, %cst_10 {dimension_numbers = #tpu.dot_dimension_numbers<[1], [0], [0], [1], [0, 0, 1, 1], [], []>} : vector<40x256xbf16>, vector<256x1024xbf16>, vector<40x1024xf32> -> vector<40x1024xf32>
    %12 = arith.addf %5, %11 : vector<40x1024xf32>
    %c0_11 = arith.constant 0 : index
    %c0_12 = arith.constant 0 : index
    %13 = vector.load %arg3[%c0_11, %c0_12] : memref<1x1024xf32, #tpu.memory_space<vmem>>, vector<1x1024xf32>
    %14 = vector.broadcast %13 : vector<1x1024xf32> to vector<40x1024xf32>
    %15 = arith.mulf %12, %14 : vector<40x1024xf32>
    %c0_13 = arith.constant 0 : index
    %c0_14 = arith.constant 0 : index
    %16 = vector.load %arg4[%c0_13, %c0_14] : memref<1x1024xf32, #tpu.memory_space<vmem>>, vector<1x1024xf32>
    %17 = vector.broadcast %16 : vector<1x1024xf32> to vector<40x1024xf32>
    %18 = arith.addf %15, %17 : vector<40x1024xf32>
    %cst_15 = arith.constant 0.000000e+00 : f32
    %19 = vector.broadcast %cst_15 : f32 to vector<40x1024xf32>
    %20 = arith.maximumf %18, %19 : vector<40x1024xf32>
    %c0_16 = arith.constant 0 : index
    %c0_17 = arith.constant 0 : index
    %c0_18 = arith.constant 0 : index
    %21 = vector.load %arg5[%c0_16, %c0_17, %c0_18] : memref<1x40x1024xf32, #tpu.memory_space<vmem>>, vector<1x40x1024xf32>
    %22 = vector.shape_cast %21 : vector<1x40x1024xf32> to vector<40x1024xf32>
    %23 = vector.shape_cast %20 : vector<40x1024xf32> to vector<1x40x1024xf32>
    tpu.vector_store %arg5[%c0_16, %c0_17, %c0_18], %23 {strides = array<i32>} : memref<1x40x1024xf32, #tpu.memory_space<vmem>>, vector<1x40x1024xf32>,
    return
  }
  func.func @transform_0(%arg0: i32) -> (i32, i32, i32) {
    %c0_i32 = arith.constant 0 : i32
    %c0_i32_0 = arith.constant 0 : i32
    %c0_i32_1 = arith.constant 0 : i32
    return %arg0, %c0_i32, %c0_i32_0 : i32, i32, i32
  }
  func.func @transform_1(%arg0: i32) -> (i32, i32, i32) {
    %c0_i32 = arith.constant 0 : i32
    %c0_i32_0 = arith.constant 0 : i32
    %c0_i32_1 = arith.constant 0 : i32
    %c0_i32_2 = arith.constant 0 : i32
    return %c0_i32, %c0_i32_0, %c0_i32_1 : i32, i32, i32
  }
  func.func @transform_2(%arg0: i32) -> (i32, i32) {
    %c0_i32 = arith.constant 0 : i32
    %c0_i32_0 = arith.constant 0 : i32
    %c0_i32_1 = arith.constant 0 : i32
    return %c0_i32, %c0_i32_0 : i32, i32
  }
  func.func @transform_3(%arg0: i32) -> (i32, i32) {
    %c0_i32 = arith.constant 0 : i32
    %c0_i32_0 = arith.constant 0 : i32
    %c0_i32_1 = arith.constant 0 : i32
    return %c0_i32, %c0_i32_0 : i32, i32
  }
  func.func @transform_4(%arg0: i32) -> (i32, i32, i32) {
    %c0_i32 = arith.constant 0 : i32
    %c0_i32_0 = arith.constant 0 : i32
    %c0_i32_1 = arith.constant 0 : i32
    return %arg0, %c0_i32, %c0_i32_0 : i32, i32, i32
  }
}

module attributes {stable_mosaic.version = 11 : i64} {
  func.func @kernel(%arg0: i32, %arg1: memref<1x128x256xf32, #tpu.memory_space<vmem>>, %arg2: memref<8x256x128xbf16, #tpu.memory_space<vmem>>, %arg3: memref<1x128xf32, #tpu.memory_space<vmem>>, %arg4: memref<1x128xf32, #tpu.memory_space<vmem>>, %arg5: memref<1x120x128xf32, #tpu.memory_space<vmem>>) attributes {dimension_semantics = [#tpu.dimension_semantics<parallel>], iteration_bounds = array<i64: 5>, scalar_prefetch = 0 : i64, scratch_operands = 0 : i64, tpu.core_type = #tpu.core_type<tc>, window_params = [{transform_indices = @transform_0, window_bounds = array<i64: 1, 128, 256>}, {pipeline_mode = #tpu.pipeline_mode<synchronous>, transform_indices = @transform_1, window_bounds = array<i64: 8, 256, 128>}, {pipeline_mode = #tpu.pipeline_mode<synchronous>, transform_indices = @transform_2, window_bounds = array<i64: 1, 128>}, {pipeline_mode = #tpu.pipeline_mode<synchronous>, transform_indices = @transform_3, window_bounds = array<i64: 1, 128>}, {transform_indices = @transform_4, window_bounds = array<i64: 1, 120, 128>}]} {
    %c0 = arith.constant 0 : index
    %c0_0 = arith.constant 0 : index
    %c0_1 = arith.constant 0 : index
    %0 = vector.load %arg1[%c0, %c0_0, %c0_1] : memref<1x128x256xf32, #tpu.memory_space<vmem>>, vector<1x120x256xf32>
    %1 = vector.shape_cast %0 : vector<1x120x256xf32> to vector<120x256xf32>
    %2 = arith.truncf %1 : vector<120x256xf32> to vector<120x256xbf16>
    %c0_2 = arith.constant 0 : index
    %c0_3 = arith.constant 0 : index
    %c0_4 = arith.constant 0 : index
    %3 = vector.load %arg2[%c0_2, %c0_3, %c0_4] : memref<8x256x128xbf16, #tpu.memory_space<vmem>>, vector<1x256x128xbf16>
    %4 = vector.shape_cast %3 : vector<1x256x128xbf16> to vector<256x128xbf16>
    %cst = arith.constant dense<0.000000e+00> : vector<120x128xf32>
    %5 = tpu.matmul %2, %4, %cst {dimension_numbers = #tpu.dot_dimension_numbers<[1], [0], [0], [1], [0, 0, 1, 1], [], []>} : vector<120x256xbf16>, vector<256x128xbf16>, vector<120x128xf32> -> vector<120x128xf32>
    %c0_5 = arith.constant 0 : index
    %c1 = arith.constant 1 : index
    %c0_6 = arith.constant 0 : index
    %6 = vector.load %arg1[%c0_5, %c1, %c0_6] : memref<1x128x256xf32, #tpu.memory_space<vmem>>, vector<1x120x256xf32>
    %7 = vector.shape_cast %6 : vector<1x120x256xf32> to vector<120x256xf32>
    %8 = arith.truncf %7 : vector<120x256xf32> to vector<120x256xbf16>
    %c1_7 = arith.constant 1 : index
    %c0_8 = arith.constant 0 : index
    %c0_9 = arith.constant 0 : index
    %9 = vector.load %arg2[%c1_7, %c0_8, %c0_9] : memref<8x256x128xbf16, #tpu.memory_space<vmem>>, vector<1x256x128xbf16>
    %10 = vector.shape_cast %9 : vector<1x256x128xbf16> to vector<256x128xbf16>
    %cst_10 = arith.constant dense<0.000000e+00> : vector<120x128xf32>
    %11 = tpu.matmul %8, %10, %cst_10 {dimension_numbers = #tpu.dot_dimension_numbers<[1], [0], [0], [1], [0, 0, 1, 1], [], []>} : vector<120x256xbf16>, vector<256x128xbf16>, vector<120x128xf32> -> vector<120x128xf32>
    %12 = arith.addf %5, %11 : vector<120x128xf32>
    %c0_11 = arith.constant 0 : index
    %c2 = arith.constant 2 : index
    %c0_12 = arith.constant 0 : index
    %13 = vector.load %arg1[%c0_11, %c2, %c0_12] : memref<1x128x256xf32, #tpu.memory_space<vmem>>, vector<1x120x256xf32>
    %14 = vector.shape_cast %13 : vector<1x120x256xf32> to vector<120x256xf32>
    %15 = arith.truncf %14 : vector<120x256xf32> to vector<120x256xbf16>
    %c2_13 = arith.constant 2 : index
    %c0_14 = arith.constant 0 : index
    %c0_15 = arith.constant 0 : index
    %16 = vector.load %arg2[%c2_13, %c0_14, %c0_15] : memref<8x256x128xbf16, #tpu.memory_space<vmem>>, vector<1x256x128xbf16>
    %17 = vector.shape_cast %16 : vector<1x256x128xbf16> to vector<256x128xbf16>
    %cst_16 = arith.constant dense<0.000000e+00> : vector<120x128xf32>
    %18 = tpu.matmul %15, %17, %cst_16 {dimension_numbers = #tpu.dot_dimension_numbers<[1], [0], [0], [1], [0, 0, 1, 1], [], []>} : vector<120x256xbf16>, vector<256x128xbf16>, vector<120x128xf32> -> vector<120x128xf32>
    %19 = arith.addf %12, %18 : vector<120x128xf32>
    %c0_17 = arith.constant 0 : index
    %c3 = arith.constant 3 : index
    %c0_18 = arith.constant 0 : index
    %20 = vector.load %arg1[%c0_17, %c3, %c0_18] : memref<1x128x256xf32, #tpu.memory_space<vmem>>, vector<1x120x256xf32>
    %21 = vector.shape_cast %20 : vector<1x120x256xf32> to vector<120x256xf32>
    %22 = arith.truncf %21 : vector<120x256xf32> to vector<120x256xbf16>
    %c3_19 = arith.constant 3 : index
    %c0_20 = arith.constant 0 : index
    %c0_21 = arith.constant 0 : index
    %23 = vector.load %arg2[%c3_19, %c0_20, %c0_21] : memref<8x256x128xbf16, #tpu.memory_space<vmem>>, vector<1x256x128xbf16>
    %24 = vector.shape_cast %23 : vector<1x256x128xbf16> to vector<256x128xbf16>
    %cst_22 = arith.constant dense<0.000000e+00> : vector<120x128xf32>
    %25 = tpu.matmul %22, %24, %cst_22 {dimension_numbers = #tpu.dot_dimension_numbers<[1], [0], [0], [1], [0, 0, 1, 1], [], []>} : vector<120x256xbf16>, vector<256x128xbf16>, vector<120x128xf32> -> vector<120x128xf32>
    %26 = arith.addf %19, %25 : vector<120x128xf32>
    %c0_23 = arith.constant 0 : index
    %c4 = arith.constant 4 : index
    %c0_24 = arith.constant 0 : index
    %27 = vector.load %arg1[%c0_23, %c4, %c0_24] : memref<1x128x256xf32, #tpu.memory_space<vmem>>, vector<1x120x256xf32>
    %28 = vector.shape_cast %27 : vector<1x120x256xf32> to vector<120x256xf32>
    %29 = arith.truncf %28 : vector<120x256xf32> to vector<120x256xbf16>
    %c4_25 = arith.constant 4 : index
    %c0_26 = arith.constant 0 : index
    %c0_27 = arith.constant 0 : index
    %30 = vector.load %arg2[%c4_25, %c0_26, %c0_27] : memref<8x256x128xbf16, #tpu.memory_space<vmem>>, vector<1x256x128xbf16>
    %31 = vector.shape_cast %30 : vector<1x256x128xbf16> to vector<256x128xbf16>
    %cst_28 = arith.constant dense<0.000000e+00> : vector<120x128xf32>
    %32 = tpu.matmul %29, %31, %cst_28 {dimension_numbers = #tpu.dot_dimension_numbers<[1], [0], [0], [1], [0, 0, 1, 1], [], []>} : vector<120x256xbf16>, vector<256x128xbf16>, vector<120x128xf32> -> vector<120x128xf32>
    %33 = arith.addf %26, %32 : vector<120x128xf32>
    %c0_29 = arith.constant 0 : index
    %c5 = arith.constant 5 : index
    %c0_30 = arith.constant 0 : index
    %34 = vector.load %arg1[%c0_29, %c5, %c0_30] : memref<1x128x256xf32, #tpu.memory_space<vmem>>, vector<1x120x256xf32>
    %35 = vector.shape_cast %34 : vector<1x120x256xf32> to vector<120x256xf32>
    %36 = arith.truncf %35 : vector<120x256xf32> to vector<120x256xbf16>
    %c5_31 = arith.constant 5 : index
    %c0_32 = arith.constant 0 : index
    %c0_33 = arith.constant 0 : index
    %37 = vector.load %arg2[%c5_31, %c0_32, %c0_33] : memref<8x256x128xbf16, #tpu.memory_space<vmem>>, vector<1x256x128xbf16>
    %38 = vector.shape_cast %37 : vector<1x256x128xbf16> to vector<256x128xbf16>
    %cst_34 = arith.constant dense<0.000000e+00> : vector<120x128xf32>
    %39 = tpu.matmul %36, %38, %cst_34 {dimension_numbers = #tpu.dot_dimension_numbers<[1], [0], [0], [1], [0, 0, 1, 1], [], []>} : vector<120x256xbf16>, vector<256x128xbf16>, vector<120x128xf32> -> vector<120x128xf32>
    %40 = arith.addf %33, %39 : vector<120x128xf32>
    %c0_35 = arith.constant 0 : index
    %c6 = arith.constant 6 : index
    %c0_36 = arith.constant 0 : index
    %41 = vector.load %arg1[%c0_35, %c6, %c0_36] : memref<1x128x256xf32, #tpu.memory_space<vmem>>, vector<1x120x256xf32>
    %42 = vector.shape_cast %41 : vector<1x120x256xf32> to vector<120x256xf32>
    %43 = arith.truncf %42 : vector<120x256xf32> to vector<120x256xbf16>
    %c6_37 = arith.constant 6 : index
    %c0_38 = arith.constant 0 : index
    %c0_39 = arith.constant 0 : index
    %44 = vector.load %arg2[%c6_37, %c0_38, %c0_39] : memref<8x256x128xbf16, #tpu.memory_space<vmem>>, vector<1x256x128xbf16>
    %45 = vector.shape_cast %44 : vector<1x256x128xbf16> to vector<256x128xbf16>
    %cst_40 = arith.constant dense<0.000000e+00> : vector<120x128xf32>
    %46 = tpu.matmul %43, %45, %cst_40 {dimension_numbers = #tpu.dot_dimension_numbers<[1], [0], [0], [1], [0, 0, 1, 1], [], []>} : vector<120x256xbf16>, vector<256x128xbf16>, vector<120x128xf32> -> vector<120x128xf32>
    %47 = arith.addf %40, %46 : vector<120x128xf32>
    %c0_41 = arith.constant 0 : index
    %c7 = arith.constant 7 : index
    %c0_42 = arith.constant 0 : index
    %48 = vector.load %arg1[%c0_41, %c7, %c0_42] : memref<1x128x256xf32, #tpu.memory_space<vmem>>, vector<1x120x256xf32>
    %49 = vector.shape_cast %48 : vector<1x120x256xf32> to vector<120x256xf32>
    %50 = arith.truncf %49 : vector<120x256xf32> to vector<120x256xbf16>
    %c7_43 = arith.constant 7 : index
    %c0_44 = arith.constant 0 : index
    %c0_45 = arith.constant 0 : index
    %51 = vector.load %arg2[%c7_43, %c0_44, %c0_45] : memref<8x256x128xbf16, #tpu.memory_space<vmem>>, vector<1x256x128xbf16>
    %52 = vector.shape_cast %51 : vector<1x256x128xbf16> to vector<256x128xbf16>
    %cst_46 = arith.constant dense<0.000000e+00> : vector<120x128xf32>
    %53 = tpu.matmul %50, %52, %cst_46 {dimension_numbers = #tpu.dot_dimension_numbers<[1], [0], [0], [1], [0, 0, 1, 1], [], []>} : vector<120x256xbf16>, vector<256x128xbf16>, vector<120x128xf32> -> vector<120x128xf32>
    %54 = arith.addf %47, %53 : vector<120x128xf32>
    %c0_47 = arith.constant 0 : index
    %c0_48 = arith.constant 0 : index
    %55 = vector.load %arg3[%c0_47, %c0_48] : memref<1x128xf32, #tpu.memory_space<vmem>>, vector<1x128xf32>
    %56 = vector.broadcast %55 : vector<1x128xf32> to vector<120x128xf32>
    %57 = arith.mulf %54, %56 : vector<120x128xf32>
    %c0_49 = arith.constant 0 : index
    %c0_50 = arith.constant 0 : index
    %58 = vector.load %arg4[%c0_49, %c0_50] : memref<1x128xf32, #tpu.memory_space<vmem>>, vector<1x128xf32>
    %59 = vector.broadcast %58 : vector<1x128xf32> to vector<120x128xf32>
    %60 = arith.addf %57, %59 : vector<120x128xf32>
    %cst_51 = arith.constant 0.000000e+00 : f32
    %61 = vector.broadcast %cst_51 : f32 to vector<120x128xf32>
    %62 = arith.maximumf %60, %61 : vector<120x128xf32>
    %c0_52 = arith.constant 0 : index
    %c0_53 = arith.constant 0 : index
    %c0_54 = arith.constant 0 : index
    %63 = vector.load %arg5[%c0_52, %c0_53, %c0_54] : memref<1x120x128xf32, #tpu.memory_space<vmem>>, vector<1x120x128xf32>
    %64 = vector.shape_cast %63 : vector<1x120x128xf32> to vector<120x128xf32>
    %65 = vector.shape_cast %62 : vector<120x128xf32> to vector<1x120x128xf32>
    tpu.vector_store %arg5[%c0_52, %c0_53, %c0_54], %65 {strides = array<i32>} : memref<1x120x128xf32, #tpu.memory_space<vmem>>, vector<1x120x128xf32>,
    return
  }
  func.func @transform_0(%arg0: i32) -> (i32, i32, i32) {
    %c0_i32 = arith.constant 0 : i32
    %c0_i32_0 = arith.constant 0 : i32
    %c0_i32_1 = arith.constant 0 : i32
    return %arg0, %c0_i32, %c0_i32_0 : i32, i32, i32
  }
  func.func @transform_1(%arg0: i32) -> (i32, i32, i32) {
    %c0_i32 = arith.constant 0 : i32
    %c0_i32_0 = arith.constant 0 : i32
    %c0_i32_1 = arith.constant 0 : i32
    %c0_i32_2 = arith.constant 0 : i32
    return %c0_i32, %c0_i32_0, %c0_i32_1 : i32, i32, i32
  }
  func.func @transform_2(%arg0: i32) -> (i32, i32) {
    %c0_i32 = arith.constant 0 : i32
    %c0_i32_0 = arith.constant 0 : i32
    %c0_i32_1 = arith.constant 0 : i32
    return %c0_i32, %c0_i32_0 : i32, i32
  }
  func.func @transform_3(%arg0: i32) -> (i32, i32) {
    %c0_i32 = arith.constant 0 : i32
    %c0_i32_0 = arith.constant 0 : i32
    %c0_i32_1 = arith.constant 0 : i32
    return %c0_i32, %c0_i32_0 : i32, i32
  }
  func.func @transform_4(%arg0: i32) -> (i32, i32, i32) {
    %c0_i32 = arith.constant 0 : i32
    %c0_i32_0 = arith.constant 0 : i32
    %c0_i32_1 = arith.constant 0 : i32
    return %arg0, %c0_i32, %c0_i32_0 : i32, i32, i32
  }
}

module attributes {stable_mosaic.version = 11 : i64} {
  func.func @kernel(%arg0: i32, %arg1: memref<1x88x128xf32, #tpu.memory_space<vmem>>, %arg2: memref<5x128x768xbf16, #tpu.memory_space<vmem>>, %arg3: memref<1x768xf32, #tpu.memory_space<vmem>>, %arg4: memref<1x768xf32, #tpu.memory_space<vmem>>, %arg5: memref<1x80x768xf32, #tpu.memory_space<vmem>>) attributes {dimension_semantics = [#tpu.dimension_semantics<parallel>], iteration_bounds = array<i64: 5>, scalar_prefetch = 0 : i64, scratch_operands = 0 : i64, tpu.core_type = #tpu.core_type<tc>, window_params = [{transform_indices = @transform_0, window_bounds = array<i64: 1, 88, 128>}, {pipeline_mode = #tpu.pipeline_mode<synchronous>, transform_indices = @transform_1, window_bounds = array<i64: 5, 128, 768>}, {pipeline_mode = #tpu.pipeline_mode<synchronous>, transform_indices = @transform_2, window_bounds = array<i64: 1, 768>}, {pipeline_mode = #tpu.pipeline_mode<synchronous>, transform_indices = @transform_3, window_bounds = array<i64: 1, 768>}, {transform_indices = @transform_4, window_bounds = array<i64: 1, 80, 768>}]} {
    %c0 = arith.constant 0 : index
    %c0_0 = arith.constant 0 : index
    %c0_1 = arith.constant 0 : index
    %0 = vector.load %arg1[%c0, %c0_0, %c0_1] : memref<1x88x128xf32, #tpu.memory_space<vmem>>, vector<1x80x128xf32>
    %1 = vector.shape_cast %0 : vector<1x80x128xf32> to vector<80x128xf32>
    %2 = arith.truncf %1 : vector<80x128xf32> to vector<80x128xbf16>
    %c0_2 = arith.constant 0 : index
    %c0_3 = arith.constant 0 : index
    %c0_4 = arith.constant 0 : index
    %3 = vector.load %arg2[%c0_2, %c0_3, %c0_4] : memref<5x128x768xbf16, #tpu.memory_space<vmem>>, vector<1x128x768xbf16>
    %4 = vector.shape_cast %3 : vector<1x128x768xbf16> to vector<128x768xbf16>
    %cst = arith.constant dense<0.000000e+00> : vector<80x768xf32>
    %5 = tpu.matmul %2, %4, %cst {dimension_numbers = #tpu.dot_dimension_numbers<[1], [0], [0], [1], [0, 0, 1, 1], [], []>} : vector<80x128xbf16>, vector<128x768xbf16>, vector<80x768xf32> -> vector<80x768xf32>
    %c0_5 = arith.constant 0 : index
    %c1 = arith.constant 1 : index
    %c0_6 = arith.constant 0 : index
    %6 = vector.load %arg1[%c0_5, %c1, %c0_6] : memref<1x88x128xf32, #tpu.memory_space<vmem>>, vector<1x80x128xf32>
    %7 = vector.shape_cast %6 : vector<1x80x128xf32> to vector<80x128xf32>
    %8 = arith.truncf %7 : vector<80x128xf32> to vector<80x128xbf16>
    %c1_7 = arith.constant 1 : index
    %c0_8 = arith.constant 0 : index
    %c0_9 = arith.constant 0 : index
    %9 = vector.load %arg2[%c1_7, %c0_8, %c0_9] : memref<5x128x768xbf16, #tpu.memory_space<vmem>>, vector<1x128x768xbf16>
    %10 = vector.shape_cast %9 : vector<1x128x768xbf16> to vector<128x768xbf16>
    %cst_10 = arith.constant dense<0.000000e+00> : vector<80x768xf32>
    %11 = tpu.matmul %8, %10, %cst_10 {dimension_numbers = #tpu.dot_dimension_numbers<[1], [0], [0], [1], [0, 0, 1, 1], [], []>} : vector<80x128xbf16>, vector<128x768xbf16>, vector<80x768xf32> -> vector<80x768xf32>
    %12 = arith.addf %5, %11 : vector<80x768xf32>
    %c0_11 = arith.constant 0 : index
    %c2 = arith.constant 2 : index
    %c0_12 = arith.constant 0 : index
    %13 = vector.load %arg1[%c0_11, %c2, %c0_12] : memref<1x88x128xf32, #tpu.memory_space<vmem>>, vector<1x80x128xf32>
    %14 = vector.shape_cast %13 : vector<1x80x128xf32> to vector<80x128xf32>
    %15 = arith.truncf %14 : vector<80x128xf32> to vector<80x128xbf16>
    %c2_13 = arith.constant 2 : index
    %c0_14 = arith.constant 0 : index
    %c0_15 = arith.constant 0 : index
    %16 = vector.load %arg2[%c2_13, %c0_14, %c0_15] : memref<5x128x768xbf16, #tpu.memory_space<vmem>>, vector<1x128x768xbf16>
    %17 = vector.shape_cast %16 : vector<1x128x768xbf16> to vector<128x768xbf16>
    %cst_16 = arith.constant dense<0.000000e+00> : vector<80x768xf32>
    %18 = tpu.matmul %15, %17, %cst_16 {dimension_numbers = #tpu.dot_dimension_numbers<[1], [0], [0], [1], [0, 0, 1, 1], [], []>} : vector<80x128xbf16>, vector<128x768xbf16>, vector<80x768xf32> -> vector<80x768xf32>
    %19 = arith.addf %12, %18 : vector<80x768xf32>
    %c0_17 = arith.constant 0 : index
    %c3 = arith.constant 3 : index
    %c0_18 = arith.constant 0 : index
    %20 = vector.load %arg1[%c0_17, %c3, %c0_18] : memref<1x88x128xf32, #tpu.memory_space<vmem>>, vector<1x80x128xf32>
    %21 = vector.shape_cast %20 : vector<1x80x128xf32> to vector<80x128xf32>
    %22 = arith.truncf %21 : vector<80x128xf32> to vector<80x128xbf16>
    %c3_19 = arith.constant 3 : index
    %c0_20 = arith.constant 0 : index
    %c0_21 = arith.constant 0 : index
    %23 = vector.load %arg2[%c3_19, %c0_20, %c0_21] : memref<5x128x768xbf16, #tpu.memory_space<vmem>>, vector<1x128x768xbf16>
    %24 = vector.shape_cast %23 : vector<1x128x768xbf16> to vector<128x768xbf16>
    %cst_22 = arith.constant dense<0.000000e+00> : vector<80x768xf32>
    %25 = tpu.matmul %22, %24, %cst_22 {dimension_numbers = #tpu.dot_dimension_numbers<[1], [0], [0], [1], [0, 0, 1, 1], [], []>} : vector<80x128xbf16>, vector<128x768xbf16>, vector<80x768xf32> -> vector<80x768xf32>
    %26 = arith.addf %19, %25 : vector<80x768xf32>
    %c0_23 = arith.constant 0 : index
    %c4 = arith.constant 4 : index
    %c0_24 = arith.constant 0 : index
    %27 = vector.load %arg1[%c0_23, %c4, %c0_24] : memref<1x88x128xf32, #tpu.memory_space<vmem>>, vector<1x80x128xf32>
    %28 = vector.shape_cast %27 : vector<1x80x128xf32> to vector<80x128xf32>
    %29 = arith.truncf %28 : vector<80x128xf32> to vector<80x128xbf16>
    %c4_25 = arith.constant 4 : index
    %c0_26 = arith.constant 0 : index
    %c0_27 = arith.constant 0 : index
    %30 = vector.load %arg2[%c4_25, %c0_26, %c0_27] : memref<5x128x768xbf16, #tpu.memory_space<vmem>>, vector<1x128x768xbf16>
    %31 = vector.shape_cast %30 : vector<1x128x768xbf16> to vector<128x768xbf16>
    %cst_28 = arith.constant dense<0.000000e+00> : vector<80x768xf32>
    %32 = tpu.matmul %29, %31, %cst_28 {dimension_numbers = #tpu.dot_dimension_numbers<[1], [0], [0], [1], [0, 0, 1, 1], [], []>} : vector<80x128xbf16>, vector<128x768xbf16>, vector<80x768xf32> -> vector<80x768xf32>
    %33 = arith.addf %26, %32 : vector<80x768xf32>
    %c0_29 = arith.constant 0 : index
    %c0_30 = arith.constant 0 : index
    %34 = vector.load %arg3[%c0_29, %c0_30] : memref<1x768xf32, #tpu.memory_space<vmem>>, vector<1x768xf32>
    %35 = vector.broadcast %34 : vector<1x768xf32> to vector<80x768xf32>
    %36 = arith.mulf %33, %35 : vector<80x768xf32>
    %c0_31 = arith.constant 0 : index
    %c0_32 = arith.constant 0 : index
    %37 = vector.load %arg4[%c0_31, %c0_32] : memref<1x768xf32, #tpu.memory_space<vmem>>, vector<1x768xf32>
    %38 = vector.broadcast %37 : vector<1x768xf32> to vector<80x768xf32>
    %39 = arith.addf %36, %38 : vector<80x768xf32>
    %cst_33 = arith.constant 0.000000e+00 : f32
    %40 = vector.broadcast %cst_33 : f32 to vector<80x768xf32>
    %41 = arith.maximumf %39, %40 : vector<80x768xf32>
    %c0_34 = arith.constant 0 : index
    %c0_35 = arith.constant 0 : index
    %c0_36 = arith.constant 0 : index
    %42 = vector.load %arg5[%c0_34, %c0_35, %c0_36] : memref<1x80x768xf32, #tpu.memory_space<vmem>>, vector<1x80x768xf32>
    %43 = vector.shape_cast %42 : vector<1x80x768xf32> to vector<80x768xf32>
    %44 = vector.shape_cast %41 : vector<80x768xf32> to vector<1x80x768xf32>
    tpu.vector_store %arg5[%c0_34, %c0_35, %c0_36], %44 {strides = array<i32>} : memref<1x80x768xf32, #tpu.memory_space<vmem>>, vector<1x80x768xf32>,
    return
  }
  func.func @transform_0(%arg0: i32) -> (i32, i32, i32) {
    %c0_i32 = arith.constant 0 : i32
    %c0_i32_0 = arith.constant 0 : i32
    %c0_i32_1 = arith.constant 0 : i32
    return %arg0, %c0_i32, %c0_i32_0 : i32, i32, i32
  }
  func.func @transform_1(%arg0: i32) -> (i32, i32, i32) {
    %c0_i32 = arith.constant 0 : i32
    %c0_i32_0 = arith.constant 0 : i32
    %c0_i32_1 = arith.constant 0 : i32
    %c0_i32_2 = arith.constant 0 : i32
    return %c0_i32, %c0_i32_0, %c0_i32_1 : i32, i32, i32
  }
  func.func @transform_2(%arg0: i32) -> (i32, i32) {
    %c0_i32 = arith.constant 0 : i32
    %c0_i32_0 = arith.constant 0 : i32
    %c0_i32_1 = arith.constant 0 : i32
    return %c0_i32, %c0_i32_0 : i32, i32
  }
  func.func @transform_3(%arg0: i32) -> (i32, i32) {
    %c0_i32 = arith.constant 0 : i32
    %c0_i32_0 = arith.constant 0 : i32
    %c0_i32_1 = arith.constant 0 : i32
    return %c0_i32, %c0_i32_0 : i32, i32
  }
  func.func @transform_4(%arg0: i32) -> (i32, i32, i32) {
    %c0_i32 = arith.constant 0 : i32
    %c0_i32_0 = arith.constant 0 : i32
    %c0_i32_1 = arith.constant 0 : i32
    return %arg0, %c0_i32, %c0_i32_0 : i32, i32, i32
  }
}

module attributes {stable_mosaic.version = 11 : i64} {
  func.func @kernel(%arg0: i32, %arg1: memref<1x360x128xf32, #tpu.memory_space<vmem>>, %arg2: memref<1x128x128xbf16, #tpu.memory_space<vmem>>, %arg3: memref<1x128xf32, #tpu.memory_space<vmem>>, %arg4: memref<1x128xf32, #tpu.memory_space<vmem>>, %arg5: memref<1x360x128xf32, #tpu.memory_space<vmem>>) attributes {dimension_semantics = [#tpu.dimension_semantics<parallel>], iteration_bounds = array<i64: 5>, scalar_prefetch = 0 : i64, scratch_operands = 0 : i64, tpu.core_type = #tpu.core_type<tc>, window_params = [{transform_indices = @transform_0, window_bounds = array<i64: 1, 360, 128>}, {pipeline_mode = #tpu.pipeline_mode<synchronous>, transform_indices = @transform_1, window_bounds = array<i64: 1, 128, 128>}, {pipeline_mode = #tpu.pipeline_mode<synchronous>, transform_indices = @transform_2, window_bounds = array<i64: 1, 128>}, {pipeline_mode = #tpu.pipeline_mode<synchronous>, transform_indices = @transform_3, window_bounds = array<i64: 1, 128>}, {transform_indices = @transform_4, window_bounds = array<i64: 1, 360, 128>}]} {
    %c0 = arith.constant 0 : index
    %c0_0 = arith.constant 0 : index
    %c0_1 = arith.constant 0 : index
    %0 = vector.load %arg1[%c0, %c0_0, %c0_1] : memref<1x360x128xf32, #tpu.memory_space<vmem>>, vector<1x360x128xf32>
    %1 = vector.shape_cast %0 : vector<1x360x128xf32> to vector<360x128xf32>
    %2 = arith.truncf %1 : vector<360x128xf32> to vector<360x128xbf16>
    %c0_2 = arith.constant 0 : index
    %c0_3 = arith.constant 0 : index
    %c0_4 = arith.constant 0 : index
    %3 = vector.load %arg2[%c0_2, %c0_3, %c0_4] : memref<1x128x128xbf16, #tpu.memory_space<vmem>>, vector<1x128x128xbf16>
    %4 = vector.shape_cast %3 : vector<1x128x128xbf16> to vector<128x128xbf16>
    %cst = arith.constant dense<0.000000e+00> : vector<360x128xf32>
    %5 = tpu.matmul %2, %4, %cst {dimension_numbers = #tpu.dot_dimension_numbers<[1], [0], [0], [1], [0, 0, 1, 1], [], []>} : vector<360x128xbf16>, vector<128x128xbf16>, vector<360x128xf32> -> vector<360x128xf32>
    %c0_5 = arith.constant 0 : index
    %c0_6 = arith.constant 0 : index
    %6 = vector.load %arg3[%c0_5, %c0_6] : memref<1x128xf32, #tpu.memory_space<vmem>>, vector<1x128xf32>
    %7 = vector.broadcast %6 : vector<1x128xf32> to vector<360x128xf32>
    %8 = arith.mulf %5, %7 : vector<360x128xf32>
    %c0_7 = arith.constant 0 : index
    %c0_8 = arith.constant 0 : index
    %9 = vector.load %arg4[%c0_7, %c0_8] : memref<1x128xf32, #tpu.memory_space<vmem>>, vector<1x128xf32>
    %10 = vector.broadcast %9 : vector<1x128xf32> to vector<360x128xf32>
    %11 = arith.addf %8, %10 : vector<360x128xf32>
    %c0_9 = arith.constant 0 : index
    %c0_10 = arith.constant 0 : index
    %c0_11 = arith.constant 0 : index
    %12 = vector.load %arg5[%c0_9, %c0_10, %c0_11] : memref<1x360x128xf32, #tpu.memory_space<vmem>>, vector<1x360x128xf32>
    %13 = vector.shape_cast %12 : vector<1x360x128xf32> to vector<360x128xf32>
    %14 = vector.shape_cast %11 : vector<360x128xf32> to vector<1x360x128xf32>
    tpu.vector_store %arg5[%c0_9, %c0_10, %c0_11], %14 {strides = array<i32>} : memref<1x360x128xf32, #tpu.memory_space<vmem>>, vector<1x360x128xf32>,
    return
  }
  func.func @transform_0(%arg0: i32) -> (i32, i32, i32) {
    %c0_i32 = arith.constant 0 : i32
    %c0_i32_0 = arith.constant 0 : i32
    %c0_i32_1 = arith.constant 0 : i32
    return %arg0, %c0_i32, %c0_i32_0 : i32, i32, i32
  }
  func.func @transform_1(%arg0: i32) -> (i32, i32, i32) {
    %c0_i32 = arith.constant 0 : i32
    %c0_i32_0 = arith.constant 0 : i32
    %c0_i32_1 = arith.constant 0 : i32
    %c0_i32_2 = arith.constant 0 : i32
    return %c0_i32, %c0_i32_0, %c0_i32_1 : i32, i32, i32
  }
  func.func @transform_2(%arg0: i32) -> (i32, i32) {
    %c0_i32 = arith.constant 0 : i32
    %c0_i32_0 = arith.constant 0 : i32
    %c0_i32_1 = arith.constant 0 : i32
    return %c0_i32, %c0_i32_0 : i32, i32
  }
  func.func @transform_3(%arg0: i32) -> (i32, i32) {
    %c0_i32 = arith.constant 0 : i32
    %c0_i32_0 = arith.constant 0 : i32
    %c0_i32_1 = arith.constant 0 : i32
    return %c0_i32, %c0_i32_0 : i32, i32
  }
  func.func @transform_4(%arg0: i32) -> (i32, i32, i32) {
    %c0_i32 = arith.constant 0 : i32
    %c0_i32_0 = arith.constant 0 : i32
    %c0_i32_1 = arith.constant 0 : i32
    return %arg0, %c0_i32, %c0_i32_0 : i32, i32, i32
  }
}

</mosaic_0001>

<llo_original>
// kernel: multi_decoder_forward.4
$region0: #{multi_decoder_forward.4}
  #allocation0 [shape = 'u32[]', space=smem, size = 0x4, offset = 0x4, fixed_abs, tag = 'smem constant byte address 0x4 - core index']
  #allocation1 [shape = 'u32[144,128]{1,0:T(1,128)}', space=vmem, size = 0x12000, scoped, tag = 'internal scratch']
  %s0 = inlined_call_operand.vmem [shape: f32[5,48,256], index: 0, kind: input, shape index: {}]
  %s1 = inlined_call_operand.hbm [shape: bf16[2,256,1024], index: 1, kind: input, shape index: {}]
  %s2 = inlined_call_operand.hbm [shape: f32[1,1024], index: 2, kind: input, shape index: {}]
  %s3 = inlined_call_operand.hbm [shape: f32[1,1024], index: 3, kind: input, shape index: {}]
  %s4 = inlined_call_operand.vmem [shape: f32[5,40,1024], index: 4, kind: output, shape index: {}]
  %s5 = sld [smem:[#allocation0]]
  $region61: #{multi_decoder_forward.4} parent=0
    _
  %s7 = ssub.s32 1, %s5
  %s8 = scalar_select 0, %s7, %s5
  $region1: #{multi_decoder_forward.4} parent=0
    #allocation2 [shape = 'u8[1048576]{0}', space=vmem, size = 0x100000, scoped, tag = 'input window, operand 1, single buffered']
    #allocation3 [shape = 's32[2]{0}', space=sflag, size = 0x8, scoped, tag = 'scoped memory for multi_decoder_forward.4']
    #allocation4 [shape = 'u8[4096]{0}', space=vmem, size = 0x1000, scoped, tag = 'input window, operand 2, single buffered']
    #allocation5 [shape = 's32[1]{0}', space=sflag, size = 0x4, scoped, tag = 'scoped memory for multi_decoder_forward.4']
    #allocation6 [shape = 'u8[4096]{0}', space=vmem, size = 0x1000, scoped, tag = 'input window, operand 3, single buffered']
    %9 = vsyncpa [#allocation3], 0
    %10 = vsyncpa [#allocation5], 0
    loop: start=0, step=1, limit=7
    $region2: #{multi_decoder_forward.4} parent=1 // loop_pre_header
      _
    $region3: #{multi_decoder_forward.4} parent=1 // loop_header
      %s12 = sphi 0, %s16
      %p13 = scmp.ge.s32.totalorder %s12, 7
      %s22 = sphi 0, %s24
      %s25 = sphi 0, %s22
      %s26 = sphi 0, %s25
      %s42 = sphi 0, %s26
      %s46 = sphi 0, %s46
      %s48 = sphi 0, %s46
      %s49 = sphi 0, %s48
      %s63 = sphi 0, %s49
      %s67 = sphi 0, %s67
      %s69 = sphi 0, %s67
      %s70 = sphi 0, %s69
      %s84 = sphi 0, %s70
      %s88 = sphi 0, %s88
      %s90 = sphi 0, %s88
      %s91 = sphi 0, %s90
      %s105 = sphi 0, %s91
      %s111 = sphi 0, %s113
      %s114 = sphi 0, %s111
      %s115 = sphi 0, %s114
      %s131 = sphi 0, %s115
    $region4: #{multi_decoder_forward.4} parent=1 // loop_header_branch
      %15 = sbr.rel (%p13) target = $region8
    $region5: #{multi_decoder_forward.4} parent=1 // loop_body
      %s17 = ssub.s32 %s12, 1
      %s18 = ssub.s32 %s12, 2
      %s19 = sadd.s32 %s12, 1
      %s20 = ssub.s32 %s12, %s19
      %p21 = scmp.eq.s32.totalorder %s20, 0
      %s23 = sadd.s32 %s22, 1
      %s24 = scalar_select %p21, %s22, %s23
      %p27 = pneg %p21
      %p28 = scmp.eq.s32.totalorder %s12, 4
      %p29 = por %p27, %p28
      %p30 = scmp.ne.s32.totalorder %s22, %s25
      %p31 = scmp.eq.s32.totalorder %s12, 0
      %p32 = por %p30, %p31
      %p33 = scmp.ne.s32.totalorder %s22, %s25
      %p34 = scmp.eq.s32.totalorder %s17, 4
      %p35 = por %p33, %p34
      %p36 = scmp.ne.s32.totalorder %s25, %s26
      %p37 = scmp.eq.s32.totalorder %s17, 0
      %p38 = por %p36, %p37
      %p39 = scmp.ne.s32.totalorder %s25, %s26
      %p40 = scmp.eq.s32.totalorder %s18, 4
      %p41 = por %p39, %p40
      %p43 = scmp.ne.s32.totalorder %s26, %s42
      %p44 = scmp.eq.s32.totalorder %s18, 0
      %p45 = por %p43, %p44
      %s47 = sadd.s32 %s46, 1
      %p50 = scmp.eq.s32.totalorder %s12, 4
      %p51 = scmp.ne.s32.totalorder %s46, %s48
      %p52 = scmp.eq.s32.totalorder %s12, 0
      %p53 = por %p51, %p52
      %p54 = scmp.ne.s32.totalorder %s46, %s48
      %p55 = scmp.eq.s32.totalorder %s17, 4
      %p56 = por %p54, %p55
      %p57 = scmp.ne.s32.totalorder %s48, %s49
      %p58 = scmp.eq.s32.totalorder %s17, 0
      %p59 = por %p57, %p58
      %p60 = scmp.ne.s32.totalorder %s48, %s49
      %p61 = scmp.eq.s32.totalorder %s18, 4
      %p62 = por %p60, %p61
      %p64 = scmp.ne.s32.totalorder %s49, %s63
      %p65 = scmp.eq.s32.totalorder %s18, 0
      %p66 = por %p64, %p65
      %s68 = sadd.s32 %s67, 1
      %p71 = scmp.eq.s32.totalorder %s12, 4
      %p72 = scmp.ne.s32.totalorder %s67, %s69
      %p73 = scmp.eq.s32.totalorder %s12, 0
      %p74 = por %p72, %p73
      %p75 = scmp.ne.s32.totalorder %s67, %s69
      %p76 = scmp.eq.s32.totalorder %s17, 4
      %p77 = por %p75, %p76
      %p78 = scmp.ne.s32.totalorder %s69, %s70
      %p79 = scmp.eq.s32.totalorder %s17, 0
      %p80 = por %p78, %p79
      %p81 = scmp.ne.s32.totalorder %s69, %s70
      %p82 = scmp.eq.s32.totalorder %s18, 4
      %p83 = por %p81, %p82
      %p85 = scmp.ne.s32.totalorder %s70, %s84
      %p86 = scmp.eq.s32.totalorder %s18, 0
      %p87 = por %p85, %p86
      %s89 = sadd.s32 %s88, 1
      %p92 = scmp.eq.s32.totalorder %s12, 4
      %p93 = scmp.ne.s32.totalorder %s88, %s90
      %p94 = scmp.eq.s32.totalorder %s12, 0
      %p95 = por %p93, %p94
      %p96 = scmp.ne.s32.totalorder %s88, %s90
      %p97 = scmp.eq.s32.totalorder %s17, 4
      %p98 = por %p96, %p97
      %p99 = scmp.ne.s32.totalorder %s90, %s91
      %p100 = scmp.eq.s32.totalorder %s17, 0
      %p101 = por %p99, %p100
      %p102 = scmp.ne.s32.totalorder %s90, %s91
      %p103 = scmp.eq.s32.totalorder %s18, 4
      %p104 = por %p102, %p103
      %p106 = scmp.ne.s32.totalorder %s91, %s105
      %p107 = scmp.eq.s32.totalorder %s18, 0
      %p108 = por %p106, %p107
      %s109 = ssub.s32 %s12, %s19
      %p110 = scmp.eq.s32.totalorder %s109, 0
      %s112 = sadd.s32 %s111, 1
      %s113 = scalar_select %p110, %s111, %s112
      %p116 = pneg %p110
      %p117 = scmp.eq.s32.totalorder %s12, 4
      %p118 = por %p116, %p117
      %p119 = scmp.ne.s32.totalorder %s111, %s114
      %p120 = scmp.eq.s32.totalorder %s12, 0
      %p121 = por %p119, %p120
      %p122 = scmp.ne.s32.totalorder %s111, %s114
      %p123 = scmp.eq.s32.totalorder %s17, 4
      %p124 = por %p122, %p123
      %p125 = scmp.ne.s32.totalorder %s114, %s115
      %p126 = scmp.eq.s32.totalorder %s17, 0
      %p127 = por %p125, %p126
      %p128 = scmp.ne.s32.totalorder %s114, %s115
      %p129 = scmp.eq.s32.totalorder %s18, 4
      %p130 = por %p128, %p129
      %p132 = scmp.ne.s32.totalorder %s115, %s131
      %p133 = scmp.eq.s32.totalorder %s18, 0
      %p134 = por %p132, %p133
      %p135 = scmp.le.s32.totalorder 1, %s12
      %p136 = scmp.lt.s32.totalorder %s12, 6
      %p137 = pnand %p135, %p136
      %p138 = pneg %p137
      // Predicated region
      $region9: #{multi_decoder_forward.4} parent=5 // pred_check
        _
      $region10: #{multi_decoder_forward.4} parent=5 // pred_check_branch
        %140 = sbr.rel (%p137) target = $region12
      $region11: #{multi_decoder_forward.4} parent=5 // pred_region
        %s141 = ssub.s32 %s12, 1
        // Predicated region
        $region13: #{multi_decoder_forward.4} parent=11 // pred_check
          %p142 = pneg %p59
        $region14: #{multi_decoder_forward.4} parent=11 // pred_check_branch
          %144 = sbr.rel (%p142) target = $region16
        $region15: #{multi_decoder_forward.4} parent=11 // pred_region
          %s146 = ssub.s32 32768, 32768
          %147 = vsyncadd [#allocation3], %s146
          %s148 = sshll.u32 [#allocation2], 4
          %s149 = int_to_ptr.vmem [resolvable:$true] %s148
          %154 = dma.hbm_to_vmem [thread:$0]  %s1, 32768, %s149, [#allocation3], 512, 512, 32
        $region16: #{multi_decoder_forward.4} parent=11 // pred_fallthru
          _
        // Predicated region
        $region17: #{multi_decoder_forward.4} parent=11 // pred_check
          %p155 = pneg %p80
        $region18: #{multi_decoder_forward.4} parent=11 // pred_check_branch
          %157 = sbr.rel (%p155) target = $region20
        $region19: #{multi_decoder_forward.4} parent=11 // pred_region
          %s159 = ssub.s32 128, 128
          %160 = vsyncadd [#allocation5], %s159
          %s162 = sshll.u32 [#allocation4], 4
          %s163 = int_to_ptr.vmem [resolvable:$true] %s162
          %165 = dma.hbm_to_vmem [thread:$0]  %s2, 128, %s163, [#allocation5]
        $region20: #{multi_decoder_forward.4} parent=11 // pred_fallthru
          _
        // Predicated region
        $region21: #{multi_decoder_forward.4} parent=11 // pred_check
          %p166 = pneg %p101
        $region22: #{multi_decoder_forward.4} parent=11 // pred_check_branch
          %168 = sbr.rel (%p166) target = $region24
        $region23: #{multi_decoder_forward.4} parent=11 // pred_region
          %s170 = ssub.s32 128, 128
          %171 = vsyncadd [#allocation5], %s170
          %s173 = sshll.u32 [#allocation6], 4
          %s174 = int_to_ptr.vmem [resolvable:$true] %s173
          %176 = dma.hbm_to_vmem [thread:$0]  %s3, 128, %s174, [#allocation5]
        $region24: #{multi_decoder_forward.4} parent=11 // pred_fallthru
          _
      $region12: #{multi_decoder_forward.4} parent=5 // pred_fallthru
        _
      %p177 = scmp.lt.s32.totalorder %s12, 5
      // Predicated region
      $region25: #{multi_decoder_forward.4} parent=5 // pred_check
        %p178 = pneg %p177
      $region26: #{multi_decoder_forward.4} parent=5 // pred_check_branch
        %180 = sbr.rel (%p178) target = $region28
      $region27: #{multi_decoder_forward.4} parent=5 // pred_region
        // Predicated region
        $region29: #{multi_decoder_forward.4} parent=27 // pred_check
          %p181 = pneg %p32
        $region30: #{multi_decoder_forward.4} parent=27 // pred_check_branch
          %183 = sbr.rel (%p181) target = $region32
        $region31: #{multi_decoder_forward.4} parent=27 // pred_region
          %p184 = scmp.lt.s32.totalorder %s12, 4
          %s185 = scalar_select %p184, %s12, 4
          %s186 = smul.addr %s185, 12
          %s187 = smul.addr %s186, 8
          %s188 = scalar_lea.vmem %s0, %s187
        $region32: #{multi_decoder_forward.4} parent=27 // pred_fallthru
          _
      $region28: #{multi_decoder_forward.4} parent=5 // pred_fallthru
        _
      %p189 = scmp.le.s32.totalorder 1, %s12
      %p190 = scmp.lt.s32.totalorder %s12, 6
      %p191 = pnand %p189, %p190
      %p192 = pneg %p191
      // Predicated region
      $region33: #{multi_decoder_forward.4} parent=5 // pred_check
        _
      $region34: #{multi_decoder_forward.4} parent=5 // pred_check_branch
        %194 = sbr.rel (%p191) target = $region36
      $region35: #{multi_decoder_forward.4} parent=5 // pred_region
        %s195 = ssub.s32 %s12, 1
        // Predicated region
        $region37: #{multi_decoder_forward.4} parent=35 // pred_check
          %p196 = pneg %p59
        $region38: #{multi_decoder_forward.4} parent=35 // pred_check_branch
          %198 = sbr.rel (%p196) target = $region40
        $region39: #{multi_decoder_forward.4} parent=35 // pred_region
          %199 = dma.done [#allocation3], 32768
        $region40: #{multi_decoder_forward.4} parent=35 // pred_fallthru
          _
        // Predicated region
        $region41: #{multi_decoder_forward.4} parent=35 // pred_check
          %p200 = pneg %p80
        $region42: #{multi_decoder_forward.4} parent=35 // pred_check_branch
          %202 = sbr.rel (%p200) target = $region44
        $region43: #{multi_decoder_forward.4} parent=35 // pred_region
          %203 = dma.done [#allocation5], 128
        $region44: #{multi_decoder_forward.4} parent=35 // pred_fallthru
          _
        // Predicated region
        $region45: #{multi_decoder_forward.4} parent=35 // pred_check
          %p204 = pneg %p101
        $region46: #{multi_decoder_forward.4} parent=35 // pred_check_branch
          %206 = sbr.rel (%p204) target = $region48
        $region47: #{multi_decoder_forward.4} parent=35 // pred_region
          %207 = dma.done [#allocation5], 128
        $region48: #{multi_decoder_forward.4} parent=35 // pred_fallthru
          _
        %p208 = scmp.lt.s32.totalorder %s17, 4
        %s209 = scalar_select %p208, %s17, 4
        %s210 = smul.addr %s209, 12
        %s211 = smul.addr %s210, 8
        %s212 = scalar_lea.vmem %s0, %s211
        %p213 = pneg %p38
        %p214 = pneg %p35
        %p215 = pneg %p59
        %p216 = pneg %p56
        %p217 = pneg %p80
        %p218 = pneg %p77
        %p219 = pneg %p101
        %p220 = pneg %p98
        %p221 = pneg %p127
        %p222 = pneg %p124
        %p223 = scmp.lt.s32.totalorder %s17, 4
        %s224 = scalar_select %p223, %s17, 4
        %s225 = smul.addr %s224, 40
        %s226 = smul.addr %s225, 8
        %s227 = scalar_lea.vmem %s4, %s226
        %p228 = scmp.lt.s32.totalorder %s17, 4
        %s229 = scalar_select %p228, %s17, 4
        %s230 = smul.addr %s229, 12
        %s231 = smul.addr %s230, 8
        %s232 = scalar_lea.vmem %s0, %s231
        %p233 = scmp.lt.s32.totalorder %s17, 4
        %s234 = scalar_select %p233, %s17, 4
        %s235 = smul.addr %s234, 40
        %s236 = smul.addr %s235, 8
        %s237 = scalar_lea.vmem %s4, %s236
        %v238 = vld [vmem:[%s232] sm:$0xff]
        %v239 = vld [vmem:[%s232 + $0x8] sm:$0xff]
        %v240 = vld [vmem:[%s232 + $0x10] sm:$0xff]
        %v241 = vld [vmem:[%s232 + $0x18] sm:$0xff]
        %v242 = vld [vmem:[%s232 + $0x20] sm:$0xff]
        %v243 = vld [vmem:[%s232 + $0x28] sm:$0xff]
        %v244 = vld [vmem:[%s232 + $0x30] sm:$0xff]
        %v245 = vld [vmem:[%s232 + $0x38] sm:$0xff]
        %v246 = vld [vmem:[%s232 + $0x40] sm:$0xff]
        %v247 = vld [vmem:[%s232 + $0x48] sm:$0xff]
        %v248 = vpack.c.bf16 %v240, %v238
        %v249 = vpack.c.bf16 %v241, %v239
        %v250 = vpack.c.bf16 %v244, %v242
        %v251 = vpack.c.bf16 %v245, %v243
        %v252 = vpack.c.bf16 %v246, %v246
        %v253 = vpack.c.bf16 %v247, %v247
        %v254 = vld [vmem:[#allocation2] sm:$0xff]
        %v255 = vld [vmem:[#allocation2 + $0x8] sm:$0xff]
        %v256 = vld [vmem:[#allocation2 + $0x10] sm:$0xff]
        %v257 = vld [vmem:[#allocation2 + $0x18] sm:$0xff]
        %v258 = vld [vmem:[#allocation2 + $0x20] sm:$0xff]
        %v259 = vld [vmem:[#allocation2 + $0x28] sm:$0xff]
        %v260 = vld [vmem:[#allocation2 + $0x30] sm:$0xff]
        %v261 = vld [vmem:[#allocation2 + $0x38] sm:$0xff]
        %v262 = vld [vmem:[#allocation2 + $0x40] sm:$0xff]
        %v263 = vld [vmem:[#allocation2 + $0x48] sm:$0xff]
        %v264 = vld [vmem:[#allocation2 + $0x50] sm:$0xff]
        %v265 = vld [vmem:[#allocation2 + $0x58] sm:$0xff]
        %v266 = vld [vmem:[#allocation2 + $0x60] sm:$0xff]
        %v267 = vld [vmem:[#allocation2 + $0x68] sm:$0xff]
        %v268 = vld [vmem:[#allocation2 + $0x70] sm:$0xff]
        %v269 = vld [vmem:[#allocation2 + $0x78] sm:$0xff]
        %v270 = vld [vmem:[#allocation2 + $0x80] sm:$0xff]
        %v271 = vld [vmem:[#allocation2 + $0x88] sm:$0xff]
        %v272 = vld [vmem:[#allocation2 + $0x90] sm:$0xff]
        %v273 = vld [vmem:[#allocation2 + $0x98] sm:$0xff]
        %v274 = vld [vmem:[#allocation2 + $0xa0] sm:$0xff]
        %v275 = vld [vmem:[#allocation2 + $0xa8] sm:$0xff]
        %v276 = vld [vmem:[#allocation2 + $0xb0] sm:$0xff]
        %v277 = vld [vmem:[#allocation2 + $0xb8] sm:$0xff]
        %v278 = vld [vmem:[#allocation2 + $0xc0] sm:$0xff]
        %v279 = vld [vmem:[#allocation2 + $0xc8] sm:$0xff]
        %v280 = vld [vmem:[#allocation2 + $0xd0] sm:$0xff]
        %v281 = vld [vmem:[#allocation2 + $0xd8] sm:$0xff]
        %v282 = vld [vmem:[#allocation2 + $0xe0] sm:$0xff]
        %v283 = vld [vmem:[#allocation2 + $0xe8] sm:$0xff]
        %v284 = vld [vmem:[#allocation2 + $0xf0] sm:$0xff]
        %v285 = vld [vmem:[#allocation2 + $0xf8] sm:$0xff]
        %v286 = vld [vmem:[#allocation2 + $0x100] sm:$0xff]
        %v287 = vld [vmem:[#allocation2 + $0x108] sm:$0xff]
        %v288 = vld [vmem:[#allocation2 + $0x110] sm:$0xff]
        %v289 = vld [vmem:[#allocation2 + $0x118] sm:$0xff]
        %v290 = vld [vmem:[#allocation2 + $0x120] sm:$0xff]
        %v291 = vld [vmem:[#allocation2 + $0x128] sm:$0xff]
        %v292 = vld [vmem:[#allocation2 + $0x130] sm:$0xff]
        %v293 = vld [vmem:[#allocation2 + $0x138] sm:$0xff]
        %v294 = vld [vmem:[#allocation2 + $0x140] sm:$0xff]
        %v295 = vld [vmem:[#allocation2 + $0x148] sm:$0xff]
        %v296 = vld [vmem:[#allocation2 + $0x150] sm:$0xff]
        %v297 = vld [vmem:[#allocation2 + $0x158] sm:$0xff]
        %v298 = vld [vmem:[#allocation2 + $0x160] sm:$0xff]
        %v299 = vld [vmem:[#allocation2 + $0x168] sm:$0xff]
        %v300 = vld [vmem:[#allocation2 + $0x170] sm:$0xff]
        %v301 = vld [vmem:[#allocation2 + $0x178] sm:$0xff]
        %v302 = vld [vmem:[#allocation2 + $0x180] sm:$0xff]
        %v303 = vld [vmem:[#allocation2 + $0x188] sm:$0xff]
        %v304 = vld [vmem:[#allocation2 + $0x190] sm:$0xff]
        %v305 = vld [vmem:[#allocation2 + $0x198] sm:$0xff]
        %v306 = vld [vmem:[#allocation2 + $0x1a0] sm:$0xff]
        %v307 = vld [vmem:[#allocation2 + $0x1a8] sm:$0xff]
        %v308 = vld [vmem:[#allocation2 + $0x1b0] sm:$0xff]
        %v309 = vld [vmem:[#allocation2 + $0x1b8] sm:$0xff]
        %v310 = vld [vmem:[#allocation2 + $0x1c0] sm:$0xff]
        %v311 = vld [vmem:[#allocation2 + $0x1c8] sm:$0xff]
        %v312 = vld [vmem:[#allocation2 + $0x1d0] sm:$0xff]
        %v313 = vld [vmem:[#allocation2 + $0x1d8] sm:$0xff]
        %v314 = vld [vmem:[#allocation2 + $0x1e0] sm:$0xff]
        %v315 = vld [vmem:[#allocation2 + $0x1e8] sm:$0xff]
        %v316 = vld [vmem:[#allocation2 + $0x1f0] sm:$0xff]
        %v317 = vld [vmem:[#allocation2 + $0x1f8] sm:$0xff]
        %v318 = vld [vmem:[#allocation2 + $0x200] sm:$0xff]
        %v319 = vld [vmem:[#allocation2 + $0x208] sm:$0xff]
        %v320 = vld [vmem:[#allocation2 + $0x210] sm:$0xff]
        %v321 = vld [vmem:[#allocation2 + $0x218] sm:$0xff]
        %v322 = vld [vmem:[#allocation2 + $0x220] sm:$0xff]
        %v323 = vld [vmem:[#allocation2 + $0x228] sm:$0xff]
        %v324 = vld [vmem:[#allocation2 + $0x230] sm:$0xff]
        %v325 = vld [vmem:[#allocation2 + $0x238] sm:$0xff]
        %v326 = vld [vmem:[#allocation2 + $0x240] sm:$0xff]
        %v327 = vld [vmem:[#allocation2 + $0x248] sm:$0xff]
        %v328 = vld [vmem:[#allocation2 + $0x250] sm:$0xff]
        %v329 = vld [vmem:[#allocation2 + $0x258] sm:$0xff]
        %v330 = vld [vmem:[#allocation2 + $0x260] sm:$0xff]
        %v331 = vld [vmem:[#allocation2 + $0x268] sm:$0xff]
        %v332 = vld [vmem:[#allocation2 + $0x270] sm:$0xff]
        %v333 = vld [vmem:[#allocation2 + $0x278] sm:$0xff]
        %v334 = vld [vmem:[#allocation2 + $0x280] sm:$0xff]
        %v335 = vld [vmem:[#allocation2 + $0x288] sm:$0xff]
        %v336 = vld [vmem:[#allocation2 + $0x290] sm:$0xff]
        %v337 = vld [vmem:[#allocation2 + $0x298] sm:$0xff]
        %v338 = vld [vmem:[#allocation2 + $0x2a0] sm:$0xff]
        %v339 = vld [vmem:[#allocation2 + $0x2a8] sm:$0xff]
        %v340 = vld [vmem:[#allocation2 + $0x2b0] sm:$0xff]
        %v341 = vld [vmem:[#allocation2 + $0x2b8] sm:$0xff]
        %v342 = vld [vmem:[#allocation2 + $0x2c0] sm:$0xff]
        %v343 = vld [vmem:[#allocation2 + $0x2c8] sm:$0xff]
        %v344 = vld [vmem:[#allocation2 + $0x2d0] sm:$0xff]
        %v345 = vld [vmem:[#allocation2 + $0x2d8] sm:$0xff]
        %v346 = vld [vmem:[#allocation2 + $0x2e0] sm:$0xff]
        %v347 = vld [vmem:[#allocation2 + $0x2e8] sm:$0xff]
        %v348 = vld [vmem:[#allocation2 + $0x2f0] sm:$0xff]
        %v349 = vld [vmem:[#allocation2 + $0x2f8] sm:$0xff]
        %v350 = vld [vmem:[#allocation2 + $0x300] sm:$0xff]
        %v351 = vld [vmem:[#allocation2 + $0x308] sm:$0xff]
        %v352 = vld [vmem:[#allocation2 + $0x310] sm:$0xff]
        %v353 = vld [vmem:[#allocation2 + $0x318] sm:$0xff]
        %v354 = vld [vmem:[#allocation2 + $0x320] sm:$0xff]
        %v355 = vld [vmem:[#allocation2 + $0x328] sm:$0xff]
        %v356 = vld [vmem:[#allocation2 + $0x330] sm:$0xff]
        %v357 = vld [vmem:[#allocation2 + $0x338] sm:$0xff]
        %v358 = vld [vmem:[#allocation2 + $0x340] sm:$0xff]
        %v359 = vld [vmem:[#allocation2 + $0x348] sm:$0xff]
        %v360 = vld [vmem:[#allocation2 + $0x350] sm:$0xff]
        %v361 = vld [vmem:[#allocation2 + $0x358] sm:$0xff]
        %v362 = vld [vmem:[#allocation2 + $0x360] sm:$0xff]
        %v363 = vld [vmem:[#allocation2 + $0x368] sm:$0xff]
        %v364 = vld [vmem:[#allocation2 + $0x370] sm:$0xff]
        %v365 = vld [vmem:[#allocation2 + $0x378] sm:$0xff]
        %v366 = vld [vmem:[#allocation2 + $0x380] sm:$0xff]
        %v367 = vld [vmem:[#allocation2 + $0x388] sm:$0xff]
        %v368 = vld [vmem:[#allocation2 + $0x390] sm:$0xff]
        %v369 = vld [vmem:[#allocation2 + $0x398] sm:$0xff]
        %v370 = vld [vmem:[#allocation2 + $0x3a0] sm:$0xff]
        %v371 = vld [vmem:[#allocation2 + $0x3a8] sm:$0xff]
        %v372 = vld [vmem:[#allocation2 + $0x3b0] sm:$0xff]
        %v373 = vld [vmem:[#allocation2 + $0x3b8] sm:$0xff]
        %v374 = vld [vmem:[#allocation2 + $0x3c0] sm:$0xff]
        %v375 = vld [vmem:[#allocation2 + $0x3c8] sm:$0xff]
        %v376 = vld [vmem:[#allocation2 + $0x3d0] sm:$0xff]
        %v377 = vld [vmem:[#allocation2 + $0x3d8] sm:$0xff]
        %v378 = vld [vmem:[#allocation2 + $0x3e0] sm:$0xff]
        %v379 = vld [vmem:[#allocation2 + $0x3e8] sm:$0xff]
        %v380 = vld [vmem:[#allocation2 + $0x3f0] sm:$0xff]
        %v381 = vld [vmem:[#allocation2 + $0x3f8] sm:$0xff]
        %v382 = vld [vmem:[%s232] sm:$0xfe]
        %v383 = vld [vmem:[%s232 + $0x8] sm:$0xfe]
        %v384 = vld [vmem:[%s232 + $0x10] sm:$0xff]
        %v385 = vld [vmem:[%s232 + $0x18] sm:$0xff]
        %v386 = vld [vmem:[%s232 + $0x20] sm:$0xff]
        %v387 = vld [vmem:[%s232 + $0x28] sm:$0xff]
        %v388 = vld [vmem:[%s232 + $0x30] sm:$0xff]
        %v389 = vld [vmem:[%s232 + $0x38] sm:$0xff]
        %v390 = vld [vmem:[%s232 + $0x40] sm:$0xff]
        %v391 = vld [vmem:[%s232 + $0x48] sm:$0xff]
        %v392 = vld [vmem:[%s232 + $0x50] sm:$0x1]
        %v393 = vld [vmem:[%s232 + $0x58] sm:$0x1]
        %v394 = vpack.c.bf16 %v384, %v382
        %v395 = vpack.c.bf16 %v385, %v383
        %v396 = vpack.c.bf16 %v388, %v386
        %v397 = vpack.c.bf16 %v389, %v387
        %v398 = vpack.c.bf16 %v392, %v390
        %v399 = vpack.c.bf16 %v393, %v391
        %s400 = scalar_lea.vmem [#allocation2], 1024
        %v401 = vld [vmem:[%s400] sm:$0xff]
        %v402 = vld [vmem:[%s400 + $0x8] sm:$0xff]
        %v403 = vld [vmem:[%s400 + $0x10] sm:$0xff]
        %v404 = vld [vmem:[%s400 + $0x18] sm:$0xff]
        %v405 = vld [vmem:[%s400 + $0x20] sm:$0xff]
        %v406 = vld [vmem:[%s400 + $0x28] sm:$0xff]
        %v407 = vld [vmem:[%s400 + $0x30] sm:$0xff]
        %v408 = vld [vmem:[%s400 + $0x38] sm:$0xff]
        %v409 = vld [vmem:[%s400 + $0x40] sm:$0xff]
        %v410 = vld [vmem:[%s400 + $0x48] sm:$0xff]
        %v411 = vld [vmem:[%s400 + $0x50] sm:$0xff]
        %v412 = vld [vmem:[%s400 + $0x58] sm:$0xff]
        %v413 = vld [vmem:[%s400 + $0x60] sm:$0xff]
        %v414 = vld [vmem:[%s400 + $0x68] sm:$0xff]
        %v415 = vld [vmem:[%s400 + $0x70] sm:$0xff]
        %v416 = vld [vmem:[%s400 + $0x78] sm:$0xff]
        %v417 = vld [vmem:[%s400 + $0x80] sm:$0xff]
        %v418 = vld [vmem:[%s400 + $0x88] sm:$0xff]
        %v419 = vld [vmem:[%s400 + $0x90] sm:$0xff]
        %v420 = vld [vmem:[%s400 + $0x98] sm:$0xff]
        %v421 = vld [vmem:[%s400 + $0xa0] sm:$0xff]
        %v422 = vld [vmem:[%s400 + $0xa8] sm:$0xff]
        %v423 = vld [vmem:[%s400 + $0xb0] sm:$0xff]
        %v424 = vld [vmem:[%s400 + $0xb8] sm:$0xff]
        %v425 = vld [vmem:[%s400 + $0xc0] sm:$0xff]
        %v426 = vld [vmem:[%s400 + $0xc8] sm:$0xff]
        %v427 = vld [vmem:[%s400 + $0xd0] sm:$0xff]
        %v428 = vld [vmem:[%s400 + $0xd8] sm:$0xff]
        %v429 = vld [vmem:[%s400 + $0xe0] sm:$0xff]
        %v430 = vld [vmem:[%s400 + $0xe8] sm:$0xff]
        %v431 = vld [vmem:[%s400 + $0xf0] sm:$0xff]
        %v432 = vld [vmem:[%s400 + $0xf8] sm:$0xff]
        %v433 = vld [vmem:[%s400 + $0x100] sm:$0xff]
        %v434 = vld [vmem:[%s400 + $0x108] sm:$0xff]
        %v435 = vld [vmem:[%s400 + $0x110] sm:$0xff]
        %v436 = vld [vmem:[%s400 + $0x118] sm:$0xff]
        %v437 = vld [vmem:[%s400 + $0x120] sm:$0xff]
        %v438 = vld [vmem:[%s400 + $0x128] sm:$0xff]
        %v439 = vld [vmem:[%s400 + $0x130] sm:$0xff]
        %v440 = vld [vmem:[%s400 + $0x138] sm:$0xff]
        %v441 = vld [vmem:[%s400 + $0x140] sm:$0xff]
        %v442 = vld [vmem:[%s400 + $0x148] sm:$0xff]
        %v443 = vld [vmem:[%s400 + $0x150] sm:$0xff]
        %v444 = vld [vmem:[%s400 + $0x158] sm:$0xff]
        %v445 = vld [vmem:[%s400 + $0x160] sm:$0xff]
        %v446 = vld [vmem:[%s400 + $0x168] sm:$0xff]
        %v447 = vld [vmem:[%s400 + $0x170] sm:$0xff]
        %v448 = vld [vmem:[%s400 + $0x178] sm:$0xff]
        %v449 = vld [vmem:[%s400 + $0x180] sm:$0xff]
        %v450 = vld [vmem:[%s400 + $0x188] sm:$0xff]
        %v451 = vld [vmem:[%s400 + $0x190] sm:$0xff]
        %v452 = vld [vmem:[%s400 + $0x198] sm:$0xff]
        %v453 = vld [vmem:[%s400 + $0x1a0] sm:$0xff]
        %v454 = vld [vmem:[%s400 + $0x1a8] sm:$0xff]
        %v455 = vld [vmem:[%s400 + $0x1b0] sm:$0xff]
        %v456 = vld [vmem:[%s400 + $0x1b8] sm:$0xff]
        %v457 = vld [vmem:[%s400 + $0x1c0] sm:$0xff]
        %v458 = vld [vmem:[%s400 + $0x1c8] sm:$0xff]
        %v459 = vld [vmem:[%s400 + $0x1d0] sm:$0xff]
        %v460 = vld [vmem:[%s400 + $0x1d8] sm:$0xff]
        %v461 = vld [vmem:[%s400 + $0x1e0] sm:$0xff]
        %v462 = vld [vmem:[%s400 + $0x1e8] sm:$0xff]
        %v463 = vld [vmem:[%s400 + $0x1f0] sm:$0xff]
        %v464 = vld [vmem:[%s400 + $0x1f8] sm:$0xff]
        %v465 = vld [vmem:[%s400 + $0x200] sm:$0xff]
        %v466 = vld [vmem:[%s400 + $0x208] sm:$0xff]
        %v467 = vld [vmem:[%s400 + $0x210] sm:$0xff]
        %v468 = vld [vmem:[%s400 + $0x218] sm:$0xff]
        %v469 = vld [vmem:[%s400 + $0x220] sm:$0xff]
        %v470 = vld [vmem:[%s400 + $0x228] sm:$0xff]
        %v471 = vld [vmem:[%s400 + $0x230] sm:$0xff]
        %v472 = vld [vmem:[%s400 + $0x238] sm:$0xff]
        %v473 = vld [vmem:[%s400 + $0x240] sm:$0xff]
        %v474 = vld [vmem:[%s400 + $0x248] sm:$0xff]
        %v475 = vld [vmem:[%s400 + $0x250] sm:$0xff]
        %v476 = vld [vmem:[%s400 + $0x258] sm:$0xff]
        %v477 = vld [vmem:[%s400 + $0x260] sm:$0xff]
        %v478 = vld [vmem:[%s400 + $0x268] sm:$0xff]
        %v479 = vld [vmem:[%s400 + $0x270] sm:$0xff]
        %v480 = vld [vmem:[%s400 + $0x278] sm:$0xff]
        %v481 = vld [vmem:[%s400 + $0x280] sm:$0xff]
        %v482 = vld [vmem:[%s400 + $0x288] sm:$0xff]
        %v483 = vld [vmem:[%s400 + $0x290] sm:$0xff]
        %v484 = vld [vmem:[%s400 + $0x298] sm:$0xff]
        %v485 = vld [vmem:[%s400 + $0x2a0] sm:$0xff]
        %v486 = vld [vmem:[%s400 + $0x2a8] sm:$0xff]
        %v487 = vld [vmem:[%s400 + $0x2b0] sm:$0xff]
        %v488 = vld [vmem:[%s400 + $0x2b8] sm:$0xff]
        %v489 = vld [vmem:[%s400 + $0x2c0] sm:$0xff]
        %v490 = vld [vmem:[%s400 + $0x2c8] sm:$0xff]
        %v491 = vld [vmem:[%s400 + $0x2d0] sm:$0xff]
        %v492 = vld [vmem:[%s400 + $0x2d8] sm:$0xff]
        %v493 = vld [vmem:[%s400 + $0x2e0] sm:$0xff]
        %v494 = vld [vmem:[%s400 + $0x2e8] sm:$0xff]
        %v495 = vld [vmem:[%s400 + $0x2f0] sm:$0xff]
        %v496 = vld [vmem:[%s400 + $0x2f8] sm:$0xff]
        %v497 = vld [vmem:[%s400 + $0x300] sm:$0xff]
        %v498 = vld [vmem:[%s400 + $0x308] sm:$0xff]
        %v499 = vld [vmem:[%s400 + $0x310] sm:$0xff]
        %v500 = vld [vmem:[%s400 + $0x318] sm:$0xff]
        %v501 = vld [vmem:[%s400 + $0x320] sm:$0xff]
        %v502 = vld [vmem:[%s400 + $0x328] sm:$0xff]
        %v503 = vld [vmem:[%s400 + $0x330] sm:$0xff]
        %v504 = vld [vmem:[%s400 + $0x338] sm:$0xff]
        %v505 = vld [vmem:[%s400 + $0x340] sm:$0xff]
        %v506 = vld [vmem:[%s400 + $0x348] sm:$0xff]
        %v507 = vld [vmem:[%s400 + $0x350] sm:$0xff]
        %v508 = vld [vmem:[%s400 + $0x358] sm:$0xff]
        %v509 = vld [vmem:[%s400 + $0x360] sm:$0xff]
        %v510 = vld [vmem:[%s400 + $0x368] sm:$0xff]
        %v511 = vld [vmem:[%s400 + $0x370] sm:$0xff]
        %v512 = vld [vmem:[%s400 + $0x378] sm:$0xff]
        %v513 = vld [vmem:[%s400 + $0x380] sm:$0xff]
        %v514 = vld [vmem:[%s400 + $0x388] sm:$0xff]
        %v515 = vld [vmem:[%s400 + $0x390] sm:$0xff]
        %v516 = vld [vmem:[%s400 + $0x398] sm:$0xff]
        %v517 = vld [vmem:[%s400 + $0x3a0] sm:$0xff]
        %v518 = vld [vmem:[%s400 + $0x3a8] sm:$0xff]
        %v519 = vld [vmem:[%s400 + $0x3b0] sm:$0xff]
        %v520 = vld [vmem:[%s400 + $0x3b8] sm:$0xff]
        %v521 = vld [vmem:[%s400 + $0x3c0] sm:$0xff]
        %v522 = vld [vmem:[%s400 + $0x3c8] sm:$0xff]
        %v523 = vld [vmem:[%s400 + $0x3d0] sm:$0xff]
        %v524 = vld [vmem:[%s400 + $0x3d8] sm:$0xff]
        %v525 = vld [vmem:[%s400 + $0x3e0] sm:$0xff]
        %v526 = vld [vmem:[%s400 + $0x3e8] sm:$0xff]
        %v527 = vld [vmem:[%s400 + $0x3f0] sm:$0xff]
        %v528 = vld [vmem:[%s400 + $0x3f8] sm:$0xff]
        %vm529 = vsmask.f32 7424
        %v531 = vshrl.u32 %v394, 16
        %v533 = vshll.u32 %v394, 16
        %v535 = vrot.slane %v533, 1
        %v536 = vor.u32 %v531, %v535
        %v538 = vshll.u32 %v396, 16
        %v540 = vrot.slane %v538, 1
        %v541 = vsel %vm529, %v536, %v540
        %v543 = vshrl.u32 %v395, 16
        %v545 = vshll.u32 %v395, 16
        %v547 = vrot.slane %v545, 1
        %v548 = vor.u32 %v543, %v547
        %v550 = vshll.u32 %v397, 16
        %v552 = vrot.slane %v550, 1
        %v553 = vsel %vm529, %v548, %v552
        %v554 = vshrl.u32 %v396, 16
        %v556 = vor.u32 %v554, %v540
        %v558 = vshll.u32 %v398, 16
        %v560 = vrot.slane %v558, 1
        %v561 = vsel %vm529, %v556, %v560
        %v562 = vshrl.u32 %v397, 16
        %v564 = vor.u32 %v562, %v552
        %v566 = vshll.u32 %v399, 16
        %v568 = vrot.slane %v566, 1
        %v569 = vsel %vm529, %v564, %v568
        %v570 = vshrl.u32 %v398, 16
        %v572 = vor.u32 %v570, %v560
        %v573 = vshrl.u32 %v399, 16
        %v575 = vor.u32 %v573, %v568
        %v710 = vunpack.c.l.b16 %v401
        %v711 = vunpack.c.h.b16 %v401
        %v712 = vunpack.c.l.b16 %v402
        %v713 = vunpack.c.h.b16 %v402
        %v714 = vunpack.c.l.b16 %v403
        %v715 = vunpack.c.h.b16 %v403
        %v716 = vunpack.c.l.b16 %v404
        %v717 = vunpack.c.h.b16 %v404
        %v718 = vunpack.c.l.b16 %v405
        %v719 = vunpack.c.h.b16 %v405
        %v720 = vunpack.c.l.b16 %v406
        %v721 = vunpack.c.h.b16 %v406
        %v722 = vunpack.c.l.b16 %v407
        %v723 = vunpack.c.h.b16 %v407
        %v724 = vunpack.c.l.b16 %v408
        %v725 = vunpack.c.h.b16 %v408
        %v726 = vunpack.c.l.b16 %v409
        %v727 = vunpack.c.h.b16 %v409
        %v728 = vunpack.c.l.b16 %v410
        %v729 = vunpack.c.h.b16 %v410
        %v730 = vunpack.c.l.b16 %v411
        %v731 = vunpack.c.h.b16 %v411
        %v732 = vunpack.c.l.b16 %v412
        %v733 = vunpack.c.h.b16 %v412
        %v734 = vunpack.c.l.b16 %v413
        %v735 = vunpack.c.h.b16 %v413
        %v736 = vunpack.c.l.b16 %v414
        %v737 = vunpack.c.h.b16 %v414
        %v738 = vunpack.c.l.b16 %v415
        %v739 = vunpack.c.h.b16 %v415
        %v740 = vunpack.c.l.b16 %v416
        %v741 = vunpack.c.h.b16 %v416
        %v742 = vunpack.c.l.b16 %v417
        %v743 = vunpack.c.h.b16 %v417
        %v744 = vunpack.c.l.b16 %v418
        %v745 = vunpack.c.h.b16 %v418
        %v746 = vunpack.c.l.b16 %v419
        %v747 = vunpack.c.h.b16 %v419
        %v748 = vunpack.c.l.b16 %v420
        %v749 = vunpack.c.h.b16 %v420
        %v750 = vunpack.c.l.b16 %v421
        %v751 = vunpack.c.h.b16 %v421
        %v752 = vunpack.c.l.b16 %v422
        %v753 = vunpack.c.h.b16 %v422
        %v754 = vunpack.c.l.b16 %v423
        %v755 = vunpack.c.h.b16 %v423
        %v756 = vunpack.c.l.b16 %v424
        %v757 = vunpack.c.h.b16 %v424
        %v758 = vunpack.c.l.b16 %v425
        %v759 = vunpack.c.h.b16 %v425
        %v760 = vunpack.c.l.b16 %v426
        %v761 = vunpack.c.h.b16 %v426
        %v762 = vunpack.c.l.b16 %v427
        %v763 = vunpack.c.h.b16 %v427
        %v764 = vunpack.c.l.b16 %v428
        %v765 = vunpack.c.h.b16 %v428
        %v766 = vunpack.c.l.b16 %v429
        %v767 = vunpack.c.h.b16 %v429
        %v768 = vunpack.c.l.b16 %v430
        %v769 = vunpack.c.h.b16 %v430
        %v770 = vunpack.c.l.b16 %v431
        %v771 = vunpack.c.h.b16 %v431
        %v772 = vunpack.c.l.b16 %v432
        %v773 = vunpack.c.h.b16 %v432
        %v774 = vunpack.c.l.b16 %v433
        %v775 = vunpack.c.h.b16 %v433
        %v776 = vunpack.c.l.b16 %v434
        %v777 = vunpack.c.h.b16 %v434
        %v778 = vunpack.c.l.b16 %v435
        %v779 = vunpack.c.h.b16 %v435
        %v780 = vunpack.c.l.b16 %v436
        %v781 = vunpack.c.h.b16 %v436
        %v782 = vunpack.c.l.b16 %v437
        %v783 = vunpack.c.h.b16 %v437
        %v784 = vunpack.c.l.b16 %v438
        %v785 = vunpack.c.h.b16 %v438
        %v786 = vunpack.c.l.b16 %v439
        %v787 = vunpack.c.h.b16 %v439
        %v788 = vunpack.c.l.b16 %v440
        %v789 = vunpack.c.h.b16 %v440
        %v790 = vunpack.c.l.b16 %v441
        %v791 = vunpack.c.h.b16 %v441
        %v792 = vunpack.c.l.b16 %v442
        %v793 = vunpack.c.h.b16 %v442
        %v794 = vunpack.c.l.b16 %v443
        %v795 = vunpack.c.h.b16 %v443
        %v796 = vunpack.c.l.b16 %v444
        %v797 = vunpack.c.h.b16 %v444
        %v798 = vunpack.c.l.b16 %v445
        %v799 = vunpack.c.h.b16 %v445
        %v800 = vunpack.c.l.b16 %v446
        %v801 = vunpack.c.h.b16 %v446
        %v802 = vunpack.c.l.b16 %v447
        %v803 = vunpack.c.h.b16 %v447
        %v804 = vunpack.c.l.b16 %v448
        %v805 = vunpack.c.h.b16 %v448
        %v806 = vunpack.c.l.b16 %v449
        %v807 = vunpack.c.h.b16 %v449
        %v808 = vunpack.c.l.b16 %v450
        %v809 = vunpack.c.h.b16 %v450
        %v810 = vunpack.c.l.b16 %v451
        %v811 = vunpack.c.h.b16 %v451
        %v812 = vunpack.c.l.b16 %v452
        %v813 = vunpack.c.h.b16 %v452
        %v814 = vunpack.c.l.b16 %v453
        %v815 = vunpack.c.h.b16 %v453
        %v816 = vunpack.c.l.b16 %v454
        %v817 = vunpack.c.h.b16 %v454
        %v818 = vunpack.c.l.b16 %v455
        %v819 = vunpack.c.h.b16 %v455
        %v820 = vunpack.c.l.b16 %v456
        %v821 = vunpack.c.h.b16 %v456
        %v822 = vunpack.c.l.b16 %v457
        %v823 = vunpack.c.h.b16 %v457
        %v824 = vunpack.c.l.b16 %v458
        %v825 = vunpack.c.h.b16 %v458
        %v826 = vunpack.c.l.b16 %v459
        %v827 = vunpack.c.h.b16 %v459
        %v828 = vunpack.c.l.b16 %v460
        %v829 = vunpack.c.h.b16 %v460
        %v830 = vunpack.c.l.b16 %v461
        %v831 = vunpack.c.h.b16 %v461
        %v832 = vunpack.c.l.b16 %v462
        %v833 = vunpack.c.h.b16 %v462
        %v834 = vunpack.c.l.b16 %v463
        %v835 = vunpack.c.h.b16 %v463
        %v836 = vunpack.c.l.b16 %v464
        %v837 = vunpack.c.h.b16 %v464
        %v838 = vunpack.c.l.b16 %v465
        %v839 = vunpack.c.h.b16 %v465
        %v840 = vunpack.c.l.b16 %v466
        %v841 = vunpack.c.h.b16 %v466
        %v842 = vunpack.c.l.b16 %v467
        %v843 = vunpack.c.h.b16 %v467
        %v844 = vunpack.c.l.b16 %v468
        %v845 = vunpack.c.h.b16 %v468
        %v846 = vunpack.c.l.b16 %v469
        %v847 = vunpack.c.h.b16 %v469
        %v848 = vunpack.c.l.b16 %v470
        %v849 = vunpack.c.h.b16 %v470
        %v850 = vunpack.c.l.b16 %v471
        %v851 = vunpack.c.h.b16 %v471
        %v852 = vunpack.c.l.b16 %v472
        %v853 = vunpack.c.h.b16 %v472
        %v854 = vunpack.c.l.b16 %v473
        %v855 = vunpack.c.h.b16 %v473
        %v856 = vunpack.c.l.b16 %v474
        %v857 = vunpack.c.h.b16 %v474
        %v858 = vunpack.c.l.b16 %v475
        %v859 = vunpack.c.h.b16 %v475
        %v860 = vunpack.c.l.b16 %v476
        %v861 = vunpack.c.h.b16 %v476
        %v862 = vunpack.c.l.b16 %v477
        %v863 = vunpack.c.h.b16 %v477
        %v864 = vunpack.c.l.b16 %v478
        %v865 = vunpack.c.h.b16 %v478
        %v866 = vunpack.c.l.b16 %v479
        %v867 = vunpack.c.h.b16 %v479
        %v868 = vunpack.c.l.b16 %v480
        %v869 = vunpack.c.h.b16 %v480
        %v870 = vunpack.c.l.b16 %v481
        %v871 = vunpack.c.h.b16 %v481
        %v872 = vunpack.c.l.b16 %v482
        %v873 = vunpack.c.h.b16 %v482
        %v874 = vunpack.c.l.b16 %v483
        %v875 = vunpack.c.h.b16 %v483
        %v876 = vunpack.c.l.b16 %v484
        %v877 = vunpack.c.h.b16 %v484
        %v878 = vunpack.c.l.b16 %v485
        %v879 = vunpack.c.h.b16 %v485
        %v880 = vunpack.c.l.b16 %v486
        %v881 = vunpack.c.h.b16 %v486
        %v882 = vunpack.c.l.b16 %v487
        %v883 = vunpack.c.h.b16 %v487
        %v884 = vunpack.c.l.b16 %v488
        %v885 = vunpack.c.h.b16 %v488
        %v886 = vunpack.c.l.b16 %v489
        %v887 = vunpack.c.h.b16 %v489
        %v888 = vunpack.c.l.b16 %v490
        %v889 = vunpack.c.h.b16 %v490
        %v890 = vunpack.c.l.b16 %v491
        %v891 = vunpack.c.h.b16 %v491
        %v892 = vunpack.c.l.b16 %v492
        %v893 = vunpack.c.h.b16 %v492
        %v894 = vunpack.c.l.b16 %v493
        %v895 = vunpack.c.h.b16 %v493
        %v896 = vunpack.c.l.b16 %v494
        %v897 = vunpack.c.h.b16 %v494
        %v898 = vunpack.c.l.b16 %v495
        %v899 = vunpack.c.h.b16 %v495
        %v900 = vunpack.c.l.b16 %v496
        %v901 = vunpack.c.h.b16 %v496
        %v902 = vunpack.c.l.b16 %v497
        %v903 = vunpack.c.h.b16 %v497
        %v904 = vunpack.c.l.b16 %v498
        %v905 = vunpack.c.h.b16 %v498
        %v906 = vunpack.c.l.b16 %v499
        %v907 = vunpack.c.h.b16 %v499
        %v908 = vunpack.c.l.b16 %v500
        %v909 = vunpack.c.h.b16 %v500
        %v910 = vunpack.c.l.b16 %v501
        %v911 = vunpack.c.h.b16 %v501
        %v912 = vunpack.c.l.b16 %v502
        %v913 = vunpack.c.h.b16 %v502
        %v914 = vunpack.c.l.b16 %v503
        %v915 = vunpack.c.h.b16 %v503
        %v916 = vunpack.c.l.b16 %v504
        %v917 = vunpack.c.h.b16 %v504
        %v918 = vunpack.c.l.b16 %v505
        %v919 = vunpack.c.h.b16 %v505
        %v920 = vunpack.c.l.b16 %v506
        %v921 = vunpack.c.h.b16 %v506
        %v922 = vunpack.c.l.b16 %v507
        %v923 = vunpack.c.h.b16 %v507
        %v924 = vunpack.c.l.b16 %v508
        %v925 = vunpack.c.h.b16 %v508
        %v926 = vunpack.c.l.b16 %v509
        %v927 = vunpack.c.h.b16 %v509
        %v928 = vunpack.c.l.b16 %v510
        %v929 = vunpack.c.h.b16 %v510
        %v930 = vunpack.c.l.b16 %v511
        %v931 = vunpack.c.h.b16 %v511
        %v932 = vunpack.c.l.b16 %v512
        %v933 = vunpack.c.h.b16 %v512
        %v934 = vunpack.c.l.b16 %v513
        %v935 = vunpack.c.h.b16 %v513
        %v936 = vunpack.c.l.b16 %v514
        %v937 = vunpack.c.h.b16 %v514
        %v938 = vunpack.c.l.b16 %v515
        %v939 = vunpack.c.h.b16 %v515
        %v940 = vunpack.c.l.b16 %v516
        %v941 = vunpack.c.h.b16 %v516
        %v942 = vunpack.c.l.b16 %v517
        %v943 = vunpack.c.h.b16 %v517
        %v944 = vunpack.c.l.b16 %v518
        %v945 = vunpack.c.h.b16 %v518
        %v946 = vunpack.c.l.b16 %v519
        %v947 = vunpack.c.h.b16 %v519
        %v948 = vunpack.c.l.b16 %v520
        %v949 = vunpack.c.h.b16 %v520
        %v950 = vunpack.c.l.b16 %v521
        %v951 = vunpack.c.h.b16 %v521
        %v952 = vunpack.c.l.b16 %v522
        %v953 = vunpack.c.h.b16 %v522
        %v954 = vunpack.c.l.b16 %v523
        %v955 = vunpack.c.h.b16 %v523
        %v956 = vunpack.c.l.b16 %v524
        %v957 = vunpack.c.h.b16 %v524
        %v958 = vunpack.c.l.b16 %v525
        %v959 = vunpack.c.h.b16 %v525
        %v960 = vunpack.c.l.b16 %v526
        %v961 = vunpack.c.h.b16 %v526
        %v962 = vunpack.c.l.b16 %v527
        %v963 = vunpack.c.h.b16 %v527
        %v964 = vunpack.c.l.b16 %v528
        %v965 = vunpack.c.h.b16 %v528
        %v966 = vpack.c.b16 %v718, %v710
        %v967 = vpack.c.b16 %v719, %v711
        %v968 = vpack.c.b16 %v720, %v712
        %v969 = vpack.c.b16 %v721, %v713
        %v970 = vpack.c.b16 %v722, %v714
        %v971 = vpack.c.b16 %v723, %v715
        %v972 = vpack.c.b16 %v724, %v716
        %v973 = vpack.c.b16 %v725, %v717
        %v974 = vpack.c.b16 %v734, %v726
        %v975 = vpack.c.b16 %v735, %v727
        %v976 = vpack.c.b16 %v736, %v728
        %v977 = vpack.c.b16 %v737, %v729
        %v978 = vpack.c.b16 %v738, %v730
        %v979 = vpack.c.b16 %v739, %v731
        %v980 = vpack.c.b16 %v740, %v732
        %v981 = vpack.c.b16 %v741, %v733
        %v982 = vpack.c.b16 %v750, %v742
        %v983 = vpack.c.b16 %v751, %v743
        %v984 = vpack.c.b16 %v752, %v744
        %v985 = vpack.c.b16 %v753, %v745
        %v986 = vpack.c.b16 %v754, %v746
        %v987 = vpack.c.b16 %v755, %v747
        %v988 = vpack.c.b16 %v756, %v748
        %v989 = vpack.c.b16 %v757, %v749
        %v990 = vpack.c.b16 %v766, %v758
        %v991 = vpack.c.b16 %v767, %v759
        %v992 = vpack.c.b16 %v768, %v760
        %v993 = vpack.c.b16 %v769, %v761
        %v994 = vpack.c.b16 %v770, %v762
        %v995 = vpack.c.b16 %v771, %v763
        %v996 = vpack.c.b16 %v772, %v764
        %v997 = vpack.c.b16 %v773, %v765
        %v998 = vpack.c.b16 %v782, %v774
        %v999 = vpack.c.b16 %v783, %v775
        %v1000 = vpack.c.b16 %v784, %v776
        %v1001 = vpack.c.b16 %v785, %v777
        %v1002 = vpack.c.b16 %v786, %v778
        %v1003 = vpack.c.b16 %v787, %v779
        %v1004 = vpack.c.b16 %v788, %v780
        %v1005 = vpack.c.b16 %v789, %v781
        %v1006 = vpack.c.b16 %v798, %v790
        %v1007 = vpack.c.b16 %v799, %v791
        %v1008 = vpack.c.b16 %v800, %v792
        %v1009 = vpack.c.b16 %v801, %v793
        %v1010 = vpack.c.b16 %v802, %v794
        %v1011 = vpack.c.b16 %v803, %v795
        %v1012 = vpack.c.b16 %v804, %v796
        %v1013 = vpack.c.b16 %v805, %v797
        %v1014 = vpack.c.b16 %v814, %v806
        %v1015 = vpack.c.b16 %v815, %v807
        %v1016 = vpack.c.b16 %v816, %v808
        %v1017 = vpack.c.b16 %v817, %v809
        %v1018 = vpack.c.b16 %v818, %v810
        %v1019 = vpack.c.b16 %v819, %v811
        %v1020 = vpack.c.b16 %v820, %v812
        %v1021 = vpack.c.b16 %v821, %v813
        %v1022 = vpack.c.b16 %v830, %v822
        %v1023 = vpack.c.b16 %v831, %v823
        %v1024 = vpack.c.b16 %v832, %v824
        %v1025 = vpack.c.b16 %v833, %v825
        %v1026 = vpack.c.b16 %v834, %v826
        %v1027 = vpack.c.b16 %v835, %v827
        %v1028 = vpack.c.b16 %v836, %v828
        %v1029 = vpack.c.b16 %v837, %v829
        %v1030 = vpack.c.b16 %v846, %v838
        %v1031 = vpack.c.b16 %v847, %v839
        %v1032 = vpack.c.b16 %v848, %v840
        %v1033 = vpack.c.b16 %v849, %v841
        %v1034 = vpack.c.b16 %v850, %v842
        %v1035 = vpack.c.b16 %v851, %v843
        %v1036 = vpack.c.b16 %v852, %v844
        %v1037 = vpack.c.b16 %v853, %v845
        %v1038 = vpack.c.b16 %v862, %v854
        %v1039 = vpack.c.b16 %v863, %v855
        %v1040 = vpack.c.b16 %v864, %v856
        %v1041 = vpack.c.b16 %v865, %v857
        %v1042 = vpack.c.b16 %v866, %v858
        %v1043 = vpack.c.b16 %v867, %v859
        %v1044 = vpack.c.b16 %v868, %v860
        %v1045 = vpack.c.b16 %v869, %v861
        %v1046 = vpack.c.b16 %v878, %v870
        %v1047 = vpack.c.b16 %v879, %v871
        %v1048 = vpack.c.b16 %v880, %v872
        %v1049 = vpack.c.b16 %v881, %v873
        %v1050 = vpack.c.b16 %v882, %v874
        %v1051 = vpack.c.b16 %v883, %v875
        %v1052 = vpack.c.b16 %v884, %v876
        %v1053 = vpack.c.b16 %v885, %v877
        %v1054 = vpack.c.b16 %v894, %v886
        %v1055 = vpack.c.b16 %v895, %v887
        %v1056 = vpack.c.b16 %v896, %v888
        %v1057 = vpack.c.b16 %v897, %v889
        %v1058 = vpack.c.b16 %v898, %v890
        %v1059 = vpack.c.b16 %v899, %v891
        %v1060 = vpack.c.b16 %v900, %v892
        %v1061 = vpack.c.b16 %v901, %v893
        %v1062 = vpack.c.b16 %v910, %v902
        %v1063 = vpack.c.b16 %v911, %v903
        %v1064 = vpack.c.b16 %v912, %v904
        %v1065 = vpack.c.b16 %v913, %v905
        %v1066 = vpack.c.b16 %v914, %v906
        %v1067 = vpack.c.b16 %v915, %v907
        %v1068 = vpack.c.b16 %v916, %v908
        %v1069 = vpack.c.b16 %v917, %v909
        %v1070 = vpack.c.b16 %v926, %v918
        %v1071 = vpack.c.b16 %v927, %v919
        %v1072 = vpack.c.b16 %v928, %v920
        %v1073 = vpack.c.b16 %v929, %v921
        %v1074 = vpack.c.b16 %v930, %v922
        %v1075 = vpack.c.b16 %v931, %v923
        %v1076 = vpack.c.b16 %v932, %v924
        %v1077 = vpack.c.b16 %v933, %v925
        %v1078 = vpack.c.b16 %v942, %v934
        %v1079 = vpack.c.b16 %v943, %v935
        %v1080 = vpack.c.b16 %v944, %v936
        %v1081 = vpack.c.b16 %v945, %v937
        %v1082 = vpack.c.b16 %v946, %v938
        %v1083 = vpack.c.b16 %v947, %v939
        %v1084 = vpack.c.b16 %v948, %v940
        %v1085 = vpack.c.b16 %v949, %v941
        %v1086 = vpack.c.b16 %v958, %v950
        %v1087 = vpack.c.b16 %v959, %v951
        %v1088 = vpack.c.b16 %v960, %v952
        %v1089 = vpack.c.b16 %v961, %v953
        %v1090 = vpack.c.b16 %v962, %v954
        %v1091 = vpack.c.b16 %v963, %v955
        %v1092 = vpack.c.b16 %v964, %v956
        %v1093 = vpack.c.b16 %v965, %v957
        %1222 = vmatprep.subr.bf16.mxu0 %v967
        %1223 = vmatpush1.bf16.msra.mxu0 %v966
        %1224 = vmatprep.subr.bf16.mxu0 %v975
        %1225 = vmatpush1.bf16.msra.mxu0 %v974
        %1226 = vmatprep.subr.bf16.mxu0 %v983
        %1227 = vmatpush1.bf16.msra.mxu0 %v982
        %1228 = vmatprep.subr.bf16.mxu0 %v991
        %1229 = vmatpush1.bf16.msra.mxu0 %v990
        %1230 = vmatprep.subr.bf16.mxu0 %v999
        %1231 = vmatpush1.bf16.msra.mxu0 %v998
        %1232 = vmatprep.subr.bf16.mxu0 %v1007
        %1233 = vmatpush1.bf16.msra.mxu0 %v1006
        %1234 = vmatprep.subr.bf16.mxu0 %v1015
        %1235 = vmatpush1.bf16.msra.mxu0 %v1014
        %1236 = vmatprep.subr.bf16.mxu0 %v1023
        %1237 = vmatpush1.bf16.msra.mxu0 %v1022
        %1238 = vmatprep.subr.bf16.mxu0 %v1031
        %1239 = vmatpush1.bf16.msra.mxu0 %v1030
        %1240 = vmatprep.subr.bf16.mxu0 %v1039
        %1241 = vmatpush1.bf16.msra.mxu0 %v1038
        %1242 = vmatprep.subr.bf16.mxu0 %v1047
        %1243 = vmatpush1.bf16.msra.mxu0 %v1046
        %1244 = vmatprep.subr.bf16.mxu0 %v1055
        %1245 = vmatpush1.bf16.msra.mxu0 %v1054
        %1246 = vmatprep.subr.bf16.mxu0 %v1063
        %1247 = vmatpush1.bf16.msra.mxu0 %v1062
        %1248 = vmatprep.subr.bf16.mxu0 %v1071
        %1249 = vmatpush1.bf16.msra.mxu0 %v1070
        %1250 = vmatprep.subr.bf16.mxu0 %v1079
        %1251 = vmatpush1.bf16.msra.mxu0 %v1078
        %1252 = vmatprep.subr.bf16.mxu0 %v1087
        %1253 = vmatpush1.bf16.msra.mxu0 %v1086
        %1254 = vmatprep.mubr.bf16.mxu0 %v553
        %1255 = vmatmul.mubr.bf16.gmra.mrb[0].mxu0 %v541
        %v1256 = vpop.f32.mrb[0].mxu0
        %v1257 = vadd.f32 0.0, %v1256
        %v1258 = vpop.f32.mrb[0].mxu0
        %v1259 = vadd.f32 0.0, %v1258
        %v1260 = vpop.f32.mrb[0].mxu0
        %v1261 = vadd.f32 0.0, %v1260
        %v1262 = vpop.f32.mrb[0].mxu0
        %v1263 = vadd.f32 0.0, %v1262
        %1264 = vmatprep.mubr.bf16.mxu0 %v569
        %1265 = vmatmul.mubr.bf16.gmra.mrb[0].mxu0 %v561
        %v1266 = vpop.f32.mrb[0].mxu0
        %v1267 = vadd.f32 0.0, %v1266
        %v1268 = vpop.f32.mrb[0].mxu0
        %v1269 = vadd.f32 0.0, %v1268
        %v1270 = vpop.f32.mrb[0].mxu0
        %v1271 = vadd.f32 0.0, %v1270
        %v1272 = vpop.f32.mrb[0].mxu0
        %v1273 = vadd.f32 0.0, %v1272
        %1274 = vmatprep.mubr.bf16.mxu0 %v575
        %1275 = vmatmul.mubr.bf16.gmra.mrb[0].mxu0 %v572
        %v1276 = vpop.f32.mrb[0].mxu0
        %v1277 = vadd.f32 0.0, %v1276
        %v1278 = vpop.f32.mrb[0].mxu0
        %v1279 = vadd.f32 0.0, %v1278
        %v1280 = vpop.f32.mrb[0].mxu0
        %v1281 = vpop.f32.mrb[0].mxu0
        %1282 = vdwg.mxu0
        %1283 = vmatprep.subr.bf16.mxu0 %v969
        %1284 = vmatpush1.bf16.msra.mxu0 %v968
        %1285 = vmatprep.subr.bf16.mxu0 %v977
        %1286 = vmatpush1.bf16.msra.mxu0 %v976
        %1287 = vmatprep.subr.bf16.mxu0 %v985
        %1288 = vmatpush1.bf16.msra.mxu0 %v984
        %1289 = vmatprep.subr.bf16.mxu0 %v993
        %1290 = vmatpush1.bf16.msra.mxu0 %v992
        %1291 = vmatprep.subr.bf16.mxu0 %v1001
        %1292 = vmatpush1.bf16.msra.mxu0 %v1000
        %1293 = vmatprep.subr.bf16.mxu0 %v1009
        %1294 = vmatpush1.bf16.msra.mxu0 %v1008
        %1295 = vmatprep.subr.bf16.mxu0 %v1017
        %1296 = vmatpush1.bf16.msra.mxu0 %v1016
        %1297 = vmatprep.subr.bf16.mxu0 %v1025
        %1298 = vmatpush1.bf16.msra.mxu0 %v1024
        %1299 = vmatprep.subr.bf16.mxu0 %v1033
        %1300 = vmatpush1.bf16.msra.mxu0 %v1032
        %1301 = vmatprep.subr.bf16.mxu0 %v1041
        %1302 = vmatpush1.bf16.msra.mxu0 %v1040
        %1303 = vmatprep.subr.bf16.mxu0 %v1049
        %1304 = vmatpush1.bf16.msra.mxu0 %v1048
        %1305 = vmatprep.subr.bf16.mxu0 %v1057
        %1306 = vmatpush1.bf16.msra.mxu0 %v1056
        %1307 = vmatprep.subr.bf16.mxu0 %v1065
        %1308 = vmatpush1.bf16.msra.mxu0 %v1064
        %1309 = vmatprep.subr.bf16.mxu0 %v1073
        %1310 = vmatpush1.bf16.msra.mxu0 %v1072
        %1311 = vmatprep.subr.bf16.mxu0 %v1081
        %1312 = vmatpush1.bf16.msra.mxu0 %v1080
        %1313 = vmatprep.subr.bf16.mxu0 %v1089
        %1314 = vmatpush1.bf16.msra.mxu0 %v1088
        %1315 = vmatprep.mubr.bf16.mxu0 %v553
        %1316 = vmatmul.mubr.bf16.gmra.mrb[0].mxu0 %v541
        %v1317 = vpop.f32.mrb[0].mxu0
        %v1318 = vadd.f32 0.0, %v1317
        %v1319 = vpop.f32.mrb[0].mxu0
        %v1320 = vadd.f32 0.0, %v1319
        %v1321 = vpop.f32.mrb[0].mxu0
        %v1322 = vadd.f32 0.0, %v1321
        %v1323 = vpop.f32.mrb[0].mxu0
        %v1324 = vadd.f32 0.0, %v1323
        %1325 = vmatprep.mubr.bf16.mxu0 %v569
        %1326 = vmatmul.mubr.bf16.gmra.mrb[0].mxu0 %v561
        %v1327 = vpop.f32.mrb[0].mxu0
        %v1328 = vadd.f32 0.0, %v1327
        %v1329 = vpop.f32.mrb[0].mxu0
        %v1330 = vadd.f32 0.0, %v1329
        %v1331 = vpop.f32.mrb[0].mxu0
        %v1332 = vadd.f32 0.0, %v1331
        %v1333 = vpop.f32.mrb[0].mxu0
        %v1334 = vadd.f32 0.0, %v1333
        %1335 = vmatprep.mubr.bf16.mxu0 %v575
        %1336 = vmatmul.mubr.bf16.gmra.mrb[0].mxu0 %v572
        %v1337 = vpop.f32.mrb[0].mxu0
        %v1338 = vadd.f32 0.0, %v1337
        %v1339 = vpop.f32.mrb[0].mxu0
        %v1340 = vadd.f32 0.0, %v1339
        %v1341 = vpop.f32.mrb[0].mxu0
        %v1342 = vpop.f32.mrb[0].mxu0
        %1343 = vdwg.mxu0
        %1344 = vmatprep.subr.bf16.mxu0 %v971
        %1345 = vmatpush1.bf16.msra.mxu0 %v970
        %1346 = vmatprep.subr.bf16.mxu0 %v979
        %1347 = vmatpush1.bf16.msra.mxu0 %v978
        %1348 = vmatprep.subr.bf16.mxu0 %v987
        %1349 = vmatpush1.bf16.msra.mxu0 %v986
        %1350 = vmatprep.subr.bf16.mxu0 %v995
        %1351 = vmatpush1.bf16.msra.mxu0 %v994
        %1352 = vmatprep.subr.bf16.mxu0 %v1003
        %1353 = vmatpush1.bf16.msra.mxu0 %v1002
        %1354 = vmatprep.subr.bf16.mxu0 %v1011
        %1355 = vmatpush1.bf16.msra.mxu0 %v1010
        %1356 = vmatprep.subr.bf16.mxu0 %v1019
        %1357 = vmatpush1.bf16.msra.mxu0 %v1018
        %1358 = vmatprep.subr.bf16.mxu0 %v1027
        %1359 = vmatpush1.bf16.msra.mxu0 %v1026
        %1360 = vmatprep.subr.bf16.mxu0 %v1035
        %1361 = vmatpush1.bf16.msra.mxu0 %v1034
        %1362 = vmatprep.subr.bf16.mxu0 %v1043
        %1363 = vmatpush1.bf16.msra.mxu0 %v1042
        %1364 = vmatprep.subr.bf16.mxu0 %v1051
        %1365 = vmatpush1.bf16.msra.mxu0 %v1050
        %1366 = vmatprep.subr.bf16.mxu0 %v1059
        %1367 = vmatpush1.bf16.msra.mxu0 %v1058
        %1368 = vmatprep.subr.bf16.mxu0 %v1067
        %1369 = vmatpush1.bf16.msra.mxu0 %v1066
        %1370 = vmatprep.subr.bf16.mxu0 %v1075
        %1371 = vmatpush1.bf16.msra.mxu0 %v1074
        %1372 = vmatprep.subr.bf16.mxu0 %v1083
        %1373 = vmatpush1.bf16.msra.mxu0 %v1082
        %1374 = vmatprep.subr.bf16.mxu0 %v1091
        %1375 = vmatpush1.bf16.msra.mxu0 %v1090
        %1376 = vmatprep.mubr.bf16.mxu0 %v553
        %1377 = vmatmul.mubr.bf16.gmra.mrb[0].mxu0 %v541
        %v1378 = vpop.f32.mrb[0].mxu0
        %v1379 = vadd.f32 0.0, %v1378
        %v1380 = vpop.f32.mrb[0].mxu0
        %v1381 = vadd.f32 0.0, %v1380
        %v1382 = vpop.f32.mrb[0].mxu0
        %v1383 = vadd.f32 0.0, %v1382
        %v1384 = vpop.f32.mrb[0].mxu0
        %v1385 = vadd.f32 0.0, %v1384
        %1386 = vmatprep.mubr.bf16.mxu0 %v569
        %1387 = vmatmul.mubr.bf16.gmra.mrb[0].mxu0 %v561
        %v1388 = vpop.f32.mrb[0].mxu0
        %v1389 = vadd.f32 0.0, %v1388
        %v1390 = vpop.f32.mrb[0].mxu0
        %v1391 = vadd.f32 0.0, %v1390
        %v1392 = vpop.f32.mrb[0].mxu0
        %v1393 = vadd.f32 0.0, %v1392
        %v1394 = vpop.f32.mrb[0].mxu0
        %v1395 = vadd.f32 0.0, %v1394
        %1396 = vmatprep.mubr.bf16.mxu0 %v575
        %1397 = vmatmul.mubr.bf16.gmra.mrb[0].mxu0 %v572
        %v1398 = vpop.f32.mrb[0].mxu0
        %v1399 = vadd.f32 0.0, %v1398
        %v1400 = vpop.f32.mrb[0].mxu0
        %v1401 = vadd.f32 0.0, %v1400
        %v1402 = vpop.f32.mrb[0].mxu0
        %v1403 = vpop.f32.mrb[0].mxu0
        %1404 = vdwg.mxu0
        %1405 = vmatprep.subr.bf16.mxu0 %v973
        %1406 = vmatpush1.bf16.msra.mxu0 %v972
        %1407 = vmatprep.subr.bf16.mxu0 %v981
        %1408 = vmatpush1.bf16.msra.mxu0 %v980
        %1409 = vmatprep.subr.bf16.mxu0 %v989
        %1410 = vmatpush1.bf16.msra.mxu0 %v988
        %1411 = vmatprep.subr.bf16.mxu0 %v997
        %1412 = vmatpush1.bf16.msra.mxu0 %v996
        %1413 = vmatprep.subr.bf16.mxu0 %v1005
        %1414 = vmatpush1.bf16.msra.mxu0 %v1004
        %1415 = vmatprep.subr.bf16.mxu0 %v1013
        %1416 = vmatpush1.bf16.msra.mxu0 %v1012
        %1417 = vmatprep.subr.bf16.mxu0 %v1021
        %1418 = vmatpush1.bf16.msra.mxu0 %v1020
        %1419 = vmatprep.subr.bf16.mxu0 %v1029
        %1420 = vmatpush1.bf16.msra.mxu0 %v1028
        %1421 = vmatprep.subr.bf16.mxu0 %v1037
        %1422 = vmatpush1.bf16.msra.mxu0 %v1036
        %1423 = vmatprep.subr.bf16.mxu0 %v1045
        %1424 = vmatpush1.bf16.msra.mxu0 %v1044
        %1425 = vmatprep.subr.bf16.mxu0 %v1053
        %1426 = vmatpush1.bf16.msra.mxu0 %v1052
        %1427 = vmatprep.subr.bf16.mxu0 %v1061
        %1428 = vmatpush1.bf16.msra.mxu0 %v1060
        %1429 = vmatprep.subr.bf16.mxu0 %v1069
        %1430 = vmatpush1.bf16.msra.mxu0 %v1068
        %1431 = vmatprep.subr.bf16.mxu0 %v1077
        %1432 = vmatpush1.bf16.msra.mxu0 %v1076
        %1433 = vmatprep.subr.bf16.mxu0 %v1085
        %1434 = vmatpush1.bf16.msra.mxu0 %v1084
        %1435 = vmatprep.subr.bf16.mxu0 %v1093
        %1436 = vmatpush1.bf16.msra.mxu0 %v1092
        %1437 = vmatprep.mubr.bf16.mxu0 %v553
        %1438 = vmatmul.mubr.bf16.gmra.mrb[0].mxu0 %v541
        %v1439 = vpop.f32.mrb[0].mxu0
        %v1440 = vadd.f32 0.0, %v1439
        %v1441 = vpop.f32.mrb[0].mxu0
        %v1442 = vadd.f32 0.0, %v1441
        %v1443 = vpop.f32.mrb[0].mxu0
        %v1444 = vadd.f32 0.0, %v1443
        %v1445 = vpop.f32.mrb[0].mxu0
        %v1446 = vadd.f32 0.0, %v1445
        %1447 = vmatprep.mubr.bf16.mxu0 %v569
        %1448 = vmatmul.mubr.bf16.gmra.mrb[0].mxu0 %v561
        %v1449 = vpop.f32.mrb[0].mxu0
        %v1450 = vadd.f32 0.0, %v1449
        %v1451 = vpop.f32.mrb[0].mxu0
        %v1452 = vadd.f32 0.0, %v1451
        %v1453 = vpop.f32.mrb[0].mxu0
        %v1454 = vadd.f32 0.0, %v1453
        %v1455 = vpop.f32.mrb[0].mxu0
        %v1456 = vadd.f32 0.0, %v1455
        %1457 = vmatprep.mubr.bf16.mxu0 %v575
        %1458 = vmatmul.mubr.bf16.gmra.mrb[0].mxu0 %v572
        %v1459 = vpop.f32.mrb[0].mxu0
        %v1460 = vadd.f32 0.0, %v1459
        %v1461 = vpop.f32.mrb[0].mxu0
        %v1462 = vadd.f32 0.0, %v1461
        %v1463 = vpop.f32.mrb[0].mxu0
        %v1464 = vpop.f32.mrb[0].mxu0
        %1465 = vdwg.mxu0
        %v1594 = vunpack.c.l.b16 %v254
        %v1595 = vunpack.c.h.b16 %v254
        %v1596 = vunpack.c.l.b16 %v255
        %v1597 = vunpack.c.h.b16 %v255
        %v1598 = vunpack.c.l.b16 %v256
        %v1599 = vunpack.c.h.b16 %v256
        %v1600 = vunpack.c.l.b16 %v257
        %v1601 = vunpack.c.h.b16 %v257
        %v1602 = vunpack.c.l.b16 %v258
        %v1603 = vunpack.c.h.b16 %v258
        %v1604 = vunpack.c.l.b16 %v259
        %v1605 = vunpack.c.h.b16 %v259
        %v1606 = vunpack.c.l.b16 %v260
        %v1607 = vunpack.c.h.b16 %v260
        %v1608 = vunpack.c.l.b16 %v261
        %v1609 = vunpack.c.h.b16 %v261
        %v1610 = vunpack.c.l.b16 %v262
        %v1611 = vunpack.c.h.b16 %v262
        %v1612 = vunpack.c.l.b16 %v263
        %v1613 = vunpack.c.h.b16 %v263
        %v1614 = vunpack.c.l.b16 %v264
        %v1615 = vunpack.c.h.b16 %v264
        %v1616 = vunpack.c.l.b16 %v265
        %v1617 = vunpack.c.h.b16 %v265
        %v1618 = vunpack.c.l.b16 %v266
        %v1619 = vunpack.c.h.b16 %v266
        %v1620 = vunpack.c.l.b16 %v267
        %v1621 = vunpack.c.h.b16 %v267
        %v1622 = vunpack.c.l.b16 %v268
        %v1623 = vunpack.c.h.b16 %v268
        %v1624 = vunpack.c.l.b16 %v269
        %v1625 = vunpack.c.h.b16 %v269
        %v1626 = vunpack.c.l.b16 %v270
        %v1627 = vunpack.c.h.b16 %v270
        %v1628 = vunpack.c.l.b16 %v271
        %v1629 = vunpack.c.h.b16 %v271
        %v1630 = vunpack.c.l.b16 %v272
        %v1631 = vunpack.c.h.b16 %v272
        %v1632 = vunpack.c.l.b16 %v273
        %v1633 = vunpack.c.h.b16 %v273
        %v1634 = vunpack.c.l.b16 %v274
        %v1635 = vunpack.c.h.b16 %v274
        %v1636 = vunpack.c.l.b16 %v275
        %v1637 = vunpack.c.h.b16 %v275
        %v1638 = vunpack.c.l.b16 %v276
        %v1639 = vunpack.c.h.b16 %v276
        %v1640 = vunpack.c.l.b16 %v277
        %v1641 = vunpack.c.h.b16 %v277
        %v1642 = vunpack.c.l.b16 %v278
        %v1643 = vunpack.c.h.b16 %v278
        %v1644 = vunpack.c.l.b16 %v279
        %v1645 = vunpack.c.h.b16 %v279
        %v1646 = vunpack.c.l.b16 %v280
        %v1647 = vunpack.c.h.b16 %v280
        %v1648 = vunpack.c.l.b16 %v281
        %v1649 = vunpack.c.h.b16 %v281
        %v1650 = vunpack.c.l.b16 %v282
        %v1651 = vunpack.c.h.b16 %v282
        %v1652 = vunpack.c.l.b16 %v283
        %v1653 = vunpack.c.h.b16 %v283
        %v1654 = vunpack.c.l.b16 %v284
        %v1655 = vunpack.c.h.b16 %v284
        %v1656 = vunpack.c.l.b16 %v285
        %v1657 = vunpack.c.h.b16 %v285
        %v1658 = vunpack.c.l.b16 %v286
        %v1659 = vunpack.c.h.b16 %v286
        %v1660 = vunpack.c.l.b16 %v287
        %v1661 = vunpack.c.h.b16 %v287
        %v1662 = vunpack.c.l.b16 %v288
        %v1663 = vunpack.c.h.b16 %v288
        %v1664 = vunpack.c.l.b16 %v289
        %v1665 = vunpack.c.h.b16 %v289
        %v1666 = vunpack.c.l.b16 %v290
        %v1667 = vunpack.c.h.b16 %v290
        %v1668 = vunpack.c.l.b16 %v291
        %v1669 = vunpack.c.h.b16 %v291
        %v1670 = vunpack.c.l.b16 %v292
        %v1671 = vunpack.c.h.b16 %v292
        %v1672 = vunpack.c.l.b16 %v293
        %v1673 = vunpack.c.h.b16 %v293
        %v1674 = vunpack.c.l.b16 %v294
        %v1675 = vunpack.c.h.b16 %v294
        %v1676 = vunpack.c.l.b16 %v295
        %v1677 = vunpack.c.h.b16 %v295
        %v1678 = vunpack.c.l.b16 %v296
        %v1679 = vunpack.c.h.b16 %v296
        %v1680 = vunpack.c.l.b16 %v297
        %v1681 = vunpack.c.h.b16 %v297
        %v1682 = vunpack.c.l.b16 %v298
        %v1683 = vunpack.c.h.b16 %v298
        %v1684 = vunpack.c.l.b16 %v299
        %v1685 = vunpack.c.h.b16 %v299
        %v1686 = vunpack.c.l.b16 %v300
        %v1687 = vunpack.c.h.b16 %v300
        %v1688 = vunpack.c.l.b16 %v301
        %v1689 = vunpack.c.h.b16 %v301
        %v1690 = vunpack.c.l.b16 %v302
        %v1691 = vunpack.c.h.b16 %v302
        %v1692 = vunpack.c.l.b16 %v303
        %v1693 = vunpack.c.h.b16 %v303
        %v1694 = vunpack.c.l.b16 %v304
        %v1695 = vunpack.c.h.b16 %v304
        %v1696 = vunpack.c.l.b16 %v305
        %v1697 = vunpack.c.h.b16 %v305
        %v1698 = vunpack.c.l.b16 %v306
        %v1699 = vunpack.c.h.b16 %v306
        %v1700 = vunpack.c.l.b16 %v307
        %v1701 = vunpack.c.h.b16 %v307
        %v1702 = vunpack.c.l.b16 %v308
        %v1703 = vunpack.c.h.b16 %v308
        %v1704 = vunpack.c.l.b16 %v309
        %v1705 = vunpack.c.h.b16 %v309
        %v1706 = vunpack.c.l.b16 %v310
        %v1707 = vunpack.c.h.b16 %v310
        %v1708 = vunpack.c.l.b16 %v311
        %v1709 = vunpack.c.h.b16 %v311
        %v1710 = vunpack.c.l.b16 %v312
        %v1711 = vunpack.c.h.b16 %v312
        %v1712 = vunpack.c.l.b16 %v313
        %v1713 = vunpack.c.h.b16 %v313
        %v1714 = vunpack.c.l.b16 %v314
        %v1715 = vunpack.c.h.b16 %v314
        %v1716 = vunpack.c.l.b16 %v315
        %v1717 = vunpack.c.h.b16 %v315
        %v1718 = vunpack.c.l.b16 %v316
        %v1719 = vunpack.c.h.b16 %v316
        %v1720 = vunpack.c.l.b16 %v317
        %v1721 = vunpack.c.h.b16 %v317
        %v1722 = vunpack.c.l.b16 %v318
        %v1723 = vunpack.c.h.b16 %v318
        %v1724 = vunpack.c.l.b16 %v319
        %v1725 = vunpack.c.h.b16 %v319
        %v1726 = vunpack.c.l.b16 %v320
        %v1727 = vunpack.c.h.b16 %v320
        %v1728 = vunpack.c.l.b16 %v321
        %v1729 = vunpack.c.h.b16 %v321
        %v1730 = vunpack.c.l.b16 %v322
        %v1731 = vunpack.c.h.b16 %v322
        %v1732 = vunpack.c.l.b16 %v323
        %v1733 = vunpack.c.h.b16 %v323
        %v1734 = vunpack.c.l.b16 %v324
        %v1735 = vunpack.c.h.b16 %v324
        %v1736 = vunpack.c.l.b16 %v325
        %v1737 = vunpack.c.h.b16 %v325
        %v1738 = vunpack.c.l.b16 %v326
        %v1739 = vunpack.c.h.b16 %v326
        %v1740 = vunpack.c.l.b16 %v327
        %v1741 = vunpack.c.h.b16 %v327
        %v1742 = vunpack.c.l.b16 %v328
        %v1743 = vunpack.c.h.b16 %v328
        %v1744 = vunpack.c.l.b16 %v329
        %v1745 = vunpack.c.h.b16 %v329
        %v1746 = vunpack.c.l.b16 %v330
        %v1747 = vunpack.c.h.b16 %v330
        %v1748 = vunpack.c.l.b16 %v331
        %v1749 = vunpack.c.h.b16 %v331
        %v1750 = vunpack.c.l.b16 %v332
        %v1751 = vunpack.c.h.b16 %v332
        %v1752 = vunpack.c.l.b16 %v333
        %v1753 = vunpack.c.h.b16 %v333
        %v1754 = vunpack.c.l.b16 %v334
        %v1755 = vunpack.c.h.b16 %v334
        %v1756 = vunpack.c.l.b16 %v335
        %v1757 = vunpack.c.h.b16 %v335
        %v1758 = vunpack.c.l.b16 %v336
        %v1759 = vunpack.c.h.b16 %v336
        %v1760 = vunpack.c.l.b16 %v337
        %v1761 = vunpack.c.h.b16 %v337
        %v1762 = vunpack.c.l.b16 %v338
        %v1763 = vunpack.c.h.b16 %v338
        %v1764 = vunpack.c.l.b16 %v339
        %v1765 = vunpack.c.h.b16 %v339
        %v1766 = vunpack.c.l.b16 %v340
        %v1767 = vunpack.c.h.b16 %v340
        %v1768 = vunpack.c.l.b16 %v341
        %v1769 = vunpack.c.h.b16 %v341
        %v1770 = vunpack.c.l.b16 %v342
        %v1771 = vunpack.c.h.b16 %v342
        %v1772 = vunpack.c.l.b16 %v343
        %v1773 = vunpack.c.h.b16 %v343
        %v1774 = vunpack.c.l.b16 %v344
        %v1775 = vunpack.c.h.b16 %v344
        %v1776 = vunpack.c.l.b16 %v345
        %v1777 = vunpack.c.h.b16 %v345
        %v1778 = vunpack.c.l.b16 %v346
        %v1779 = vunpack.c.h.b16 %v346
        %v1780 = vunpack.c.l.b16 %v347
        %v1781 = vunpack.c.h.b16 %v347
        %v1782 = vunpack.c.l.b16 %v348
        %v1783 = vunpack.c.h.b16 %v348
        %v1784 = vunpack.c.l.b16 %v349
        %v1785 = vunpack.c.h.b16 %v349
        %v1786 = vunpack.c.l.b16 %v350
        %v1787 = vunpack.c.h.b16 %v350
        %v1788 = vunpack.c.l.b16 %v351
        %v1789 = vunpack.c.h.b16 %v351
        %v1790 = vunpack.c.l.b16 %v352
        %v1791 = vunpack.c.h.b16 %v352
        %v1792 = vunpack.c.l.b16 %v353
        %v1793 = vunpack.c.h.b16 %v353
        %v1794 = vunpack.c.l.b16 %v354
        %v1795 = vunpack.c.h.b16 %v354
        %v1796 = vunpack.c.l.b16 %v355
        %v1797 = vunpack.c.h.b16 %v355
        %v1798 = vunpack.c.l.b16 %v356
        %v1799 = vunpack.c.h.b16 %v356
        %v1800 = vunpack.c.l.b16 %v357
        %v1801 = vunpack.c.h.b16 %v357
        %v1802 = vunpack.c.l.b16 %v358
        %v1803 = vunpack.c.h.b16 %v358
        %v1804 = vunpack.c.l.b16 %v359
        %v1805 = vunpack.c.h.b16 %v359
        %v1806 = vunpack.c.l.b16 %v360
        %v1807 = vunpack.c.h.b16 %v360
        %v1808 = vunpack.c.l.b16 %v361
        %v1809 = vunpack.c.h.b16 %v361
        %v1810 = vunpack.c.l.b16 %v362
        %v1811 = vunpack.c.h.b16 %v362
        %v1812 = vunpack.c.l.b16 %v363
        %v1813 = vunpack.c.h.b16 %v363
        %v1814 = vunpack.c.l.b16 %v364
        %v1815 = vunpack.c.h.b16 %v364
        %v1816 = vunpack.c.l.b16 %v365
        %v1817 = vunpack.c.h.b16 %v365
        %v1818 = vunpack.c.l.b16 %v366
        %v1819 = vunpack.c.h.b16 %v366
        %v1820 = vunpack.c.l.b16 %v367
        %v1821 = vunpack.c.h.b16 %v367
        %v1822 = vunpack.c.l.b16 %v368
        %v1823 = vunpack.c.h.b16 %v368
        %v1824 = vunpack.c.l.b16 %v369
        %v1825 = vunpack.c.h.b16 %v369
        %v1826 = vunpack.c.l.b16 %v370
        %v1827 = vunpack.c.h.b16 %v370
        %v1828 = vunpack.c.l.b16 %v371
        %v1829 = vunpack.c.h.b16 %v371
        %v1830 = vunpack.c.l.b16 %v372
        %v1831 = vunpack.c.h.b16 %v372
        %v1832 = vunpack.c.l.b16 %v373
        %v1833 = vunpack.c.h.b16 %v373
        %v1834 = vunpack.c.l.b16 %v374
        %v1835 = vunpack.c.h.b16 %v374
        %v1836 = vunpack.c.l.b16 %v375
        %v1837 = vunpack.c.h.b16 %v375
        %v1838 = vunpack.c.l.b16 %v376
        %v1839 = vunpack.c.h.b16 %v376
        %v1840 = vunpack.c.l.b16 %v377
        %v1841 = vunpack.c.h.b16 %v377
        %v1842 = vunpack.c.l.b16 %v378
        %v1843 = vunpack.c.h.b16 %v378
        %v1844 = vunpack.c.l.b16 %v379
        %v1845 = vunpack.c.h.b16 %v379
        %v1846 = vunpack.c.l.b16 %v380
        %v1847 = vunpack.c.h.b16 %v380
        %v1848 = vunpack.c.l.b16 %v381
        %v1849 = vunpack.c.h.b16 %v381
        %v1850 = vpack.c.b16 %v1602, %v1594
        %v1851 = vpack.c.b16 %v1603, %v1595
        %v1852 = vpack.c.b16 %v1604, %v1596
        %v1853 = vpack.c.b16 %v1605, %v1597
        %v1854 = vpack.c.b16 %v1606, %v1598
        %v1855 = vpack.c.b16 %v1607, %v1599
        %v1856 = vpack.c.b16 %v1608, %v1600
        %v1857 = vpack.c.b16 %v1609, %v1601
        %v1858 = vpack.c.b16 %v1618, %v1610
        %v1859 = vpack.c.b16 %v1619, %v1611
        %v1860 = vpack.c.b16 %v1620, %v1612
        %v1861 = vpack.c.b16 %v1621, %v1613
        %v1862 = vpack.c.b16 %v1622, %v1614
        %v1863 = vpack.c.b16 %v1623, %v1615
        %v1864 = vpack.c.b16 %v1624, %v1616
        %v1865 = vpack.c.b16 %v1625, %v1617
        %v1866 = vpack.c.b16 %v1634, %v1626
        %v1867 = vpack.c.b16 %v1635, %v1627
        %v1868 = vpack.c.b16 %v1636, %v1628
        %v1869 = vpack.c.b16 %v1637, %v1629
        %v1870 = vpack.c.b16 %v1638, %v1630
        %v1871 = vpack.c.b16 %v1639, %v1631
        %v1872 = vpack.c.b16 %v1640, %v1632
        %v1873 = vpack.c.b16 %v1641, %v1633
        %v1874 = vpack.c.b16 %v1650, %v1642
        %v1875 = vpack.c.b16 %v1651, %v1643
        %v1876 = vpack.c.b16 %v1652, %v1644
        %v1877 = vpack.c.b16 %v1653, %v1645
        %v1878 = vpack.c.b16 %v1654, %v1646
        %v1879 = vpack.c.b16 %v1655, %v1647
        %v1880 = vpack.c.b16 %v1656, %v1648
        %v1881 = vpack.c.b16 %v1657, %v1649
        %v1882 = vpack.c.b16 %v1666, %v1658
        %v1883 = vpack.c.b16 %v1667, %v1659
        %v1884 = vpack.c.b16 %v1668, %v1660
        %v1885 = vpack.c.b16 %v1669, %v1661
        %v1886 = vpack.c.b16 %v1670, %v1662
        %v1887 = vpack.c.b16 %v1671, %v1663
        %v1888 = vpack.c.b16 %v1672, %v1664
        %v1889 = vpack.c.b16 %v1673, %v1665
        %v1890 = vpack.c.b16 %v1682, %v1674
        %v1891 = vpack.c.b16 %v1683, %v1675
        %v1892 = vpack.c.b16 %v1684, %v1676
        %v1893 = vpack.c.b16 %v1685, %v1677
        %v1894 = vpack.c.b16 %v1686, %v1678
        %v1895 = vpack.c.b16 %v1687, %v1679
        %v1896 = vpack.c.b16 %v1688, %v1680
        %v1897 = vpack.c.b16 %v1689, %v1681
        %v1898 = vpack.c.b16 %v1698, %v1690
        %v1899 = vpack.c.b16 %v1699, %v1691
        %v1900 = vpack.c.b16 %v1700, %v1692
        %v1901 = vpack.c.b16 %v1701, %v1693
        %v1902 = vpack.c.b16 %v1702, %v1694
        %v1903 = vpack.c.b16 %v1703, %v1695
        %v1904 = vpack.c.b16 %v1704, %v1696
        %v1905 = vpack.c.b16 %v1705, %v1697
        %v1906 = vpack.c.b16 %v1714, %v1706
        %v1907 = vpack.c.b16 %v1715, %v1707
        %v1908 = vpack.c.b16 %v1716, %v1708
        %v1909 = vpack.c.b16 %v1717, %v1709
        %v1910 = vpack.c.b16 %v1718, %v1710
        %v1911 = vpack.c.b16 %v1719, %v1711
        %v1912 = vpack.c.b16 %v1720, %v1712
        %v1913 = vpack.c.b16 %v1721, %v1713
        %v1914 = vpack.c.b16 %v1730, %v1722
        %v1915 = vpack.c.b16 %v1731, %v1723
        %v1916 = vpack.c.b16 %v1732, %v1724
        %v1917 = vpack.c.b16 %v1733, %v1725
        %v1918 = vpack.c.b16 %v1734, %v1726
        %v1919 = vpack.c.b16 %v1735, %v1727
        %v1920 = vpack.c.b16 %v1736, %v1728
        %v1921 = vpack.c.b16 %v1737, %v1729
        %v1922 = vpack.c.b16 %v1746, %v1738
        %v1923 = vpack.c.b16 %v1747, %v1739
        %v1924 = vpack.c.b16 %v1748, %v1740
        %v1925 = vpack.c.b16 %v1749, %v1741
        %v1926 = vpack.c.b16 %v1750, %v1742
        %v1927 = vpack.c.b16 %v1751, %v1743
        %v1928 = vpack.c.b16 %v1752, %v1744
        %v1929 = vpack.c.b16 %v1753, %v1745
        %v1930 = vpack.c.b16 %v1762, %v1754
        %v1931 = vpack.c.b16 %v1763, %v1755
        %v1932 = vpack.c.b16 %v1764, %v1756
        %v1933 = vpack.c.b16 %v1765, %v1757
        %v1934 = vpack.c.b16 %v1766, %v1758
        %v1935 = vpack.c.b16 %v1767, %v1759
        %v1936 = vpack.c.b16 %v1768, %v1760
        %v1937 = vpack.c.b16 %v1769, %v1761
        %v1938 = vpack.c.b16 %v1778, %v1770
        %v1939 = vpack.c.b16 %v1779, %v1771
        %v1940 = vpack.c.b16 %v1780, %v1772
        %v1941 = vpack.c.b16 %v1781, %v1773
        %v1942 = vpack.c.b16 %v1782, %v1774
        %v1943 = vpack.c.b16 %v1783, %v1775
        %v1944 = vpack.c.b16 %v1784, %v1776
        %v1945 = vpack.c.b16 %v1785, %v1777
        %v1946 = vpack.c.b16 %v1794, %v1786
        %v1947 = vpack.c.b16 %v1795, %v1787
        %v1948 = vpack.c.b16 %v1796, %v1788
        %v1949 = vpack.c.b16 %v1797, %v1789
        %v1950 = vpack.c.b16 %v1798, %v1790
        %v1951 = vpack.c.b16 %v1799, %v1791
        %v1952 = vpack.c.b16 %v1800, %v1792
        %v1953 = vpack.c.b16 %v1801, %v1793
        %v1954 = vpack.c.b16 %v1810, %v1802
        %v1955 = vpack.c.b16 %v1811, %v1803
        %v1956 = vpack.c.b16 %v1812, %v1804
        %v1957 = vpack.c.b16 %v1813, %v1805
        %v1958 = vpack.c.b16 %v1814, %v1806
        %v1959 = vpack.c.b16 %v1815, %v1807
        %v1960 = vpack.c.b16 %v1816, %v1808
        %v1961 = vpack.c.b16 %v1817, %v1809
        %v1962 = vpack.c.b16 %v1826, %v1818
        %v1963 = vpack.c.b16 %v1827, %v1819
        %v1964 = vpack.c.b16 %v1828, %v1820
        %v1965 = vpack.c.b16 %v1829, %v1821
        %v1966 = vpack.c.b16 %v1830, %v1822
        %v1967 = vpack.c.b16 %v1831, %v1823
        %v1968 = vpack.c.b16 %v1832, %v1824
        %v1969 = vpack.c.b16 %v1833, %v1825
        %v1970 = vpack.c.b16 %v1842, %v1834
        %v1971 = vpack.c.b16 %v1843, %v1835
        %v1972 = vpack.c.b16 %v1844, %v1836
        %v1973 = vpack.c.b16 %v1845, %v1837
        %v1974 = vpack.c.b16 %v1846, %v1838
        %v1975 = vpack.c.b16 %v1847, %v1839
        %v1976 = vpack.c.b16 %v1848, %v1840
        %v1977 = vpack.c.b16 %v1849, %v1841
        %2106 = vmatprep.subr.bf16.mxu0 %v1851
        %2107 = vmatpush1.bf16.msra.mxu0 %v1850
        %2108 = vmatprep.subr.bf16.mxu0 %v1859
        %2109 = vmatpush1.bf16.msra.mxu0 %v1858
        %2110 = vmatprep.subr.bf16.mxu0 %v1867
        %2111 = vmatpush1.bf16.msra.mxu0 %v1866
        %2112 = vmatprep.subr.bf16.mxu0 %v1875
        %2113 = vmatpush1.bf16.msra.mxu0 %v1874
        %2114 = vmatprep.subr.bf16.mxu0 %v1883
        %2115 = vmatpush1.bf16.msra.mxu0 %v1882
        %2116 = vmatprep.subr.bf16.mxu0 %v1891
        %2117 = vmatpush1.bf16.msra.mxu0 %v1890
        %2118 = vmatprep.subr.bf16.mxu0 %v1899
        %2119 = vmatpush1.bf16.msra.mxu0 %v1898
        %2120 = vmatprep.subr.bf16.mxu0 %v1907
        %2121 = vmatpush1.bf16.msra.mxu0 %v1906
        %2122 = vmatprep.subr.bf16.mxu0 %v1915
        %2123 = vmatpush1.bf16.msra.mxu0 %v1914
        %2124 = vmatprep.subr.bf16.mxu0 %v1923
        %2125 = vmatpush1.bf16.msra.mxu0 %v1922
        %2126 = vmatprep.subr.bf16.mxu0 %v1931
        %2127 = vmatpush1.bf16.msra.mxu0 %v1930
        %2128 = vmatprep.subr.bf16.mxu0 %v1939
        %2129 = vmatpush1.bf16.msra.mxu0 %v1938
        %2130 = vmatprep.subr.bf16.mxu0 %v1947
        %2131 = vmatpush1.bf16.msra.mxu0 %v1946
        %2132 = vmatprep.subr.bf16.mxu0 %v1955
        %2133 = vmatpush1.bf16.msra.mxu0 %v1954
        %2134 = vmatprep.subr.bf16.mxu0 %v1963
        %2135 = vmatpush1.bf16.msra.mxu0 %v1962
        %2136 = vmatprep.subr.bf16.mxu0 %v1971
        %2137 = vmatpush1.bf16.msra.mxu0 %v1970
        %2138 = vmatprep.mubr.bf16.mxu0 %v249
        %2139 = vmatmul.mubr.bf16.gmra.mrb[0].mxu0 %v248
        %v2140 = vpop.f32.mrb[0].mxu0
        %v2141 = vadd.f32 %v1257, %v2140
        %v2142 = vpop.f32.mrb[0].mxu0
        %v2143 = vadd.f32 %v1259, %v2142
        %v2144 = vpop.f32.mrb[0].mxu0
        %v2145 = vadd.f32 %v1261, %v2144
        %v2146 = vpop.f32.mrb[0].mxu0
        %v2147 = vadd.f32 %v1263, %v2146
        %2148 = vmatprep.mubr.bf16.mxu0 %v251
        %2149 = vmatmul.mubr.bf16.gmra.mrb[0].mxu0 %v250
        %v2150 = vpop.f32.mrb[0].mxu0
        %v2151 = vadd.f32 %v1267, %v2150
        %v2152 = vpop.f32.mrb[0].mxu0
        %v2153 = vadd.f32 %v1269, %v2152
        %v2154 = vpop.f32.mrb[0].mxu0
        %v2155 = vadd.f32 %v1271, %v2154
        %v2156 = vpop.f32.mrb[0].mxu0
        %v2157 = vadd.f32 %v1273, %v2156
        %2158 = vmatprep.mubr.bf16.mxu0 %v253
        %2159 = vmatmul.mubr.bf16.gmra.mrb[0].mxu0 %v252
        %v2160 = vpop.f32.mrb[0].mxu0
        %v2161 = vadd.f32 %v1277, %v2160
        %v2162 = vpop.f32.mrb[0].mxu0
        %v2163 = vadd.f32 %v1279, %v2162
        %v2164 = vpop.f32.mrb[0].mxu0
        %v2165 = vpop.f32.mrb[0].mxu0
        %2166 = vdwg.mxu0
        %2167 = vmatprep.subr.bf16.mxu0 %v1853
        %2168 = vmatpush1.bf16.msra.mxu0 %v1852
        %2169 = vmatprep.subr.bf16.mxu0 %v1861
        %2170 = vmatpush1.bf16.msra.mxu0 %v1860
        %2171 = vmatprep.subr.bf16.mxu0 %v1869
        %2172 = vmatpush1.bf16.msra.mxu0 %v1868
        %2173 = vmatprep.subr.bf16.mxu0 %v1877
        %2174 = vmatpush1.bf16.msra.mxu0 %v1876
        %2175 = vmatprep.subr.bf16.mxu0 %v1885
        %2176 = vmatpush1.bf16.msra.mxu0 %v1884
        %2177 = vmatprep.subr.bf16.mxu0 %v1893
        %2178 = vmatpush1.bf16.msra.mxu0 %v1892
        %2179 = vmatprep.subr.bf16.mxu0 %v1901
        %2180 = vmatpush1.bf16.msra.mxu0 %v1900
        %2181 = vmatprep.subr.bf16.mxu0 %v1909
        %2182 = vmatpush1.bf16.msra.mxu0 %v1908
        %2183 = vmatprep.subr.bf16.mxu0 %v1917
        %2184 = vmatpush1.bf16.msra.mxu0 %v1916
        %2185 = vmatprep.subr.bf16.mxu0 %v1925
        %2186 = vmatpush1.bf16.msra.mxu0 %v1924
        %2187 = vmatprep.subr.bf16.mxu0 %v1933
        %2188 = vmatpush1.bf16.msra.mxu0 %v1932
        %2189 = vmatprep.subr.bf16.mxu0 %v1941
        %2190 = vmatpush1.bf16.msra.mxu0 %v1940
        %2191 = vmatprep.subr.bf16.mxu0 %v1949
        %2192 = vmatpush1.bf16.msra.mxu0 %v1948
        %2193 = vmatprep.subr.bf16.mxu0 %v1957
        %2194 = vmatpush1.bf16.msra.mxu0 %v1956
        %2195 = vmatprep.subr.bf16.mxu0 %v1965
        %2196 = vmatpush1.bf16.msra.mxu0 %v1964
        %2197 = vmatprep.subr.bf16.mxu0 %v1973
        %2198 = vmatpush1.bf16.msra.mxu0 %v1972
        %2199 = vmatprep.mubr.bf16.mxu0 %v249
        %2200 = vmatmul.mubr.bf16.gmra.mrb[0].mxu0 %v248
        %v2201 = vpop.f32.mrb[0].mxu0
        %v2202 = vadd.f32 %v1318, %v2201
        %v2203 = vpop.f32.mrb[0].mxu0
        %v2204 = vadd.f32 %v1320, %v2203
        %v2205 = vpop.f32.mrb[0].mxu0
        %v2206 = vadd.f32 %v1322, %v2205
        %v2207 = vpop.f32.mrb[0].mxu0
        %v2208 = vadd.f32 %v1324, %v2207
        %2209 = vmatprep.mubr.bf16.mxu0 %v251
        %2210 = vmatmul.mubr.bf16.gmra.mrb[0].mxu0 %v250
        %v2211 = vpop.f32.mrb[0].mxu0
        %v2212 = vadd.f32 %v1328, %v2211
        %v2213 = vpop.f32.mrb[0].mxu0
        %v2214 = vadd.f32 %v1330, %v2213
        %v2215 = vpop.f32.mrb[0].mxu0
        %v2216 = vadd.f32 %v1332, %v2215
        %v2217 = vpop.f32.mrb[0].mxu0
        %v2218 = vadd.f32 %v1334, %v2217
        %2219 = vmatprep.mubr.bf16.mxu0 %v253
        %2220 = vmatmul.mubr.bf16.gmra.mrb[0].mxu0 %v252
        %v2221 = vpop.f32.mrb[0].mxu0
        %v2222 = vadd.f32 %v1338, %v2221
        %v2223 = vpop.f32.mrb[0].mxu0
        %v2224 = vadd.f32 %v1340, %v2223
        %v2225 = vpop.f32.mrb[0].mxu0
        %v2226 = vpop.f32.mrb[0].mxu0
        %2227 = vdwg.mxu0
        %2228 = vmatprep.subr.bf16.mxu0 %v1855
        %2229 = vmatpush1.bf16.msra.mxu0 %v1854
        %2230 = vmatprep.subr.bf16.mxu0 %v1863
        %2231 = vmatpush1.bf16.msra.mxu0 %v1862
        %2232 = vmatprep.subr.bf16.mxu0 %v1871
        %2233 = vmatpush1.bf16.msra.mxu0 %v1870
        %2234 = vmatprep.subr.bf16.mxu0 %v1879
        %2235 = vmatpush1.bf16.msra.mxu0 %v1878
        %2236 = vmatprep.subr.bf16.mxu0 %v1887
        %2237 = vmatpush1.bf16.msra.mxu0 %v1886
        %2238 = vmatprep.subr.bf16.mxu0 %v1895
        %2239 = vmatpush1.bf16.msra.mxu0 %v1894
        %2240 = vmatprep.subr.bf16.mxu0 %v1903
        %2241 = vmatpush1.bf16.msra.mxu0 %v1902
        %2242 = vmatprep.subr.bf16.mxu0 %v1911
        %2243 = vmatpush1.bf16.msra.mxu0 %v1910
        %2244 = vmatprep.subr.bf16.mxu0 %v1919
        %2245 = vmatpush1.bf16.msra.mxu0 %v1918
        %2246 = vmatprep.subr.bf16.mxu0 %v1927
        %2247 = vmatpush1.bf16.msra.mxu0 %v1926
        %2248 = vmatprep.subr.bf16.mxu0 %v1935
        %2249 = vmatpush1.bf16.msra.mxu0 %v1934
        %2250 = vmatprep.subr.bf16.mxu0 %v1943
        %2251 = vmatpush1.bf16.msra.mxu0 %v1942
        %2252 = vmatprep.subr.bf16.mxu0 %v1951
        %2253 = vmatpush1.bf16.msra.mxu0 %v1950
        %2254 = vmatprep.subr.bf16.mxu0 %v1959
        %2255 = vmatpush1.bf16.msra.mxu0 %v1958
        %2256 = vmatprep.subr.bf16.mxu0 %v1967
        %2257 = vmatpush1.bf16.msra.mxu0 %v1966
        %2258 = vmatprep.subr.bf16.mxu0 %v1975
        %2259 = vmatpush1.bf16.msra.mxu0 %v1974
        %2260 = vmatprep.mubr.bf16.mxu0 %v249
        %2261 = vmatmul.mubr.bf16.gmra.mrb[0].mxu0 %v248
        %v2262 = vpop.f32.mrb[0].mxu0
        %v2263 = vadd.f32 %v1379, %v2262
        %v2264 = vpop.f32.mrb[0].mxu0
        %v2265 = vadd.f32 %v1381, %v2264
        %v2266 = vpop.f32.mrb[0].mxu0
        %v2267 = vadd.f32 %v1383, %v2266
        %v2268 = vpop.f32.mrb[0].mxu0
        %v2269 = vadd.f32 %v1385, %v2268
        %2270 = vmatprep.mubr.bf16.mxu0 %v251
        %2271 = vmatmul.mubr.bf16.gmra.mrb[0].mxu0 %v250
        %v2272 = vpop.f32.mrb[0].mxu0
        %v2273 = vadd.f32 %v1389, %v2272
        %v2274 = vpop.f32.mrb[0].mxu0
        %v2275 = vadd.f32 %v1391, %v2274
        %v2276 = vpop.f32.mrb[0].mxu0
        %v2277 = vadd.f32 %v1393, %v2276
        %v2278 = vpop.f32.mrb[0].mxu0
        %v2279 = vadd.f32 %v1395, %v2278
        %2280 = vmatprep.mubr.bf16.mxu0 %v253
        %2281 = vmatmul.mubr.bf16.gmra.mrb[0].mxu0 %v252
        %v2282 = vpop.f32.mrb[0].mxu0
        %v2283 = vadd.f32 %v1399, %v2282
        %v2284 = vpop.f32.mrb[0].mxu0
        %v2285 = vadd.f32 %v1401, %v2284
        %v2286 = vpop.f32.mrb[0].mxu0
        %v2287 = vpop.f32.mrb[0].mxu0
        %2288 = vdwg.mxu0
        %2289 = vmatprep.subr.bf16.mxu0 %v1857
        %2290 = vmatpush1.bf16.msra.mxu0 %v1856
        %2291 = vmatprep.subr.bf16.mxu0 %v1865
        %2292 = vmatpush1.bf16.msra.mxu0 %v1864
        %2293 = vmatprep.subr.bf16.mxu0 %v1873
        %2294 = vmatpush1.bf16.msra.mxu0 %v1872
        %2295 = vmatprep.subr.bf16.mxu0 %v1881
        %2296 = vmatpush1.bf16.msra.mxu0 %v1880
        %2297 = vmatprep.subr.bf16.mxu0 %v1889
        %2298 = vmatpush1.bf16.msra.mxu0 %v1888
        %2299 = vmatprep.subr.bf16.mxu0 %v1897
        %2300 = vmatpush1.bf16.msra.mxu0 %v1896
        %2301 = vmatprep.subr.bf16.mxu0 %v1905
        %2302 = vmatpush1.bf16.msra.mxu0 %v1904
        %2303 = vmatprep.subr.bf16.mxu0 %v1913
        %2304 = vmatpush1.bf16.msra.mxu0 %v1912
        %2305 = vmatprep.subr.bf16.mxu0 %v1921
        %2306 = vmatpush1.bf16.msra.mxu0 %v1920
        %2307 = vmatprep.subr.bf16.mxu0 %v1929
        %2308 = vmatpush1.bf16.msra.mxu0 %v1928
        %2309 = vmatprep.subr.bf16.mxu0 %v1937
        %2310 = vmatpush1.bf16.msra.mxu0 %v1936
        %2311 = vmatprep.subr.bf16.mxu0 %v1945
        %2312 = vmatpush1.bf16.msra.mxu0 %v1944
        %2313 = vmatprep.subr.bf16.mxu0 %v1953
        %2314 = vmatpush1.bf16.msra.mxu0 %v1952
        %2315 = vmatprep.subr.bf16.mxu0 %v1961
        %2316 = vmatpush1.bf16.msra.mxu0 %v1960
        %2317 = vmatprep.subr.bf16.mxu0 %v1969
        %2318 = vmatpush1.bf16.msra.mxu0 %v1968
        %2319 = vmatprep.subr.bf16.mxu0 %v1977
        %2320 = vmatpush1.bf16.msra.mxu0 %v1976
        %2321 = vmatprep.mubr.bf16.mxu0 %v249
        %2322 = vmatmul.mubr.bf16.gmra.mrb[0].mxu0 %v248
        %v2323 = vpop.f32.mrb[0].mxu0
        %v2324 = vadd.f32 %v1440, %v2323
        %v2325 = vpop.f32.mrb[0].mxu0
        %v2326 = vadd.f32 %v1442, %v2325
        %v2327 = vpop.f32.mrb[0].mxu0
        %v2328 = vadd.f32 %v1444, %v2327
        %v2329 = vpop.f32.mrb[0].mxu0
        %v2330 = vadd.f32 %v1446, %v2329
        %2331 = vmatprep.mubr.bf16.mxu0 %v251
        %2332 = vmatmul.mubr.bf16.gmra.mrb[0].mxu0 %v250
        %v2333 = vpop.f32.mrb[0].mxu0
        %v2334 = vadd.f32 %v1450, %v2333
        %v2335 = vpop.f32.mrb[0].mxu0
        %v2336 = vadd.f32 %v1452, %v2335
        %v2337 = vpop.f32.mrb[0].mxu0
        %v2338 = vadd.f32 %v1454, %v2337
        %v2339 = vpop.f32.mrb[0].mxu0
        %v2340 = vadd.f32 %v1456, %v2339
        %2341 = vmatprep.mubr.bf16.mxu0 %v253
        %2342 = vmatmul.mubr.bf16.gmra.mrb[0].mxu0 %v252
        %v2343 = vpop.f32.mrb[0].mxu0
        %v2344 = vadd.f32 %v1460, %v2343
        %v2345 = vpop.f32.mrb[0].mxu0
        %v2346 = vadd.f32 %v1462, %v2345
        %v2347 = vpop.f32.mrb[0].mxu0
        %v2348 = vpop.f32.mrb[0].mxu0
        %2349 = vdwg.mxu0
        %v2350 = vld [vmem:[#allocation4] sm:$0xff]
        %v2352 = vlaneseq
        %v2353 = vshrl.u32 %v2352, 7
        %v2354 = vsub.s32 0, %v2353
        %v2355 = vrot.slane %v2350, %v2354
        %v2356 = vlaneseq
        %v2357 = vshrl.u32 %v2356, 7
        %v2358 = vsub.s32 1, %v2357
        %v2359 = vrot.slane %v2350, %v2358
        %v2360 = vlaneseq
        %v2361 = vshrl.u32 %v2360, 7
        %v2362 = vsub.s32 2, %v2361
        %v2363 = vrot.slane %v2350, %v2362
        %v2364 = vlaneseq
        %v2365 = vshrl.u32 %v2364, 7
        %v2366 = vsub.s32 3, %v2365
        %v2367 = vrot.slane %v2350, %v2366
        %v2368 = vlaneseq
        %v2369 = vshrl.u32 %v2368, 7
        %v2370 = vsub.s32 4, %v2369
        %v2371 = vrot.slane %v2350, %v2370
        %v2372 = vlaneseq
        %v2373 = vshrl.u32 %v2372, 7
        %v2374 = vsub.s32 5, %v2373
        %v2375 = vrot.slane %v2350, %v2374
        %v2376 = vlaneseq
        %v2377 = vshrl.u32 %v2376, 7
        %v2378 = vsub.s32 6, %v2377
        %v2379 = vrot.slane %v2350, %v2378
        %v2380 = vlaneseq
        %v2381 = vshrl.u32 %v2380, 7
        %v2382 = vsub.s32 7, %v2381
        %v2383 = vrot.slane %v2350, %v2382
        %v2392 = vmul.f32 %v2141, %v2355
        %v2393 = vmul.f32 %v2143, %v2359
        %v2394 = vmul.f32 %v2202, %v2363
        %v2395 = vmul.f32 %v2204, %v2367
        %v2396 = vmul.f32 %v2263, %v2371
        %v2397 = vmul.f32 %v2265, %v2375
        %v2398 = vmul.f32 %v2324, %v2379
        %v2399 = vmul.f32 %v2326, %v2383
        %v2400 = vmul.f32 %v2145, %v2355
        %v2401 = vmul.f32 %v2147, %v2359
        %v2402 = vmul.f32 %v2206, %v2363
        %v2403 = vmul.f32 %v2208, %v2367
        %v2404 = vmul.f32 %v2267, %v2371
        %v2405 = vmul.f32 %v2269, %v2375
        %v2406 = vmul.f32 %v2328, %v2379
        %v2407 = vmul.f32 %v2330, %v2383
        %v2408 = vmul.f32 %v2151, %v2355
        %v2409 = vmul.f32 %v2153, %v2359
        %v2410 = vmul.f32 %v2212, %v2363
        %v2411 = vmul.f32 %v2214, %v2367
        %v2412 = vmul.f32 %v2273, %v2371
        %v2413 = vmul.f32 %v2275, %v2375
        %v2414 = vmul.f32 %v2334, %v2379
        %v2415 = vmul.f32 %v2336, %v2383
        %v2416 = vmul.f32 %v2155, %v2355
        %v2417 = vmul.f32 %v2157, %v2359
        %v2418 = vmul.f32 %v2216, %v2363
        %v2419 = vmul.f32 %v2218, %v2367
        %v2420 = vmul.f32 %v2277, %v2371
        %v2421 = vmul.f32 %v2279, %v2375
        %v2422 = vmul.f32 %v2338, %v2379
        %v2423 = vmul.f32 %v2340, %v2383
        %v2424 = vmul.f32 %v2161, %v2355
        %v2425 = vmul.f32 %v2163, %v2359
        %v2426 = vmul.f32 %v2222, %v2363
        %v2427 = vmul.f32 %v2224, %v2367
        %v2428 = vmul.f32 %v2283, %v2371
        %v2429 = vmul.f32 %v2285, %v2375
        %v2430 = vmul.f32 %v2344, %v2379
        %v2431 = vmul.f32 %v2346, %v2383
        %v2432 = vld [vmem:[#allocation6] sm:$0xff]
        %v2434 = vlaneseq
        %v2435 = vshrl.u32 %v2434, 7
        %v2436 = vsub.s32 0, %v2435
        %v2437 = vrot.slane %v2432, %v2436
        %v2438 = vlaneseq
        %v2439 = vshrl.u32 %v2438, 7
        %v2440 = vsub.s32 1, %v2439
        %v2441 = vrot.slane %v2432, %v2440
        %v2442 = vlaneseq
        %v2443 = vshrl.u32 %v2442, 7
        %v2444 = vsub.s32 2, %v2443
        %v2445 = vrot.slane %v2432, %v2444
        %v2446 = vlaneseq
        %v2447 = vshrl.u32 %v2446, 7
        %v2448 = vsub.s32 3, %v2447
        %v2449 = vrot.slane %v2432, %v2448
        %v2450 = vlaneseq
        %v2451 = vshrl.u32 %v2450, 7
        %v2452 = vsub.s32 4, %v2451
        %v2453 = vrot.slane %v2432, %v2452
        %v2454 = vlaneseq
        %v2455 = vshrl.u32 %v2454, 7
        %v2456 = vsub.s32 5, %v2455
        %v2457 = vrot.slane %v2432, %v2456
        %v2458 = vlaneseq
        %v2459 = vshrl.u32 %v2458, 7
        %v2460 = vsub.s32 6, %v2459
        %v2461 = vrot.slane %v2432, %v2460
        %v2462 = vlaneseq
        %v2463 = vshrl.u32 %v2462, 7
        %v2464 = vsub.s32 7, %v2463
        %v2465 = vrot.slane %v2432, %v2464
        %v2474 = vadd.f32 %v2392, %v2437
        %v2475 = vadd.f32 %v2393, %v2441
        %v2476 = vadd.f32 %v2394, %v2445
        %v2477 = vadd.f32 %v2395, %v2449
        %v2478 = vadd.f32 %v2396, %v2453
        %v2479 = vadd.f32 %v2397, %v2457
        %v2480 = vadd.f32 %v2398, %v2461
        %v2481 = vadd.f32 %v2399, %v2465
        %v2482 = vadd.f32 %v2400, %v2437
        %v2483 = vadd.f32 %v2401, %v2441
        %v2484 = vadd.f32 %v2402, %v2445
        %v2485 = vadd.f32 %v2403, %v2449
        %v2486 = vadd.f32 %v2404, %v2453
        %v2487 = vadd.f32 %v2405, %v2457
        %v2488 = vadd.f32 %v2406, %v2461
        %v2489 = vadd.f32 %v2407, %v2465
        %v2490 = vadd.f32 %v2408, %v2437
        %v2491 = vadd.f32 %v2409, %v2441
        %v2492 = vadd.f32 %v2410, %v2445
        %v2493 = vadd.f32 %v2411, %v2449
        %v2494 = vadd.f32 %v2412, %v2453
        %v2495 = vadd.f32 %v2413, %v2457
        %v2496 = vadd.f32 %v2414, %v2461
        %v2497 = vadd.f32 %v2415, %v2465
        %v2498 = vadd.f32 %v2416, %v2437
        %v2499 = vadd.f32 %v2417, %v2441
        %v2500 = vadd.f32 %v2418, %v2445
        %v2501 = vadd.f32 %v2419, %v2449
        %v2502 = vadd.f32 %v2420, %v2453
        %v2503 = vadd.f32 %v2421, %v2457
        %v2504 = vadd.f32 %v2422, %v2461
        %v2505 = vadd.f32 %v2423, %v2465
        %v2506 = vadd.f32 %v2424, %v2437
        %v2507 = vadd.f32 %v2425, %v2441
        %v2508 = vadd.f32 %v2426, %v2445
        %v2509 = vadd.f32 %v2427, %v2449
        %v2510 = vadd.f32 %v2428, %v2453
        %v2511 = vadd.f32 %v2429, %v2457
        %v2512 = vadd.f32 %v2430, %v2461
        %v2513 = vadd.f32 %v2431, %v2465
        %v2514 = vmax.f32 %v2474, 0.0
        %v2515 = vmax.f32 %v2475, 0.0
        %v2516 = vmax.f32 %v2476, 0.0
        %v2517 = vmax.f32 %v2477, 0.0
        %v2518 = vmax.f32 %v2478, 0.0
        %v2519 = vmax.f32 %v2479, 0.0
        %v2520 = vmax.f32 %v2480, 0.0
        %v2521 = vmax.f32 %v2481, 0.0
        %v2522 = vmax.f32 %v2482, 0.0
        %v2523 = vmax.f32 %v2483, 0.0
        %v2524 = vmax.f32 %v2484, 0.0
        %v2525 = vmax.f32 %v2485, 0.0
        %v2526 = vmax.f32 %v2486, 0.0
        %v2527 = vmax.f32 %v2487, 0.0
        %v2528 = vmax.f32 %v2488, 0.0
        %v2529 = vmax.f32 %v2489, 0.0
        %v2530 = vmax.f32 %v2490, 0.0
        %v2531 = vmax.f32 %v2491, 0.0
        %v2532 = vmax.f32 %v2492, 0.0
        %v2533 = vmax.f32 %v2493, 0.0
        %v2534 = vmax.f32 %v2494, 0.0
        %v2535 = vmax.f32 %v2495, 0.0
        %v2536 = vmax.f32 %v2496, 0.0
        %v2537 = vmax.f32 %v2497, 0.0
        %v2538 = vmax.f32 %v2498, 0.0
        %v2539 = vmax.f32 %v2499, 0.0
        %v2540 = vmax.f32 %v2500, 0.0
        %v2541 = vmax.f32 %v2501, 0.0
        %v2542 = vmax.f32 %v2502, 0.0
        %v2543 = vmax.f32 %v2503, 0.0
        %v2544 = vmax.f32 %v2504, 0.0
        %v2545 = vmax.f32 %v2505, 0.0
        %v2546 = vmax.f32 %v2506, 0.0
        %v2547 = vmax.f32 %v2507, 0.0
        %v2548 = vmax.f32 %v2508, 0.0
        %v2549 = vmax.f32 %v2509, 0.0
        %v2550 = vmax.f32 %v2510, 0.0
        %v2551 = vmax.f32 %v2511, 0.0
        %v2552 = vmax.f32 %v2512, 0.0
        %v2553 = vmax.f32 %v2513, 0.0
        %2554 = vst [vmem:[%s237] sm:$0xff] %v2514
        %2555 = vst [vmem:[%s237 + $0x8] sm:$0xff] %v2515
        %2556 = vst [vmem:[%s237 + $0x10] sm:$0xff] %v2516
        %2557 = vst [vmem:[%s237 + $0x18] sm:$0xff] %v2517
        %2558 = vst [vmem:[%s237 + $0x20] sm:$0xff] %v2518
        %2559 = vst [vmem:[%s237 + $0x28] sm:$0xff] %v2519
        %2560 = vst [vmem:[%s237 + $0x30] sm:$0xff] %v2520
        %2561 = vst [vmem:[%s237 + $0x38] sm:$0xff] %v2521
        %2562 = vst [vmem:[%s237 + $0x40] sm:$0xff] %v2522
        %2563 = vst [vmem:[%s237 + $0x48] sm:$0xff] %v2523
        %2564 = vst [vmem:[%s237 + $0x50] sm:$0xff] %v2524
        %2565 = vst [vmem:[%s237 + $0x58] sm:$0xff] %v2525
        %2566 = vst [vmem:[%s237 + $0x60] sm:$0xff] %v2526
        %2567 = vst [vmem:[%s237 + $0x68] sm:$0xff] %v2527
        %2568 = vst [vmem:[%s237 + $0x70] sm:$0xff] %v2528
        %2569 = vst [vmem:[%s237 + $0x78] sm:$0xff] %v2529
        %2570 = vst [vmem:[%s237 + $0x80] sm:$0xff] %v2530
        %2571 = vst [vmem:[%s237 + $0x88] sm:$0xff] %v2531
        %2572 = vst [vmem:[%s237 + $0x90] sm:$0xff] %v2532
        %2573 = vst [vmem:[%s237 + $0x98] sm:$0xff] %v2533
        %2574 = vst [vmem:[%s237 + $0xa0] sm:$0xff] %v2534
        %2575 = vst [vmem:[%s237 + $0xa8] sm:$0xff] %v2535
        %2576 = vst [vmem:[%s237 + $0xb0] sm:$0xff] %v2536
        %2577 = vst [vmem:[%s237 + $0xb8] sm:$0xff] %v2537
        %2578 = vst [vmem:[%s237 + $0xc0] sm:$0xff] %v2538
        %2579 = vst [vmem:[%s237 + $0xc8] sm:$0xff] %v2539
        %2580 = vst [vmem:[%s237 + $0xd0] sm:$0xff] %v2540
        %2581 = vst [vmem:[%s237 + $0xd8] sm:$0xff] %v2541
        %2582 = vst [vmem:[%s237 + $0xe0] sm:$0xff] %v2542
        %2583 = vst [vmem:[%s237 + $0xe8] sm:$0xff] %v2543
        %2584 = vst [vmem:[%s237 + $0xf0] sm:$0xff] %v2544
        %2585 = vst [vmem:[%s237 + $0xf8] sm:$0xff] %v2545
        %2586 = vst [vmem:[%s237 + $0x100] sm:$0xff] %v2546
        %2587 = vst [vmem:[%s237 + $0x108] sm:$0xff] %v2547
        %2588 = vst [vmem:[%s237 + $0x110] sm:$0xff] %v2548
        %2589 = vst [vmem:[%s237 + $0x118] sm:$0xff] %v2549
        %2590 = vst [vmem:[%s237 + $0x120] sm:$0xff] %v2550
        %2591 = vst [vmem:[%s237 + $0x128] sm:$0xff] %v2551
        %2592 = vst [vmem:[%s237 + $0x130] sm:$0xff] %v2552
        %2593 = vst [vmem:[%s237 + $0x138] sm:$0xff] %v2553
        %p2594 = scmp.lt.s32.totalorder %s17, 4
        %s2595 = scalar_select %p2594, %s17, 4
        %s2596 = smul.addr %s2595, 40
        %s2597 = smul.addr %s2596, 8
        %s2598 = scalar_lea.vmem %s4, %s2597
        // Predicated region
        $region49: #{multi_decoder_forward.4} parent=35 // pred_check
          %p2599 = pneg %p124
        $region50: #{multi_decoder_forward.4} parent=35 // pred_check_branch
          %2601 = sbr.rel (%p2599) target = $region52
        $region51: #{multi_decoder_forward.4} parent=35 // pred_region
          _
        $region52: #{multi_decoder_forward.4} parent=35 // pred_fallthru
          _
      $region36: #{multi_decoder_forward.4} parent=5 // pred_fallthru
        _
      %p2602 = scmp.le.s32.totalorder 2, %s12
      // Predicated region
      $region53: #{multi_decoder_forward.4} parent=5 // pred_check
        %p2603 = pneg %p2602
      $region54: #{multi_decoder_forward.4} parent=5 // pred_check_branch
        %2605 = sbr.rel (%p2603) target = $region56
      $region55: #{multi_decoder_forward.4} parent=5 // pred_region
        %s2606 = ssub.s32 %s12, 2
        // Predicated region
        $region57: #{multi_decoder_forward.4} parent=55 // pred_check
          %p2607 = pneg %p130
        $region58: #{multi_decoder_forward.4} parent=55 // pred_check_branch
          %2609 = sbr.rel (%p2607) target = $region60
        $region59: #{multi_decoder_forward.4} parent=55 // pred_region
          %p2610 = scmp.lt.s32.totalorder %s18, 4
          %s2611 = scalar_select %p2610, %s18, 4
          %s2612 = smul.addr %s2611, 40
          %s2613 = smul.addr %s2612, 8
          %s2614 = scalar_lea.vmem %s4, %s2613
        $region60: #{multi_decoder_forward.4} parent=55 // pred_fallthru
          _
      $region56: #{multi_decoder_forward.4} parent=5 // pred_fallthru
        _
    $region6: #{multi_decoder_forward.4} parent=1 // loop_footer
      %s16 = sadd.s32 1, %s12
    $region7: #{multi_decoder_forward.4} parent=1 // loop_footer_branch
      %11 = sbr.rel target = $region3
    $region8: #{multi_decoder_forward.4} parent=1 // loop_exit
      _
    %2615 = vsyncpa [#allocation3], 1
    %s2616 = scalar_lea.sflag [#allocation3], 1
    %2617 = vsyncpa %s2616, 1
    %2618 = vsyncpa [#allocation5], 1

// kernel: multi_decoder_forward.5
$region0: #{multi_decoder_forward.5}
  #allocation0 [shape = 'u32[]', space=smem, size = 0x4, offset = 0x4, fixed_abs, tag = 'smem constant byte address 0x4 - core index']
  #allocation1 [shape = 'u32[144,128]{1,0:T(1,128)}', space=vmem, size = 0x12000, scoped, tag = 'internal scratch']
  %s0 = inlined_call_operand.vmem [shape: f32[5,128,256], index: 0, kind: input, shape index: {}]
  %s1 = inlined_call_operand.vmem [shape: bf16[8,256,128], index: 1, kind: input, shape index: {}]
  %s2 = inlined_call_operand.vmem [shape: f32[1,128], index: 2, kind: input, shape index: {}]
  %s3 = inlined_call_operand.vmem [shape: f32[1,128], index: 3, kind: input, shape index: {}]
  %s4 = inlined_call_operand.vmem [shape: f32[5,120,128], index: 4, kind: output, shape index: {}]
  %s5 = sld [smem:[#allocation0]]
  $region49: #{multi_decoder_forward.5} parent=0
    _
  %s7 = ssub.s32 1, %s5
  %s8 = scalar_select 0, %s7, %s5
  loop: start=0, step=1, limit=7
  $region2: #{multi_decoder_forward.5} parent=0 // loop_pre_header
    _
  $region3: #{multi_decoder_forward.5} parent=0 // loop_header
    %s10 = sphi 0, %s14
    %p11 = scmp.ge.s32.totalorder %s10, 7
    %s20 = sphi 0, %s22
    %s23 = sphi 0, %s20
    %s24 = sphi 0, %s23
    %s40 = sphi 0, %s24
    %s44 = sphi 0, %s44
    %s46 = sphi 0, %s44
    %s47 = sphi 0, %s46
    %s61 = sphi 0, %s47
    %s65 = sphi 0, %s65
    %s67 = sphi 0, %s65
    %s68 = sphi 0, %s67
    %s82 = sphi 0, %s68
    %s86 = sphi 0, %s86
    %s88 = sphi 0, %s86
    %s89 = sphi 0, %s88
    %s103 = sphi 0, %s89
    %s109 = sphi 0, %s111
    %s112 = sphi 0, %s109
    %s113 = sphi 0, %s112
    %s129 = sphi 0, %s113
  $region4: #{multi_decoder_forward.5} parent=0 // loop_header_branch
    %13 = sbr.rel (%p11) target = $region8
  $region5: #{multi_decoder_forward.5} parent=0 // loop_body
    %s15 = ssub.s32 %s10, 1
    %s16 = ssub.s32 %s10, 2
    %s17 = sadd.s32 %s10, 1
    %s18 = ssub.s32 %s10, %s17
    %p19 = scmp.eq.s32.totalorder %s18, 0
    %s21 = sadd.s32 %s20, 1
    %s22 = scalar_select %p19, %s20, %s21
    %p25 = pneg %p19
    %p26 = scmp.eq.s32.totalorder %s10, 4
    %p27 = por %p25, %p26
    %p28 = scmp.ne.s32.totalorder %s20, %s23
    %p29 = scmp.eq.s32.totalorder %s10, 0
    %p30 = por %p28, %p29
    %p31 = scmp.ne.s32.totalorder %s20, %s23
    %p32 = scmp.eq.s32.totalorder %s15, 4
    %p33 = por %p31, %p32
    %p34 = scmp.ne.s32.totalorder %s23, %s24
    %p35 = scmp.eq.s32.totalorder %s15, 0
    %p36 = por %p34, %p35
    %p37 = scmp.ne.s32.totalorder %s23, %s24
    %p38 = scmp.eq.s32.totalorder %s16, 4
    %p39 = por %p37, %p38
    %p41 = scmp.ne.s32.totalorder %s24, %s40
    %p42 = scmp.eq.s32.totalorder %s16, 0
    %p43 = por %p41, %p42
    %s45 = sadd.s32 %s44, 1
    %p48 = scmp.eq.s32.totalorder %s10, 4
    %p49 = scmp.ne.s32.totalorder %s44, %s46
    %p50 = scmp.eq.s32.totalorder %s10, 0
    %p51 = por %p49, %p50
    %p52 = scmp.ne.s32.totalorder %s44, %s46
    %p53 = scmp.eq.s32.totalorder %s15, 4
    %p54 = por %p52, %p53
    %p55 = scmp.ne.s32.totalorder %s46, %s47
    %p56 = scmp.eq.s32.totalorder %s15, 0
    %p57 = por %p55, %p56
    %p58 = scmp.ne.s32.totalorder %s46, %s47
    %p59 = scmp.eq.s32.totalorder %s16, 4
    %p60 = por %p58, %p59
    %p62 = scmp.ne.s32.totalorder %s47, %s61
    %p63 = scmp.eq.s32.totalorder %s16, 0
    %p64 = por %p62, %p63
    %s66 = sadd.s32 %s65, 1
    %p69 = scmp.eq.s32.totalorder %s10, 4
    %p70 = scmp.ne.s32.totalorder %s65, %s67
    %p71 = scmp.eq.s32.totalorder %s10, 0
    %p72 = por %p70, %p71
    %p73 = scmp.ne.s32.totalorder %s65, %s67
    %p74 = scmp.eq.s32.totalorder %s15, 4
    %p75 = por %p73, %p74
    %p76 = scmp.ne.s32.totalorder %s67, %s68
    %p77 = scmp.eq.s32.totalorder %s15, 0
    %p78 = por %p76, %p77
    %p79 = scmp.ne.s32.totalorder %s67, %s68
    %p80 = scmp.eq.s32.totalorder %s16, 4
    %p81 = por %p79, %p80
    %p83 = scmp.ne.s32.totalorder %s68, %s82
    %p84 = scmp.eq.s32.totalorder %s16, 0
    %p85 = por %p83, %p84
    %s87 = sadd.s32 %s86, 1
    %p90 = scmp.eq.s32.totalorder %s10, 4
    %p91 = scmp.ne.s32.totalorder %s86, %s88
    %p92 = scmp.eq.s32.totalorder %s10, 0
    %p93 = por %p91, %p92
    %p94 = scmp.ne.s32.totalorder %s86, %s88
    %p95 = scmp.eq.s32.totalorder %s15, 4
    %p96 = por %p94, %p95
    %p97 = scmp.ne.s32.totalorder %s88, %s89
    %p98 = scmp.eq.s32.totalorder %s15, 0
    %p99 = por %p97, %p98
    %p100 = scmp.ne.s32.totalorder %s88, %s89
    %p101 = scmp.eq.s32.totalorder %s16, 4
    %p102 = por %p100, %p101
    %p104 = scmp.ne.s32.totalorder %s89, %s103
    %p105 = scmp.eq.s32.totalorder %s16, 0
    %p106 = por %p104, %p105
    %s107 = ssub.s32 %s10, %s17
    %p108 = scmp.eq.s32.totalorder %s107, 0
    %s110 = sadd.s32 %s109, 1
    %s111 = scalar_select %p108, %s109, %s110
    %p114 = pneg %p108
    %p115 = scmp.eq.s32.totalorder %s10, 4
    %p116 = por %p114, %p115
    %p117 = scmp.ne.s32.totalorder %s109, %s112
    %p118 = scmp.eq.s32.totalorder %s10, 0
    %p119 = por %p117, %p118
    %p120 = scmp.ne.s32.totalorder %s109, %s112
    %p121 = scmp.eq.s32.totalorder %s15, 4
    %p122 = por %p120, %p121
    %p123 = scmp.ne.s32.totalorder %s112, %s113
    %p124 = scmp.eq.s32.totalorder %s15, 0
    %p125 = por %p123, %p124
    %p126 = scmp.ne.s32.totalorder %s112, %s113
    %p127 = scmp.eq.s32.totalorder %s16, 4
    %p128 = por %p126, %p127
    %p130 = scmp.ne.s32.totalorder %s113, %s129
    %p131 = scmp.eq.s32.totalorder %s16, 0
    %p132 = por %p130, %p131
    %p133 = scmp.le.s32.totalorder 1, %s10
    %p134 = scmp.lt.s32.totalorder %s10, 6
    %p135 = pnand %p133, %p134
    %p136 = pneg %p135
    // Predicated region
    $region9: #{multi_decoder_forward.5} parent=5 // pred_check
      _
    $region10: #{multi_decoder_forward.5} parent=5 // pred_check_branch
      %138 = sbr.rel (%p135) target = $region12
    $region11: #{multi_decoder_forward.5} parent=5 // pred_region
      %s139 = ssub.s32 %s10, 1
      // Predicated region
      $region13: #{multi_decoder_forward.5} parent=11 // pred_check
        %p140 = pneg %p57
      $region14: #{multi_decoder_forward.5} parent=11 // pred_check_branch
        %142 = sbr.rel (%p140) target = $region16
      $region15: #{multi_decoder_forward.5} parent=11 // pred_region
        _
      $region16: #{multi_decoder_forward.5} parent=11 // pred_fallthru
        _
      // Predicated region
      $region17: #{multi_decoder_forward.5} parent=11 // pred_check
        %p143 = pneg %p78
      $region18: #{multi_decoder_forward.5} parent=11 // pred_check_branch
        %145 = sbr.rel (%p143) target = $region20
      $region19: #{multi_decoder_forward.5} parent=11 // pred_region
        _
      $region20: #{multi_decoder_forward.5} parent=11 // pred_fallthru
        _
      // Predicated region
      $region21: #{multi_decoder_forward.5} parent=11 // pred_check
        %p146 = pneg %p99
      $region22: #{multi_decoder_forward.5} parent=11 // pred_check_branch
        %148 = sbr.rel (%p146) target = $region24
      $region23: #{multi_decoder_forward.5} parent=11 // pred_region
        _
      $region24: #{multi_decoder_forward.5} parent=11 // pred_fallthru
        _
    $region12: #{multi_decoder_forward.5} parent=5 // pred_fallthru
      _
    %p149 = scmp.lt.s32.totalorder %s10, 5
    // Predicated region
    $region25: #{multi_decoder_forward.5} parent=5 // pred_check
      %p150 = pneg %p149
    $region26: #{multi_decoder_forward.5} parent=5 // pred_check_branch
      %152 = sbr.rel (%p150) target = $region28
    $region27: #{multi_decoder_forward.5} parent=5 // pred_region
      // Predicated region
      $region29: #{multi_decoder_forward.5} parent=27 // pred_check
        %p153 = pneg %p30
      $region30: #{multi_decoder_forward.5} parent=27 // pred_check_branch
        %155 = sbr.rel (%p153) target = $region32
      $region31: #{multi_decoder_forward.5} parent=27 // pred_region
        %p156 = scmp.lt.s32.totalorder %s10, 4
        %s157 = scalar_select %p156, %s10, 4
        %s158 = smul.addr %s157, 32
        %s159 = smul.addr %s158, 8
        %s160 = scalar_lea.vmem %s0, %s159
      $region32: #{multi_decoder_forward.5} parent=27 // pred_fallthru
        _
    $region28: #{multi_decoder_forward.5} parent=5 // pred_fallthru
      _
    %p161 = scmp.le.s32.totalorder 1, %s10
    %p162 = scmp.lt.s32.totalorder %s10, 6
    %p163 = pnand %p161, %p162
    %p164 = pneg %p163
    // Predicated region
    $region33: #{multi_decoder_forward.5} parent=5 // pred_check
      _
    $region34: #{multi_decoder_forward.5} parent=5 // pred_check_branch
      %166 = sbr.rel (%p163) target = $region36
    $region35: #{multi_decoder_forward.5} parent=5 // pred_region
      %s167 = ssub.s32 %s10, 1
      %p168 = scmp.lt.s32.totalorder %s15, 4
      %s169 = scalar_select %p168, %s15, 4
      %s170 = smul.addr %s169, 32
      %s171 = smul.addr %s170, 8
      %s172 = scalar_lea.vmem %s0, %s171
      %p173 = pneg %p36
      %p174 = pneg %p33
      %p175 = pneg %p57
      %p176 = pneg %p54
      %p177 = pneg %p78
      %p178 = pneg %p75
      %p179 = pneg %p99
      %p180 = pneg %p96
      %p181 = pneg %p125
      %p182 = pneg %p122
      %p183 = scmp.lt.s32.totalorder %s15, 4
      %s184 = scalar_select %p183, %s15, 4
      %s185 = smul.addr %s184, 15
      %s186 = smul.addr %s185, 8
      %s187 = scalar_lea.vmem %s4, %s186
      %p188 = scmp.lt.s32.totalorder %s15, 4
      %s189 = scalar_select %p188, %s15, 4
      %s190 = smul.addr %s189, 32
      %s191 = smul.addr %s190, 8
      %s192 = scalar_lea.vmem %s0, %s191
      %p193 = scmp.lt.s32.totalorder %s15, 4
      %s194 = scalar_select %p193, %s15, 4
      %s195 = smul.addr %s194, 15
      %s196 = smul.addr %s195, 8
      %s197 = scalar_lea.vmem %s4, %s196
      %v199 = vld [vmem:[%s192] sm:$0xff]
      %v200 = vld [vmem:[%s192 + $0x8] sm:$0xff]
      %v201 = vld [vmem:[%s192 + $0x10] sm:$0xff]
      %v202 = vld [vmem:[%s192 + $0x18] sm:$0xff]
      %v203 = vld [vmem:[%s192 + $0x20] sm:$0xff]
      %v204 = vld [vmem:[%s192 + $0x28] sm:$0xff]
      %v205 = vld [vmem:[%s192 + $0x30] sm:$0xff]
      %v206 = vld [vmem:[%s192 + $0x38] sm:$0xff]
      %v207 = vld [vmem:[%s192 + $0x40] sm:$0xff]
      %v208 = vld [vmem:[%s192 + $0x48] sm:$0xff]
      %v209 = vld [vmem:[%s192 + $0x50] sm:$0xff]
      %v210 = vld [vmem:[%s192 + $0x58] sm:$0xff]
      %v211 = vld [vmem:[%s192 + $0x60] sm:$0xff]
      %v212 = vld [vmem:[%s192 + $0x68] sm:$0xff]
      %v213 = vld [vmem:[%s192 + $0x70] sm:$0xff]
      %v214 = vld [vmem:[%s192 + $0x78] sm:$0xff]
      %v215 = vld [vmem:[%s192 + $0x80] sm:$0xff]
      %v216 = vld [vmem:[%s192 + $0x88] sm:$0xff]
      %v217 = vld [vmem:[%s192 + $0x90] sm:$0xff]
      %v218 = vld [vmem:[%s192 + $0x98] sm:$0xff]
      %v219 = vld [vmem:[%s192 + $0xa0] sm:$0xff]
      %v220 = vld [vmem:[%s192 + $0xa8] sm:$0xff]
      %v221 = vld [vmem:[%s192 + $0xb0] sm:$0xff]
      %v222 = vld [vmem:[%s192 + $0xb8] sm:$0xff]
      %v223 = vld [vmem:[%s192 + $0xc0] sm:$0xff]
      %v224 = vld [vmem:[%s192 + $0xc8] sm:$0xff]
      %v225 = vld [vmem:[%s192 + $0xd0] sm:$0xff]
      %v226 = vld [vmem:[%s192 + $0xd8] sm:$0xff]
      %v227 = vld [vmem:[%s192 + $0xe0] sm:$0xff]
      %v228 = vld [vmem:[%s192 + $0xe8] sm:$0xff]
      %v229 = vpack.c.bf16 %v201, %v199
      %v230 = vpack.c.bf16 %v202, %v200
      %v231 = vpack.c.bf16 %v205, %v203
      %v232 = vpack.c.bf16 %v206, %v204
      %v233 = vpack.c.bf16 %v209, %v207
      %v234 = vpack.c.bf16 %v210, %v208
      %v235 = vpack.c.bf16 %v213, %v211
      %v236 = vpack.c.bf16 %v214, %v212
      %v237 = vpack.c.bf16 %v217, %v215
      %v238 = vpack.c.bf16 %v218, %v216
      %v239 = vpack.c.bf16 %v221, %v219
      %v240 = vpack.c.bf16 %v222, %v220
      %v241 = vpack.c.bf16 %v225, %v223
      %v242 = vpack.c.bf16 %v226, %v224
      %v243 = vpack.c.bf16 %v227, %v227
      %v244 = vpack.c.bf16 %v228, %v228
      %v245 = vld [vmem:[%s1] sm:$0xf]
      %v246 = vld [vmem:[%s1 + $0x4] sm:$0xf]
      %v247 = vld [vmem:[%s1 + $0x8] sm:$0xf]
      %v248 = vld [vmem:[%s1 + $0xc] sm:$0xf]
      %v249 = vld [vmem:[%s1 + $0x10] sm:$0xf]
      %v250 = vld [vmem:[%s1 + $0x14] sm:$0xf]
      %v251 = vld [vmem:[%s1 + $0x18] sm:$0xf]
      %v252 = vld [vmem:[%s1 + $0x1c] sm:$0xf]
      %v253 = vld [vmem:[%s1 + $0x20] sm:$0xf]
      %v254 = vld [vmem:[%s1 + $0x24] sm:$0xf]
      %v255 = vld [vmem:[%s1 + $0x28] sm:$0xf]
      %v256 = vld [vmem:[%s1 + $0x2c] sm:$0xf]
      %v257 = vld [vmem:[%s1 + $0x30] sm:$0xf]
      %v258 = vld [vmem:[%s1 + $0x34] sm:$0xf]
      %v259 = vld [vmem:[%s1 + $0x38] sm:$0xf]
      %v260 = vld [vmem:[%s1 + $0x3c] sm:$0xf]
      %v261 = vld [vmem:[%s1 + $0x40] sm:$0xf]
      %v262 = vld [vmem:[%s1 + $0x44] sm:$0xf]
      %v263 = vld [vmem:[%s1 + $0x48] sm:$0xf]
      %v264 = vld [vmem:[%s1 + $0x4c] sm:$0xf]
      %v265 = vld [vmem:[%s1 + $0x50] sm:$0xf]
      %v266 = vld [vmem:[%s1 + $0x54] sm:$0xf]
      %v267 = vld [vmem:[%s1 + $0x58] sm:$0xf]
      %v268 = vld [vmem:[%s1 + $0x5c] sm:$0xf]
      %v269 = vld [vmem:[%s1 + $0x60] sm:$0xf]
      %v270 = vld [vmem:[%s1 + $0x64] sm:$0xf]
      %v271 = vld [vmem:[%s1 + $0x68] sm:$0xf]
      %v272 = vld [vmem:[%s1 + $0x6c] sm:$0xf]
      %v273 = vld [vmem:[%s1 + $0x70] sm:$0xf]
      %v274 = vld [vmem:[%s1 + $0x74] sm:$0xf]
      %v275 = vld [vmem:[%s1 + $0x78] sm:$0xf]
      %v276 = vld [vmem:[%s1 + $0x7c] sm:$0xf]
      %v277 = vld [vmem:[%s192] sm:$0xfe]
      %v278 = vld [vmem:[%s192 + $0x8] sm:$0xfe]
      %v279 = vld [vmem:[%s192 + $0x10] sm:$0xff]
      %v280 = vld [vmem:[%s192 + $0x18] sm:$0xff]
      %v281 = vld [vmem:[%s192 + $0x20] sm:$0xff]
      %v282 = vld [vmem:[%s192 + $0x28] sm:$0xff]
      %v283 = vld [vmem:[%s192 + $0x30] sm:$0xff]
      %v284 = vld [vmem:[%s192 + $0x38] sm:$0xff]
      %v285 = vld [vmem:[%s192 + $0x40] sm:$0xff]
      %v286 = vld [vmem:[%s192 + $0x48] sm:$0xff]
      %v287 = vld [vmem:[%s192 + $0x50] sm:$0xff]
      %v288 = vld [vmem:[%s192 + $0x58] sm:$0xff]
      %v289 = vld [vmem:[%s192 + $0x60] sm:$0xff]
      %v290 = vld [vmem:[%s192 + $0x68] sm:$0xff]
      %v291 = vld [vmem:[%s192 + $0x70] sm:$0xff]
      %v292 = vld [vmem:[%s192 + $0x78] sm:$0xff]
      %v293 = vld [vmem:[%s192 + $0x80] sm:$0xff]
      %v294 = vld [vmem:[%s192 + $0x88] sm:$0xff]
      %v295 = vld [vmem:[%s192 + $0x90] sm:$0xff]
      %v296 = vld [vmem:[%s192 + $0x98] sm:$0xff]
      %v297 = vld [vmem:[%s192 + $0xa0] sm:$0xff]
      %v298 = vld [vmem:[%s192 + $0xa8] sm:$0xff]
      %v299 = vld [vmem:[%s192 + $0xb0] sm:$0xff]
      %v300 = vld [vmem:[%s192 + $0xb8] sm:$0xff]
      %v301 = vld [vmem:[%s192 + $0xc0] sm:$0xff]
      %v302 = vld [vmem:[%s192 + $0xc8] sm:$0xff]
      %v303 = vld [vmem:[%s192 + $0xd0] sm:$0xff]
      %v304 = vld [vmem:[%s192 + $0xd8] sm:$0xff]
      %v305 = vld [vmem:[%s192 + $0xe0] sm:$0xff]
      %v306 = vld [vmem:[%s192 + $0xe8] sm:$0xff]
      %v307 = vld [vmem:[%s192 + $0xf0] sm:$0x1]
      %v308 = vld [vmem:[%s192 + $0xf8] sm:$0x1]
      %v309 = vpack.c.bf16 %v279, %v277
      %v310 = vpack.c.bf16 %v280, %v278
      %v311 = vpack.c.bf16 %v283, %v281
      %v312 = vpack.c.bf16 %v284, %v282
      %v313 = vpack.c.bf16 %v287, %v285
      %v314 = vpack.c.bf16 %v288, %v286
      %v315 = vpack.c.bf16 %v291, %v289
      %v316 = vpack.c.bf16 %v292, %v290
      %v317 = vpack.c.bf16 %v295, %v293
      %v318 = vpack.c.bf16 %v296, %v294
      %v319 = vpack.c.bf16 %v299, %v297
      %v320 = vpack.c.bf16 %v300, %v298
      %v321 = vpack.c.bf16 %v303, %v301
      %v322 = vpack.c.bf16 %v304, %v302
      %v323 = vpack.c.bf16 %v307, %v305
      %v324 = vpack.c.bf16 %v308, %v306
      %s325 = scalar_lea.vmem %s1, 128
      %v326 = vld [vmem:[%s325] sm:$0xf]
      %v327 = vld [vmem:[%s325 + $0x4] sm:$0xf]
      %v328 = vld [vmem:[%s325 + $0x8] sm:$0xf]
      %v329 = vld [vmem:[%s325 + $0xc] sm:$0xf]
      %v330 = vld [vmem:[%s325 + $0x10] sm:$0xf]
      %v331 = vld [vmem:[%s325 + $0x14] sm:$0xf]
      %v332 = vld [vmem:[%s325 + $0x18] sm:$0xf]
      %v333 = vld [vmem:[%s325 + $0x1c] sm:$0xf]
      %v334 = vld [vmem:[%s325 + $0x20] sm:$0xf]
      %v335 = vld [vmem:[%s325 + $0x24] sm:$0xf]
      %v336 = vld [vmem:[%s325 + $0x28] sm:$0xf]
      %v337 = vld [vmem:[%s325 + $0x2c] sm:$0xf]
      %v338 = vld [vmem:[%s325 + $0x30] sm:$0xf]
      %v339 = vld [vmem:[%s325 + $0x34] sm:$0xf]
      %v340 = vld [vmem:[%s325 + $0x38] sm:$0xf]
      %v341 = vld [vmem:[%s325 + $0x3c] sm:$0xf]
      %v342 = vld [vmem:[%s325 + $0x40] sm:$0xf]
      %v343 = vld [vmem:[%s325 + $0x44] sm:$0xf]
      %v344 = vld [vmem:[%s325 + $0x48] sm:$0xf]
      %v345 = vld [vmem:[%s325 + $0x4c] sm:$0xf]
      %v346 = vld [vmem:[%s325 + $0x50] sm:$0xf]
      %v347 = vld [vmem:[%s325 + $0x54] sm:$0xf]
      %v348 = vld [vmem:[%s325 + $0x58] sm:$0xf]
      %v349 = vld [vmem:[%s325 + $0x5c] sm:$0xf]
      %v350 = vld [vmem:[%s325 + $0x60] sm:$0xf]
      %v351 = vld [vmem:[%s325 + $0x64] sm:$0xf]
      %v352 = vld [vmem:[%s325 + $0x68] sm:$0xf]
      %v353 = vld [vmem:[%s325 + $0x6c] sm:$0xf]
      %v354 = vld [vmem:[%s325 + $0x70] sm:$0xf]
      %v355 = vld [vmem:[%s325 + $0x74] sm:$0xf]
      %v356 = vld [vmem:[%s325 + $0x78] sm:$0xf]
      %v357 = vld [vmem:[%s325 + $0x7c] sm:$0xf]
      %vm358 = vsmask.f32 7424
      %v360 = vshrl.u32 %v309, 16
      %v362 = vshll.u32 %v309, 16
      %v364 = vrot.slane %v362, 1
      %v365 = vor.u32 %v360, %v364
      %v367 = vshll.u32 %v311, 16
      %v369 = vrot.slane %v367, 1
      %v370 = vsel %vm358, %v365, %v369
      %v372 = vshrl.u32 %v310, 16
      %v374 = vshll.u32 %v310, 16
      %v376 = vrot.slane %v374, 1
      %v377 = vor.u32 %v372, %v376
      %v379 = vshll.u32 %v312, 16
      %v381 = vrot.slane %v379, 1
      %v382 = vsel %vm358, %v377, %v381
      %v383 = vshrl.u32 %v311, 16
      %v385 = vor.u32 %v383, %v369
      %v387 = vshll.u32 %v313, 16
      %v389 = vrot.slane %v387, 1
      %v390 = vsel %vm358, %v385, %v389
      %v391 = vshrl.u32 %v312, 16
      %v393 = vor.u32 %v391, %v381
      %v395 = vshll.u32 %v314, 16
      %v397 = vrot.slane %v395, 1
      %v398 = vsel %vm358, %v393, %v397
      %v399 = vshrl.u32 %v313, 16
      %v401 = vor.u32 %v399, %v389
      %v403 = vshll.u32 %v315, 16
      %v405 = vrot.slane %v403, 1
      %v406 = vsel %vm358, %v401, %v405
      %v407 = vshrl.u32 %v314, 16
      %v409 = vor.u32 %v407, %v397
      %v411 = vshll.u32 %v316, 16
      %v413 = vrot.slane %v411, 1
      %v414 = vsel %vm358, %v409, %v413
      %v415 = vshrl.u32 %v315, 16
      %v417 = vor.u32 %v415, %v405
      %v419 = vshll.u32 %v317, 16
      %v421 = vrot.slane %v419, 1
      %v422 = vsel %vm358, %v417, %v421
      %v423 = vshrl.u32 %v316, 16
      %v425 = vor.u32 %v423, %v413
      %v427 = vshll.u32 %v318, 16
      %v429 = vrot.slane %v427, 1
      %v430 = vsel %vm358, %v425, %v429
      %v431 = vshrl.u32 %v317, 16
      %v433 = vor.u32 %v431, %v421
      %v435 = vshll.u32 %v319, 16
      %v437 = vrot.slane %v435, 1
      %v438 = vsel %vm358, %v433, %v437
      %v439 = vshrl.u32 %v318, 16
      %v441 = vor.u32 %v439, %v429
      %v443 = vshll.u32 %v320, 16
      %v445 = vrot.slane %v443, 1
      %v446 = vsel %vm358, %v441, %v445
      %v447 = vshrl.u32 %v319, 16
      %v449 = vor.u32 %v447, %v437
      %v451 = vshll.u32 %v321, 16
      %v453 = vrot.slane %v451, 1
      %v454 = vsel %vm358, %v449, %v453
      %v455 = vshrl.u32 %v320, 16
      %v457 = vor.u32 %v455, %v445
      %v459 = vshll.u32 %v322, 16
      %v461 = vrot.slane %v459, 1
      %v462 = vsel %vm358, %v457, %v461
      %v463 = vshrl.u32 %v321, 16
      %v465 = vor.u32 %v463, %v453
      %v467 = vshll.u32 %v323, 16
      %v469 = vrot.slane %v467, 1
      %v470 = vsel %vm358, %v465, %v469
      %v471 = vshrl.u32 %v322, 16
      %v473 = vor.u32 %v471, %v461
      %v475 = vshll.u32 %v324, 16
      %v477 = vrot.slane %v475, 1
      %v478 = vsel %vm358, %v473, %v477
      %v479 = vshrl.u32 %v323, 16
      %v481 = vor.u32 %v479, %v469
      %v482 = vshrl.u32 %v324, 16
      %v484 = vor.u32 %v482, %v477
      %v533 = vunpack.c.l.b16 %v326
      %v534 = vunpack.c.l.b16 %v327
      %v535 = vunpack.c.l.b16 %v328
      %v536 = vunpack.c.l.b16 %v329
      %v537 = vunpack.c.l.b16 %v330
      %v538 = vunpack.c.l.b16 %v331
      %v539 = vunpack.c.l.b16 %v332
      %v540 = vunpack.c.l.b16 %v333
      %v541 = vunpack.c.l.b16 %v334
      %v542 = vunpack.c.l.b16 %v335
      %v543 = vunpack.c.l.b16 %v336
      %v544 = vunpack.c.l.b16 %v337
      %v545 = vunpack.c.l.b16 %v338
      %v546 = vunpack.c.l.b16 %v339
      %v547 = vunpack.c.l.b16 %v340
      %v548 = vunpack.c.l.b16 %v341
      %v549 = vunpack.c.l.b16 %v342
      %v550 = vunpack.c.l.b16 %v343
      %v551 = vunpack.c.l.b16 %v344
      %v552 = vunpack.c.l.b16 %v345
      %v553 = vunpack.c.l.b16 %v346
      %v554 = vunpack.c.l.b16 %v347
      %v555 = vunpack.c.l.b16 %v348
      %v556 = vunpack.c.l.b16 %v349
      %v557 = vunpack.c.l.b16 %v350
      %v558 = vunpack.c.l.b16 %v351
      %v559 = vunpack.c.l.b16 %v352
      %v560 = vunpack.c.l.b16 %v353
      %v561 = vunpack.c.l.b16 %v354
      %v562 = vunpack.c.l.b16 %v355
      %v563 = vunpack.c.l.b16 %v356
      %v564 = vunpack.c.l.b16 %v357
      %v565 = vpack.c.b16 %v534, %v533
      %v566 = vpack.c.b16 %v536, %v535
      %v567 = vpack.c.b16 %v538, %v537
      %v568 = vpack.c.b16 %v540, %v539
      %v569 = vpack.c.b16 %v542, %v541
      %v570 = vpack.c.b16 %v544, %v543
      %v571 = vpack.c.b16 %v546, %v545
      %v572 = vpack.c.b16 %v548, %v547
      %v573 = vpack.c.b16 %v550, %v549
      %v574 = vpack.c.b16 %v552, %v551
      %v575 = vpack.c.b16 %v554, %v553
      %v576 = vpack.c.b16 %v556, %v555
      %v577 = vpack.c.b16 %v558, %v557
      %v578 = vpack.c.b16 %v560, %v559
      %v579 = vpack.c.b16 %v562, %v561
      %v580 = vpack.c.b16 %v564, %v563
      %597 = vmatprep.subr.bf16.mxu0 0
      %598 = vmatpush1.bf16.msra.mxu0 %v565
      %599 = vmatprep.subr.bf16.mxu0 0
      %600 = vmatpush1.bf16.msra.mxu0 %v566
      %601 = vmatprep.subr.bf16.mxu0 0
      %602 = vmatpush1.bf16.msra.mxu0 %v567
      %603 = vmatprep.subr.bf16.mxu0 0
      %604 = vmatpush1.bf16.msra.mxu0 %v568
      %605 = vmatprep.subr.bf16.mxu0 0
      %606 = vmatpush1.bf16.msra.mxu0 %v569
      %607 = vmatprep.subr.bf16.mxu0 0
      %608 = vmatpush1.bf16.msra.mxu0 %v570
      %609 = vmatprep.subr.bf16.mxu0 0
      %610 = vmatpush1.bf16.msra.mxu0 %v571
      %611 = vmatprep.subr.bf16.mxu0 0
      %612 = vmatpush1.bf16.msra.mxu0 %v572
      %613 = vmatprep.subr.bf16.mxu0 0
      %614 = vmatpush1.bf16.msra.mxu0 %v573
      %615 = vmatprep.subr.bf16.mxu0 0
      %616 = vmatpush1.bf16.msra.mxu0 %v574
      %617 = vmatprep.subr.bf16.mxu0 0
      %618 = vmatpush1.bf16.msra.mxu0 %v575
      %619 = vmatprep.subr.bf16.mxu0 0
      %620 = vmatpush1.bf16.msra.mxu0 %v576
      %621 = vmatprep.subr.bf16.mxu0 0
      %622 = vmatpush1.bf16.msra.mxu0 %v577
      %623 = vmatprep.subr.bf16.mxu0 0
      %624 = vmatpush1.bf16.msra.mxu0 %v578
      %625 = vmatprep.subr.bf16.mxu0 0
      %626 = vmatpush1.bf16.msra.mxu0 %v579
      %627 = vmatprep.subr.bf16.mxu0 0
      %628 = vmatpush1.bf16.msra.mxu0 %v580
      %629 = vmatprep.mubr.bf16.mxu0 %v382
      %630 = vmatmul.mubr.bf16.gmra.mrb[0].mxu0 %v370
      %v631 = vpop.f32.mrb[0].mxu0
      %v632 = vadd.f32 0.0, %v631
      %v633 = vpop.f32.mrb[0].mxu0
      %v634 = vpop.f32.mrb[0].mxu0
      %v635 = vadd.f32 0.0, %v634
      %v636 = vpop.f32.mrb[0].mxu0
      %637 = vmatprep.mubr.bf16.mxu0 %v398
      %638 = vmatmul.mubr.bf16.gmra.mrb[0].mxu0 %v390
      %v639 = vpop.f32.mrb[0].mxu0
      %v640 = vadd.f32 0.0, %v639
      %v641 = vpop.f32.mrb[0].mxu0
      %v642 = vpop.f32.mrb[0].mxu0
      %v643 = vadd.f32 0.0, %v642
      %v644 = vpop.f32.mrb[0].mxu0
      %645 = vmatprep.mubr.bf16.mxu0 %v414
      %646 = vmatmul.mubr.bf16.gmra.mrb[0].mxu0 %v406
      %v647 = vpop.f32.mrb[0].mxu0
      %v648 = vadd.f32 0.0, %v647
      %v649 = vpop.f32.mrb[0].mxu0
      %v650 = vpop.f32.mrb[0].mxu0
      %v651 = vadd.f32 0.0, %v650
      %v652 = vpop.f32.mrb[0].mxu0
      %653 = vmatprep.mubr.bf16.mxu0 %v430
      %654 = vmatmul.mubr.bf16.gmra.mrb[0].mxu0 %v422
      %v655 = vpop.f32.mrb[0].mxu0
      %v656 = vadd.f32 0.0, %v655
      %v657 = vpop.f32.mrb[0].mxu0
      %v658 = vpop.f32.mrb[0].mxu0
      %v659 = vadd.f32 0.0, %v658
      %v660 = vpop.f32.mrb[0].mxu0
      %661 = vmatprep.mubr.bf16.mxu0 %v446
      %662 = vmatmul.mubr.bf16.gmra.mrb[0].mxu0 %v438
      %v663 = vpop.f32.mrb[0].mxu0
      %v664 = vadd.f32 0.0, %v663
      %v665 = vpop.f32.mrb[0].mxu0
      %v666 = vpop.f32.mrb[0].mxu0
      %v667 = vadd.f32 0.0, %v666
      %v668 = vpop.f32.mrb[0].mxu0
      %669 = vmatprep.mubr.bf16.mxu0 %v462
      %670 = vmatmul.mubr.bf16.gmra.mrb[0].mxu0 %v454
      %v671 = vpop.f32.mrb[0].mxu0
      %v672 = vadd.f32 0.0, %v671
      %v673 = vpop.f32.mrb[0].mxu0
      %v674 = vpop.f32.mrb[0].mxu0
      %v675 = vadd.f32 0.0, %v674
      %v676 = vpop.f32.mrb[0].mxu0
      %677 = vmatprep.mubr.bf16.mxu0 %v478
      %678 = vmatmul.mubr.bf16.gmra.mrb[0].mxu0 %v470
      %v679 = vpop.f32.mrb[0].mxu0
      %v680 = vadd.f32 0.0, %v679
      %v681 = vpop.f32.mrb[0].mxu0
      %v682 = vpop.f32.mrb[0].mxu0
      %v683 = vadd.f32 0.0, %v682
      %v684 = vpop.f32.mrb[0].mxu0
      %685 = vmatprep.mubr.bf16.mxu0 %v484
      %686 = vmatmul.mubr.bf16.gmra.mrb[0].mxu0 %v481
      %v687 = vpop.f32.mrb[0].mxu0
      %v688 = vadd.f32 0.0, %v687
      %v689 = vpop.f32.mrb[0].mxu0
      %v690 = vpop.f32.mrb[0].mxu0
      %v691 = vpop.f32.mrb[0].mxu0
      %692 = vdwg.mxu0
      %v725 = vunpack.c.l.b16 %v245
      %v726 = vunpack.c.l.b16 %v246
      %v727 = vunpack.c.l.b16 %v247
      %v728 = vunpack.c.l.b16 %v248
      %v729 = vunpack.c.l.b16 %v249
      %v730 = vunpack.c.l.b16 %v250
      %v731 = vunpack.c.l.b16 %v251
      %v732 = vunpack.c.l.b16 %v252
      %v733 = vunpack.c.l.b16 %v253
      %v734 = vunpack.c.l.b16 %v254
      %v735 = vunpack.c.l.b16 %v255
      %v736 = vunpack.c.l.b16 %v256
      %v737 = vunpack.c.l.b16 %v257
      %v738 = vunpack.c.l.b16 %v258
      %v739 = vunpack.c.l.b16 %v259
      %v740 = vunpack.c.l.b16 %v260
      %v741 = vunpack.c.l.b16 %v261
      %v742 = vunpack.c.l.b16 %v262
      %v743 = vunpack.c.l.b16 %v263
      %v744 = vunpack.c.l.b16 %v264
      %v745 = vunpack.c.l.b16 %v265
      %v746 = vunpack.c.l.b16 %v266
      %v747 = vunpack.c.l.b16 %v267
      %v748 = vunpack.c.l.b16 %v268
      %v749 = vunpack.c.l.b16 %v269
      %v750 = vunpack.c.l.b16 %v270
      %v751 = vunpack.c.l.b16 %v271
      %v752 = vunpack.c.l.b16 %v272
      %v753 = vunpack.c.l.b16 %v273
      %v754 = vunpack.c.l.b16 %v274
      %v755 = vunpack.c.l.b16 %v275
      %v756 = vunpack.c.l.b16 %v276
      %v757 = vpack.c.b16 %v726, %v725
      %v758 = vpack.c.b16 %v728, %v727
      %v759 = vpack.c.b16 %v730, %v729
      %v760 = vpack.c.b16 %v732, %v731
      %v761 = vpack.c.b16 %v734, %v733
      %v762 = vpack.c.b16 %v736, %v735
      %v763 = vpack.c.b16 %v738, %v737
      %v764 = vpack.c.b16 %v740, %v739
      %v765 = vpack.c.b16 %v742, %v741
      %v766 = vpack.c.b16 %v744, %v743
      %v767 = vpack.c.b16 %v746, %v745
      %v768 = vpack.c.b16 %v748, %v747
      %v769 = vpack.c.b16 %v750, %v749
      %v770 = vpack.c.b16 %v752, %v751
      %v771 = vpack.c.b16 %v754, %v753
      %v772 = vpack.c.b16 %v756, %v755
      %789 = vmatprep.subr.bf16.mxu0 0
      %790 = vmatpush1.bf16.msra.mxu0 %v757
      %791 = vmatprep.subr.bf16.mxu0 0
      %792 = vmatpush1.bf16.msra.mxu0 %v758
      %793 = vmatprep.subr.bf16.mxu0 0
      %794 = vmatpush1.bf16.msra.mxu0 %v759
      %795 = vmatprep.subr.bf16.mxu0 0
      %796 = vmatpush1.bf16.msra.mxu0 %v760
      %797 = vmatprep.subr.bf16.mxu0 0
      %798 = vmatpush1.bf16.msra.mxu0 %v761
      %799 = vmatprep.subr.bf16.mxu0 0
      %800 = vmatpush1.bf16.msra.mxu0 %v762
      %801 = vmatprep.subr.bf16.mxu0 0
      %802 = vmatpush1.bf16.msra.mxu0 %v763
      %803 = vmatprep.subr.bf16.mxu0 0
      %804 = vmatpush1.bf16.msra.mxu0 %v764
      %805 = vmatprep.subr.bf16.mxu0 0
      %806 = vmatpush1.bf16.msra.mxu0 %v765
      %807 = vmatprep.subr.bf16.mxu0 0
      %808 = vmatpush1.bf16.msra.mxu0 %v766
      %809 = vmatprep.subr.bf16.mxu0 0
      %810 = vmatpush1.bf16.msra.mxu0 %v767
      %811 = vmatprep.subr.bf16.mxu0 0
      %812 = vmatpush1.bf16.msra.mxu0 %v768
      %813 = vmatprep.subr.bf16.mxu0 0
      %814 = vmatpush1.bf16.msra.mxu0 %v769
      %815 = vmatprep.subr.bf16.mxu0 0
      %816 = vmatpush1.bf16.msra.mxu0 %v770
      %817 = vmatprep.subr.bf16.mxu0 0
      %818 = vmatpush1.bf16.msra.mxu0 %v771
      %819 = vmatprep.subr.bf16.mxu0 0
      %820 = vmatpush1.bf16.msra.mxu0 %v772
      %821 = vmatprep.mubr.bf16.mxu0 %v230
      %822 = vmatmul.mubr.bf16.gmra.mrb[0].mxu0 %v229
      %v823 = vpop.f32.mrb[0].mxu0
      %v824 = vadd.f32 %v632, %v823
      %v825 = vpop.f32.mrb[0].mxu0
      %v826 = vpop.f32.mrb[0].mxu0
      %v827 = vadd.f32 %v635, %v826
      %v828 = vpop.f32.mrb[0].mxu0
      %829 = vmatprep.mubr.bf16.mxu0 %v232
      %830 = vmatmul.mubr.bf16.gmra.mrb[0].mxu0 %v231
      %v831 = vpop.f32.mrb[0].mxu0
      %v832 = vadd.f32 %v640, %v831
      %v833 = vpop.f32.mrb[0].mxu0
      %v834 = vpop.f32.mrb[0].mxu0
      %v835 = vadd.f32 %v643, %v834
      %v836 = vpop.f32.mrb[0].mxu0
      %837 = vmatprep.mubr.bf16.mxu0 %v234
      %838 = vmatmul.mubr.bf16.gmra.mrb[0].mxu0 %v233
      %v839 = vpop.f32.mrb[0].mxu0
      %v840 = vadd.f32 %v648, %v839
      %v841 = vpop.f32.mrb[0].mxu0
      %v842 = vpop.f32.mrb[0].mxu0
      %v843 = vadd.f32 %v651, %v842
      %v844 = vpop.f32.mrb[0].mxu0
      %845 = vmatprep.mubr.bf16.mxu0 %v236
      %846 = vmatmul.mubr.bf16.gmra.mrb[0].mxu0 %v235
      %v847 = vpop.f32.mrb[0].mxu0
      %v848 = vadd.f32 %v656, %v847
      %v849 = vpop.f32.mrb[0].mxu0
      %v850 = vpop.f32.mrb[0].mxu0
      %v851 = vadd.f32 %v659, %v850
      %v852 = vpop.f32.mrb[0].mxu0
      %853 = vmatprep.mubr.bf16.mxu0 %v238
      %854 = vmatmul.mubr.bf16.gmra.mrb[0].mxu0 %v237
      %v855 = vpop.f32.mrb[0].mxu0
      %v856 = vadd.f32 %v664, %v855
      %v857 = vpop.f32.mrb[0].mxu0
      %v858 = vpop.f32.mrb[0].mxu0
      %v859 = vadd.f32 %v667, %v858
      %v860 = vpop.f32.mrb[0].mxu0
      %861 = vmatprep.mubr.bf16.mxu0 %v240
      %862 = vmatmul.mubr.bf16.gmra.mrb[0].mxu0 %v239
      %v863 = vpop.f32.mrb[0].mxu0
      %v864 = vadd.f32 %v672, %v863
      %v865 = vpop.f32.mrb[0].mxu0
      %v866 = vpop.f32.mrb[0].mxu0
      %v867 = vadd.f32 %v675, %v866
      %v868 = vpop.f32.mrb[0].mxu0
      %869 = vmatprep.mubr.bf16.mxu0 %v242
      %870 = vmatmul.mubr.bf16.gmra.mrb[0].mxu0 %v241
      %v871 = vpop.f32.mrb[0].mxu0
      %v872 = vadd.f32 %v680, %v871
      %v873 = vpop.f32.mrb[0].mxu0
      %v874 = vpop.f32.mrb[0].mxu0
      %v875 = vadd.f32 %v683, %v874
      %v876 = vpop.f32.mrb[0].mxu0
      %877 = vmatprep.mubr.bf16.mxu0 %v244
      %878 = vmatmul.mubr.bf16.gmra.mrb[0].mxu0 %v243
      %v879 = vpop.f32.mrb[0].mxu0
      %v880 = vadd.f32 %v688, %v879
      %v881 = vpop.f32.mrb[0].mxu0
      %v882 = vpop.f32.mrb[0].mxu0
      %v883 = vpop.f32.mrb[0].mxu0
      %884 = vdwg.mxu0
      %v885 = vld [vmem:[%s192] sm:$0xfc]
      %v886 = vld [vmem:[%s192 + $0x8] sm:$0xfc]
      %v887 = vld [vmem:[%s192 + $0xf0] sm:$0x3]
      %v888 = vld [vmem:[%s192 + $0xf8] sm:$0x3]
      %v889 = vpack.c.bf16 %v279, %v885
      %v890 = vpack.c.bf16 %v280, %v886
      %v891 = vpack.c.bf16 %v887, %v305
      %v892 = vpack.c.bf16 %v888, %v306
      %s893 = scalar_lea.vmem %s1, 256
      %v894 = vld [vmem:[%s893] sm:$0xf]
      %v895 = vld [vmem:[%s893 + $0x4] sm:$0xf]
      %v896 = vld [vmem:[%s893 + $0x8] sm:$0xf]
      %v897 = vld [vmem:[%s893 + $0xc] sm:$0xf]
      %v898 = vld [vmem:[%s893 + $0x10] sm:$0xf]
      %v899 = vld [vmem:[%s893 + $0x14] sm:$0xf]
      %v900 = vld [vmem:[%s893 + $0x18] sm:$0xf]
      %v901 = vld [vmem:[%s893 + $0x1c] sm:$0xf]
      %v902 = vld [vmem:[%s893 + $0x20] sm:$0xf]
      %v903 = vld [vmem:[%s893 + $0x24] sm:$0xf]
      %v904 = vld [vmem:[%s893 + $0x28] sm:$0xf]
      %v905 = vld [vmem:[%s893 + $0x2c] sm:$0xf]
      %v906 = vld [vmem:[%s893 + $0x30] sm:$0xf]
      %v907 = vld [vmem:[%s893 + $0x34] sm:$0xf]
      %v908 = vld [vmem:[%s893 + $0x38] sm:$0xf]
      %v909 = vld [vmem:[%s893 + $0x3c] sm:$0xf]
      %v910 = vld [vmem:[%s893 + $0x40] sm:$0xf]
      %v911 = vld [vmem:[%s893 + $0x44] sm:$0xf]
      %v912 = vld [vmem:[%s893 + $0x48] sm:$0xf]
      %v913 = vld [vmem:[%s893 + $0x4c] sm:$0xf]
      %v914 = vld [vmem:[%s893 + $0x50] sm:$0xf]
      %v915 = vld [vmem:[%s893 + $0x54] sm:$0xf]
      %v916 = vld [vmem:[%s893 + $0x58] sm:$0xf]
      %v917 = vld [vmem:[%s893 + $0x5c] sm:$0xf]
      %v918 = vld [vmem:[%s893 + $0x60] sm:$0xf]
      %v919 = vld [vmem:[%s893 + $0x64] sm:$0xf]
      %v920 = vld [vmem:[%s893 + $0x68] sm:$0xf]
      %v921 = vld [vmem:[%s893 + $0x6c] sm:$0xf]
      %v922 = vld [vmem:[%s893 + $0x70] sm:$0xf]
      %v923 = vld [vmem:[%s893 + $0x74] sm:$0xf]
      %v924 = vld [vmem:[%s893 + $0x78] sm:$0xf]
      %v925 = vld [vmem:[%s893 + $0x7c] sm:$0xf]
      %vm942 = vcmask 1046528
      %v943 = vrot.slane %v889, 1
      %v944 = vrot.slane %v311, 1
      %v945 = vsel %vm942, %v943, %v944
      %v946 = vrot.slane %v890, 1
      %v947 = vrot.slane %v312, 1
      %v948 = vsel %vm942, %v946, %v947
      %v949 = vrot.slane %v313, 1
      %v950 = vsel %vm942, %v944, %v949
      %v951 = vrot.slane %v314, 1
      %v952 = vsel %vm942, %v947, %v951
      %v953 = vrot.slane %v315, 1
      %v954 = vsel %vm942, %v949, %v953
      %v955 = vrot.slane %v316, 1
      %v956 = vsel %vm942, %v951, %v955
      %v957 = vrot.slane %v317, 1
      %v958 = vsel %vm942, %v953, %v957
      %v959 = vrot.slane %v318, 1
      %v960 = vsel %vm942, %v955, %v959
      %v961 = vrot.slane %v319, 1
      %v962 = vsel %vm942, %v957, %v961
      %v963 = vrot.slane %v320, 1
      %v964 = vsel %vm942, %v959, %v963
      %v965 = vrot.slane %v321, 1
      %v966 = vsel %vm942, %v961, %v965
      %v967 = vrot.slane %v322, 1
      %v968 = vsel %vm942, %v963, %v967
      %v969 = vrot.slane %v891, 1
      %v970 = vsel %vm942, %v965, %v969
      %v971 = vrot.slane %v892, 1
      %v972 = vsel %vm942, %v967, %v971
      %v1021 = vunpack.c.l.b16 %v894
      %v1022 = vunpack.c.l.b16 %v895
      %v1023 = vunpack.c.l.b16 %v896
      %v1024 = vunpack.c.l.b16 %v897
      %v1025 = vunpack.c.l.b16 %v898
      %v1026 = vunpack.c.l.b16 %v899
      %v1027 = vunpack.c.l.b16 %v900
      %v1028 = vunpack.c.l.b16 %v901
      %v1029 = vunpack.c.l.b16 %v902
      %v1030 = vunpack.c.l.b16 %v903
      %v1031 = vunpack.c.l.b16 %v904
      %v1032 = vunpack.c.l.b16 %v905
      %v1033 = vunpack.c.l.b16 %v906
      %v1034 = vunpack.c.l.b16 %v907
      %v1035 = vunpack.c.l.b16 %v908
      %v1036 = vunpack.c.l.b16 %v909
      %v1037 = vunpack.c.l.b16 %v910
      %v1038 = vunpack.c.l.b16 %v911
      %v1039 = vunpack.c.l.b16 %v912
      %v1040 = vunpack.c.l.b16 %v913
      %v1041 = vunpack.c.l.b16 %v914
      %v1042 = vunpack.c.l.b16 %v915
      %v1043 = vunpack.c.l.b16 %v916
      %v1044 = vunpack.c.l.b16 %v917
      %v1045 = vunpack.c.l.b16 %v918
      %v1046 = vunpack.c.l.b16 %v919
      %v1047 = vunpack.c.l.b16 %v920
      %v1048 = vunpack.c.l.b16 %v921
      %v1049 = vunpack.c.l.b16 %v922
      %v1050 = vunpack.c.l.b16 %v923
      %v1051 = vunpack.c.l.b16 %v924
      %v1052 = vunpack.c.l.b16 %v925
      %v1053 = vpack.c.b16 %v1022, %v1021
      %v1054 = vpack.c.b16 %v1024, %v1023
      %v1055 = vpack.c.b16 %v1026, %v1025
      %v1056 = vpack.c.b16 %v1028, %v1027
      %v1057 = vpack.c.b16 %v1030, %v1029
      %v1058 = vpack.c.b16 %v1032, %v1031
      %v1059 = vpack.c.b16 %v1034, %v1033
      %v1060 = vpack.c.b16 %v1036, %v1035
      %v1061 = vpack.c.b16 %v1038, %v1037
      %v1062 = vpack.c.b16 %v1040, %v1039
      %v1063 = vpack.c.b16 %v1042, %v1041
      %v1064 = vpack.c.b16 %v1044, %v1043
      %v1065 = vpack.c.b16 %v1046, %v1045
      %v1066 = vpack.c.b16 %v1048, %v1047
      %v1067 = vpack.c.b16 %v1050, %v1049
      %v1068 = vpack.c.b16 %v1052, %v1051
      %1085 = vmatprep.subr.bf16.mxu0 0
      %1086 = vmatpush1.bf16.msra.mxu0 %v1053
      %1087 = vmatprep.subr.bf16.mxu0 0
      %1088 = vmatpush1.bf16.msra.mxu0 %v1054
      %1089 = vmatprep.subr.bf16.mxu0 0
      %1090 = vmatpush1.bf16.msra.mxu0 %v1055
      %1091 = vmatprep.subr.bf16.mxu0 0
      %1092 = vmatpush1.bf16.msra.mxu0 %v1056
      %1093 = vmatprep.subr.bf16.mxu0 0
      %1094 = vmatpush1.bf16.msra.mxu0 %v1057
      %1095 = vmatprep.subr.bf16.mxu0 0
      %1096 = vmatpush1.bf16.msra.mxu0 %v1058
      %1097 = vmatprep.subr.bf16.mxu0 0
      %1098 = vmatpush1.bf16.msra.mxu0 %v1059
      %1099 = vmatprep.subr.bf16.mxu0 0
      %1100 = vmatpush1.bf16.msra.mxu0 %v1060
      %1101 = vmatprep.subr.bf16.mxu0 0
      %1102 = vmatpush1.bf16.msra.mxu0 %v1061
      %1103 = vmatprep.subr.bf16.mxu0 0
      %1104 = vmatpush1.bf16.msra.mxu0 %v1062
      %1105 = vmatprep.subr.bf16.mxu0 0
      %1106 = vmatpush1.bf16.msra.mxu0 %v1063
      %1107 = vmatprep.subr.bf16.mxu0 0
      %1108 = vmatpush1.bf16.msra.mxu0 %v1064
      %1109 = vmatprep.subr.bf16.mxu0 0
      %1110 = vmatpush1.bf16.msra.mxu0 %v1065
      %1111 = vmatprep.subr.bf16.mxu0 0
      %1112 = vmatpush1.bf16.msra.mxu0 %v1066
      %1113 = vmatprep.subr.bf16.mxu0 0
      %1114 = vmatpush1.bf16.msra.mxu0 %v1067
      %1115 = vmatprep.subr.bf16.mxu0 0
      %1116 = vmatpush1.bf16.msra.mxu0 %v1068
      %1117 = vmatprep.mubr.bf16.mxu0 %v948
      %1118 = vmatmul.mubr.bf16.gmra.mrb[0].mxu0 %v945
      %v1119 = vpop.f32.mrb[0].mxu0
      %v1120 = vadd.f32 0.0, %v1119
      %v1121 = vpop.f32.mrb[0].mxu0
      %v1122 = vpop.f32.mrb[0].mxu0
      %v1123 = vadd.f32 0.0, %v1122
      %v1124 = vpop.f32.mrb[0].mxu0
      %1125 = vmatprep.mubr.bf16.mxu0 %v952
      %1126 = vmatmul.mubr.bf16.gmra.mrb[0].mxu0 %v950
      %v1127 = vpop.f32.mrb[0].mxu0
      %v1128 = vadd.f32 0.0, %v1127
      %v1129 = vpop.f32.mrb[0].mxu0
      %v1130 = vpop.f32.mrb[0].mxu0
      %v1131 = vadd.f32 0.0, %v1130
      %v1132 = vpop.f32.mrb[0].mxu0
      %1133 = vmatprep.mubr.bf16.mxu0 %v956
      %1134 = vmatmul.mubr.bf16.gmra.mrb[0].mxu0 %v954
      %v1135 = vpop.f32.mrb[0].mxu0
      %v1136 = vadd.f32 0.0, %v1135
      %v1137 = vpop.f32.mrb[0].mxu0
      %v1138 = vpop.f32.mrb[0].mxu0
      %v1139 = vadd.f32 0.0, %v1138
      %v1140 = vpop.f32.mrb[0].mxu0
      %1141 = vmatprep.mubr.bf16.mxu0 %v960
      %1142 = vmatmul.mubr.bf16.gmra.mrb[0].mxu0 %v958
      %v1143 = vpop.f32.mrb[0].mxu0
      %v1144 = vadd.f32 0.0, %v1143
      %v1145 = vpop.f32.mrb[0].mxu0
      %v1146 = vpop.f32.mrb[0].mxu0
      %v1147 = vadd.f32 0.0, %v1146
      %v1148 = vpop.f32.mrb[0].mxu0
      %1149 = vmatprep.mubr.bf16.mxu0 %v964
      %1150 = vmatmul.mubr.bf16.gmra.mrb[0].mxu0 %v962
      %v1151 = vpop.f32.mrb[0].mxu0
      %v1152 = vadd.f32 0.0, %v1151
      %v1153 = vpop.f32.mrb[0].mxu0
      %v1154 = vpop.f32.mrb[0].mxu0
      %v1155 = vadd.f32 0.0, %v1154
      %v1156 = vpop.f32.mrb[0].mxu0
      %1157 = vmatprep.mubr.bf16.mxu0 %v968
      %1158 = vmatmul.mubr.bf16.gmra.mrb[0].mxu0 %v966
      %v1159 = vpop.f32.mrb[0].mxu0
      %v1160 = vadd.f32 0.0, %v1159
      %v1161 = vpop.f32.mrb[0].mxu0
      %v1162 = vpop.f32.mrb[0].mxu0
      %v1163 = vadd.f32 0.0, %v1162
      %v1164 = vpop.f32.mrb[0].mxu0
      %1165 = vmatprep.mubr.bf16.mxu0 %v972
      %1166 = vmatmul.mubr.bf16.gmra.mrb[0].mxu0 %v970
      %v1167 = vpop.f32.mrb[0].mxu0
      %v1168 = vadd.f32 0.0, %v1167
      %v1169 = vpop.f32.mrb[0].mxu0
      %v1170 = vpop.f32.mrb[0].mxu0
      %v1171 = vadd.f32 0.0, %v1170
      %v1172 = vpop.f32.mrb[0].mxu0
      %1173 = vmatprep.mubr.bf16.mxu0 %v971
      %1174 = vmatmul.mubr.bf16.gmra.mrb[0].mxu0 %v969
      %v1175 = vpop.f32.mrb[0].mxu0
      %v1176 = vadd.f32 0.0, %v1175
      %v1177 = vpop.f32.mrb[0].mxu0
      %v1178 = vpop.f32.mrb[0].mxu0
      %v1179 = vpop.f32.mrb[0].mxu0
      %1180 = vdwg.mxu0
      %v1181 = vadd.f32 %v824, %v1120
      %v1182 = vadd.f32 %v827, %v1123
      %v1183 = vadd.f32 %v832, %v1128
      %v1184 = vadd.f32 %v835, %v1131
      %v1185 = vadd.f32 %v840, %v1136
      %v1186 = vadd.f32 %v843, %v1139
      %v1187 = vadd.f32 %v848, %v1144
      %v1188 = vadd.f32 %v851, %v1147
      %v1189 = vadd.f32 %v856, %v1152
      %v1190 = vadd.f32 %v859, %v1155
      %v1191 = vadd.f32 %v864, %v1160
      %v1192 = vadd.f32 %v867, %v1163
      %v1193 = vadd.f32 %v872, %v1168
      %v1194 = vadd.f32 %v875, %v1171
      %v1195 = vadd.f32 %v880, %v1176
      %v1196 = vld [vmem:[%s192] sm:$0xf8]
      %v1197 = vld [vmem:[%s192 + $0x8] sm:$0xf8]
      %v1198 = vld [vmem:[%s192 + $0xf0] sm:$0x7]
      %v1199 = vld [vmem:[%s192 + $0xf8] sm:$0x7]
      %v1200 = vpack.c.bf16 %v279, %v1196
      %v1201 = vpack.c.bf16 %v280, %v1197
      %v1202 = vpack.c.bf16 %v1198, %v305
      %v1203 = vpack.c.bf16 %v1199, %v306
      %s1204 = scalar_lea.vmem %s1, 384
      %v1205 = vld [vmem:[%s1204] sm:$0xf]
      %v1206 = vld [vmem:[%s1204 + $0x4] sm:$0xf]
      %v1207 = vld [vmem:[%s1204 + $0x8] sm:$0xf]
      %v1208 = vld [vmem:[%s1204 + $0xc] sm:$0xf]
      %v1209 = vld [vmem:[%s1204 + $0x10] sm:$0xf]
      %v1210 = vld [vmem:[%s1204 + $0x14] sm:$0xf]
      %v1211 = vld [vmem:[%s1204 + $0x18] sm:$0xf]
      %v1212 = vld [vmem:[%s1204 + $0x1c] sm:$0xf]
      %v1213 = vld [vmem:[%s1204 + $0x20] sm:$0xf]
      %v1214 = vld [vmem:[%s1204 + $0x24] sm:$0xf]
      %v1215 = vld [vmem:[%s1204 + $0x28] sm:$0xf]
      %v1216 = vld [vmem:[%s1204 + $0x2c] sm:$0xf]
      %v1217 = vld [vmem:[%s1204 + $0x30] sm:$0xf]
      %v1218 = vld [vmem:[%s1204 + $0x34] sm:$0xf]
      %v1219 = vld [vmem:[%s1204 + $0x38] sm:$0xf]
      %v1220 = vld [vmem:[%s1204 + $0x3c] sm:$0xf]
      %v1221 = vld [vmem:[%s1204 + $0x40] sm:$0xf]
      %v1222 = vld [vmem:[%s1204 + $0x44] sm:$0xf]
      %v1223 = vld [vmem:[%s1204 + $0x48] sm:$0xf]
      %v1224 = vld [vmem:[%s1204 + $0x4c] sm:$0xf]
      %v1225 = vld [vmem:[%s1204 + $0x50] sm:$0xf]
      %v1226 = vld [vmem:[%s1204 + $0x54] sm:$0xf]
      %v1227 = vld [vmem:[%s1204 + $0x58] sm:$0xf]
      %v1228 = vld [vmem:[%s1204 + $0x5c] sm:$0xf]
      %v1229 = vld [vmem:[%s1204 + $0x60] sm:$0xf]
      %v1230 = vld [vmem:[%s1204 + $0x64] sm:$0xf]
      %v1231 = vld [vmem:[%s1204 + $0x68] sm:$0xf]
      %v1232 = vld [vmem:[%s1204 + $0x6c] sm:$0xf]
      %v1233 = vld [vmem:[%s1204 + $0x70] sm:$0xf]
      %v1234 = vld [vmem:[%s1204 + $0x74] sm:$0xf]
      %v1235 = vld [vmem:[%s1204 + $0x78] sm:$0xf]
      %v1236 = vld [vmem:[%s1204 + $0x7c] sm:$0xf]
      %vm1237 = vsmask.f32 6400
      %v1239 = vshrl.u32 %v1200, 16
      %v1241 = vrot.slane %v1239, 1
      %v1242 = vshll.u32 %v1200, 16
      %v1244 = vrot.slane %v1242, 2
      %v1245 = vor.u32 %v1241, %v1244
      %v1246 = vrot.slane %v383, 1
      %v1247 = vrot.slane %v367, 2
      %v1248 = vor.u32 %v1246, %v1247
      %v1249 = vsel %vm1237, %v1245, %v1248
      %v1251 = vshrl.u32 %v1201, 16
      %v1253 = vrot.slane %v1251, 1
      %v1254 = vshll.u32 %v1201, 16
      %v1256 = vrot.slane %v1254, 2
      %v1257 = vor.u32 %v1253, %v1256
      %v1258 = vrot.slane %v391, 1
      %v1259 = vrot.slane %v379, 2
      %v1260 = vor.u32 %v1258, %v1259
      %v1261 = vsel %vm1237, %v1257, %v1260
      %v1262 = vrot.slane %v399, 1
      %v1263 = vrot.slane %v387, 2
      %v1264 = vor.u32 %v1262, %v1263
      %v1265 = vsel %vm1237, %v1248, %v1264
      %v1266 = vrot.slane %v407, 1
      %v1267 = vrot.slane %v395, 2
      %v1268 = vor.u32 %v1266, %v1267
      %v1269 = vsel %vm1237, %v1260, %v1268
      %v1270 = vrot.slane %v415, 1
      %v1271 = vrot.slane %v403, 2
      %v1272 = vor.u32 %v1270, %v1271
      %v1273 = vsel %vm1237, %v1264, %v1272
      %v1274 = vrot.slane %v423, 1
      %v1275 = vrot.slane %v411, 2
      %v1276 = vor.u32 %v1274, %v1275
      %v1277 = vsel %vm1237, %v1268, %v1276
      %v1278 = vrot.slane %v431, 1
      %v1279 = vrot.slane %v419, 2
      %v1280 = vor.u32 %v1278, %v1279
      %v1281 = vsel %vm1237, %v1272, %v1280
      %v1282 = vrot.slane %v439, 1
      %v1283 = vrot.slane %v427, 2
      %v1284 = vor.u32 %v1282, %v1283
      %v1285 = vsel %vm1237, %v1276, %v1284
      %v1286 = vrot.slane %v447, 1
      %v1287 = vrot.slane %v435, 2
      %v1288 = vor.u32 %v1286, %v1287
      %v1289 = vsel %vm1237, %v1280, %v1288
      %v1290 = vrot.slane %v455, 1
      %v1291 = vrot.slane %v443, 2
      %v1292 = vor.u32 %v1290, %v1291
      %v1293 = vsel %vm1237, %v1284, %v1292
      %v1294 = vrot.slane %v463, 1
      %v1295 = vrot.slane %v451, 2
      %v1296 = vor.u32 %v1294, %v1295
      %v1297 = vsel %vm1237, %v1288, %v1296
      %v1298 = vrot.slane %v471, 1
      %v1299 = vrot.slane %v459, 2
      %v1300 = vor.u32 %v1298, %v1299
      %v1301 = vsel %vm1237, %v1292, %v1300
      %v1303 = vshrl.u32 %v1202, 16
      %v1305 = vrot.slane %v1303, 1
      %v1306 = vshll.u32 %v1202, 16
      %v1308 = vrot.slane %v1306, 2
      %v1309 = vor.u32 %v1305, %v1308
      %v1310 = vsel %vm1237, %v1296, %v1309
      %v1312 = vshrl.u32 %v1203, 16
      %v1314 = vrot.slane %v1312, 1
      %v1315 = vshll.u32 %v1203, 16
      %v1317 = vrot.slane %v1315, 2
      %v1318 = vor.u32 %v1314, %v1317
      %v1319 = vsel %vm1237, %v1300, %v1318
      %v1368 = vunpack.c.l.b16 %v1205
      %v1369 = vunpack.c.l.b16 %v1206
      %v1370 = vunpack.c.l.b16 %v1207
      %v1371 = vunpack.c.l.b16 %v1208
      %v1372 = vunpack.c.l.b16 %v1209
      %v1373 = vunpack.c.l.b16 %v1210
      %v1374 = vunpack.c.l.b16 %v1211
      %v1375 = vunpack.c.l.b16 %v1212
      %v1376 = vunpack.c.l.b16 %v1213
      %v1377 = vunpack.c.l.b16 %v1214
      %v1378 = vunpack.c.l.b16 %v1215
      %v1379 = vunpack.c.l.b16 %v1216
      %v1380 = vunpack.c.l.b16 %v1217
      %v1381 = vunpack.c.l.b16 %v1218
      %v1382 = vunpack.c.l.b16 %v1219
      %v1383 = vunpack.c.l.b16 %v1220
      %v1384 = vunpack.c.l.b16 %v1221
      %v1385 = vunpack.c.l.b16 %v1222
      %v1386 = vunpack.c.l.b16 %v1223
      %v1387 = vunpack.c.l.b16 %v1224
      %v1388 = vunpack.c.l.b16 %v1225
      %v1389 = vunpack.c.l.b16 %v1226
      %v1390 = vunpack.c.l.b16 %v1227
      %v1391 = vunpack.c.l.b16 %v1228
      %v1392 = vunpack.c.l.b16 %v1229
      %v1393 = vunpack.c.l.b16 %v1230
      %v1394 = vunpack.c.l.b16 %v1231
      %v1395 = vunpack.c.l.b16 %v1232
      %v1396 = vunpack.c.l.b16 %v1233
      %v1397 = vunpack.c.l.b16 %v1234
      %v1398 = vunpack.c.l.b16 %v1235
      %v1399 = vunpack.c.l.b16 %v1236
      %v1400 = vpack.c.b16 %v1369, %v1368
      %v1401 = vpack.c.b16 %v1371, %v1370
      %v1402 = vpack.c.b16 %v1373, %v1372
      %v1403 = vpack.c.b16 %v1375, %v1374
      %v1404 = vpack.c.b16 %v1377, %v1376
      %v1405 = vpack.c.b16 %v1379, %v1378
      %v1406 = vpack.c.b16 %v1381, %v1380
      %v1407 = vpack.c.b16 %v1383, %v1382
      %v1408 = vpack.c.b16 %v1385, %v1384
      %v1409 = vpack.c.b16 %v1387, %v1386
      %v1410 = vpack.c.b16 %v1389, %v1388
      %v1411 = vpack.c.b16 %v1391, %v1390
      %v1412 = vpack.c.b16 %v1393, %v1392
      %v1413 = vpack.c.b16 %v1395, %v1394
      %v1414 = vpack.c.b16 %v1397, %v1396
      %v1415 = vpack.c.b16 %v1399, %v1398
      %1432 = vmatprep.subr.bf16.mxu0 0
      %1433 = vmatpush1.bf16.msra.mxu0 %v1400
      %1434 = vmatprep.subr.bf16.mxu0 0
      %1435 = vmatpush1.bf16.msra.mxu0 %v1401
      %1436 = vmatprep.subr.bf16.mxu0 0
      %1437 = vmatpush1.bf16.msra.mxu0 %v1402
      %1438 = vmatprep.subr.bf16.mxu0 0
      %1439 = vmatpush1.bf16.msra.mxu0 %v1403
      %1440 = vmatprep.subr.bf16.mxu0 0
      %1441 = vmatpush1.bf16.msra.mxu0 %v1404
      %1442 = vmatprep.subr.bf16.mxu0 0
      %1443 = vmatpush1.bf16.msra.mxu0 %v1405
      %1444 = vmatprep.subr.bf16.mxu0 0
      %1445 = vmatpush1.bf16.msra.mxu0 %v1406
      %1446 = vmatprep.subr.bf16.mxu0 0
      %1447 = vmatpush1.bf16.msra.mxu0 %v1407
      %1448 = vmatprep.subr.bf16.mxu0 0
      %1449 = vmatpush1.bf16.msra.mxu0 %v1408
      %1450 = vmatprep.subr.bf16.mxu0 0
      %1451 = vmatpush1.bf16.msra.mxu0 %v1409
      %1452 = vmatprep.subr.bf16.mxu0 0
      %1453 = vmatpush1.bf16.msra.mxu0 %v1410
      %1454 = vmatprep.subr.bf16.mxu0 0
      %1455 = vmatpush1.bf16.msra.mxu0 %v1411
      %1456 = vmatprep.subr.bf16.mxu0 0
      %1457 = vmatpush1.bf16.msra.mxu0 %v1412
      %1458 = vmatprep.subr.bf16.mxu0 0
      %1459 = vmatpush1.bf16.msra.mxu0 %v1413
      %1460 = vmatprep.subr.bf16.mxu0 0
      %1461 = vmatpush1.bf16.msra.mxu0 %v1414
      %1462 = vmatprep.subr.bf16.mxu0 0
      %1463 = vmatpush1.bf16.msra.mxu0 %v1415
      %1464 = vmatprep.mubr.bf16.mxu0 %v1261
      %1465 = vmatmul.mubr.bf16.gmra.mrb[0].mxu0 %v1249
      %v1466 = vpop.f32.mrb[0].mxu0
      %v1467 = vadd.f32 0.0, %v1466
      %v1468 = vpop.f32.mrb[0].mxu0
      %v1469 = vpop.f32.mrb[0].mxu0
      %v1470 = vadd.f32 0.0, %v1469
      %v1471 = vpop.f32.mrb[0].mxu0
      %1472 = vmatprep.mubr.bf16.mxu0 %v1269
      %1473 = vmatmul.mubr.bf16.gmra.mrb[0].mxu0 %v1265
      %v1474 = vpop.f32.mrb[0].mxu0
      %v1475 = vadd.f32 0.0, %v1474
      %v1476 = vpop.f32.mrb[0].mxu0
      %v1477 = vpop.f32.mrb[0].mxu0
      %v1478 = vadd.f32 0.0, %v1477
      %v1479 = vpop.f32.mrb[0].mxu0
      %1480 = vmatprep.mubr.bf16.mxu0 %v1277
      %1481 = vmatmul.mubr.bf16.gmra.mrb[0].mxu0 %v1273
      %v1482 = vpop.f32.mrb[0].mxu0
      %v1483 = vadd.f32 0.0, %v1482
      %v1484 = vpop.f32.mrb[0].mxu0
      %v1485 = vpop.f32.mrb[0].mxu0
      %v1486 = vadd.f32 0.0, %v1485
      %v1487 = vpop.f32.mrb[0].mxu0
      %1488 = vmatprep.mubr.bf16.mxu0 %v1285
      %1489 = vmatmul.mubr.bf16.gmra.mrb[0].mxu0 %v1281
      %v1490 = vpop.f32.mrb[0].mxu0
      %v1491 = vadd.f32 0.0, %v1490
      %v1492 = vpop.f32.mrb[0].mxu0
      %v1493 = vpop.f32.mrb[0].mxu0
      %v1494 = vadd.f32 0.0, %v1493
      %v1495 = vpop.f32.mrb[0].mxu0
      %1496 = vmatprep.mubr.bf16.mxu0 %v1293
      %1497 = vmatmul.mubr.bf16.gmra.mrb[0].mxu0 %v1289
      %v1498 = vpop.f32.mrb[0].mxu0
      %v1499 = vadd.f32 0.0, %v1498
      %v1500 = vpop.f32.mrb[0].mxu0
      %v1501 = vpop.f32.mrb[0].mxu0
      %v1502 = vadd.f32 0.0, %v1501
      %v1503 = vpop.f32.mrb[0].mxu0
      %1504 = vmatprep.mubr.bf16.mxu0 %v1301
      %1505 = vmatmul.mubr.bf16.gmra.mrb[0].mxu0 %v1297
      %v1506 = vpop.f32.mrb[0].mxu0
      %v1507 = vadd.f32 0.0, %v1506
      %v1508 = vpop.f32.mrb[0].mxu0
      %v1509 = vpop.f32.mrb[0].mxu0
      %v1510 = vadd.f32 0.0, %v1509
      %v1511 = vpop.f32.mrb[0].mxu0
      %1512 = vmatprep.mubr.bf16.mxu0 %v1319
      %1513 = vmatmul.mubr.bf16.gmra.mrb[0].mxu0 %v1310
      %v1514 = vpop.f32.mrb[0].mxu0
      %v1515 = vadd.f32 0.0, %v1514
      %v1516 = vpop.f32.mrb[0].mxu0
      %v1517 = vpop.f32.mrb[0].mxu0
      %v1518 = vadd.f32 0.0, %v1517
      %v1519 = vpop.f32.mrb[0].mxu0
      %1520 = vmatprep.mubr.bf16.mxu0 %v1318
      %1521 = vmatmul.mubr.bf16.gmra.mrb[0].mxu0 %v1309
      %v1522 = vpop.f32.mrb[0].mxu0
      %v1523 = vadd.f32 0.0, %v1522
      %v1524 = vpop.f32.mrb[0].mxu0
      %v1525 = vpop.f32.mrb[0].mxu0
      %v1526 = vpop.f32.mrb[0].mxu0
      %1527 = vdwg.mxu0
      %v1528 = vadd.f32 %v1181, %v1467
      %v1529 = vadd.f32 %v1182, %v1470
      %v1530 = vadd.f32 %v1183, %v1475
      %v1531 = vadd.f32 %v1184, %v1478
      %v1532 = vadd.f32 %v1185, %v1483
      %v1533 = vadd.f32 %v1186, %v1486
      %v1534 = vadd.f32 %v1187, %v1491
      %v1535 = vadd.f32 %v1188, %v1494
      %v1536 = vadd.f32 %v1189, %v1499
      %v1537 = vadd.f32 %v1190, %v1502
      %v1538 = vadd.f32 %v1191, %v1507
      %v1539 = vadd.f32 %v1192, %v1510
      %v1540 = vadd.f32 %v1193, %v1515
      %v1541 = vadd.f32 %v1194, %v1518
      %v1542 = vadd.f32 %v1195, %v1523
      %v1543 = vld [vmem:[%s192] sm:$0xf0]
      %v1544 = vld [vmem:[%s192 + $0x8] sm:$0xf0]
      %v1545 = vld [vmem:[%s192 + $0xf0] sm:$0xf]
      %v1546 = vld [vmem:[%s192 + $0xf8] sm:$0xf]
      %v1547 = vpack.c.bf16 %v279, %v1543
      %v1548 = vpack.c.bf16 %v280, %v1544
      %v1549 = vpack.c.bf16 %v1545, %v305
      %v1550 = vpack.c.bf16 %v1546, %v306
      %s1551 = scalar_lea.vmem %s1, 512
      %v1552 = vld [vmem:[%s1551] sm:$0xf]
      %v1553 = vld [vmem:[%s1551 + $0x4] sm:$0xf]
      %v1554 = vld [vmem:[%s1551 + $0x8] sm:$0xf]
      %v1555 = vld [vmem:[%s1551 + $0xc] sm:$0xf]
      %v1556 = vld [vmem:[%s1551 + $0x10] sm:$0xf]
      %v1557 = vld [vmem:[%s1551 + $0x14] sm:$0xf]
      %v1558 = vld [vmem:[%s1551 + $0x18] sm:$0xf]
      %v1559 = vld [vmem:[%s1551 + $0x1c] sm:$0xf]
      %v1560 = vld [vmem:[%s1551 + $0x20] sm:$0xf]
      %v1561 = vld [vmem:[%s1551 + $0x24] sm:$0xf]
      %v1562 = vld [vmem:[%s1551 + $0x28] sm:$0xf]
      %v1563 = vld [vmem:[%s1551 + $0x2c] sm:$0xf]
      %v1564 = vld [vmem:[%s1551 + $0x30] sm:$0xf]
      %v1565 = vld [vmem:[%s1551 + $0x34] sm:$0xf]
      %v1566 = vld [vmem:[%s1551 + $0x38] sm:$0xf]
      %v1567 = vld [vmem:[%s1551 + $0x3c] sm:$0xf]
      %v1568 = vld [vmem:[%s1551 + $0x40] sm:$0xf]
      %v1569 = vld [vmem:[%s1551 + $0x44] sm:$0xf]
      %v1570 = vld [vmem:[%s1551 + $0x48] sm:$0xf]
      %v1571 = vld [vmem:[%s1551 + $0x4c] sm:$0xf]
      %v1572 = vld [vmem:[%s1551 + $0x50] sm:$0xf]
      %v1573 = vld [vmem:[%s1551 + $0x54] sm:$0xf]
      %v1574 = vld [vmem:[%s1551 + $0x58] sm:$0xf]
      %v1575 = vld [vmem:[%s1551 + $0x5c] sm:$0xf]
      %v1576 = vld [vmem:[%s1551 + $0x60] sm:$0xf]
      %v1577 = vld [vmem:[%s1551 + $0x64] sm:$0xf]
      %v1578 = vld [vmem:[%s1551 + $0x68] sm:$0xf]
      %v1579 = vld [vmem:[%s1551 + $0x6c] sm:$0xf]
      %v1580 = vld [vmem:[%s1551 + $0x70] sm:$0xf]
      %v1581 = vld [vmem:[%s1551 + $0x74] sm:$0xf]
      %v1582 = vld [vmem:[%s1551 + $0x78] sm:$0xf]
      %v1583 = vld [vmem:[%s1551 + $0x7c] sm:$0xf]
      %vm1588 = vcmask 1045504
      %v1589 = vrot.slane %v1547, 2
      %v1590 = vrot.slane %v311, 2
      %v1591 = vsel %vm1588, %v1589, %v1590
      %v1592 = vrot.slane %v1548, 2
      %v1593 = vrot.slane %v312, 2
      %v1594 = vsel %vm1588, %v1592, %v1593
      %v1595 = vrot.slane %v313, 2
      %v1596 = vsel %vm1588, %v1590, %v1595
      %v1597 = vrot.slane %v314, 2
      %v1598 = vsel %vm1588, %v1593, %v1597
      %v1599 = vrot.slane %v315, 2
      %v1600 = vsel %vm1588, %v1595, %v1599
      %v1601 = vrot.slane %v316, 2
      %v1602 = vsel %vm1588, %v1597, %v1601
      %v1603 = vrot.slane %v317, 2
      %v1604 = vsel %vm1588, %v1599, %v1603
      %v1605 = vrot.slane %v318, 2
      %v1606 = vsel %vm1588, %v1601, %v1605
      %v1607 = vrot.slane %v319, 2
      %v1608 = vsel %vm1588, %v1603, %v1607
      %v1609 = vrot.slane %v320, 2
      %v1610 = vsel %vm1588, %v1605, %v1609
      %v1611 = vrot.slane %v321, 2
      %v1612 = vsel %vm1588, %v1607, %v1611
      %v1613 = vrot.slane %v322, 2
      %v1614 = vsel %vm1588, %v1609, %v1613
      %v1615 = vrot.slane %v1549, 2
      %v1616 = vsel %vm1588, %v1611, %v1615
      %v1617 = vrot.slane %v1550, 2
      %v1618 = vsel %vm1588, %v1613, %v1617
      %v1667 = vunpack.c.l.b16 %v1552
      %v1668 = vunpack.c.l.b16 %v1553
      %v1669 = vunpack.c.l.b16 %v1554
      %v1670 = vunpack.c.l.b16 %v1555
      %v1671 = vunpack.c.l.b16 %v1556
      %v1672 = vunpack.c.l.b16 %v1557
      %v1673 = vunpack.c.l.b16 %v1558
      %v1674 = vunpack.c.l.b16 %v1559
      %v1675 = vunpack.c.l.b16 %v1560
      %v1676 = vunpack.c.l.b16 %v1561
      %v1677 = vunpack.c.l.b16 %v1562
      %v1678 = vunpack.c.l.b16 %v1563
      %v1679 = vunpack.c.l.b16 %v1564
      %v1680 = vunpack.c.l.b16 %v1565
      %v1681 = vunpack.c.l.b16 %v1566
      %v1682 = vunpack.c.l.b16 %v1567
      %v1683 = vunpack.c.l.b16 %v1568
      %v1684 = vunpack.c.l.b16 %v1569
      %v1685 = vunpack.c.l.b16 %v1570
      %v1686 = vunpack.c.l.b16 %v1571
      %v1687 = vunpack.c.l.b16 %v1572
      %v1688 = vunpack.c.l.b16 %v1573
      %v1689 = vunpack.c.l.b16 %v1574
      %v1690 = vunpack.c.l.b16 %v1575
      %v1691 = vunpack.c.l.b16 %v1576
      %v1692 = vunpack.c.l.b16 %v1577
      %v1693 = vunpack.c.l.b16 %v1578
      %v1694 = vunpack.c.l.b16 %v1579
      %v1695 = vunpack.c.l.b16 %v1580
      %v1696 = vunpack.c.l.b16 %v1581
      %v1697 = vunpack.c.l.b16 %v1582
      %v1698 = vunpack.c.l.b16 %v1583
      %v1699 = vpack.c.b16 %v1668, %v1667
      %v1700 = vpack.c.b16 %v1670, %v1669
      %v1701 = vpack.c.b16 %v1672, %v1671
      %v1702 = vpack.c.b16 %v1674, %v1673
      %v1703 = vpack.c.b16 %v1676, %v1675
      %v1704 = vpack.c.b16 %v1678, %v1677
      %v1705 = vpack.c.b16 %v1680, %v1679
      %v1706 = vpack.c.b16 %v1682, %v1681
      %v1707 = vpack.c.b16 %v1684, %v1683
      %v1708 = vpack.c.b16 %v1686, %v1685
      %v1709 = vpack.c.b16 %v1688, %v1687
      %v1710 = vpack.c.b16 %v1690, %v1689
      %v1711 = vpack.c.b16 %v1692, %v1691
      %v1712 = vpack.c.b16 %v1694, %v1693
      %v1713 = vpack.c.b16 %v1696, %v1695
      %v1714 = vpack.c.b16 %v1698, %v1697
      %1731 = vmatprep.subr.bf16.mxu0 0
      %1732 = vmatpush1.bf16.msra.mxu0 %v1699
      %1733 = vmatprep.subr.bf16.mxu0 0
      %1734 = vmatpush1.bf16.msra.mxu0 %v1700
      %1735 = vmatprep.subr.bf16.mxu0 0
      %1736 = vmatpush1.bf16.msra.mxu0 %v1701
      %1737 = vmatprep.subr.bf16.mxu0 0
      %1738 = vmatpush1.bf16.msra.mxu0 %v1702
      %1739 = vmatprep.subr.bf16.mxu0 0
      %1740 = vmatpush1.bf16.msra.mxu0 %v1703
      %1741 = vmatprep.subr.bf16.mxu0 0
      %1742 = vmatpush1.bf16.msra.mxu0 %v1704
      %1743 = vmatprep.subr.bf16.mxu0 0
      %1744 = vmatpush1.bf16.msra.mxu0 %v1705
      %1745 = vmatprep.subr.bf16.mxu0 0
      %1746 = vmatpush1.bf16.msra.mxu0 %v1706
      %1747 = vmatprep.subr.bf16.mxu0 0
      %1748 = vmatpush1.bf16.msra.mxu0 %v1707
      %1749 = vmatprep.subr.bf16.mxu0 0
      %1750 = vmatpush1.bf16.msra.mxu0 %v1708
      %1751 = vmatprep.subr.bf16.mxu0 0
      %1752 = vmatpush1.bf16.msra.mxu0 %v1709
      %1753 = vmatprep.subr.bf16.mxu0 0
      %1754 = vmatpush1.bf16.msra.mxu0 %v1710
      %1755 = vmatprep.subr.bf16.mxu0 0
      %1756 = vmatpush1.bf16.msra.mxu0 %v1711
      %1757 = vmatprep.subr.bf16.mxu0 0
      %1758 = vmatpush1.bf16.msra.mxu0 %v1712
      %1759 = vmatprep.subr.bf16.mxu0 0
      %1760 = vmatpush1.bf16.msra.mxu0 %v1713
      %1761 = vmatprep.subr.bf16.mxu0 0
      %1762 = vmatpush1.bf16.msra.mxu0 %v1714
      %1763 = vmatprep.mubr.bf16.mxu0 %v1594
      %1764 = vmatmul.mubr.bf16.gmra.mrb[0].mxu0 %v1591
      %v1765 = vpop.f32.mrb[0].mxu0
      %v1766 = vadd.f32 0.0, %v1765
      %v1767 = vpop.f32.mrb[0].mxu0
      %v1768 = vpop.f32.mrb[0].mxu0
      %v1769 = vadd.f32 0.0, %v1768
      %v1770 = vpop.f32.mrb[0].mxu0
      %1771 = vmatprep.mubr.bf16.mxu0 %v1598
      %1772 = vmatmul.mubr.bf16.gmra.mrb[0].mxu0 %v1596
      %v1773 = vpop.f32.mrb[0].mxu0
      %v1774 = vadd.f32 0.0, %v1773
      %v1775 = vpop.f32.mrb[0].mxu0
      %v1776 = vpop.f32.mrb[0].mxu0
      %v1777 = vadd.f32 0.0, %v1776
      %v1778 = vpop.f32.mrb[0].mxu0
      %1779 = vmatprep.mubr.bf16.mxu0 %v1602
      %1780 = vmatmul.mubr.bf16.gmra.mrb[0].mxu0 %v1600
      %v1781 = vpop.f32.mrb[0].mxu0
      %v1782 = vadd.f32 0.0, %v1781
      %v1783 = vpop.f32.mrb[0].mxu0
      %v1784 = vpop.f32.mrb[0].mxu0
      %v1785 = vadd.f32 0.0, %v1784
      %v1786 = vpop.f32.mrb[0].mxu0
      %1787 = vmatprep.mubr.bf16.mxu0 %v1606
      %1788 = vmatmul.mubr.bf16.gmra.mrb[0].mxu0 %v1604
      %v1789 = vpop.f32.mrb[0].mxu0
      %v1790 = vadd.f32 0.0, %v1789
      %v1791 = vpop.f32.mrb[0].mxu0
      %v1792 = vpop.f32.mrb[0].mxu0
      %v1793 = vadd.f32 0.0, %v1792
      %v1794 = vpop.f32.mrb[0].mxu0
      %1795 = vmatprep.mubr.bf16.mxu0 %v1610
      %1796 = vmatmul.mubr.bf16.gmra.mrb[0].mxu0 %v1608
      %v1797 = vpop.f32.mrb[0].mxu0
      %v1798 = vadd.f32 0.0, %v1797
      %v1799 = vpop.f32.mrb[0].mxu0
      %v1800 = vpop.f32.mrb[0].mxu0
      %v1801 = vadd.f32 0.0, %v1800
      %v1802 = vpop.f32.mrb[0].mxu0
      %1803 = vmatprep.mubr.bf16.mxu0 %v1614
      %1804 = vmatmul.mubr.bf16.gmra.mrb[0].mxu0 %v1612
      %v1805 = vpop.f32.mrb[0].mxu0
      %v1806 = vadd.f32 0.0, %v1805
      %v1807 = vpop.f32.mrb[0].mxu0
      %v1808 = vpop.f32.mrb[0].mxu0
      %v1809 = vadd.f32 0.0, %v1808
      %v1810 = vpop.f32.mrb[0].mxu0
      %1811 = vmatprep.mubr.bf16.mxu0 %v1618
      %1812 = vmatmul.mubr.bf16.gmra.mrb[0].mxu0 %v1616
      %v1813 = vpop.f32.mrb[0].mxu0
      %v1814 = vadd.f32 0.0, %v1813
      %v1815 = vpop.f32.mrb[0].mxu0
      %v1816 = vpop.f32.mrb[0].mxu0
      %v1817 = vadd.f32 0.0, %v1816
      %v1818 = vpop.f32.mrb[0].mxu0
      %1819 = vmatprep.mubr.bf16.mxu0 %v1617
      %1820 = vmatmul.mubr.bf16.gmra.mrb[0].mxu0 %v1615
      %v1821 = vpop.f32.mrb[0].mxu0
      %v1822 = vadd.f32 0.0, %v1821
      %v1823 = vpop.f32.mrb[0].mxu0
      %v1824 = vpop.f32.mrb[0].mxu0
      %v1825 = vpop.f32.mrb[0].mxu0
      %1826 = vdwg.mxu0
      %v1827 = vadd.f32 %v1528, %v1766
      %v1828 = vadd.f32 %v1529, %v1769
      %v1829 = vadd.f32 %v1530, %v1774
      %v1830 = vadd.f32 %v1531, %v1777
      %v1831 = vadd.f32 %v1532, %v1782
      %v1832 = vadd.f32 %v1533, %v1785
      %v1833 = vadd.f32 %v1534, %v1790
      %v1834 = vadd.f32 %v1535, %v1793
      %v1835 = vadd.f32 %v1536, %v1798
      %v1836 = vadd.f32 %v1537, %v1801
      %v1837 = vadd.f32 %v1538, %v1806
      %v1838 = vadd.f32 %v1539, %v1809
      %v1839 = vadd.f32 %v1540, %v1814
      %v1840 = vadd.f32 %v1541, %v1817
      %v1841 = vadd.f32 %v1542, %v1822
      %v1842 = vld [vmem:[%s192] sm:$0xe0]
      %v1843 = vld [vmem:[%s192 + $0x8] sm:$0xe0]
      %v1844 = vld [vmem:[%s192 + $0xf0] sm:$0x1f]
      %v1845 = vld [vmem:[%s192 + $0xf8] sm:$0x1f]
      %v1846 = vpack.c.bf16 %v279, %v1842
      %v1847 = vpack.c.bf16 %v280, %v1843
      %v1848 = vpack.c.bf16 %v1844, %v305
      %v1849 = vpack.c.bf16 %v1845, %v306
      %s1850 = scalar_lea.vmem %s1, 640
      %v1851 = vld [vmem:[%s1850] sm:$0xf]
      %v1852 = vld [vmem:[%s1850 + $0x4] sm:$0xf]
      %v1853 = vld [vmem:[%s1850 + $0x8] sm:$0xf]
      %v1854 = vld [vmem:[%s1850 + $0xc] sm:$0xf]
      %v1855 = vld [vmem:[%s1850 + $0x10] sm:$0xf]
      %v1856 = vld [vmem:[%s1850 + $0x14] sm:$0xf]
      %v1857 = vld [vmem:[%s1850 + $0x18] sm:$0xf]
      %v1858 = vld [vmem:[%s1850 + $0x1c] sm:$0xf]
      %v1859 = vld [vmem:[%s1850 + $0x20] sm:$0xf]
      %v1860 = vld [vmem:[%s1850 + $0x24] sm:$0xf]
      %v1861 = vld [vmem:[%s1850 + $0x28] sm:$0xf]
      %v1862 = vld [vmem:[%s1850 + $0x2c] sm:$0xf]
      %v1863 = vld [vmem:[%s1850 + $0x30] sm:$0xf]
      %v1864 = vld [vmem:[%s1850 + $0x34] sm:$0xf]
      %v1865 = vld [vmem:[%s1850 + $0x38] sm:$0xf]
      %v1866 = vld [vmem:[%s1850 + $0x3c] sm:$0xf]
      %v1867 = vld [vmem:[%s1850 + $0x40] sm:$0xf]
      %v1868 = vld [vmem:[%s1850 + $0x44] sm:$0xf]
      %v1869 = vld [vmem:[%s1850 + $0x48] sm:$0xf]
      %v1870 = vld [vmem:[%s1850 + $0x4c] sm:$0xf]
      %v1871 = vld [vmem:[%s1850 + $0x50] sm:$0xf]
      %v1872 = vld [vmem:[%s1850 + $0x54] sm:$0xf]
      %v1873 = vld [vmem:[%s1850 + $0x58] sm:$0xf]
      %v1874 = vld [vmem:[%s1850 + $0x5c] sm:$0xf]
      %v1875 = vld [vmem:[%s1850 + $0x60] sm:$0xf]
      %v1876 = vld [vmem:[%s1850 + $0x64] sm:$0xf]
      %v1877 = vld [vmem:[%s1850 + $0x68] sm:$0xf]
      %v1878 = vld [vmem:[%s1850 + $0x6c] sm:$0xf]
      %v1879 = vld [vmem:[%s1850 + $0x70] sm:$0xf]
      %v1880 = vld [vmem:[%s1850 + $0x74] sm:$0xf]
      %v1881 = vld [vmem:[%s1850 + $0x78] sm:$0xf]
      %v1882 = vld [vmem:[%s1850 + $0x7c] sm:$0xf]
      %vm1883 = vsmask.f32 5376
      %v1885 = vshrl.u32 %v1846, 16
      %v1887 = vrot.slane %v1885, 2
      %v1888 = vshll.u32 %v1846, 16
      %v1890 = vrot.slane %v1888, 3
      %v1891 = vor.u32 %v1887, %v1890
      %v1892 = vrot.slane %v383, 2
      %v1893 = vrot.slane %v367, 3
      %v1894 = vor.u32 %v1892, %v1893
      %v1895 = vsel %vm1883, %v1891, %v1894
      %v1897 = vshrl.u32 %v1847, 16
      %v1899 = vrot.slane %v1897, 2
      %v1900 = vshll.u32 %v1847, 16
      %v1902 = vrot.slane %v1900, 3
      %v1903 = vor.u32 %v1899, %v1902
      %v1904 = vrot.slane %v391, 2
      %v1905 = vrot.slane %v379, 3
      %v1906 = vor.u32 %v1904, %v1905
      %v1907 = vsel %vm1883, %v1903, %v1906
      %v1908 = vrot.slane %v399, 2
      %v1909 = vrot.slane %v387, 3
      %v1910 = vor.u32 %v1908, %v1909
      %v1911 = vsel %vm1883, %v1894, %v1910
      %v1912 = vrot.slane %v407, 2
      %v1913 = vrot.slane %v395, 3
      %v1914 = vor.u32 %v1912, %v1913
      %v1915 = vsel %vm1883, %v1906, %v1914
      %v1916 = vrot.slane %v415, 2
      %v1917 = vrot.slane %v403, 3
      %v1918 = vor.u32 %v1916, %v1917
      %v1919 = vsel %vm1883, %v1910, %v1918
      %v1920 = vrot.slane %v423, 2
      %v1921 = vrot.slane %v411, 3
      %v1922 = vor.u32 %v1920, %v1921
      %v1923 = vsel %vm1883, %v1914, %v1922
      %v1924 = vrot.slane %v431, 2
      %v1925 = vrot.slane %v419, 3
      %v1926 = vor.u32 %v1924, %v1925
      %v1927 = vsel %vm1883, %v1918, %v1926
      %v1928 = vrot.slane %v439, 2
      %v1929 = vrot.slane %v427, 3
      %v1930 = vor.u32 %v1928, %v1929
      %v1931 = vsel %vm1883, %v1922, %v1930
      %v1932 = vrot.slane %v447, 2
      %v1933 = vrot.slane %v435, 3
      %v1934 = vor.u32 %v1932, %v1933
      %v1935 = vsel %vm1883, %v1926, %v1934
      %v1936 = vrot.slane %v455, 2
      %v1937 = vrot.slane %v443, 3
      %v1938 = vor.u32 %v1936, %v1937
      %v1939 = vsel %vm1883, %v1930, %v1938
      %v1940 = vrot.slane %v463, 2
      %v1941 = vrot.slane %v451, 3
      %v1942 = vor.u32 %v1940, %v1941
      %v1943 = vsel %vm1883, %v1934, %v1942
      %v1944 = vrot.slane %v471, 2
      %v1945 = vrot.slane %v459, 3
      %v1946 = vor.u32 %v1944, %v1945
      %v1947 = vsel %vm1883, %v1938, %v1946
      %v1949 = vshrl.u32 %v1848, 16
      %v1951 = vrot.slane %v1949, 2
      %v1952 = vshll.u32 %v1848, 16
      %v1954 = vrot.slane %v1952, 3
      %v1955 = vor.u32 %v1951, %v1954
      %v1956 = vsel %vm1883, %v1942, %v1955
      %v1958 = vshrl.u32 %v1849, 16
      %v1960 = vrot.slane %v1958, 2
      %v1961 = vshll.u32 %v1849, 16
      %v1963 = vrot.slane %v1961, 3
      %v1964 = vor.u32 %v1960, %v1963
      %v1965 = vsel %vm1883, %v1946, %v1964
      %v2014 = vunpack.c.l.b16 %v1851
      %v2015 = vunpack.c.l.b16 %v1852
      %v2016 = vunpack.c.l.b16 %v1853
      %v2017 = vunpack.c.l.b16 %v1854
      %v2018 = vunpack.c.l.b16 %v1855
      %v2019 = vunpack.c.l.b16 %v1856
      %v2020 = vunpack.c.l.b16 %v1857
      %v2021 = vunpack.c.l.b16 %v1858
      %v2022 = vunpack.c.l.b16 %v1859
      %v2023 = vunpack.c.l.b16 %v1860
      %v2024 = vunpack.c.l.b16 %v1861
      %v2025 = vunpack.c.l.b16 %v1862
      %v2026 = vunpack.c.l.b16 %v1863
      %v2027 = vunpack.c.l.b16 %v1864
      %v2028 = vunpack.c.l.b16 %v1865
      %v2029 = vunpack.c.l.b16 %v1866
      %v2030 = vunpack.c.l.b16 %v1867
      %v2031 = vunpack.c.l.b16 %v1868
      %v2032 = vunpack.c.l.b16 %v1869
      %v2033 = vunpack.c.l.b16 %v1870
      %v2034 = vunpack.c.l.b16 %v1871
      %v2035 = vunpack.c.l.b16 %v1872
      %v2036 = vunpack.c.l.b16 %v1873
      %v2037 = vunpack.c.l.b16 %v1874
      %v2038 = vunpack.c.l.b16 %v1875
      %v2039 = vunpack.c.l.b16 %v1876
      %v2040 = vunpack.c.l.b16 %v1877
      %v2041 = vunpack.c.l.b16 %v1878
      %v2042 = vunpack.c.l.b16 %v1879
      %v2043 = vunpack.c.l.b16 %v1880
      %v2044 = vunpack.c.l.b16 %v1881
      %v2045 = vunpack.c.l.b16 %v1882
      %v2046 = vpack.c.b16 %v2015, %v2014
      %v2047 = vpack.c.b16 %v2017, %v2016
      %v2048 = vpack.c.b16 %v2019, %v2018
      %v2049 = vpack.c.b16 %v2021, %v2020
      %v2050 = vpack.c.b16 %v2023, %v2022
      %v2051 = vpack.c.b16 %v2025, %v2024
      %v2052 = vpack.c.b16 %v2027, %v2026
      %v2053 = vpack.c.b16 %v2029, %v2028
      %v2054 = vpack.c.b16 %v2031, %v2030
      %v2055 = vpack.c.b16 %v2033, %v2032
      %v2056 = vpack.c.b16 %v2035, %v2034
      %v2057 = vpack.c.b16 %v2037, %v2036
      %v2058 = vpack.c.b16 %v2039, %v2038
      %v2059 = vpack.c.b16 %v2041, %v2040
      %v2060 = vpack.c.b16 %v2043, %v2042
      %v2061 = vpack.c.b16 %v2045, %v2044
      %2078 = vmatprep.subr.bf16.mxu0 0
      %2079 = vmatpush1.bf16.msra.mxu0 %v2046
      %2080 = vmatprep.subr.bf16.mxu0 0
      %2081 = vmatpush1.bf16.msra.mxu0 %v2047
      %2082 = vmatprep.subr.bf16.mxu0 0
      %2083 = vmatpush1.bf16.msra.mxu0 %v2048
      %2084 = vmatprep.subr.bf16.mxu0 0
      %2085 = vmatpush1.bf16.msra.mxu0 %v2049
      %2086 = vmatprep.subr.bf16.mxu0 0
      %2087 = vmatpush1.bf16.msra.mxu0 %v2050
      %2088 = vmatprep.subr.bf16.mxu0 0
      %2089 = vmatpush1.bf16.msra.mxu0 %v2051
      %2090 = vmatprep.subr.bf16.mxu0 0
      %2091 = vmatpush1.bf16.msra.mxu0 %v2052
      %2092 = vmatprep.subr.bf16.mxu0 0
      %2093 = vmatpush1.bf16.msra.mxu0 %v2053
      %2094 = vmatprep.subr.bf16.mxu0 0
      %2095 = vmatpush1.bf16.msra.mxu0 %v2054
      %2096 = vmatprep.subr.bf16.mxu0 0
      %2097 = vmatpush1.bf16.msra.mxu0 %v2055
      %2098 = vmatprep.subr.bf16.mxu0 0
      %2099 = vmatpush1.bf16.msra.mxu0 %v2056
      %2100 = vmatprep.subr.bf16.mxu0 0
      %2101 = vmatpush1.bf16.msra.mxu0 %v2057
      %2102 = vmatprep.subr.bf16.mxu0 0
      %2103 = vmatpush1.bf16.msra.mxu0 %v2058
      %2104 = vmatprep.subr.bf16.mxu0 0
      %2105 = vmatpush1.bf16.msra.mxu0 %v2059
      %2106 = vmatprep.subr.bf16.mxu0 0
      %2107 = vmatpush1.bf16.msra.mxu0 %v2060
      %2108 = vmatprep.subr.bf16.mxu0 0
      %2109 = vmatpush1.bf16.msra.mxu0 %v2061
      %2110 = vmatprep.mubr.bf16.mxu0 %v1907
      %2111 = vmatmul.mubr.bf16.gmra.mrb[0].mxu0 %v1895
      %v2112 = vpop.f32.mrb[0].mxu0
      %v2113 = vadd.f32 0.0, %v2112
      %v2114 = vpop.f32.mrb[0].mxu0
      %v2115 = vpop.f32.mrb[0].mxu0
      %v2116 = vadd.f32 0.0, %v2115
      %v2117 = vpop.f32.mrb[0].mxu0
      %2118 = vmatprep.mubr.bf16.mxu0 %v1915
      %2119 = vmatmul.mubr.bf16.gmra.mrb[0].mxu0 %v1911
      %v2120 = vpop.f32.mrb[0].mxu0
      %v2121 = vadd.f32 0.0, %v2120
      %v2122 = vpop.f32.mrb[0].mxu0
      %v2123 = vpop.f32.mrb[0].mxu0
      %v2124 = vadd.f32 0.0, %v2123
      %v2125 = vpop.f32.mrb[0].mxu0
      %2126 = vmatprep.mubr.bf16.mxu0 %v1923
      %2127 = vmatmul.mubr.bf16.gmra.mrb[0].mxu0 %v1919
      %v2128 = vpop.f32.mrb[0].mxu0
      %v2129 = vadd.f32 0.0, %v2128
      %v2130 = vpop.f32.mrb[0].mxu0
      %v2131 = vpop.f32.mrb[0].mxu0
      %v2132 = vadd.f32 0.0, %v2131
      %v2133 = vpop.f32.mrb[0].mxu0
      %2134 = vmatprep.mubr.bf16.mxu0 %v1931
      %2135 = vmatmul.mubr.bf16.gmra.mrb[0].mxu0 %v1927
      %v2136 = vpop.f32.mrb[0].mxu0
      %v2137 = vadd.f32 0.0, %v2136
      %v2138 = vpop.f32.mrb[0].mxu0
      %v2139 = vpop.f32.mrb[0].mxu0
      %v2140 = vadd.f32 0.0, %v2139
      %v2141 = vpop.f32.mrb[0].mxu0
      %2142 = vmatprep.mubr.bf16.mxu0 %v1939
      %2143 = vmatmul.mubr.bf16.gmra.mrb[0].mxu0 %v1935
      %v2144 = vpop.f32.mrb[0].mxu0
      %v2145 = vadd.f32 0.0, %v2144
      %v2146 = vpop.f32.mrb[0].mxu0
      %v2147 = vpop.f32.mrb[0].mxu0
      %v2148 = vadd.f32 0.0, %v2147
      %v2149 = vpop.f32.mrb[0].mxu0
      %2150 = vmatprep.mubr.bf16.mxu0 %v1947
      %2151 = vmatmul.mubr.bf16.gmra.mrb[0].mxu0 %v1943
      %v2152 = vpop.f32.mrb[0].mxu0
      %v2153 = vadd.f32 0.0, %v2152
      %v2154 = vpop.f32.mrb[0].mxu0
      %v2155 = vpop.f32.mrb[0].mxu0
      %v2156 = vadd.f32 0.0, %v2155
      %v2157 = vpop.f32.mrb[0].mxu0
      %2158 = vmatprep.mubr.bf16.mxu0 %v1965
      %2159 = vmatmul.mubr.bf16.gmra.mrb[0].mxu0 %v1956
      %v2160 = vpop.f32.mrb[0].mxu0
      %v2161 = vadd.f32 0.0, %v2160
      %v2162 = vpop.f32.mrb[0].mxu0
      %v2163 = vpop.f32.mrb[0].mxu0
      %v2164 = vadd.f32 0.0, %v2163
      %v2165 = vpop.f32.mrb[0].mxu0
      %2166 = vmatprep.mubr.bf16.mxu0 %v1964
      %2167 = vmatmul.mubr.bf16.gmra.mrb[0].mxu0 %v1955
      %v2168 = vpop.f32.mrb[0].mxu0
      %v2169 = vadd.f32 0.0, %v2168
      %v2170 = vpop.f32.mrb[0].mxu0
      %v2171 = vpop.f32.mrb[0].mxu0
      %v2172 = vpop.f32.mrb[0].mxu0
      %2173 = vdwg.mxu0
      %v2174 = vadd.f32 %v1827, %v2113
      %v2175 = vadd.f32 %v1828, %v2116
      %v2176 = vadd.f32 %v1829, %v2121
      %v2177 = vadd.f32 %v1830, %v2124
      %v2178 = vadd.f32 %v1831, %v2129
      %v2179 = vadd.f32 %v1832, %v2132
      %v2180 = vadd.f32 %v1833, %v2137
      %v2181 = vadd.f32 %v1834, %v2140
      %v2182 = vadd.f32 %v1835, %v2145
      %v2183 = vadd.f32 %v1836, %v2148
      %v2184 = vadd.f32 %v1837, %v2153
      %v2185 = vadd.f32 %v1838, %v2156
      %v2186 = vadd.f32 %v1839, %v2161
      %v2187 = vadd.f32 %v1840, %v2164
      %v2188 = vadd.f32 %v1841, %v2169
      %v2189 = vld [vmem:[%s192] sm:$0xc0]
      %v2190 = vld [vmem:[%s192 + $0x8] sm:$0xc0]
      %v2191 = vld [vmem:[%s192 + $0xf0] sm:$0x3f]
      %v2192 = vld [vmem:[%s192 + $0xf8] sm:$0x3f]
      %v2193 = vpack.c.bf16 %v279, %v2189
      %v2194 = vpack.c.bf16 %v280, %v2190
      %v2195 = vpack.c.bf16 %v2191, %v305
      %v2196 = vpack.c.bf16 %v2192, %v306
      %s2197 = scalar_lea.vmem %s1, 768
      %v2198 = vld [vmem:[%s2197] sm:$0xf]
      %v2199 = vld [vmem:[%s2197 + $0x4] sm:$0xf]
      %v2200 = vld [vmem:[%s2197 + $0x8] sm:$0xf]
      %v2201 = vld [vmem:[%s2197 + $0xc] sm:$0xf]
      %v2202 = vld [vmem:[%s2197 + $0x10] sm:$0xf]
      %v2203 = vld [vmem:[%s2197 + $0x14] sm:$0xf]
      %v2204 = vld [vmem:[%s2197 + $0x18] sm:$0xf]
      %v2205 = vld [vmem:[%s2197 + $0x1c] sm:$0xf]
      %v2206 = vld [vmem:[%s2197 + $0x20] sm:$0xf]
      %v2207 = vld [vmem:[%s2197 + $0x24] sm:$0xf]
      %v2208 = vld [vmem:[%s2197 + $0x28] sm:$0xf]
      %v2209 = vld [vmem:[%s2197 + $0x2c] sm:$0xf]
      %v2210 = vld [vmem:[%s2197 + $0x30] sm:$0xf]
      %v2211 = vld [vmem:[%s2197 + $0x34] sm:$0xf]
      %v2212 = vld [vmem:[%s2197 + $0x38] sm:$0xf]
      %v2213 = vld [vmem:[%s2197 + $0x3c] sm:$0xf]
      %v2214 = vld [vmem:[%s2197 + $0x40] sm:$0xf]
      %v2215 = vld [vmem:[%s2197 + $0x44] sm:$0xf]
      %v2216 = vld [vmem:[%s2197 + $0x48] sm:$0xf]
      %v2217 = vld [vmem:[%s2197 + $0x4c] sm:$0xf]
      %v2218 = vld [vmem:[%s2197 + $0x50] sm:$0xf]
      %v2219 = vld [vmem:[%s2197 + $0x54] sm:$0xf]
      %v2220 = vld [vmem:[%s2197 + $0x58] sm:$0xf]
      %v2221 = vld [vmem:[%s2197 + $0x5c] sm:$0xf]
      %v2222 = vld [vmem:[%s2197 + $0x60] sm:$0xf]
      %v2223 = vld [vmem:[%s2197 + $0x64] sm:$0xf]
      %v2224 = vld [vmem:[%s2197 + $0x68] sm:$0xf]
      %v2225 = vld [vmem:[%s2197 + $0x6c] sm:$0xf]
      %v2226 = vld [vmem:[%s2197 + $0x70] sm:$0xf]
      %v2227 = vld [vmem:[%s2197 + $0x74] sm:$0xf]
      %v2228 = vld [vmem:[%s2197 + $0x78] sm:$0xf]
      %v2229 = vld [vmem:[%s2197 + $0x7c] sm:$0xf]
      %vm2234 = vcmask 1044480
      %v2235 = vrot.slane %v2193, 3
      %v2236 = vrot.slane %v311, 3
      %v2237 = vsel %vm2234, %v2235, %v2236
      %v2238 = vrot.slane %v2194, 3
      %v2239 = vrot.slane %v312, 3
      %v2240 = vsel %vm2234, %v2238, %v2239
      %v2241 = vrot.slane %v313, 3
      %v2242 = vsel %vm2234, %v2236, %v2241
      %v2243 = vrot.slane %v314, 3
      %v2244 = vsel %vm2234, %v2239, %v2243
      %v2245 = vrot.slane %v315, 3
      %v2246 = vsel %vm2234, %v2241, %v2245
      %v2247 = vrot.slane %v316, 3
      %v2248 = vsel %vm2234, %v2243, %v2247
      %v2249 = vrot.slane %v317, 3
      %v2250 = vsel %vm2234, %v2245, %v2249
      %v2251 = vrot.slane %v318, 3
      %v2252 = vsel %vm2234, %v2247, %v2251
      %v2253 = vrot.slane %v319, 3
      %v2254 = vsel %vm2234, %v2249, %v2253
      %v2255 = vrot.slane %v320, 3
      %v2256 = vsel %vm2234, %v2251, %v2255
      %v2257 = vrot.slane %v321, 3
      %v2258 = vsel %vm2234, %v2253, %v2257
      %v2259 = vrot.slane %v322, 3
      %v2260 = vsel %vm2234, %v2255, %v2259
      %v2261 = vrot.slane %v2195, 3
      %v2262 = vsel %vm2234, %v2257, %v2261
      %v2263 = vrot.slane %v2196, 3
      %v2264 = vsel %vm2234, %v2259, %v2263
      %v2313 = vunpack.c.l.b16 %v2198
      %v2314 = vunpack.c.l.b16 %v2199
      %v2315 = vunpack.c.l.b16 %v2200
      %v2316 = vunpack.c.l.b16 %v2201
      %v2317 = vunpack.c.l.b16 %v2202
      %v2318 = vunpack.c.l.b16 %v2203
      %v2319 = vunpack.c.l.b16 %v2204
      %v2320 = vunpack.c.l.b16 %v2205
      %v2321 = vunpack.c.l.b16 %v2206
      %v2322 = vunpack.c.l.b16 %v2207
      %v2323 = vunpack.c.l.b16 %v2208
      %v2324 = vunpack.c.l.b16 %v2209
      %v2325 = vunpack.c.l.b16 %v2210
      %v2326 = vunpack.c.l.b16 %v2211
      %v2327 = vunpack.c.l.b16 %v2212
      %v2328 = vunpack.c.l.b16 %v2213
      %v2329 = vunpack.c.l.b16 %v2214
      %v2330 = vunpack.c.l.b16 %v2215
      %v2331 = vunpack.c.l.b16 %v2216
      %v2332 = vunpack.c.l.b16 %v2217
      %v2333 = vunpack.c.l.b16 %v2218
      %v2334 = vunpack.c.l.b16 %v2219
      %v2335 = vunpack.c.l.b16 %v2220
      %v2336 = vunpack.c.l.b16 %v2221
      %v2337 = vunpack.c.l.b16 %v2222
      %v2338 = vunpack.c.l.b16 %v2223
      %v2339 = vunpack.c.l.b16 %v2224
      %v2340 = vunpack.c.l.b16 %v2225
      %v2341 = vunpack.c.l.b16 %v2226
      %v2342 = vunpack.c.l.b16 %v2227
      %v2343 = vunpack.c.l.b16 %v2228
      %v2344 = vunpack.c.l.b16 %v2229
      %v2345 = vpack.c.b16 %v2314, %v2313
      %v2346 = vpack.c.b16 %v2316, %v2315
      %v2347 = vpack.c.b16 %v2318, %v2317
      %v2348 = vpack.c.b16 %v2320, %v2319
      %v2349 = vpack.c.b16 %v2322, %v2321
      %v2350 = vpack.c.b16 %v2324, %v2323
      %v2351 = vpack.c.b16 %v2326, %v2325
      %v2352 = vpack.c.b16 %v2328, %v2327
      %v2353 = vpack.c.b16 %v2330, %v2329
      %v2354 = vpack.c.b16 %v2332, %v2331
      %v2355 = vpack.c.b16 %v2334, %v2333
      %v2356 = vpack.c.b16 %v2336, %v2335
      %v2357 = vpack.c.b16 %v2338, %v2337
      %v2358 = vpack.c.b16 %v2340, %v2339
      %v2359 = vpack.c.b16 %v2342, %v2341
      %v2360 = vpack.c.b16 %v2344, %v2343
      %2377 = vmatprep.subr.bf16.mxu0 0
      %2378 = vmatpush1.bf16.msra.mxu0 %v2345
      %2379 = vmatprep.subr.bf16.mxu0 0
      %2380 = vmatpush1.bf16.msra.mxu0 %v2346
      %2381 = vmatprep.subr.bf16.mxu0 0
      %2382 = vmatpush1.bf16.msra.mxu0 %v2347
      %2383 = vmatprep.subr.bf16.mxu0 0
      %2384 = vmatpush1.bf16.msra.mxu0 %v2348
      %2385 = vmatprep.subr.bf16.mxu0 0
      %2386 = vmatpush1.bf16.msra.mxu0 %v2349
      %2387 = vmatprep.subr.bf16.mxu0 0
      %2388 = vmatpush1.bf16.msra.mxu0 %v2350
      %2389 = vmatprep.subr.bf16.mxu0 0
      %2390 = vmatpush1.bf16.msra.mxu0 %v2351
      %2391 = vmatprep.subr.bf16.mxu0 0
      %2392 = vmatpush1.bf16.msra.mxu0 %v2352
      %2393 = vmatprep.subr.bf16.mxu0 0
      %2394 = vmatpush1.bf16.msra.mxu0 %v2353
      %2395 = vmatprep.subr.bf16.mxu0 0
      %2396 = vmatpush1.bf16.msra.mxu0 %v2354
      %2397 = vmatprep.subr.bf16.mxu0 0
      %2398 = vmatpush1.bf16.msra.mxu0 %v2355
      %2399 = vmatprep.subr.bf16.mxu0 0
      %2400 = vmatpush1.bf16.msra.mxu0 %v2356
      %2401 = vmatprep.subr.bf16.mxu0 0
      %2402 = vmatpush1.bf16.msra.mxu0 %v2357
      %2403 = vmatprep.subr.bf16.mxu0 0
      %2404 = vmatpush1.bf16.msra.mxu0 %v2358
      %2405 = vmatprep.subr.bf16.mxu0 0
      %2406 = vmatpush1.bf16.msra.mxu0 %v2359
      %2407 = vmatprep.subr.bf16.mxu0 0
      %2408 = vmatpush1.bf16.msra.mxu0 %v2360
      %2409 = vmatprep.mubr.bf16.mxu0 %v2240
      %2410 = vmatmul.mubr.bf16.gmra.mrb[0].mxu0 %v2237
      %v2411 = vpop.f32.mrb[0].mxu0
      %v2412 = vadd.f32 0.0, %v2411
      %v2413 = vpop.f32.mrb[0].mxu0
      %v2414 = vpop.f32.mrb[0].mxu0
      %v2415 = vadd.f32 0.0, %v2414
      %v2416 = vpop.f32.mrb[0].mxu0
      %2417 = vmatprep.mubr.bf16.mxu0 %v2244
      %2418 = vmatmul.mubr.bf16.gmra.mrb[0].mxu0 %v2242
      %v2419 = vpop.f32.mrb[0].mxu0
      %v2420 = vadd.f32 0.0, %v2419
      %v2421 = vpop.f32.mrb[0].mxu0
      %v2422 = vpop.f32.mrb[0].mxu0
      %v2423 = vadd.f32 0.0, %v2422
      %v2424 = vpop.f32.mrb[0].mxu0
      %2425 = vmatprep.mubr.bf16.mxu0 %v2248
      %2426 = vmatmul.mubr.bf16.gmra.mrb[0].mxu0 %v2246
      %v2427 = vpop.f32.mrb[0].mxu0
      %v2428 = vadd.f32 0.0, %v2427
      %v2429 = vpop.f32.mrb[0].mxu0
      %v2430 = vpop.f32.mrb[0].mxu0
      %v2431 = vadd.f32 0.0, %v2430
      %v2432 = vpop.f32.mrb[0].mxu0
      %2433 = vmatprep.mubr.bf16.mxu0 %v2252
      %2434 = vmatmul.mubr.bf16.gmra.mrb[0].mxu0 %v2250
      %v2435 = vpop.f32.mrb[0].mxu0
      %v2436 = vadd.f32 0.0, %v2435
      %v2437 = vpop.f32.mrb[0].mxu0
      %v2438 = vpop.f32.mrb[0].mxu0
      %v2439 = vadd.f32 0.0, %v2438
      %v2440 = vpop.f32.mrb[0].mxu0
      %2441 = vmatprep.mubr.bf16.mxu0 %v2256
      %2442 = vmatmul.mubr.bf16.gmra.mrb[0].mxu0 %v2254
      %v2443 = vpop.f32.mrb[0].mxu0
      %v2444 = vadd.f32 0.0, %v2443
      %v2445 = vpop.f32.mrb[0].mxu0
      %v2446 = vpop.f32.mrb[0].mxu0
      %v2447 = vadd.f32 0.0, %v2446
      %v2448 = vpop.f32.mrb[0].mxu0
      %2449 = vmatprep.mubr.bf16.mxu0 %v2260
      %2450 = vmatmul.mubr.bf16.gmra.mrb[0].mxu0 %v2258
      %v2451 = vpop.f32.mrb[0].mxu0
      %v2452 = vadd.f32 0.0, %v2451
      %v2453 = vpop.f32.mrb[0].mxu0
      %v2454 = vpop.f32.mrb[0].mxu0
      %v2455 = vadd.f32 0.0, %v2454
      %v2456 = vpop.f32.mrb[0].mxu0
      %2457 = vmatprep.mubr.bf16.mxu0 %v2264
      %2458 = vmatmul.mubr.bf16.gmra.mrb[0].mxu0 %v2262
      %v2459 = vpop.f32.mrb[0].mxu0
      %v2460 = vadd.f32 0.0, %v2459
      %v2461 = vpop.f32.mrb[0].mxu0
      %v2462 = vpop.f32.mrb[0].mxu0
      %v2463 = vadd.f32 0.0, %v2462
      %v2464 = vpop.f32.mrb[0].mxu0
      %2465 = vmatprep.mubr.bf16.mxu0 %v2263
      %2466 = vmatmul.mubr.bf16.gmra.mrb[0].mxu0 %v2261
      %v2467 = vpop.f32.mrb[0].mxu0
      %v2468 = vadd.f32 0.0, %v2467
      %v2469 = vpop.f32.mrb[0].mxu0
      %v2470 = vpop.f32.mrb[0].mxu0
      %v2471 = vpop.f32.mrb[0].mxu0
      %2472 = vdwg.mxu0
      %v2473 = vadd.f32 %v2174, %v2412
      %v2474 = vadd.f32 %v2175, %v2415
      %v2475 = vadd.f32 %v2176, %v2420
      %v2476 = vadd.f32 %v2177, %v2423
      %v2477 = vadd.f32 %v2178, %v2428
      %v2478 = vadd.f32 %v2179, %v2431
      %v2479 = vadd.f32 %v2180, %v2436
      %v2480 = vadd.f32 %v2181, %v2439
      %v2481 = vadd.f32 %v2182, %v2444
      %v2482 = vadd.f32 %v2183, %v2447
      %v2483 = vadd.f32 %v2184, %v2452
      %v2484 = vadd.f32 %v2185, %v2455
      %v2485 = vadd.f32 %v2186, %v2460
      %v2486 = vadd.f32 %v2187, %v2463
      %v2487 = vadd.f32 %v2188, %v2468
      %v2488 = vld [vmem:[%s192] sm:$0x80]
      %v2489 = vld [vmem:[%s192 + $0x8] sm:$0x80]
      %v2490 = vld [vmem:[%s192 + $0xf0] sm:$0x7f]
      %v2491 = vld [vmem:[%s192 + $0xf8] sm:$0x7f]
      %v2492 = vpack.c.bf16 %v279, %v2488
      %v2493 = vpack.c.bf16 %v280, %v2489
      %v2494 = vpack.c.bf16 %v2490, %v305
      %v2495 = vpack.c.bf16 %v2491, %v306
      %s2496 = scalar_lea.vmem %s1, 896
      %v2497 = vld [vmem:[%s2496] sm:$0xf]
      %v2498 = vld [vmem:[%s2496 + $0x4] sm:$0xf]
      %v2499 = vld [vmem:[%s2496 + $0x8] sm:$0xf]
      %v2500 = vld [vmem:[%s2496 + $0xc] sm:$0xf]
      %v2501 = vld [vmem:[%s2496 + $0x10] sm:$0xf]
      %v2502 = vld [vmem:[%s2496 + $0x14] sm:$0xf]
      %v2503 = vld [vmem:[%s2496 + $0x18] sm:$0xf]
      %v2504 = vld [vmem:[%s2496 + $0x1c] sm:$0xf]
      %v2505 = vld [vmem:[%s2496 + $0x20] sm:$0xf]
      %v2506 = vld [vmem:[%s2496 + $0x24] sm:$0xf]
      %v2507 = vld [vmem:[%s2496 + $0x28] sm:$0xf]
      %v2508 = vld [vmem:[%s2496 + $0x2c] sm:$0xf]
      %v2509 = vld [vmem:[%s2496 + $0x30] sm:$0xf]
      %v2510 = vld [vmem:[%s2496 + $0x34] sm:$0xf]
      %v2511 = vld [vmem:[%s2496 + $0x38] sm:$0xf]
      %v2512 = vld [vmem:[%s2496 + $0x3c] sm:$0xf]
      %v2513 = vld [vmem:[%s2496 + $0x40] sm:$0xf]
      %v2514 = vld [vmem:[%s2496 + $0x44] sm:$0xf]
      %v2515 = vld [vmem:[%s2496 + $0x48] sm:$0xf]
      %v2516 = vld [vmem:[%s2496 + $0x4c] sm:$0xf]
      %v2517 = vld [vmem:[%s2496 + $0x50] sm:$0xf]
      %v2518 = vld [vmem:[%s2496 + $0x54] sm:$0xf]
      %v2519 = vld [vmem:[%s2496 + $0x58] sm:$0xf]
      %v2520 = vld [vmem:[%s2496 + $0x5c] sm:$0xf]
      %v2521 = vld [vmem:[%s2496 + $0x60] sm:$0xf]
      %v2522 = vld [vmem:[%s2496 + $0x64] sm:$0xf]
      %v2523 = vld [vmem:[%s2496 + $0x68] sm:$0xf]
      %v2524 = vld [vmem:[%s2496 + $0x6c] sm:$0xf]
      %v2525 = vld [vmem:[%s2496 + $0x70] sm:$0xf]
      %v2526 = vld [vmem:[%s2496 + $0x74] sm:$0xf]
      %v2527 = vld [vmem:[%s2496 + $0x78] sm:$0xf]
      %v2528 = vld [vmem:[%s2496 + $0x7c] sm:$0xf]
      %vm2529 = vsmask.f32 4352
      %v2531 = vshrl.u32 %v2492, 16
      %v2533 = vrot.slane %v2531, 3
      %v2534 = vshll.u32 %v2492, 16
      %v2536 = vrot.slane %v2534, 4
      %v2537 = vor.u32 %v2533, %v2536
      %v2538 = vrot.slane %v383, 3
      %v2539 = vrot.slane %v367, 4
      %v2540 = vor.u32 %v2538, %v2539
      %v2541 = vsel %vm2529, %v2537, %v2540
      %v2543 = vshrl.u32 %v2493, 16
      %v2545 = vrot.slane %v2543, 3
      %v2546 = vshll.u32 %v2493, 16
      %v2548 = vrot.slane %v2546, 4
      %v2549 = vor.u32 %v2545, %v2548
      %v2550 = vrot.slane %v391, 3
      %v2551 = vrot.slane %v379, 4
      %v2552 = vor.u32 %v2550, %v2551
      %v2553 = vsel %vm2529, %v2549, %v2552
      %v2554 = vrot.slane %v399, 3
      %v2555 = vrot.slane %v387, 4
      %v2556 = vor.u32 %v2554, %v2555
      %v2557 = vsel %vm2529, %v2540, %v2556
      %v2558 = vrot.slane %v407, 3
      %v2559 = vrot.slane %v395, 4
      %v2560 = vor.u32 %v2558, %v2559
      %v2561 = vsel %vm2529, %v2552, %v2560
      %v2562 = vrot.slane %v415, 3
      %v2563 = vrot.slane %v403, 4
      %v2564 = vor.u32 %v2562, %v2563
      %v2565 = vsel %vm2529, %v2556, %v2564
      %v2566 = vrot.slane %v423, 3
      %v2567 = vrot.slane %v411, 4
      %v2568 = vor.u32 %v2566, %v2567
      %v2569 = vsel %vm2529, %v2560, %v2568
      %v2570 = vrot.slane %v431, 3
      %v2571 = vrot.slane %v419, 4
      %v2572 = vor.u32 %v2570, %v2571
      %v2573 = vsel %vm2529, %v2564, %v2572
      %v2574 = vrot.slane %v439, 3
      %v2575 = vrot.slane %v427, 4
      %v2576 = vor.u32 %v2574, %v2575
      %v2577 = vsel %vm2529, %v2568, %v2576
      %v2578 = vrot.slane %v447, 3
      %v2579 = vrot.slane %v435, 4
      %v2580 = vor.u32 %v2578, %v2579
      %v2581 = vsel %vm2529, %v2572, %v2580
      %v2582 = vrot.slane %v455, 3
      %v2583 = vrot.slane %v443, 4
      %v2584 = vor.u32 %v2582, %v2583
      %v2585 = vsel %vm2529, %v2576, %v2584
      %v2586 = vrot.slane %v463, 3
      %v2587 = vrot.slane %v451, 4
      %v2588 = vor.u32 %v2586, %v2587
      %v2589 = vsel %vm2529, %v2580, %v2588
      %v2590 = vrot.slane %v471, 3
      %v2591 = vrot.slane %v459, 4
      %v2592 = vor.u32 %v2590, %v2591
      %v2593 = vsel %vm2529, %v2584, %v2592
      %v2595 = vshrl.u32 %v2494, 16
      %v2597 = vrot.slane %v2595, 3
      %v2598 = vshll.u32 %v2494, 16
      %v2600 = vrot.slane %v2598, 4
      %v2601 = vor.u32 %v2597, %v2600
      %v2602 = vsel %vm2529, %v2588, %v2601
      %v2604 = vshrl.u32 %v2495, 16
      %v2606 = vrot.slane %v2604, 3
      %v2607 = vshll.u32 %v2495, 16
      %v2609 = vrot.slane %v2607, 4
      %v2610 = vor.u32 %v2606, %v2609
      %v2611 = vsel %vm2529, %v2592, %v2610
      %v2660 = vunpack.c.l.b16 %v2497
      %v2661 = vunpack.c.l.b16 %v2498
      %v2662 = vunpack.c.l.b16 %v2499
      %v2663 = vunpack.c.l.b16 %v2500
      %v2664 = vunpack.c.l.b16 %v2501
      %v2665 = vunpack.c.l.b16 %v2502
      %v2666 = vunpack.c.l.b16 %v2503
      %v2667 = vunpack.c.l.b16 %v2504
      %v2668 = vunpack.c.l.b16 %v2505
      %v2669 = vunpack.c.l.b16 %v2506
      %v2670 = vunpack.c.l.b16 %v2507
      %v2671 = vunpack.c.l.b16 %v2508
      %v2672 = vunpack.c.l.b16 %v2509
      %v2673 = vunpack.c.l.b16 %v2510
      %v2674 = vunpack.c.l.b16 %v2511
      %v2675 = vunpack.c.l.b16 %v2512
      %v2676 = vunpack.c.l.b16 %v2513
      %v2677 = vunpack.c.l.b16 %v2514
      %v2678 = vunpack.c.l.b16 %v2515
      %v2679 = vunpack.c.l.b16 %v2516
      %v2680 = vunpack.c.l.b16 %v2517
      %v2681 = vunpack.c.l.b16 %v2518
      %v2682 = vunpack.c.l.b16 %v2519
      %v2683 = vunpack.c.l.b16 %v2520
      %v2684 = vunpack.c.l.b16 %v2521
      %v2685 = vunpack.c.l.b16 %v2522
      %v2686 = vunpack.c.l.b16 %v2523
      %v2687 = vunpack.c.l.b16 %v2524
      %v2688 = vunpack.c.l.b16 %v2525
      %v2689 = vunpack.c.l.b16 %v2526
      %v2690 = vunpack.c.l.b16 %v2527
      %v2691 = vunpack.c.l.b16 %v2528
      %v2692 = vpack.c.b16 %v2661, %v2660
      %v2693 = vpack.c.b16 %v2663, %v2662
      %v2694 = vpack.c.b16 %v2665, %v2664
      %v2695 = vpack.c.b16 %v2667, %v2666
      %v2696 = vpack.c.b16 %v2669, %v2668
      %v2697 = vpack.c.b16 %v2671, %v2670
      %v2698 = vpack.c.b16 %v2673, %v2672
      %v2699 = vpack.c.b16 %v2675, %v2674
      %v2700 = vpack.c.b16 %v2677, %v2676
      %v2701 = vpack.c.b16 %v2679, %v2678
      %v2702 = vpack.c.b16 %v2681, %v2680
      %v2703 = vpack.c.b16 %v2683, %v2682
      %v2704 = vpack.c.b16 %v2685, %v2684
      %v2705 = vpack.c.b16 %v2687, %v2686
      %v2706 = vpack.c.b16 %v2689, %v2688
      %v2707 = vpack.c.b16 %v2691, %v2690
      %2724 = vmatprep.subr.bf16.mxu0 0
      %2725 = vmatpush1.bf16.msra.mxu0 %v2692
      %2726 = vmatprep.subr.bf16.mxu0 0
      %2727 = vmatpush1.bf16.msra.mxu0 %v2693
      %2728 = vmatprep.subr.bf16.mxu0 0
      %2729 = vmatpush1.bf16.msra.mxu0 %v2694
      %2730 = vmatprep.subr.bf16.mxu0 0
      %2731 = vmatpush1.bf16.msra.mxu0 %v2695
      %2732 = vmatprep.subr.bf16.mxu0 0
      %2733 = vmatpush1.bf16.msra.mxu0 %v2696
      %2734 = vmatprep.subr.bf16.mxu0 0
      %2735 = vmatpush1.bf16.msra.mxu0 %v2697
      %2736 = vmatprep.subr.bf16.mxu0 0
      %2737 = vmatpush1.bf16.msra.mxu0 %v2698
      %2738 = vmatprep.subr.bf16.mxu0 0
      %2739 = vmatpush1.bf16.msra.mxu0 %v2699
      %2740 = vmatprep.subr.bf16.mxu0 0
      %2741 = vmatpush1.bf16.msra.mxu0 %v2700
      %2742 = vmatprep.subr.bf16.mxu0 0
      %2743 = vmatpush1.bf16.msra.mxu0 %v2701
      %2744 = vmatprep.subr.bf16.mxu0 0
      %2745 = vmatpush1.bf16.msra.mxu0 %v2702
      %2746 = vmatprep.subr.bf16.mxu0 0
      %2747 = vmatpush1.bf16.msra.mxu0 %v2703
      %2748 = vmatprep.subr.bf16.mxu0 0
      %2749 = vmatpush1.bf16.msra.mxu0 %v2704
      %2750 = vmatprep.subr.bf16.mxu0 0
      %2751 = vmatpush1.bf16.msra.mxu0 %v2705
      %2752 = vmatprep.subr.bf16.mxu0 0
      %2753 = vmatpush1.bf16.msra.mxu0 %v2706
      %2754 = vmatprep.subr.bf16.mxu0 0
      %2755 = vmatpush1.bf16.msra.mxu0 %v2707
      %2756 = vmatprep.mubr.bf16.mxu0 %v2553
      %2757 = vmatmul.mubr.bf16.gmra.mrb[0].mxu0 %v2541
      %v2758 = vpop.f32.mrb[0].mxu0
      %v2759 = vadd.f32 0.0, %v2758
      %v2760 = vpop.f32.mrb[0].mxu0
      %v2761 = vpop.f32.mrb[0].mxu0
      %v2762 = vadd.f32 0.0, %v2761
      %v2763 = vpop.f32.mrb[0].mxu0
      %2764 = vmatprep.mubr.bf16.mxu0 %v2561
      %2765 = vmatmul.mubr.bf16.gmra.mrb[0].mxu0 %v2557
      %v2766 = vpop.f32.mrb[0].mxu0
      %v2767 = vadd.f32 0.0, %v2766
      %v2768 = vpop.f32.mrb[0].mxu0
      %v2769 = vpop.f32.mrb[0].mxu0
      %v2770 = vadd.f32 0.0, %v2769
      %v2771 = vpop.f32.mrb[0].mxu0
      %2772 = vmatprep.mubr.bf16.mxu0 %v2569
      %2773 = vmatmul.mubr.bf16.gmra.mrb[0].mxu0 %v2565
      %v2774 = vpop.f32.mrb[0].mxu0
      %v2775 = vadd.f32 0.0, %v2774
      %v2776 = vpop.f32.mrb[0].mxu0
      %v2777 = vpop.f32.mrb[0].mxu0
      %v2778 = vadd.f32 0.0, %v2777
      %v2779 = vpop.f32.mrb[0].mxu0
      %2780 = vmatprep.mubr.bf16.mxu0 %v2577
      %2781 = vmatmul.mubr.bf16.gmra.mrb[0].mxu0 %v2573
      %v2782 = vpop.f32.mrb[0].mxu0
      %v2783 = vadd.f32 0.0, %v2782
      %v2784 = vpop.f32.mrb[0].mxu0
      %v2785 = vpop.f32.mrb[0].mxu0
      %v2786 = vadd.f32 0.0, %v2785
      %v2787 = vpop.f32.mrb[0].mxu0
      %2788 = vmatprep.mubr.bf16.mxu0 %v2585
      %2789 = vmatmul.mubr.bf16.gmra.mrb[0].mxu0 %v2581
      %v2790 = vpop.f32.mrb[0].mxu0
      %v2791 = vadd.f32 0.0, %v2790
      %v2792 = vpop.f32.mrb[0].mxu0
      %v2793 = vpop.f32.mrb[0].mxu0
      %v2794 = vadd.f32 0.0, %v2793
      %v2795 = vpop.f32.mrb[0].mxu0
      %2796 = vmatprep.mubr.bf16.mxu0 %v2593
      %2797 = vmatmul.mubr.bf16.gmra.mrb[0].mxu0 %v2589
      %v2798 = vpop.f32.mrb[0].mxu0
      %v2799 = vadd.f32 0.0, %v2798
      %v2800 = vpop.f32.mrb[0].mxu0
      %v2801 = vpop.f32.mrb[0].mxu0
      %v2802 = vadd.f32 0.0, %v2801
      %v2803 = vpop.f32.mrb[0].mxu0
      %2804 = vmatprep.mubr.bf16.mxu0 %v2611
      %2805 = vmatmul.mubr.bf16.gmra.mrb[0].mxu0 %v2602
      %v2806 = vpop.f32.mrb[0].mxu0
      %v2807 = vadd.f32 0.0, %v2806
      %v2808 = vpop.f32.mrb[0].mxu0
      %v2809 = vpop.f32.mrb[0].mxu0
      %v2810 = vadd.f32 0.0, %v2809
      %v2811 = vpop.f32.mrb[0].mxu0
      %2812 = vmatprep.mubr.bf16.mxu0 %v2610
      %2813 = vmatmul.mubr.bf16.gmra.mrb[0].mxu0 %v2601
      %v2814 = vpop.f32.mrb[0].mxu0
      %v2815 = vadd.f32 0.0, %v2814
      %v2816 = vpop.f32.mrb[0].mxu0
      %v2817 = vpop.f32.mrb[0].mxu0
      %v2818 = vpop.f32.mrb[0].mxu0
      %2819 = vdwg.mxu0
      %v2820 = vadd.f32 %v2473, %v2759
      %v2821 = vadd.f32 %v2474, %v2762
      %v2822 = vadd.f32 %v2475, %v2767
      %v2823 = vadd.f32 %v2476, %v2770
      %v2824 = vadd.f32 %v2477, %v2775
      %v2825 = vadd.f32 %v2478, %v2778
      %v2826 = vadd.f32 %v2479, %v2783
      %v2827 = vadd.f32 %v2480, %v2786
      %v2828 = vadd.f32 %v2481, %v2791
      %v2829 = vadd.f32 %v2482, %v2794
      %v2830 = vadd.f32 %v2483, %v2799
      %v2831 = vadd.f32 %v2484, %v2802
      %v2832 = vadd.f32 %v2485, %v2807
      %v2833 = vadd.f32 %v2486, %v2810
      %v2834 = vadd.f32 %v2487, %v2815
      %v2835 = vld [vmem:[%s2] sm:$0x1]
      %v2837 = vlaneseq
      %v2838 = vshrl.u32 %v2837, 7
      %v2839 = vsub.s32 0, %v2838
      %v2840 = vrot.slane %v2835, %v2839
      %v2842 = vmul.f32 %v2820, %v2840
      %v2843 = vmul.f32 %v2821, %v2840
      %v2844 = vmul.f32 %v2822, %v2840
      %v2845 = vmul.f32 %v2823, %v2840
      %v2846 = vmul.f32 %v2824, %v2840
      %v2847 = vmul.f32 %v2825, %v2840
      %v2848 = vmul.f32 %v2826, %v2840
      %v2849 = vmul.f32 %v2827, %v2840
      %v2850 = vmul.f32 %v2828, %v2840
      %v2851 = vmul.f32 %v2829, %v2840
      %v2852 = vmul.f32 %v2830, %v2840
      %v2853 = vmul.f32 %v2831, %v2840
      %v2854 = vmul.f32 %v2832, %v2840
      %v2855 = vmul.f32 %v2833, %v2840
      %v2856 = vmul.f32 %v2834, %v2840
      %v2857 = vld [vmem:[%s3] sm:$0x1]
      %v2859 = vlaneseq
      %v2860 = vshrl.u32 %v2859, 7
      %v2861 = vsub.s32 0, %v2860
      %v2862 = vrot.slane %v2857, %v2861
      %v2864 = vadd.f32 %v2842, %v2862
      %v2865 = vadd.f32 %v2843, %v2862
      %v2866 = vadd.f32 %v2844, %v2862
      %v2867 = vadd.f32 %v2845, %v2862
      %v2868 = vadd.f32 %v2846, %v2862
      %v2869 = vadd.f32 %v2847, %v2862
      %v2870 = vadd.f32 %v2848, %v2862
      %v2871 = vadd.f32 %v2849, %v2862
      %v2872 = vadd.f32 %v2850, %v2862
      %v2873 = vadd.f32 %v2851, %v2862
      %v2874 = vadd.f32 %v2852, %v2862
      %v2875 = vadd.f32 %v2853, %v2862
      %v2876 = vadd.f32 %v2854, %v2862
      %v2877 = vadd.f32 %v2855, %v2862
      %v2878 = vadd.f32 %v2856, %v2862
      %v2879 = vmax.f32 %v2864, 0.0
      %v2880 = vmax.f32 %v2865, 0.0
      %v2881 = vmax.f32 %v2866, 0.0
      %v2882 = vmax.f32 %v2867, 0.0
      %v2883 = vmax.f32 %v2868, 0.0
      %v2884 = vmax.f32 %v2869, 0.0
      %v2885 = vmax.f32 %v2870, 0.0
      %v2886 = vmax.f32 %v2871, 0.0
      %v2887 = vmax.f32 %v2872, 0.0
      %v2888 = vmax.f32 %v2873, 0.0
      %v2889 = vmax.f32 %v2874, 0.0
      %v2890 = vmax.f32 %v2875, 0.0
      %v2891 = vmax.f32 %v2876, 0.0
      %v2892 = vmax.f32 %v2877, 0.0
      %v2893 = vmax.f32 %v2878, 0.0
      %2894 = vst [vmem:[%s197] sm:$0xff] %v2879
      %2895 = vst [vmem:[%s197 + $0x8] sm:$0xff] %v2880
      %2896 = vst [vmem:[%s197 + $0x10] sm:$0xff] %v2881
      %2897 = vst [vmem:[%s197 + $0x18] sm:$0xff] %v2882
      %2898 = vst [vmem:[%s197 + $0x20] sm:$0xff] %v2883
      %2899 = vst [vmem:[%s197 + $0x28] sm:$0xff] %v2884
      %2900 = vst [vmem:[%s197 + $0x30] sm:$0xff] %v2885
      %2901 = vst [vmem:[%s197 + $0x38] sm:$0xff] %v2886
      %2902 = vst [vmem:[%s197 + $0x40] sm:$0xff] %v2887
      %2903 = vst [vmem:[%s197 + $0x48] sm:$0xff] %v2888
      %2904 = vst [vmem:[%s197 + $0x50] sm:$0xff] %v2889
      %2905 = vst [vmem:[%s197 + $0x58] sm:$0xff] %v2890
      %2906 = vst [vmem:[%s197 + $0x60] sm:$0xff] %v2891
      %2907 = vst [vmem:[%s197 + $0x68] sm:$0xff] %v2892
      %2908 = vst [vmem:[%s197 + $0x70] sm:$0xff] %v2893
      %p2909 = scmp.lt.s32.totalorder %s15, 4
      %s2910 = scalar_select %p2909, %s15, 4
      %s2911 = smul.addr %s2910, 15
      %s2912 = smul.addr %s2911, 8
      %s2913 = scalar_lea.vmem %s4, %s2912
      // Predicated region
      $region37: #{multi_decoder_forward.5} parent=35 // pred_check
        %p2914 = pneg %p122
      $region38: #{multi_decoder_forward.5} parent=35 // pred_check_branch
        %2916 = sbr.rel (%p2914) target = $region40
      $region39: #{multi_decoder_forward.5} parent=35 // pred_region
        _
      $region40: #{multi_decoder_forward.5} parent=35 // pred_fallthru
        _
    $region36: #{multi_decoder_forward.5} parent=5 // pred_fallthru
      _
    %p2917 = scmp.le.s32.totalorder 2, %s10
    // Predicated region
    $region41: #{multi_decoder_forward.5} parent=5 // pred_check
      %p2918 = pneg %p2917
    $region42: #{multi_decoder_forward.5} parent=5 // pred_check_branch
      %2920 = sbr.rel (%p2918) target = $region44
    $region43: #{multi_decoder_forward.5} parent=5 // pred_region
      %s2921 = ssub.s32 %s10, 2
      // Predicated region
      $region45: #{multi_decoder_forward.5} parent=43 // pred_check
        %p2922 = pneg %p128
      $region46: #{multi_decoder_forward.5} parent=43 // pred_check_branch
        %2924 = sbr.rel (%p2922) target = $region48
      $region47: #{multi_decoder_forward.5} parent=43 // pred_region
        %p2925 = scmp.lt.s32.totalorder %s16, 4
        %s2926 = scalar_select %p2925, %s16, 4
        %s2927 = smul.addr %s2926, 15
        %s2928 = smul.addr %s2927, 8
        %s2929 = scalar_lea.vmem %s4, %s2928
      $region48: #{multi_decoder_forward.5} parent=43 // pred_fallthru
        _
    $region44: #{multi_decoder_forward.5} parent=5 // pred_fallthru
      _
  $region6: #{multi_decoder_forward.5} parent=0 // loop_footer
    %s14 = sadd.s32 1, %s10
  $region7: #{multi_decoder_forward.5} parent=0 // loop_footer_branch
    %9 = sbr.rel target = $region3
  $region8: #{multi_decoder_forward.5} parent=0 // loop_exit
    _

// kernel: multi_decoder_forward.7
$region0: #{multi_decoder_forward.7}
  #allocation0 [shape = 'u32[]', space=smem, size = 0x4, offset = 0x4, fixed_abs, tag = 'smem constant byte address 0x4 - core index']
  #allocation1 [shape = 'u32[144,128]{1,0:T(1,128)}', space=vmem, size = 0x12000, scoped, tag = 'internal scratch']
  %s0 = inlined_call_operand.vmem [shape: f32[5,360,128], index: 0, kind: input, shape index: {}]
  %s1 = inlined_call_operand.vmem [shape: bf16[1,128,128], index: 1, kind: input, shape index: {}]
  %s2 = inlined_call_operand.vmem [shape: f32[1,128], index: 2, kind: input, shape index: {}]
  %s3 = inlined_call_operand.vmem [shape: f32[1,128], index: 3, kind: input, shape index: {}]
  %s4 = inlined_call_operand.vmem [shape: f32[5,360,128], index: 4, kind: output, shape index: {}]
  %s5 = sld [smem:[#allocation0]]
  $region49: #{multi_decoder_forward.7} parent=0
    _
  %s7 = ssub.s32 1, %s5
  %s8 = scalar_select 0, %s7, %s5
  loop: start=0, step=1, limit=7
  $region2: #{multi_decoder_forward.7} parent=0 // loop_pre_header
    _
  $region3: #{multi_decoder_forward.7} parent=0 // loop_header
    %s10 = sphi 0, %s14
    %p11 = scmp.ge.s32.totalorder %s10, 7
    %s20 = sphi 0, %s22
    %s23 = sphi 0, %s20
    %s24 = sphi 0, %s23
    %s40 = sphi 0, %s24
    %s44 = sphi 0, %s44
    %s46 = sphi 0, %s44
    %s47 = sphi 0, %s46
    %s61 = sphi 0, %s47
    %s65 = sphi 0, %s65
    %s67 = sphi 0, %s65
    %s68 = sphi 0, %s67
    %s82 = sphi 0, %s68
    %s86 = sphi 0, %s86
    %s88 = sphi 0, %s86
    %s89 = sphi 0, %s88
    %s103 = sphi 0, %s89
    %s109 = sphi 0, %s111
    %s112 = sphi 0, %s109
    %s113 = sphi 0, %s112
    %s129 = sphi 0, %s113
  $region4: #{multi_decoder_forward.7} parent=0 // loop_header_branch
    %13 = sbr.rel (%p11) target = $region8
  $region5: #{multi_decoder_forward.7} parent=0 // loop_body
    %s15 = ssub.s32 %s10, 1
    %s16 = ssub.s32 %s10, 2
    %s17 = sadd.s32 %s10, 1
    %s18 = ssub.s32 %s10, %s17
    %p19 = scmp.eq.s32.totalorder %s18, 0
    %s21 = sadd.s32 %s20, 1
    %s22 = scalar_select %p19, %s20, %s21
    %p25 = pneg %p19
    %p26 = scmp.eq.s32.totalorder %s10, 4
    %p27 = por %p25, %p26
    %p28 = scmp.ne.s32.totalorder %s20, %s23
    %p29 = scmp.eq.s32.totalorder %s10, 0
    %p30 = por %p28, %p29
    %p31 = scmp.ne.s32.totalorder %s20, %s23
    %p32 = scmp.eq.s32.totalorder %s15, 4
    %p33 = por %p31, %p32
    %p34 = scmp.ne.s32.totalorder %s23, %s24
    %p35 = scmp.eq.s32.totalorder %s15, 0
    %p36 = por %p34, %p35
    %p37 = scmp.ne.s32.totalorder %s23, %s24
    %p38 = scmp.eq.s32.totalorder %s16, 4
    %p39 = por %p37, %p38
    %p41 = scmp.ne.s32.totalorder %s24, %s40
    %p42 = scmp.eq.s32.totalorder %s16, 0
    %p43 = por %p41, %p42
    %s45 = sadd.s32 %s44, 1
    %p48 = scmp.eq.s32.totalorder %s10, 4
    %p49 = scmp.ne.s32.totalorder %s44, %s46
    %p50 = scmp.eq.s32.totalorder %s10, 0
    %p51 = por %p49, %p50
    %p52 = scmp.ne.s32.totalorder %s44, %s46
    %p53 = scmp.eq.s32.totalorder %s15, 4
    %p54 = por %p52, %p53
    %p55 = scmp.ne.s32.totalorder %s46, %s47
    %p56 = scmp.eq.s32.totalorder %s15, 0
    %p57 = por %p55, %p56
    %p58 = scmp.ne.s32.totalorder %s46, %s47
    %p59 = scmp.eq.s32.totalorder %s16, 4
    %p60 = por %p58, %p59
    %p62 = scmp.ne.s32.totalorder %s47, %s61
    %p63 = scmp.eq.s32.totalorder %s16, 0
    %p64 = por %p62, %p63
    %s66 = sadd.s32 %s65, 1
    %p69 = scmp.eq.s32.totalorder %s10, 4
    %p70 = scmp.ne.s32.totalorder %s65, %s67
    %p71 = scmp.eq.s32.totalorder %s10, 0
    %p72 = por %p70, %p71
    %p73 = scmp.ne.s32.totalorder %s65, %s67
    %p74 = scmp.eq.s32.totalorder %s15, 4
    %p75 = por %p73, %p74
    %p76 = scmp.ne.s32.totalorder %s67, %s68
    %p77 = scmp.eq.s32.totalorder %s15, 0
    %p78 = por %p76, %p77
    %p79 = scmp.ne.s32.totalorder %s67, %s68
    %p80 = scmp.eq.s32.totalorder %s16, 4
    %p81 = por %p79, %p80
    %p83 = scmp.ne.s32.totalorder %s68, %s82
    %p84 = scmp.eq.s32.totalorder %s16, 0
    %p85 = por %p83, %p84
    %s87 = sadd.s32 %s86, 1
    %p90 = scmp.eq.s32.totalorder %s10, 4
    %p91 = scmp.ne.s32.totalorder %s86, %s88
    %p92 = scmp.eq.s32.totalorder %s10, 0
    %p93 = por %p91, %p92
    %p94 = scmp.ne.s32.totalorder %s86, %s88
    %p95 = scmp.eq.s32.totalorder %s15, 4
    %p96 = por %p94, %p95
    %p97 = scmp.ne.s32.totalorder %s88, %s89
    %p98 = scmp.eq.s32.totalorder %s15, 0
    %p99 = por %p97, %p98
    %p100 = scmp.ne.s32.totalorder %s88, %s89
    %p101 = scmp.eq.s32.totalorder %s16, 4
    %p102 = por %p100, %p101
    %p104 = scmp.ne.s32.totalorder %s89, %s103
    %p105 = scmp.eq.s32.totalorder %s16, 0
    %p106 = por %p104, %p105
    %s107 = ssub.s32 %s10, %s17
    %p108 = scmp.eq.s32.totalorder %s107, 0
    %s110 = sadd.s32 %s109, 1
    %s111 = scalar_select %p108, %s109, %s110
    %p114 = pneg %p108
    %p115 = scmp.eq.s32.totalorder %s10, 4
    %p116 = por %p114, %p115
    %p117 = scmp.ne.s32.totalorder %s109, %s112
    %p118 = scmp.eq.s32.totalorder %s10, 0
    %p119 = por %p117, %p118
    %p120 = scmp.ne.s32.totalorder %s109, %s112
    %p121 = scmp.eq.s32.totalorder %s15, 4
    %p122 = por %p120, %p121
    %p123 = scmp.ne.s32.totalorder %s112, %s113
    %p124 = scmp.eq.s32.totalorder %s15, 0
    %p125 = por %p123, %p124
    %p126 = scmp.ne.s32.totalorder %s112, %s113
    %p127 = scmp.eq.s32.totalorder %s16, 4
    %p128 = por %p126, %p127
    %p130 = scmp.ne.s32.totalorder %s113, %s129
    %p131 = scmp.eq.s32.totalorder %s16, 0
    %p132 = por %p130, %p131
    %p133 = scmp.le.s32.totalorder 1, %s10
    %p134 = scmp.lt.s32.totalorder %s10, 6
    %p135 = pnand %p133, %p134
    %p136 = pneg %p135
    // Predicated region
    $region9: #{multi_decoder_forward.7} parent=5 // pred_check
      _
    $region10: #{multi_decoder_forward.7} parent=5 // pred_check_branch
      %138 = sbr.rel (%p135) target = $region12
    $region11: #{multi_decoder_forward.7} parent=5 // pred_region
      %s139 = ssub.s32 %s10, 1
      // Predicated region
      $region13: #{multi_decoder_forward.7} parent=11 // pred_check
        %p140 = pneg %p57
      $region14: #{multi_decoder_forward.7} parent=11 // pred_check_branch
        %142 = sbr.rel (%p140) target = $region16
      $region15: #{multi_decoder_forward.7} parent=11 // pred_region
        _
      $region16: #{multi_decoder_forward.7} parent=11 // pred_fallthru
        _
      // Predicated region
      $region17: #{multi_decoder_forward.7} parent=11 // pred_check
        %p143 = pneg %p78
      $region18: #{multi_decoder_forward.7} parent=11 // pred_check_branch
        %145 = sbr.rel (%p143) target = $region20
      $region19: #{multi_decoder_forward.7} parent=11 // pred_region
        _
      $region20: #{multi_decoder_forward.7} parent=11 // pred_fallthru
        _
      // Predicated region
      $region21: #{multi_decoder_forward.7} parent=11 // pred_check
        %p146 = pneg %p99
      $region22: #{multi_decoder_forward.7} parent=11 // pred_check_branch
        %148 = sbr.rel (%p146) target = $region24
      $region23: #{multi_decoder_forward.7} parent=11 // pred_region
        _
      $region24: #{multi_decoder_forward.7} parent=11 // pred_fallthru
        _
    $region12: #{multi_decoder_forward.7} parent=5 // pred_fallthru
      _
    %p149 = scmp.lt.s32.totalorder %s10, 5
    // Predicated region
    $region25: #{multi_decoder_forward.7} parent=5 // pred_check
      %p150 = pneg %p149
    $region26: #{multi_decoder_forward.7} parent=5 // pred_check_branch
      %152 = sbr.rel (%p150) target = $region28
    $region27: #{multi_decoder_forward.7} parent=5 // pred_region
      // Predicated region
      $region29: #{multi_decoder_forward.7} parent=27 // pred_check
        %p153 = pneg %p30
      $region30: #{multi_decoder_forward.7} parent=27 // pred_check_branch
        %155 = sbr.rel (%p153) target = $region32
      $region31: #{multi_decoder_forward.7} parent=27 // pred_region
        %p156 = scmp.lt.s32.totalorder %s10, 4
        %s157 = scalar_select %p156, %s10, 4
        %s158 = smul.addr %s157, 45
        %s159 = smul.addr %s158, 8
        %s160 = scalar_lea.vmem %s0, %s159
      $region32: #{multi_decoder_forward.7} parent=27 // pred_fallthru
        _
    $region28: #{multi_decoder_forward.7} parent=5 // pred_fallthru
      _
    %p161 = scmp.le.s32.totalorder 1, %s10
    %p162 = scmp.lt.s32.totalorder %s10, 6
    %p163 = pnand %p161, %p162
    %p164 = pneg %p163
    // Predicated region
    $region33: #{multi_decoder_forward.7} parent=5 // pred_check
      _
    $region34: #{multi_decoder_forward.7} parent=5 // pred_check_branch
      %166 = sbr.rel (%p163) target = $region36
    $region35: #{multi_decoder_forward.7} parent=5 // pred_region
      %s167 = ssub.s32 %s10, 1
      %p168 = scmp.lt.s32.totalorder %s15, 4
      %s169 = scalar_select %p168, %s15, 4
      %s170 = smul.addr %s169, 45
      %s171 = smul.addr %s170, 8
      %s172 = scalar_lea.vmem %s0, %s171
      %p173 = pneg %p36
      %p174 = pneg %p33
      %p175 = pneg %p57
      %p176 = pneg %p54
      %p177 = pneg %p78
      %p178 = pneg %p75
      %p179 = pneg %p99
      %p180 = pneg %p96
      %p181 = pneg %p125
      %p182 = pneg %p122
      %p183 = scmp.lt.s32.totalorder %s15, 4
      %s184 = scalar_select %p183, %s15, 4
      %s185 = smul.addr %s184, 45
      %s186 = smul.addr %s185, 8
      %s187 = scalar_lea.vmem %s4, %s186
      %p188 = scmp.lt.s32.totalorder %s15, 4
      %s189 = scalar_select %p188, %s15, 4
      %s190 = smul.addr %s189, 45
      %s191 = smul.addr %s190, 8
      %s192 = scalar_lea.vmem %s0, %s191
      %p193 = scmp.lt.s32.totalorder %s15, 4
      %s194 = scalar_select %p193, %s15, 4
      %s195 = smul.addr %s194, 45
      %s196 = smul.addr %s195, 8
      %s197 = scalar_lea.vmem %s4, %s196
      %v199 = vld [vmem:[%s192] sm:$0xff]
      %v200 = vld [vmem:[%s192 + $0x8] sm:$0xff]
      %v201 = vld [vmem:[%s192 + $0x10] sm:$0xff]
      %v202 = vld [vmem:[%s192 + $0x18] sm:$0xff]
      %v203 = vld [vmem:[%s192 + $0x20] sm:$0xff]
      %v204 = vld [vmem:[%s192 + $0x28] sm:$0xff]
      %v205 = vld [vmem:[%s192 + $0x30] sm:$0xff]
      %v206 = vld [vmem:[%s192 + $0x38] sm:$0xff]
      %v207 = vld [vmem:[%s192 + $0x40] sm:$0xff]
      %v208 = vld [vmem:[%s192 + $0x48] sm:$0xff]
      %v209 = vld [vmem:[%s192 + $0x50] sm:$0xff]
      %v210 = vld [vmem:[%s192 + $0x58] sm:$0xff]
      %v211 = vld [vmem:[%s192 + $0x60] sm:$0xff]
      %v212 = vld [vmem:[%s192 + $0x68] sm:$0xff]
      %v213 = vld [vmem:[%s192 + $0x70] sm:$0xff]
      %v214 = vld [vmem:[%s192 + $0x78] sm:$0xff]
      %v215 = vld [vmem:[%s192 + $0x80] sm:$0xff]
      %v216 = vld [vmem:[%s192 + $0x88] sm:$0xff]
      %v217 = vld [vmem:[%s192 + $0x90] sm:$0xff]
      %v218 = vld [vmem:[%s192 + $0x98] sm:$0xff]
      %v219 = vld [vmem:[%s192 + $0xa0] sm:$0xff]
      %v220 = vld [vmem:[%s192 + $0xa8] sm:$0xff]
      %v221 = vld [vmem:[%s192 + $0xb0] sm:$0xff]
      %v222 = vld [vmem:[%s192 + $0xb8] sm:$0xff]
      %v223 = vld [vmem:[%s192 + $0xc0] sm:$0xff]
      %v224 = vld [vmem:[%s192 + $0xc8] sm:$0xff]
      %v225 = vld [vmem:[%s192 + $0xd0] sm:$0xff]
      %v226 = vld [vmem:[%s192 + $0xd8] sm:$0xff]
      %v227 = vld [vmem:[%s192 + $0xe0] sm:$0xff]
      %v228 = vld [vmem:[%s192 + $0xe8] sm:$0xff]
      %v229 = vld [vmem:[%s192 + $0xf0] sm:$0xff]
      %v230 = vld [vmem:[%s192 + $0xf8] sm:$0xff]
      %v231 = vld [vmem:[%s192 + $0x100] sm:$0xff]
      %v232 = vld [vmem:[%s192 + $0x108] sm:$0xff]
      %v233 = vld [vmem:[%s192 + $0x110] sm:$0xff]
      %v234 = vld [vmem:[%s192 + $0x118] sm:$0xff]
      %v235 = vld [vmem:[%s192 + $0x120] sm:$0xff]
      %v236 = vld [vmem:[%s192 + $0x128] sm:$0xff]
      %v237 = vld [vmem:[%s192 + $0x130] sm:$0xff]
      %v238 = vld [vmem:[%s192 + $0x138] sm:$0xff]
      %v239 = vld [vmem:[%s192 + $0x140] sm:$0xff]
      %v240 = vld [vmem:[%s192 + $0x148] sm:$0xff]
      %v241 = vld [vmem:[%s192 + $0x150] sm:$0xff]
      %v242 = vld [vmem:[%s192 + $0x158] sm:$0xff]
      %v243 = vld [vmem:[%s192 + $0x160] sm:$0xff]
      %v244 = vpack.c.bf16 %v200, %v199
      %v245 = vpack.c.bf16 %v202, %v201
      %v246 = vpack.c.bf16 %v204, %v203
      %v247 = vpack.c.bf16 %v206, %v205
      %v248 = vpack.c.bf16 %v208, %v207
      %v249 = vpack.c.bf16 %v210, %v209
      %v250 = vpack.c.bf16 %v212, %v211
      %v251 = vpack.c.bf16 %v214, %v213
      %v252 = vpack.c.bf16 %v216, %v215
      %v253 = vpack.c.bf16 %v218, %v217
      %v254 = vpack.c.bf16 %v220, %v219
      %v255 = vpack.c.bf16 %v222, %v221
      %v256 = vpack.c.bf16 %v224, %v223
      %v257 = vpack.c.bf16 %v226, %v225
      %v258 = vpack.c.bf16 %v228, %v227
      %v259 = vpack.c.bf16 %v230, %v229
      %v260 = vpack.c.bf16 %v232, %v231
      %v261 = vpack.c.bf16 %v234, %v233
      %v262 = vpack.c.bf16 %v236, %v235
      %v263 = vpack.c.bf16 %v238, %v237
      %v264 = vpack.c.bf16 %v240, %v239
      %v265 = vpack.c.bf16 %v242, %v241
      %v266 = vpack.c.bf16 %v243, %v243
      %v267 = vld [vmem:[%s1] sm:$0xf]
      %v268 = vld [vmem:[%s1 + $0x4] sm:$0xf]
      %v269 = vld [vmem:[%s1 + $0x8] sm:$0xf]
      %v270 = vld [vmem:[%s1 + $0xc] sm:$0xf]
      %v271 = vld [vmem:[%s1 + $0x10] sm:$0xf]
      %v272 = vld [vmem:[%s1 + $0x14] sm:$0xf]
      %v273 = vld [vmem:[%s1 + $0x18] sm:$0xf]
      %v274 = vld [vmem:[%s1 + $0x1c] sm:$0xf]
      %v275 = vld [vmem:[%s1 + $0x20] sm:$0xf]
      %v276 = vld [vmem:[%s1 + $0x24] sm:$0xf]
      %v277 = vld [vmem:[%s1 + $0x28] sm:$0xf]
      %v278 = vld [vmem:[%s1 + $0x2c] sm:$0xf]
      %v279 = vld [vmem:[%s1 + $0x30] sm:$0xf]
      %v280 = vld [vmem:[%s1 + $0x34] sm:$0xf]
      %v281 = vld [vmem:[%s1 + $0x38] sm:$0xf]
      %v282 = vld [vmem:[%s1 + $0x3c] sm:$0xf]
      %v299 = vunpack.c.l.b16 %v267
      %v300 = vunpack.c.l.b16 %v268
      %v301 = vunpack.c.l.b16 %v269
      %v302 = vunpack.c.l.b16 %v270
      %v303 = vunpack.c.l.b16 %v271
      %v304 = vunpack.c.l.b16 %v272
      %v305 = vunpack.c.l.b16 %v273
      %v306 = vunpack.c.l.b16 %v274
      %v307 = vunpack.c.l.b16 %v275
      %v308 = vunpack.c.l.b16 %v276
      %v309 = vunpack.c.l.b16 %v277
      %v310 = vunpack.c.l.b16 %v278
      %v311 = vunpack.c.l.b16 %v279
      %v312 = vunpack.c.l.b16 %v280
      %v313 = vunpack.c.l.b16 %v281
      %v314 = vunpack.c.l.b16 %v282
      %v315 = vpack.c.b16 %v300, %v299
      %v316 = vpack.c.b16 %v302, %v301
      %v317 = vpack.c.b16 %v304, %v303
      %v318 = vpack.c.b16 %v306, %v305
      %v319 = vpack.c.b16 %v308, %v307
      %v320 = vpack.c.b16 %v310, %v309
      %v321 = vpack.c.b16 %v312, %v311
      %v322 = vpack.c.b16 %v314, %v313
      %331 = vmatprep.subr.bf16.mxu0 0
      %332 = vmatpush1.bf16.msra.mxu0 %v315
      %333 = vmatprep.subr.bf16.mxu0 0
      %334 = vmatpush1.bf16.msra.mxu0 %v316
      %335 = vmatprep.subr.bf16.mxu0 0
      %336 = vmatpush1.bf16.msra.mxu0 %v317
      %337 = vmatprep.subr.bf16.mxu0 0
      %338 = vmatpush1.bf16.msra.mxu0 %v318
      %339 = vmatprep.subr.bf16.mxu0 0
      %340 = vmatpush1.bf16.msra.mxu0 %v319
      %341 = vmatprep.subr.bf16.mxu0 0
      %342 = vmatpush1.bf16.msra.mxu0 %v320
      %343 = vmatprep.subr.bf16.mxu0 0
      %344 = vmatpush1.bf16.msra.mxu0 %v321
      %345 = vmatprep.subr.bf16.mxu0 0
      %346 = vmatpush1.bf16.msra.mxu0 %v322
      %347 = vmatprep.subr.bf16.mxu0 0
      %348 = vmatpush1.bf16.msra.mxu0 0
      %349 = vmatprep.subr.bf16.mxu0 0
      %350 = vmatpush1.bf16.msra.mxu0 0
      %351 = vmatprep.subr.bf16.mxu0 0
      %352 = vmatpush1.bf16.msra.mxu0 0
      %353 = vmatprep.subr.bf16.mxu0 0
      %354 = vmatpush1.bf16.msra.mxu0 0
      %355 = vmatprep.subr.bf16.mxu0 0
      %356 = vmatpush1.bf16.msra.mxu0 0
      %357 = vmatprep.subr.bf16.mxu0 0
      %358 = vmatpush1.bf16.msra.mxu0 0
      %359 = vmatprep.subr.bf16.mxu0 0
      %360 = vmatpush1.bf16.msra.mxu0 0
      %361 = vmatprep.subr.bf16.mxu0 0
      %362 = vmatpush1.bf16.msra.mxu0 0
      %363 = vmatprep.mubr.bf16.mxu0 0
      %364 = vmatmul.mubr.bf16.gmra.mrb[0].mxu0 %v244
      %v365 = vpop.f32.mrb[0].mxu0
      %v366 = vadd.f32 0.0, %v365
      %v367 = vpop.f32.mrb[0].mxu0
      %v368 = vpop.f32.mrb[0].mxu0
      %v369 = vadd.f32 0.0, %v368
      %v370 = vpop.f32.mrb[0].mxu0
      %371 = vmatprep.mubr.bf16.mxu0 0
      %372 = vmatmul.mubr.bf16.gmra.mrb[0].mxu0 %v245
      %v373 = vpop.f32.mrb[0].mxu0
      %v374 = vadd.f32 0.0, %v373
      %v375 = vpop.f32.mrb[0].mxu0
      %v376 = vpop.f32.mrb[0].mxu0
      %v377 = vadd.f32 0.0, %v376
      %v378 = vpop.f32.mrb[0].mxu0
      %379 = vmatprep.mubr.bf16.mxu0 0
      %380 = vmatmul.mubr.bf16.gmra.mrb[0].mxu0 %v246
      %v381 = vpop.f32.mrb[0].mxu0
      %v382 = vadd.f32 0.0, %v381
      %v383 = vpop.f32.mrb[0].mxu0
      %v384 = vpop.f32.mrb[0].mxu0
      %v385 = vadd.f32 0.0, %v384
      %v386 = vpop.f32.mrb[0].mxu0
      %387 = vmatprep.mubr.bf16.mxu0 0
      %388 = vmatmul.mubr.bf16.gmra.mrb[0].mxu0 %v247
      %v389 = vpop.f32.mrb[0].mxu0
      %v390 = vadd.f32 0.0, %v389
      %v391 = vpop.f32.mrb[0].mxu0
      %v392 = vpop.f32.mrb[0].mxu0
      %v393 = vadd.f32 0.0, %v392
      %v394 = vpop.f32.mrb[0].mxu0
      %395 = vmatprep.mubr.bf16.mxu0 0
      %396 = vmatmul.mubr.bf16.gmra.mrb[0].mxu0 %v248
      %v397 = vpop.f32.mrb[0].mxu0
      %v398 = vadd.f32 0.0, %v397
      %v399 = vpop.f32.mrb[0].mxu0
      %v400 = vpop.f32.mrb[0].mxu0
      %v401 = vadd.f32 0.0, %v400
      %v402 = vpop.f32.mrb[0].mxu0
      %403 = vmatprep.mubr.bf16.mxu0 0
      %404 = vmatmul.mubr.bf16.gmra.mrb[0].mxu0 %v249
      %v405 = vpop.f32.mrb[0].mxu0
      %v406 = vadd.f32 0.0, %v405
      %v407 = vpop.f32.mrb[0].mxu0
      %v408 = vpop.f32.mrb[0].mxu0
      %v409 = vadd.f32 0.0, %v408
      %v410 = vpop.f32.mrb[0].mxu0
      %411 = vmatprep.mubr.bf16.mxu0 0
      %412 = vmatmul.mubr.bf16.gmra.mrb[0].mxu0 %v250
      %v413 = vpop.f32.mrb[0].mxu0
      %v414 = vadd.f32 0.0, %v413
      %v415 = vpop.f32.mrb[0].mxu0
      %v416 = vpop.f32.mrb[0].mxu0
      %v417 = vadd.f32 0.0, %v416
      %v418 = vpop.f32.mrb[0].mxu0
      %419 = vmatprep.mubr.bf16.mxu0 0
      %420 = vmatmul.mubr.bf16.gmra.mrb[0].mxu0 %v251
      %v421 = vpop.f32.mrb[0].mxu0
      %v422 = vadd.f32 0.0, %v421
      %v423 = vpop.f32.mrb[0].mxu0
      %v424 = vpop.f32.mrb[0].mxu0
      %v425 = vadd.f32 0.0, %v424
      %v426 = vpop.f32.mrb[0].mxu0
      %427 = vmatprep.mubr.bf16.mxu0 0
      %428 = vmatmul.mubr.bf16.gmra.mrb[0].mxu0 %v252
      %v429 = vpop.f32.mrb[0].mxu0
      %v430 = vadd.f32 0.0, %v429
      %v431 = vpop.f32.mrb[0].mxu0
      %v432 = vpop.f32.mrb[0].mxu0
      %v433 = vadd.f32 0.0, %v432
      %v434 = vpop.f32.mrb[0].mxu0
      %435 = vmatprep.mubr.bf16.mxu0 0
      %436 = vmatmul.mubr.bf16.gmra.mrb[0].mxu0 %v253
      %v437 = vpop.f32.mrb[0].mxu0
      %v438 = vadd.f32 0.0, %v437
      %v439 = vpop.f32.mrb[0].mxu0
      %v440 = vpop.f32.mrb[0].mxu0
      %v441 = vadd.f32 0.0, %v440
      %v442 = vpop.f32.mrb[0].mxu0
      %443 = vmatprep.mubr.bf16.mxu0 0
      %444 = vmatmul.mubr.bf16.gmra.mrb[0].mxu0 %v254
      %v445 = vpop.f32.mrb[0].mxu0
      %v446 = vadd.f32 0.0, %v445
      %v447 = vpop.f32.mrb[0].mxu0
      %v448 = vpop.f32.mrb[0].mxu0
      %v449 = vadd.f32 0.0, %v448
      %v450 = vpop.f32.mrb[0].mxu0
      %451 = vmatprep.mubr.bf16.mxu0 0
      %452 = vmatmul.mubr.bf16.gmra.mrb[0].mxu0 %v255
      %v453 = vpop.f32.mrb[0].mxu0
      %v454 = vadd.f32 0.0, %v453
      %v455 = vpop.f32.mrb[0].mxu0
      %v456 = vpop.f32.mrb[0].mxu0
      %v457 = vadd.f32 0.0, %v456
      %v458 = vpop.f32.mrb[0].mxu0
      %459 = vmatprep.mubr.bf16.mxu0 0
      %460 = vmatmul.mubr.bf16.gmra.mrb[0].mxu0 %v256
      %v461 = vpop.f32.mrb[0].mxu0
      %v462 = vadd.f32 0.0, %v461
      %v463 = vpop.f32.mrb[0].mxu0
      %v464 = vpop.f32.mrb[0].mxu0
      %v465 = vadd.f32 0.0, %v464
      %v466 = vpop.f32.mrb[0].mxu0
      %467 = vmatprep.mubr.bf16.mxu0 0
      %468 = vmatmul.mubr.bf16.gmra.mrb[0].mxu0 %v257
      %v469 = vpop.f32.mrb[0].mxu0
      %v470 = vadd.f32 0.0, %v469
      %v471 = vpop.f32.mrb[0].mxu0
      %v472 = vpop.f32.mrb[0].mxu0
      %v473 = vadd.f32 0.0, %v472
      %v474 = vpop.f32.mrb[0].mxu0
      %475 = vmatprep.mubr.bf16.mxu0 0
      %476 = vmatmul.mubr.bf16.gmra.mrb[0].mxu0 %v258
      %v477 = vpop.f32.mrb[0].mxu0
      %v478 = vadd.f32 0.0, %v477
      %v479 = vpop.f32.mrb[0].mxu0
      %v480 = vpop.f32.mrb[0].mxu0
      %v481 = vadd.f32 0.0, %v480
      %v482 = vpop.f32.mrb[0].mxu0
      %483 = vmatprep.mubr.bf16.mxu0 0
      %484 = vmatmul.mubr.bf16.gmra.mrb[0].mxu0 %v259
      %v485 = vpop.f32.mrb[0].mxu0
      %v486 = vadd.f32 0.0, %v485
      %v487 = vpop.f32.mrb[0].mxu0
      %v488 = vpop.f32.mrb[0].mxu0
      %v489 = vadd.f32 0.0, %v488
      %v490 = vpop.f32.mrb[0].mxu0
      %491 = vmatprep.mubr.bf16.mxu0 0
      %492 = vmatmul.mubr.bf16.gmra.mrb[0].mxu0 %v260
      %v493 = vpop.f32.mrb[0].mxu0
      %v494 = vadd.f32 0.0, %v493
      %v495 = vpop.f32.mrb[0].mxu0
      %v496 = vpop.f32.mrb[0].mxu0
      %v497 = vadd.f32 0.0, %v496
      %v498 = vpop.f32.mrb[0].mxu0
      %499 = vmatprep.mubr.bf16.mxu0 0
      %500 = vmatmul.mubr.bf16.gmra.mrb[0].mxu0 %v261
      %v501 = vpop.f32.mrb[0].mxu0
      %v502 = vadd.f32 0.0, %v501
      %v503 = vpop.f32.mrb[0].mxu0
      %v504 = vpop.f32.mrb[0].mxu0
      %v505 = vadd.f32 0.0, %v504
      %v506 = vpop.f32.mrb[0].mxu0
      %507 = vmatprep.mubr.bf16.mxu0 0
      %508 = vmatmul.mubr.bf16.gmra.mrb[0].mxu0 %v262
      %v509 = vpop.f32.mrb[0].mxu0
      %v510 = vadd.f32 0.0, %v509
      %v511 = vpop.f32.mrb[0].mxu0
      %v512 = vpop.f32.mrb[0].mxu0
      %v513 = vadd.f32 0.0, %v512
      %v514 = vpop.f32.mrb[0].mxu0
      %515 = vmatprep.mubr.bf16.mxu0 0
      %516 = vmatmul.mubr.bf16.gmra.mrb[0].mxu0 %v263
      %v517 = vpop.f32.mrb[0].mxu0
      %v518 = vadd.f32 0.0, %v517
      %v519 = vpop.f32.mrb[0].mxu0
      %v520 = vpop.f32.mrb[0].mxu0
      %v521 = vadd.f32 0.0, %v520
      %v522 = vpop.f32.mrb[0].mxu0
      %523 = vmatprep.mubr.bf16.mxu0 0
      %524 = vmatmul.mubr.bf16.gmra.mrb[0].mxu0 %v264
      %v525 = vpop.f32.mrb[0].mxu0
      %v526 = vadd.f32 0.0, %v525
      %v527 = vpop.f32.mrb[0].mxu0
      %v528 = vpop.f32.mrb[0].mxu0
      %v529 = vadd.f32 0.0, %v528
      %v530 = vpop.f32.mrb[0].mxu0
      %531 = vmatprep.mubr.bf16.mxu0 0
      %532 = vmatmul.mubr.bf16.gmra.mrb[0].mxu0 %v265
      %v533 = vpop.f32.mrb[0].mxu0
      %v534 = vadd.f32 0.0, %v533
      %v535 = vpop.f32.mrb[0].mxu0
      %v536 = vpop.f32.mrb[0].mxu0
      %v537 = vadd.f32 0.0, %v536
      %v538 = vpop.f32.mrb[0].mxu0
      %539 = vmatprep.mubr.bf16.mxu0 0
      %540 = vmatmul.mubr.bf16.gmra.mrb[0].mxu0 %v266
      %v541 = vpop.f32.mrb[0].mxu0
      %v542 = vadd.f32 0.0, %v541
      %v543 = vpop.f32.mrb[0].mxu0
      %v544 = vpop.f32.mrb[0].mxu0
      %v545 = vpop.f32.mrb[0].mxu0
      %546 = vdwg.mxu0
      %v547 = vld [vmem:[%s2] sm:$0x1]
      %v549 = vlaneseq
      %v550 = vshrl.u32 %v549, 7
      %v551 = vsub.s32 0, %v550
      %v552 = vrot.slane %v547, %v551
      %v554 = vmul.f32 %v366, %v552
      %v555 = vmul.f32 %v369, %v552
      %v556 = vmul.f32 %v374, %v552
      %v557 = vmul.f32 %v377, %v552
      %v558 = vmul.f32 %v382, %v552
      %v559 = vmul.f32 %v385, %v552
      %v560 = vmul.f32 %v390, %v552
      %v561 = vmul.f32 %v393, %v552
      %v562 = vmul.f32 %v398, %v552
      %v563 = vmul.f32 %v401, %v552
      %v564 = vmul.f32 %v406, %v552
      %v565 = vmul.f32 %v409, %v552
      %v566 = vmul.f32 %v414, %v552
      %v567 = vmul.f32 %v417, %v552
      %v568 = vmul.f32 %v422, %v552
      %v569 = vmul.f32 %v425, %v552
      %v570 = vmul.f32 %v430, %v552
      %v571 = vmul.f32 %v433, %v552
      %v572 = vmul.f32 %v438, %v552
      %v573 = vmul.f32 %v441, %v552
      %v574 = vmul.f32 %v446, %v552
      %v575 = vmul.f32 %v449, %v552
      %v576 = vmul.f32 %v454, %v552
      %v577 = vmul.f32 %v457, %v552
      %v578 = vmul.f32 %v462, %v552
      %v579 = vmul.f32 %v465, %v552
      %v580 = vmul.f32 %v470, %v552
      %v581 = vmul.f32 %v473, %v552
      %v582 = vmul.f32 %v478, %v552
      %v583 = vmul.f32 %v481, %v552
      %v584 = vmul.f32 %v486, %v552
      %v585 = vmul.f32 %v489, %v552
      %v586 = vmul.f32 %v494, %v552
      %v587 = vmul.f32 %v497, %v552
      %v588 = vmul.f32 %v502, %v552
      %v589 = vmul.f32 %v505, %v552
      %v590 = vmul.f32 %v510, %v552
      %v591 = vmul.f32 %v513, %v552
      %v592 = vmul.f32 %v518, %v552
      %v593 = vmul.f32 %v521, %v552
      %v594 = vmul.f32 %v526, %v552
      %v595 = vmul.f32 %v529, %v552
      %v596 = vmul.f32 %v534, %v552
      %v597 = vmul.f32 %v537, %v552
      %v598 = vmul.f32 %v542, %v552
      %v599 = vld [vmem:[%s3] sm:$0x1]
      %v601 = vlaneseq
      %v602 = vshrl.u32 %v601, 7
      %v603 = vsub.s32 0, %v602
      %v604 = vrot.slane %v599, %v603
      %v606 = vadd.f32 %v554, %v604
      %v607 = vadd.f32 %v555, %v604
      %v608 = vadd.f32 %v556, %v604
      %v609 = vadd.f32 %v557, %v604
      %v610 = vadd.f32 %v558, %v604
      %v611 = vadd.f32 %v559, %v604
      %v612 = vadd.f32 %v560, %v604
      %v613 = vadd.f32 %v561, %v604
      %v614 = vadd.f32 %v562, %v604
      %v615 = vadd.f32 %v563, %v604
      %v616 = vadd.f32 %v564, %v604
      %v617 = vadd.f32 %v565, %v604
      %v618 = vadd.f32 %v566, %v604
      %v619 = vadd.f32 %v567, %v604
      %v620 = vadd.f32 %v568, %v604
      %v621 = vadd.f32 %v569, %v604
      %v622 = vadd.f32 %v570, %v604
      %v623 = vadd.f32 %v571, %v604
      %v624 = vadd.f32 %v572, %v604
      %v625 = vadd.f32 %v573, %v604
      %v626 = vadd.f32 %v574, %v604
      %v627 = vadd.f32 %v575, %v604
      %v628 = vadd.f32 %v576, %v604
      %v629 = vadd.f32 %v577, %v604
      %v630 = vadd.f32 %v578, %v604
      %v631 = vadd.f32 %v579, %v604
      %v632 = vadd.f32 %v580, %v604
      %v633 = vadd.f32 %v581, %v604
      %v634 = vadd.f32 %v582, %v604
      %v635 = vadd.f32 %v583, %v604
      %v636 = vadd.f32 %v584, %v604
      %v637 = vadd.f32 %v585, %v604
      %v638 = vadd.f32 %v586, %v604
      %v639 = vadd.f32 %v587, %v604
      %v640 = vadd.f32 %v588, %v604
      %v641 = vadd.f32 %v589, %v604
      %v642 = vadd.f32 %v590, %v604
      %v643 = vadd.f32 %v591, %v604
      %v644 = vadd.f32 %v592, %v604
      %v645 = vadd.f32 %v593, %v604
      %v646 = vadd.f32 %v594, %v604
      %v647 = vadd.f32 %v595, %v604
      %v648 = vadd.f32 %v596, %v604
      %v649 = vadd.f32 %v597, %v604
      %v650 = vadd.f32 %v598, %v604
      %651 = vst [vmem:[%s197] sm:$0xff] %v606
      %652 = vst [vmem:[%s197 + $0x8] sm:$0xff] %v607
      %653 = vst [vmem:[%s197 + $0x10] sm:$0xff] %v608
      %654 = vst [vmem:[%s197 + $0x18] sm:$0xff] %v609
      %655 = vst [vmem:[%s197 + $0x20] sm:$0xff] %v610
      %656 = vst [vmem:[%s197 + $0x28] sm:$0xff] %v611
      %657 = vst [vmem:[%s197 + $0x30] sm:$0xff] %v612
      %658 = vst [vmem:[%s197 + $0x38] sm:$0xff] %v613
      %659 = vst [vmem:[%s197 + $0x40] sm:$0xff] %v614
      %660 = vst [vmem:[%s197 + $0x48] sm:$0xff] %v615
      %661 = vst [vmem:[%s197 + $0x50] sm:$0xff] %v616
      %662 = vst [vmem:[%s197 + $0x58] sm:$0xff] %v617
      %663 = vst [vmem:[%s197 + $0x60] sm:$0xff] %v618
      %664 = vst [vmem:[%s197 + $0x68] sm:$0xff] %v619
      %665 = vst [vmem:[%s197 + $0x70] sm:$0xff] %v620
      %666 = vst [vmem:[%s197 + $0x78] sm:$0xff] %v621
      %667 = vst [vmem:[%s197 + $0x80] sm:$0xff] %v622
      %668 = vst [vmem:[%s197 + $0x88] sm:$0xff] %v623
      %669 = vst [vmem:[%s197 + $0x90] sm:$0xff] %v624
      %670 = vst [vmem:[%s197 + $0x98] sm:$0xff] %v625
      %671 = vst [vmem:[%s197 + $0xa0] sm:$0xff] %v626
      %672 = vst [vmem:[%s197 + $0xa8] sm:$0xff] %v627
      %673 = vst [vmem:[%s197 + $0xb0] sm:$0xff] %v628
      %674 = vst [vmem:[%s197 + $0xb8] sm:$0xff] %v629
      %675 = vst [vmem:[%s197 + $0xc0] sm:$0xff] %v630
      %676 = vst [vmem:[%s197 + $0xc8] sm:$0xff] %v631
      %677 = vst [vmem:[%s197 + $0xd0] sm:$0xff] %v632
      %678 = vst [vmem:[%s197 + $0xd8] sm:$0xff] %v633
      %679 = vst [vmem:[%s197 + $0xe0] sm:$0xff] %v634
      %680 = vst [vmem:[%s197 + $0xe8] sm:$0xff] %v635
      %681 = vst [vmem:[%s197 + $0xf0] sm:$0xff] %v636
      %682 = vst [vmem:[%s197 + $0xf8] sm:$0xff] %v637
      %683 = vst [vmem:[%s197 + $0x100] sm:$0xff] %v638
      %684 = vst [vmem:[%s197 + $0x108] sm:$0xff] %v639
      %685 = vst [vmem:[%s197 + $0x110] sm:$0xff] %v640
      %686 = vst [vmem:[%s197 + $0x118] sm:$0xff] %v641
      %687 = vst [vmem:[%s197 + $0x120] sm:$0xff] %v642
      %688 = vst [vmem:[%s197 + $0x128] sm:$0xff] %v643
      %689 = vst [vmem:[%s197 + $0x130] sm:$0xff] %v644
      %690 = vst [vmem:[%s197 + $0x138] sm:$0xff] %v645
      %691 = vst [vmem:[%s197 + $0x140] sm:$0xff] %v646
      %692 = vst [vmem:[%s197 + $0x148] sm:$0xff] %v647
      %693 = vst [vmem:[%s197 + $0x150] sm:$0xff] %v648
      %694 = vst [vmem:[%s197 + $0x158] sm:$0xff] %v649
      %695 = vst [vmem:[%s197 + $0x160] sm:$0xff] %v650
      %p696 = scmp.lt.s32.totalorder %s15, 4
      %s697 = scalar_select %p696, %s15, 4
      %s698 = smul.addr %s697, 45
      %s699 = smul.addr %s698, 8
      %s700 = scalar_lea.vmem %s4, %s699
      // Predicated region
      $region37: #{multi_decoder_forward.7} parent=35 // pred_check
        %p701 = pneg %p122
      $region38: #{multi_decoder_forward.7} parent=35 // pred_check_branch
        %703 = sbr.rel (%p701) target = $region40
      $region39: #{multi_decoder_forward.7} parent=35 // pred_region
        _
      $region40: #{multi_decoder_forward.7} parent=35 // pred_fallthru
        _
    $region36: #{multi_decoder_forward.7} parent=5 // pred_fallthru
      _
    %p704 = scmp.le.s32.totalorder 2, %s10
    // Predicated region
    $region41: #{multi_decoder_forward.7} parent=5 // pred_check
      %p705 = pneg %p704
    $region42: #{multi_decoder_forward.7} parent=5 // pred_check_branch
      %707 = sbr.rel (%p705) target = $region44
    $region43: #{multi_decoder_forward.7} parent=5 // pred_region
      %s708 = ssub.s32 %s10, 2
      // Predicated region
      $region45: #{multi_decoder_forward.7} parent=43 // pred_check
        %p709 = pneg %p128
      $region46: #{multi_decoder_forward.7} parent=43 // pred_check_branch
        %711 = sbr.rel (%p709) target = $region48
      $region47: #{multi_decoder_forward.7} parent=43 // pred_region
        %p712 = scmp.lt.s32.totalorder %s16, 4
        %s713 = scalar_select %p712, %s16, 4
        %s714 = smul.addr %s713, 45
        %s715 = smul.addr %s714, 8
        %s716 = scalar_lea.vmem %s4, %s715
      $region48: #{multi_decoder_forward.7} parent=43 // pred_fallthru
        _
    $region44: #{multi_decoder_forward.7} parent=5 // pred_fallthru
      _
  $region6: #{multi_decoder_forward.7} parent=0 // loop_footer
    %s14 = sadd.s32 1, %s10
  $region7: #{multi_decoder_forward.7} parent=0 // loop_footer_branch
    %9 = sbr.rel target = $region3
  $region8: #{multi_decoder_forward.7} parent=0 // loop_exit
    _

// kernel: multi_decoder_forward.6
$region0: #{multi_decoder_forward.6}
  #allocation0 [shape = 'u32[]', space=smem, size = 0x4, offset = 0x4, fixed_abs, tag = 'smem constant byte address 0x4 - core index']
  #allocation1 [shape = 'u32[144,128]{1,0:T(1,128)}', space=vmem, size = 0x12000, scoped, tag = 'internal scratch']
  %s0 = inlined_call_operand.vmem [shape: f32[5,88,128], index: 0, kind: input, shape index: {}]
  %s1 = inlined_call_operand.vmem [shape: bf16[5,128,768], index: 1, kind: input, shape index: {}]
  %s2 = inlined_call_operand.vmem [shape: f32[1,768], index: 2, kind: input, shape index: {}]
  %s3 = inlined_call_operand.vmem [shape: f32[1,768], index: 3, kind: input, shape index: {}]
  %s4 = inlined_call_operand.vmem [shape: f32[5,80,768], index: 4, kind: output, shape index: {}]
  %s5 = sld [smem:[#allocation0]]
  $region49: #{multi_decoder_forward.6} parent=0
    _
  %s7 = ssub.s32 1, %s5
  %s8 = scalar_select 0, %s7, %s5
  loop: start=0, step=1, limit=7
  $region2: #{multi_decoder_forward.6} parent=0 // loop_pre_header
    _
  $region3: #{multi_decoder_forward.6} parent=0 // loop_header
    %s10 = sphi 0, %s14
    %p11 = scmp.ge.s32.totalorder %s10, 7
    %s20 = sphi 0, %s22
    %s23 = sphi 0, %s20
    %s24 = sphi 0, %s23
    %s40 = sphi 0, %s24
    %s44 = sphi 0, %s44
    %s46 = sphi 0, %s44
    %s47 = sphi 0, %s46
    %s61 = sphi 0, %s47
    %s65 = sphi 0, %s65
    %s67 = sphi 0, %s65
    %s68 = sphi 0, %s67
    %s82 = sphi 0, %s68
    %s86 = sphi 0, %s86
    %s88 = sphi 0, %s86
    %s89 = sphi 0, %s88
    %s103 = sphi 0, %s89
    %s109 = sphi 0, %s111
    %s112 = sphi 0, %s109
    %s113 = sphi 0, %s112
    %s129 = sphi 0, %s113
  $region4: #{multi_decoder_forward.6} parent=0 // loop_header_branch
    %13 = sbr.rel (%p11) target = $region8
  $region5: #{multi_decoder_forward.6} parent=0 // loop_body
    %s15 = ssub.s32 %s10, 1
    %s16 = ssub.s32 %s10, 2
    %s17 = sadd.s32 %s10, 1
    %s18 = ssub.s32 %s10, %s17
    %p19 = scmp.eq.s32.totalorder %s18, 0
    %s21 = sadd.s32 %s20, 1
    %s22 = scalar_select %p19, %s20, %s21
    %p25 = pneg %p19
    %p26 = scmp.eq.s32.totalorder %s10, 4
    %p27 = por %p25, %p26
    %p28 = scmp.ne.s32.totalorder %s20, %s23
    %p29 = scmp.eq.s32.totalorder %s10, 0
    %p30 = por %p28, %p29
    %p31 = scmp.ne.s32.totalorder %s20, %s23
    %p32 = scmp.eq.s32.totalorder %s15, 4
    %p33 = por %p31, %p32
    %p34 = scmp.ne.s32.totalorder %s23, %s24
    %p35 = scmp.eq.s32.totalorder %s15, 0
    %p36 = por %p34, %p35
    %p37 = scmp.ne.s32.totalorder %s23, %s24
    %p38 = scmp.eq.s32.totalorder %s16, 4
    %p39 = por %p37, %p38
    %p41 = scmp.ne.s32.totalorder %s24, %s40
    %p42 = scmp.eq.s32.totalorder %s16, 0
    %p43 = por %p41, %p42
    %s45 = sadd.s32 %s44, 1
    %p48 = scmp.eq.s32.totalorder %s10, 4
    %p49 = scmp.ne.s32.totalorder %s44, %s46
    %p50 = scmp.eq.s32.totalorder %s10, 0
    %p51 = por %p49, %p50
    %p52 = scmp.ne.s32.totalorder %s44, %s46
    %p53 = scmp.eq.s32.totalorder %s15, 4
    %p54 = por %p52, %p53
    %p55 = scmp.ne.s32.totalorder %s46, %s47
    %p56 = scmp.eq.s32.totalorder %s15, 0
    %p57 = por %p55, %p56
    %p58 = scmp.ne.s32.totalorder %s46, %s47
    %p59 = scmp.eq.s32.totalorder %s16, 4
    %p60 = por %p58, %p59
    %p62 = scmp.ne.s32.totalorder %s47, %s61
    %p63 = scmp.eq.s32.totalorder %s16, 0
    %p64 = por %p62, %p63
    %s66 = sadd.s32 %s65, 1
    %p69 = scmp.eq.s32.totalorder %s10, 4
    %p70 = scmp.ne.s32.totalorder %s65, %s67
    %p71 = scmp.eq.s32.totalorder %s10, 0
    %p72 = por %p70, %p71
    %p73 = scmp.ne.s32.totalorder %s65, %s67
    %p74 = scmp.eq.s32.totalorder %s15, 4
    %p75 = por %p73, %p74
    %p76 = scmp.ne.s32.totalorder %s67, %s68
    %p77 = scmp.eq.s32.totalorder %s15, 0
    %p78 = por %p76, %p77
    %p79 = scmp.ne.s32.totalorder %s67, %s68
    %p80 = scmp.eq.s32.totalorder %s16, 4
    %p81 = por %p79, %p80
    %p83 = scmp.ne.s32.totalorder %s68, %s82
    %p84 = scmp.eq.s32.totalorder %s16, 0
    %p85 = por %p83, %p84
    %s87 = sadd.s32 %s86, 1
    %p90 = scmp.eq.s32.totalorder %s10, 4
    %p91 = scmp.ne.s32.totalorder %s86, %s88
    %p92 = scmp.eq.s32.totalorder %s10, 0
    %p93 = por %p91, %p92
    %p94 = scmp.ne.s32.totalorder %s86, %s88
    %p95 = scmp.eq.s32.totalorder %s15, 4
    %p96 = por %p94, %p95
    %p97 = scmp.ne.s32.totalorder %s88, %s89
    %p98 = scmp.eq.s32.totalorder %s15, 0
    %p99 = por %p97, %p98
    %p100 = scmp.ne.s32.totalorder %s88, %s89
    %p101 = scmp.eq.s32.totalorder %s16, 4
    %p102 = por %p100, %p101
    %p104 = scmp.ne.s32.totalorder %s89, %s103
    %p105 = scmp.eq.s32.totalorder %s16, 0
    %p106 = por %p104, %p105
    %s107 = ssub.s32 %s10, %s17
    %p108 = scmp.eq.s32.totalorder %s107, 0
    %s110 = sadd.s32 %s109, 1
    %s111 = scalar_select %p108, %s109, %s110
    %p114 = pneg %p108
    %p115 = scmp.eq.s32.totalorder %s10, 4
    %p116 = por %p114, %p115
    %p117 = scmp.ne.s32.totalorder %s109, %s112
    %p118 = scmp.eq.s32.totalorder %s10, 0
    %p119 = por %p117, %p118
    %p120 = scmp.ne.s32.totalorder %s109, %s112
    %p121 = scmp.eq.s32.totalorder %s15, 4
    %p122 = por %p120, %p121
    %p123 = scmp.ne.s32.totalorder %s112, %s113
    %p124 = scmp.eq.s32.totalorder %s15, 0
    %p125 = por %p123, %p124
    %p126 = scmp.ne.s32.totalorder %s112, %s113
    %p127 = scmp.eq.s32.totalorder %s16, 4
    %p128 = por %p126, %p127
    %p130 = scmp.ne.s32.totalorder %s113, %s129
    %p131 = scmp.eq.s32.totalorder %s16, 0
    %p132 = por %p130, %p131
    %p133 = scmp.le.s32.totalorder 1, %s10
    %p134 = scmp.lt.s32.totalorder %s10, 6
    %p135 = pnand %p133, %p134
    %p136 = pneg %p135
    // Predicated region
    $region9: #{multi_decoder_forward.6} parent=5 // pred_check
      _
    $region10: #{multi_decoder_forward.6} parent=5 // pred_check_branch
      %138 = sbr.rel (%p135) target = $region12
    $region11: #{multi_decoder_forward.6} parent=5 // pred_region
      %s139 = ssub.s32 %s10, 1
      // Predicated region
      $region13: #{multi_decoder_forward.6} parent=11 // pred_check
        %p140 = pneg %p57
      $region14: #{multi_decoder_forward.6} parent=11 // pred_check_branch
        %142 = sbr.rel (%p140) target = $region16
      $region15: #{multi_decoder_forward.6} parent=11 // pred_region
        _
      $region16: #{multi_decoder_forward.6} parent=11 // pred_fallthru
        _
      // Predicated region
      $region17: #{multi_decoder_forward.6} parent=11 // pred_check
        %p143 = pneg %p78
      $region18: #{multi_decoder_forward.6} parent=11 // pred_check_branch
        %145 = sbr.rel (%p143) target = $region20
      $region19: #{multi_decoder_forward.6} parent=11 // pred_region
        _
      $region20: #{multi_decoder_forward.6} parent=11 // pred_fallthru
        _
      // Predicated region
      $region21: #{multi_decoder_forward.6} parent=11 // pred_check
        %p146 = pneg %p99
      $region22: #{multi_decoder_forward.6} parent=11 // pred_check_branch
        %148 = sbr.rel (%p146) target = $region24
      $region23: #{multi_decoder_forward.6} parent=11 // pred_region
        _
      $region24: #{multi_decoder_forward.6} parent=11 // pred_fallthru
        _
    $region12: #{multi_decoder_forward.6} parent=5 // pred_fallthru
      _
    %p149 = scmp.lt.s32.totalorder %s10, 5
    // Predicated region
    $region25: #{multi_decoder_forward.6} parent=5 // pred_check
      %p150 = pneg %p149
    $region26: #{multi_decoder_forward.6} parent=5 // pred_check_branch
      %152 = sbr.rel (%p150) target = $region28
    $region27: #{multi_decoder_forward.6} parent=5 // pred_region
      // Predicated region
      $region29: #{multi_decoder_forward.6} parent=27 // pred_check
        %p153 = pneg %p30
      $region30: #{multi_decoder_forward.6} parent=27 // pred_check_branch
        %155 = sbr.rel (%p153) target = $region32
      $region31: #{multi_decoder_forward.6} parent=27 // pred_region
        %p156 = scmp.lt.s32.totalorder %s10, 4
        %s157 = scalar_select %p156, %s10, 4
        %s158 = smul.addr %s157, 11
        %s159 = smul.addr %s158, 8
        %s160 = scalar_lea.vmem %s0, %s159
      $region32: #{multi_decoder_forward.6} parent=27 // pred_fallthru
        _
    $region28: #{multi_decoder_forward.6} parent=5 // pred_fallthru
      _
    %p161 = scmp.le.s32.totalorder 1, %s10
    %p162 = scmp.lt.s32.totalorder %s10, 6
    %p163 = pnand %p161, %p162
    %p164 = pneg %p163
    // Predicated region
    $region33: #{multi_decoder_forward.6} parent=5 // pred_check
      _
    $region34: #{multi_decoder_forward.6} parent=5 // pred_check_branch
      %166 = sbr.rel (%p163) target = $region36
    $region35: #{multi_decoder_forward.6} parent=5 // pred_region
      %s167 = ssub.s32 %s10, 1
      %p168 = scmp.lt.s32.totalorder %s15, 4
      %s169 = scalar_select %p168, %s15, 4
      %s170 = smul.addr %s169, 11
      %s171 = smul.addr %s170, 8
      %s172 = scalar_lea.vmem %s0, %s171
      %p173 = pneg %p36
      %p174 = pneg %p33
      %p175 = pneg %p57
      %p176 = pneg %p54
      %p177 = pneg %p78
      %p178 = pneg %p75
      %p179 = pneg %p99
      %p180 = pneg %p96
      %p181 = pneg %p125
      %p182 = pneg %p122
      %p183 = scmp.lt.s32.totalorder %s15, 4
      %s184 = scalar_select %p183, %s15, 4
      %s185 = smul.addr %s184, 60
      %s186 = smul.addr %s185, 8
      %s187 = scalar_lea.vmem %s4, %s186
      %p188 = scmp.lt.s32.totalorder %s15, 4
      %s189 = scalar_select %p188, %s15, 4
      %s190 = smul.addr %s189, 11
      %s191 = smul.addr %s190, 8
      %s192 = scalar_lea.vmem %s0, %s191
      %p193 = scmp.lt.s32.totalorder %s15, 4
      %s194 = scalar_select %p193, %s15, 4
      %s195 = smul.addr %s194, 60
      %s196 = smul.addr %s195, 8
      %s197 = scalar_lea.vmem %s4, %s196
      %v199 = vld [vmem:[%s192] sm:$0xff]
      %v200 = vld [vmem:[%s192 + $0x8] sm:$0xff]
      %v201 = vld [vmem:[%s192 + $0x10] sm:$0xff]
      %v202 = vld [vmem:[%s192 + $0x18] sm:$0xff]
      %v203 = vld [vmem:[%s192 + $0x20] sm:$0xff]
      %v204 = vld [vmem:[%s192 + $0x28] sm:$0xff]
      %v205 = vld [vmem:[%s192 + $0x30] sm:$0xff]
      %v206 = vld [vmem:[%s192 + $0x38] sm:$0xff]
      %v207 = vld [vmem:[%s192 + $0x40] sm:$0xff]
      %v208 = vld [vmem:[%s192 + $0x48] sm:$0xff]
      %v209 = vpack.c.bf16 %v200, %v199
      %v210 = vpack.c.bf16 %v202, %v201
      %v211 = vpack.c.bf16 %v204, %v203
      %v212 = vpack.c.bf16 %v206, %v205
      %v213 = vpack.c.bf16 %v208, %v207
      %v214 = vld [vmem:[%s1] sm:$0xff]
      %v215 = vld [vmem:[%s1 + $0x8] sm:$0xff]
      %v216 = vld [vmem:[%s1 + $0x10] sm:$0xff]
      %v217 = vld [vmem:[%s1 + $0x18] sm:$0xff]
      %v218 = vld [vmem:[%s1 + $0x20] sm:$0xff]
      %v219 = vld [vmem:[%s1 + $0x28] sm:$0xff]
      %v220 = vld [vmem:[%s1 + $0x30] sm:$0xff]
      %v221 = vld [vmem:[%s1 + $0x38] sm:$0xff]
      %v222 = vld [vmem:[%s1 + $0x40] sm:$0xff]
      %v223 = vld [vmem:[%s1 + $0x48] sm:$0xff]
      %v224 = vld [vmem:[%s1 + $0x50] sm:$0xff]
      %v225 = vld [vmem:[%s1 + $0x58] sm:$0xff]
      %v226 = vld [vmem:[%s1 + $0x60] sm:$0xff]
      %v227 = vld [vmem:[%s1 + $0x68] sm:$0xff]
      %v228 = vld [vmem:[%s1 + $0x70] sm:$0xff]
      %v229 = vld [vmem:[%s1 + $0x78] sm:$0xff]
      %v230 = vld [vmem:[%s1 + $0x80] sm:$0xff]
      %v231 = vld [vmem:[%s1 + $0x88] sm:$0xff]
      %v232 = vld [vmem:[%s1 + $0x90] sm:$0xff]
      %v233 = vld [vmem:[%s1 + $0x98] sm:$0xff]
      %v234 = vld [vmem:[%s1 + $0xa0] sm:$0xff]
      %v235 = vld [vmem:[%s1 + $0xa8] sm:$0xff]
      %v236 = vld [vmem:[%s1 + $0xb0] sm:$0xff]
      %v237 = vld [vmem:[%s1 + $0xb8] sm:$0xff]
      %v238 = vld [vmem:[%s1 + $0xc0] sm:$0xff]
      %v239 = vld [vmem:[%s1 + $0xc8] sm:$0xff]
      %v240 = vld [vmem:[%s1 + $0xd0] sm:$0xff]
      %v241 = vld [vmem:[%s1 + $0xd8] sm:$0xff]
      %v242 = vld [vmem:[%s1 + $0xe0] sm:$0xff]
      %v243 = vld [vmem:[%s1 + $0xe8] sm:$0xff]
      %v244 = vld [vmem:[%s1 + $0xf0] sm:$0xff]
      %v245 = vld [vmem:[%s1 + $0xf8] sm:$0xff]
      %v246 = vld [vmem:[%s1 + $0x100] sm:$0xff]
      %v247 = vld [vmem:[%s1 + $0x108] sm:$0xff]
      %v248 = vld [vmem:[%s1 + $0x110] sm:$0xff]
      %v249 = vld [vmem:[%s1 + $0x118] sm:$0xff]
      %v250 = vld [vmem:[%s1 + $0x120] sm:$0xff]
      %v251 = vld [vmem:[%s1 + $0x128] sm:$0xff]
      %v252 = vld [vmem:[%s1 + $0x130] sm:$0xff]
      %v253 = vld [vmem:[%s1 + $0x138] sm:$0xff]
      %v254 = vld [vmem:[%s1 + $0x140] sm:$0xff]
      %v255 = vld [vmem:[%s1 + $0x148] sm:$0xff]
      %v256 = vld [vmem:[%s1 + $0x150] sm:$0xff]
      %v257 = vld [vmem:[%s1 + $0x158] sm:$0xff]
      %v258 = vld [vmem:[%s1 + $0x160] sm:$0xff]
      %v259 = vld [vmem:[%s1 + $0x168] sm:$0xff]
      %v260 = vld [vmem:[%s1 + $0x170] sm:$0xff]
      %v261 = vld [vmem:[%s1 + $0x178] sm:$0xff]
      %v262 = vld [vmem:[%s192 + $0x1] sm:$0xff]
      %v263 = vld [vmem:[%s192 + $0x9] sm:$0xff]
      %v264 = vld [vmem:[%s192 + $0x11] sm:$0xff]
      %v265 = vld [vmem:[%s192 + $0x19] sm:$0xff]
      %v266 = vld [vmem:[%s192 + $0x21] sm:$0xff]
      %v267 = vld [vmem:[%s192 + $0x29] sm:$0xff]
      %v268 = vld [vmem:[%s192 + $0x31] sm:$0xff]
      %v269 = vld [vmem:[%s192 + $0x39] sm:$0xff]
      %v270 = vld [vmem:[%s192 + $0x41] sm:$0xff]
      %v271 = vld [vmem:[%s192 + $0x49] sm:$0xff]
      %v272 = vpack.c.bf16 %v263, %v262
      %v273 = vpack.c.bf16 %v265, %v264
      %v274 = vpack.c.bf16 %v267, %v266
      %v275 = vpack.c.bf16 %v269, %v268
      %v276 = vpack.c.bf16 %v271, %v270
      %s277 = scalar_lea.vmem %s1, 384
      %v278 = vld [vmem:[%s277] sm:$0xff]
      %v279 = vld [vmem:[%s277 + $0x8] sm:$0xff]
      %v280 = vld [vmem:[%s277 + $0x10] sm:$0xff]
      %v281 = vld [vmem:[%s277 + $0x18] sm:$0xff]
      %v282 = vld [vmem:[%s277 + $0x20] sm:$0xff]
      %v283 = vld [vmem:[%s277 + $0x28] sm:$0xff]
      %v284 = vld [vmem:[%s277 + $0x30] sm:$0xff]
      %v285 = vld [vmem:[%s277 + $0x38] sm:$0xff]
      %v286 = vld [vmem:[%s277 + $0x40] sm:$0xff]
      %v287 = vld [vmem:[%s277 + $0x48] sm:$0xff]
      %v288 = vld [vmem:[%s277 + $0x50] sm:$0xff]
      %v289 = vld [vmem:[%s277 + $0x58] sm:$0xff]
      %v290 = vld [vmem:[%s277 + $0x60] sm:$0xff]
      %v291 = vld [vmem:[%s277 + $0x68] sm:$0xff]
      %v292 = vld [vmem:[%s277 + $0x70] sm:$0xff]
      %v293 = vld [vmem:[%s277 + $0x78] sm:$0xff]
      %v294 = vld [vmem:[%s277 + $0x80] sm:$0xff]
      %v295 = vld [vmem:[%s277 + $0x88] sm:$0xff]
      %v296 = vld [vmem:[%s277 + $0x90] sm:$0xff]
      %v297 = vld [vmem:[%s277 + $0x98] sm:$0xff]
      %v298 = vld [vmem:[%s277 + $0xa0] sm:$0xff]
      %v299 = vld [vmem:[%s277 + $0xa8] sm:$0xff]
      %v300 = vld [vmem:[%s277 + $0xb0] sm:$0xff]
      %v301 = vld [vmem:[%s277 + $0xb8] sm:$0xff]
      %v302 = vld [vmem:[%s277 + $0xc0] sm:$0xff]
      %v303 = vld [vmem:[%s277 + $0xc8] sm:$0xff]
      %v304 = vld [vmem:[%s277 + $0xd0] sm:$0xff]
      %v305 = vld [vmem:[%s277 + $0xd8] sm:$0xff]
      %v306 = vld [vmem:[%s277 + $0xe0] sm:$0xff]
      %v307 = vld [vmem:[%s277 + $0xe8] sm:$0xff]
      %v308 = vld [vmem:[%s277 + $0xf0] sm:$0xff]
      %v309 = vld [vmem:[%s277 + $0xf8] sm:$0xff]
      %v310 = vld [vmem:[%s277 + $0x100] sm:$0xff]
      %v311 = vld [vmem:[%s277 + $0x108] sm:$0xff]
      %v312 = vld [vmem:[%s277 + $0x110] sm:$0xff]
      %v313 = vld [vmem:[%s277 + $0x118] sm:$0xff]
      %v314 = vld [vmem:[%s277 + $0x120] sm:$0xff]
      %v315 = vld [vmem:[%s277 + $0x128] sm:$0xff]
      %v316 = vld [vmem:[%s277 + $0x130] sm:$0xff]
      %v317 = vld [vmem:[%s277 + $0x138] sm:$0xff]
      %v318 = vld [vmem:[%s277 + $0x140] sm:$0xff]
      %v319 = vld [vmem:[%s277 + $0x148] sm:$0xff]
      %v320 = vld [vmem:[%s277 + $0x150] sm:$0xff]
      %v321 = vld [vmem:[%s277 + $0x158] sm:$0xff]
      %v322 = vld [vmem:[%s277 + $0x160] sm:$0xff]
      %v323 = vld [vmem:[%s277 + $0x168] sm:$0xff]
      %v324 = vld [vmem:[%s277 + $0x170] sm:$0xff]
      %v325 = vld [vmem:[%s277 + $0x178] sm:$0xff]
      %v374 = vunpack.c.l.b16 %v278
      %v375 = vunpack.c.h.b16 %v278
      %v376 = vunpack.c.l.b16 %v279
      %v377 = vunpack.c.h.b16 %v279
      %v378 = vunpack.c.l.b16 %v280
      %v379 = vunpack.c.h.b16 %v280
      %v380 = vunpack.c.l.b16 %v281
      %v381 = vunpack.c.h.b16 %v281
      %v382 = vunpack.c.l.b16 %v282
      %v383 = vunpack.c.h.b16 %v282
      %v384 = vunpack.c.l.b16 %v283
      %v385 = vunpack.c.h.b16 %v283
      %v386 = vunpack.c.l.b16 %v284
      %v387 = vunpack.c.h.b16 %v284
      %v388 = vunpack.c.l.b16 %v285
      %v389 = vunpack.c.h.b16 %v285
      %v390 = vunpack.c.l.b16 %v286
      %v391 = vunpack.c.h.b16 %v286
      %v392 = vunpack.c.l.b16 %v287
      %v393 = vunpack.c.h.b16 %v287
      %v394 = vunpack.c.l.b16 %v288
      %v395 = vunpack.c.h.b16 %v288
      %v396 = vunpack.c.l.b16 %v289
      %v397 = vunpack.c.h.b16 %v289
      %v398 = vunpack.c.l.b16 %v290
      %v399 = vunpack.c.h.b16 %v290
      %v400 = vunpack.c.l.b16 %v291
      %v401 = vunpack.c.h.b16 %v291
      %v402 = vunpack.c.l.b16 %v292
      %v403 = vunpack.c.h.b16 %v292
      %v404 = vunpack.c.l.b16 %v293
      %v405 = vunpack.c.h.b16 %v293
      %v406 = vunpack.c.l.b16 %v294
      %v407 = vunpack.c.h.b16 %v294
      %v408 = vunpack.c.l.b16 %v295
      %v409 = vunpack.c.h.b16 %v295
      %v410 = vunpack.c.l.b16 %v296
      %v411 = vunpack.c.h.b16 %v296
      %v412 = vunpack.c.l.b16 %v297
      %v413 = vunpack.c.h.b16 %v297
      %v414 = vunpack.c.l.b16 %v298
      %v415 = vunpack.c.h.b16 %v298
      %v416 = vunpack.c.l.b16 %v299
      %v417 = vunpack.c.h.b16 %v299
      %v418 = vunpack.c.l.b16 %v300
      %v419 = vunpack.c.h.b16 %v300
      %v420 = vunpack.c.l.b16 %v301
      %v421 = vunpack.c.h.b16 %v301
      %v422 = vunpack.c.l.b16 %v302
      %v423 = vunpack.c.h.b16 %v302
      %v424 = vunpack.c.l.b16 %v303
      %v425 = vunpack.c.h.b16 %v303
      %v426 = vunpack.c.l.b16 %v304
      %v427 = vunpack.c.h.b16 %v304
      %v428 = vunpack.c.l.b16 %v305
      %v429 = vunpack.c.h.b16 %v305
      %v430 = vunpack.c.l.b16 %v306
      %v431 = vunpack.c.h.b16 %v306
      %v432 = vunpack.c.l.b16 %v307
      %v433 = vunpack.c.h.b16 %v307
      %v434 = vunpack.c.l.b16 %v308
      %v435 = vunpack.c.h.b16 %v308
      %v436 = vunpack.c.l.b16 %v309
      %v437 = vunpack.c.h.b16 %v309
      %v438 = vunpack.c.l.b16 %v310
      %v439 = vunpack.c.h.b16 %v310
      %v440 = vunpack.c.l.b16 %v311
      %v441 = vunpack.c.h.b16 %v311
      %v442 = vunpack.c.l.b16 %v312
      %v443 = vunpack.c.h.b16 %v312
      %v444 = vunpack.c.l.b16 %v313
      %v445 = vunpack.c.h.b16 %v313
      %v446 = vunpack.c.l.b16 %v314
      %v447 = vunpack.c.h.b16 %v314
      %v448 = vunpack.c.l.b16 %v315
      %v449 = vunpack.c.h.b16 %v315
      %v450 = vunpack.c.l.b16 %v316
      %v451 = vunpack.c.h.b16 %v316
      %v452 = vunpack.c.l.b16 %v317
      %v453 = vunpack.c.h.b16 %v317
      %v454 = vunpack.c.l.b16 %v318
      %v455 = vunpack.c.h.b16 %v318
      %v456 = vunpack.c.l.b16 %v319
      %v457 = vunpack.c.h.b16 %v319
      %v458 = vunpack.c.l.b16 %v320
      %v459 = vunpack.c.h.b16 %v320
      %v460 = vunpack.c.l.b16 %v321
      %v461 = vunpack.c.h.b16 %v321
      %v462 = vunpack.c.l.b16 %v322
      %v463 = vunpack.c.h.b16 %v322
      %v464 = vunpack.c.l.b16 %v323
      %v465 = vunpack.c.h.b16 %v323
      %v466 = vunpack.c.l.b16 %v324
      %v467 = vunpack.c.h.b16 %v324
      %v468 = vunpack.c.l.b16 %v325
      %v469 = vunpack.c.h.b16 %v325
      %v470 = vpack.c.b16 %v380, %v374
      %v471 = vpack.c.b16 %v381, %v375
      %v472 = vpack.c.b16 %v382, %v376
      %v473 = vpack.c.b16 %v383, %v377
      %v474 = vpack.c.b16 %v384, %v378
      %v475 = vpack.c.b16 %v385, %v379
      %v476 = vpack.c.b16 %v392, %v386
      %v477 = vpack.c.b16 %v393, %v387
      %v478 = vpack.c.b16 %v394, %v388
      %v479 = vpack.c.b16 %v395, %v389
      %v480 = vpack.c.b16 %v396, %v390
      %v481 = vpack.c.b16 %v397, %v391
      %v482 = vpack.c.b16 %v404, %v398
      %v483 = vpack.c.b16 %v405, %v399
      %v484 = vpack.c.b16 %v406, %v400
      %v485 = vpack.c.b16 %v407, %v401
      %v486 = vpack.c.b16 %v408, %v402
      %v487 = vpack.c.b16 %v409, %v403
      %v488 = vpack.c.b16 %v416, %v410
      %v489 = vpack.c.b16 %v417, %v411
      %v490 = vpack.c.b16 %v418, %v412
      %v491 = vpack.c.b16 %v419, %v413
      %v492 = vpack.c.b16 %v420, %v414
      %v493 = vpack.c.b16 %v421, %v415
      %v494 = vpack.c.b16 %v428, %v422
      %v495 = vpack.c.b16 %v429, %v423
      %v496 = vpack.c.b16 %v430, %v424
      %v497 = vpack.c.b16 %v431, %v425
      %v498 = vpack.c.b16 %v432, %v426
      %v499 = vpack.c.b16 %v433, %v427
      %v500 = vpack.c.b16 %v440, %v434
      %v501 = vpack.c.b16 %v441, %v435
      %v502 = vpack.c.b16 %v442, %v436
      %v503 = vpack.c.b16 %v443, %v437
      %v504 = vpack.c.b16 %v444, %v438
      %v505 = vpack.c.b16 %v445, %v439
      %v506 = vpack.c.b16 %v452, %v446
      %v507 = vpack.c.b16 %v453, %v447
      %v508 = vpack.c.b16 %v454, %v448
      %v509 = vpack.c.b16 %v455, %v449
      %v510 = vpack.c.b16 %v456, %v450
      %v511 = vpack.c.b16 %v457, %v451
      %v512 = vpack.c.b16 %v464, %v458
      %v513 = vpack.c.b16 %v465, %v459
      %v514 = vpack.c.b16 %v466, %v460
      %v515 = vpack.c.b16 %v467, %v461
      %v516 = vpack.c.b16 %v468, %v462
      %v517 = vpack.c.b16 %v469, %v463
      %566 = vmatprep.subr.bf16.mxu0 %v471
      %567 = vmatpush1.bf16.msra.mxu0 %v470
      %568 = vmatprep.subr.bf16.mxu0 %v477
      %569 = vmatpush1.bf16.msra.mxu0 %v476
      %570 = vmatprep.subr.bf16.mxu0 %v483
      %571 = vmatpush1.bf16.msra.mxu0 %v482
      %572 = vmatprep.subr.bf16.mxu0 %v489
      %573 = vmatpush1.bf16.msra.mxu0 %v488
      %574 = vmatprep.subr.bf16.mxu0 %v495
      %575 = vmatpush1.bf16.msra.mxu0 %v494
      %576 = vmatprep.subr.bf16.mxu0 %v501
      %577 = vmatpush1.bf16.msra.mxu0 %v500
      %578 = vmatprep.subr.bf16.mxu0 %v507
      %579 = vmatpush1.bf16.msra.mxu0 %v506
      %580 = vmatprep.subr.bf16.mxu0 %v513
      %581 = vmatpush1.bf16.msra.mxu0 %v512
      %582 = vmatprep.subr.bf16.mxu0 0
      %583 = vmatpush1.bf16.msra.mxu0 0
      %584 = vmatprep.subr.bf16.mxu0 0
      %585 = vmatpush1.bf16.msra.mxu0 0
      %586 = vmatprep.subr.bf16.mxu0 0
      %587 = vmatpush1.bf16.msra.mxu0 0
      %588 = vmatprep.subr.bf16.mxu0 0
      %589 = vmatpush1.bf16.msra.mxu0 0
      %590 = vmatprep.subr.bf16.mxu0 0
      %591 = vmatpush1.bf16.msra.mxu0 0
      %592 = vmatprep.subr.bf16.mxu0 0
      %593 = vmatpush1.bf16.msra.mxu0 0
      %594 = vmatprep.subr.bf16.mxu0 0
      %595 = vmatpush1.bf16.msra.mxu0 0
      %596 = vmatprep.subr.bf16.mxu0 0
      %597 = vmatpush1.bf16.msra.mxu0 0
      %598 = vmatprep.mubr.bf16.mxu0 0
      %599 = vmatmul.mubr.bf16.gmra.mrb[0].mxu0 %v272
      %v600 = vpop.f32.mrb[0].mxu0
      %v601 = vadd.f32 0.0, %v600
      %v602 = vpop.f32.mrb[0].mxu0
      %v603 = vadd.f32 0.0, %v602
      %v604 = vpop.f32.mrb[0].mxu0
      %v605 = vadd.f32 0.0, %v604
      %v606 = vpop.f32.mrb[0].mxu0
      %v607 = vadd.f32 0.0, %v606
      %608 = vmatprep.mubr.bf16.mxu0 0
      %609 = vmatmul.mubr.bf16.gmra.mrb[0].mxu0 %v273
      %v610 = vpop.f32.mrb[0].mxu0
      %v611 = vadd.f32 0.0, %v610
      %v612 = vpop.f32.mrb[0].mxu0
      %v613 = vadd.f32 0.0, %v612
      %v614 = vpop.f32.mrb[0].mxu0
      %v615 = vadd.f32 0.0, %v614
      %v616 = vpop.f32.mrb[0].mxu0
      %v617 = vadd.f32 0.0, %v616
      %618 = vmatprep.mubr.bf16.mxu0 0
      %619 = vmatmul.mubr.bf16.gmra.mrb[0].mxu0 %v274
      %v620 = vpop.f32.mrb[0].mxu0
      %v621 = vadd.f32 0.0, %v620
      %v622 = vpop.f32.mrb[0].mxu0
      %v623 = vadd.f32 0.0, %v622
      %v624 = vpop.f32.mrb[0].mxu0
      %v625 = vadd.f32 0.0, %v624
      %v626 = vpop.f32.mrb[0].mxu0
      %v627 = vadd.f32 0.0, %v626
      %628 = vmatprep.mubr.bf16.mxu0 0
      %629 = vmatmul.mubr.bf16.gmra.mrb[0].mxu0 %v275
      %v630 = vpop.f32.mrb[0].mxu0
      %v631 = vadd.f32 0.0, %v630
      %v632 = vpop.f32.mrb[0].mxu0
      %v633 = vadd.f32 0.0, %v632
      %v634 = vpop.f32.mrb[0].mxu0
      %v635 = vadd.f32 0.0, %v634
      %v636 = vpop.f32.mrb[0].mxu0
      %v637 = vadd.f32 0.0, %v636
      %638 = vmatprep.mubr.bf16.mxu0 0
      %639 = vmatmul.mubr.bf16.gmra.mrb[0].mxu0 %v276
      %v640 = vpop.f32.mrb[0].mxu0
      %v641 = vadd.f32 0.0, %v640
      %v642 = vpop.f32.mrb[0].mxu0
      %v643 = vadd.f32 0.0, %v642
      %v644 = vpop.f32.mrb[0].mxu0
      %v645 = vadd.f32 0.0, %v644
      %v646 = vpop.f32.mrb[0].mxu0
      %v647 = vadd.f32 0.0, %v646
      %648 = vdwg.mxu0
      %649 = vmatprep.subr.bf16.mxu0 %v473
      %650 = vmatpush1.bf16.msra.mxu0 %v472
      %651 = vmatprep.subr.bf16.mxu0 %v479
      %652 = vmatpush1.bf16.msra.mxu0 %v478
      %653 = vmatprep.subr.bf16.mxu0 %v485
      %654 = vmatpush1.bf16.msra.mxu0 %v484
      %655 = vmatprep.subr.bf16.mxu0 %v491
      %656 = vmatpush1.bf16.msra.mxu0 %v490
      %657 = vmatprep.subr.bf16.mxu0 %v497
      %658 = vmatpush1.bf16.msra.mxu0 %v496
      %659 = vmatprep.subr.bf16.mxu0 %v503
      %660 = vmatpush1.bf16.msra.mxu0 %v502
      %661 = vmatprep.subr.bf16.mxu0 %v509
      %662 = vmatpush1.bf16.msra.mxu0 %v508
      %663 = vmatprep.subr.bf16.mxu0 %v515
      %664 = vmatpush1.bf16.msra.mxu0 %v514
      %665 = vmatprep.subr.bf16.mxu0 0
      %666 = vmatpush1.bf16.msra.mxu0 0
      %667 = vmatprep.subr.bf16.mxu0 0
      %668 = vmatpush1.bf16.msra.mxu0 0
      %669 = vmatprep.subr.bf16.mxu0 0
      %670 = vmatpush1.bf16.msra.mxu0 0
      %671 = vmatprep.subr.bf16.mxu0 0
      %672 = vmatpush1.bf16.msra.mxu0 0
      %673 = vmatprep.subr.bf16.mxu0 0
      %674 = vmatpush1.bf16.msra.mxu0 0
      %675 = vmatprep.subr.bf16.mxu0 0
      %676 = vmatpush1.bf16.msra.mxu0 0
      %677 = vmatprep.subr.bf16.mxu0 0
      %678 = vmatpush1.bf16.msra.mxu0 0
      %679 = vmatprep.subr.bf16.mxu0 0
      %680 = vmatpush1.bf16.msra.mxu0 0
      %681 = vmatprep.mubr.bf16.mxu0 0
      %682 = vmatmul.mubr.bf16.gmra.mrb[0].mxu0 %v272
      %v683 = vpop.f32.mrb[0].mxu0
      %v684 = vadd.f32 0.0, %v683
      %v685 = vpop.f32.mrb[0].mxu0
      %v686 = vadd.f32 0.0, %v685
      %v687 = vpop.f32.mrb[0].mxu0
      %v688 = vadd.f32 0.0, %v687
      %v689 = vpop.f32.mrb[0].mxu0
      %v690 = vadd.f32 0.0, %v689
      %691 = vmatprep.mubr.bf16.mxu0 0
      %692 = vmatmul.mubr.bf16.gmra.mrb[0].mxu0 %v273
      %v693 = vpop.f32.mrb[0].mxu0
      %v694 = vadd.f32 0.0, %v693
      %v695 = vpop.f32.mrb[0].mxu0
      %v696 = vadd.f32 0.0, %v695
      %v697 = vpop.f32.mrb[0].mxu0
      %v698 = vadd.f32 0.0, %v697
      %v699 = vpop.f32.mrb[0].mxu0
      %v700 = vadd.f32 0.0, %v699
      %701 = vmatprep.mubr.bf16.mxu0 0
      %702 = vmatmul.mubr.bf16.gmra.mrb[0].mxu0 %v274
      %v703 = vpop.f32.mrb[0].mxu0
      %v704 = vadd.f32 0.0, %v703
      %v705 = vpop.f32.mrb[0].mxu0
      %v706 = vadd.f32 0.0, %v705
      %v707 = vpop.f32.mrb[0].mxu0
      %v708 = vadd.f32 0.0, %v707
      %v709 = vpop.f32.mrb[0].mxu0
      %v710 = vadd.f32 0.0, %v709
      %711 = vmatprep.mubr.bf16.mxu0 0
      %712 = vmatmul.mubr.bf16.gmra.mrb[0].mxu0 %v275
      %v713 = vpop.f32.mrb[0].mxu0
      %v714 = vadd.f32 0.0, %v713
      %v715 = vpop.f32.mrb[0].mxu0
      %v716 = vadd.f32 0.0, %v715
      %v717 = vpop.f32.mrb[0].mxu0
      %v718 = vadd.f32 0.0, %v717
      %v719 = vpop.f32.mrb[0].mxu0
      %v720 = vadd.f32 0.0, %v719
      %721 = vmatprep.mubr.bf16.mxu0 0
      %722 = vmatmul.mubr.bf16.gmra.mrb[0].mxu0 %v276
      %v723 = vpop.f32.mrb[0].mxu0
      %v724 = vadd.f32 0.0, %v723
      %v725 = vpop.f32.mrb[0].mxu0
      %v726 = vadd.f32 0.0, %v725
      %v727 = vpop.f32.mrb[0].mxu0
      %v728 = vadd.f32 0.0, %v727
      %v729 = vpop.f32.mrb[0].mxu0
      %v730 = vadd.f32 0.0, %v729
      %731 = vdwg.mxu0
      %732 = vmatprep.subr.bf16.mxu0 %v475
      %733 = vmatpush1.bf16.msra.mxu0 %v474
      %734 = vmatprep.subr.bf16.mxu0 %v481
      %735 = vmatpush1.bf16.msra.mxu0 %v480
      %736 = vmatprep.subr.bf16.mxu0 %v487
      %737 = vmatpush1.bf16.msra.mxu0 %v486
      %738 = vmatprep.subr.bf16.mxu0 %v493
      %739 = vmatpush1.bf16.msra.mxu0 %v492
      %740 = vmatprep.subr.bf16.mxu0 %v499
      %741 = vmatpush1.bf16.msra.mxu0 %v498
      %742 = vmatprep.subr.bf16.mxu0 %v505
      %743 = vmatpush1.bf16.msra.mxu0 %v504
      %744 = vmatprep.subr.bf16.mxu0 %v511
      %745 = vmatpush1.bf16.msra.mxu0 %v510
      %746 = vmatprep.subr.bf16.mxu0 %v517
      %747 = vmatpush1.bf16.msra.mxu0 %v516
      %748 = vmatprep.subr.bf16.mxu0 0
      %749 = vmatpush1.bf16.msra.mxu0 0
      %750 = vmatprep.subr.bf16.mxu0 0
      %751 = vmatpush1.bf16.msra.mxu0 0
      %752 = vmatprep.subr.bf16.mxu0 0
      %753 = vmatpush1.bf16.msra.mxu0 0
      %754 = vmatprep.subr.bf16.mxu0 0
      %755 = vmatpush1.bf16.msra.mxu0 0
      %756 = vmatprep.subr.bf16.mxu0 0
      %757 = vmatpush1.bf16.msra.mxu0 0
      %758 = vmatprep.subr.bf16.mxu0 0
      %759 = vmatpush1.bf16.msra.mxu0 0
      %760 = vmatprep.subr.bf16.mxu0 0
      %761 = vmatpush1.bf16.msra.mxu0 0
      %762 = vmatprep.subr.bf16.mxu0 0
      %763 = vmatpush1.bf16.msra.mxu0 0
      %764 = vmatprep.mubr.bf16.mxu0 0
      %765 = vmatmul.mubr.bf16.gmra.mrb[0].mxu0 %v272
      %v766 = vpop.f32.mrb[0].mxu0
      %v767 = vadd.f32 0.0, %v766
      %v768 = vpop.f32.mrb[0].mxu0
      %v769 = vadd.f32 0.0, %v768
      %v770 = vpop.f32.mrb[0].mxu0
      %v771 = vadd.f32 0.0, %v770
      %v772 = vpop.f32.mrb[0].mxu0
      %v773 = vadd.f32 0.0, %v772
      %774 = vmatprep.mubr.bf16.mxu0 0
      %775 = vmatmul.mubr.bf16.gmra.mrb[0].mxu0 %v273
      %v776 = vpop.f32.mrb[0].mxu0
      %v777 = vadd.f32 0.0, %v776
      %v778 = vpop.f32.mrb[0].mxu0
      %v779 = vadd.f32 0.0, %v778
      %v780 = vpop.f32.mrb[0].mxu0
      %v781 = vadd.f32 0.0, %v780
      %v782 = vpop.f32.mrb[0].mxu0
      %v783 = vadd.f32 0.0, %v782
      %784 = vmatprep.mubr.bf16.mxu0 0
      %785 = vmatmul.mubr.bf16.gmra.mrb[0].mxu0 %v274
      %v786 = vpop.f32.mrb[0].mxu0
      %v787 = vadd.f32 0.0, %v786
      %v788 = vpop.f32.mrb[0].mxu0
      %v789 = vadd.f32 0.0, %v788
      %v790 = vpop.f32.mrb[0].mxu0
      %v791 = vadd.f32 0.0, %v790
      %v792 = vpop.f32.mrb[0].mxu0
      %v793 = vadd.f32 0.0, %v792
      %794 = vmatprep.mubr.bf16.mxu0 0
      %795 = vmatmul.mubr.bf16.gmra.mrb[0].mxu0 %v275
      %v796 = vpop.f32.mrb[0].mxu0
      %v797 = vadd.f32 0.0, %v796
      %v798 = vpop.f32.mrb[0].mxu0
      %v799 = vadd.f32 0.0, %v798
      %v800 = vpop.f32.mrb[0].mxu0
      %v801 = vadd.f32 0.0, %v800
      %v802 = vpop.f32.mrb[0].mxu0
      %v803 = vadd.f32 0.0, %v802
      %804 = vmatprep.mubr.bf16.mxu0 0
      %805 = vmatmul.mubr.bf16.gmra.mrb[0].mxu0 %v276
      %v806 = vpop.f32.mrb[0].mxu0
      %v807 = vadd.f32 0.0, %v806
      %v808 = vpop.f32.mrb[0].mxu0
      %v809 = vadd.f32 0.0, %v808
      %v810 = vpop.f32.mrb[0].mxu0
      %v811 = vadd.f32 0.0, %v810
      %v812 = vpop.f32.mrb[0].mxu0
      %v813 = vadd.f32 0.0, %v812
      %814 = vdwg.mxu0
      %v863 = vunpack.c.l.b16 %v214
      %v864 = vunpack.c.h.b16 %v214
      %v865 = vunpack.c.l.b16 %v215
      %v866 = vunpack.c.h.b16 %v215
      %v867 = vunpack.c.l.b16 %v216
      %v868 = vunpack.c.h.b16 %v216
      %v869 = vunpack.c.l.b16 %v217
      %v870 = vunpack.c.h.b16 %v217
      %v871 = vunpack.c.l.b16 %v218
      %v872 = vunpack.c.h.b16 %v218
      %v873 = vunpack.c.l.b16 %v219
      %v874 = vunpack.c.h.b16 %v219
      %v875 = vunpack.c.l.b16 %v220
      %v876 = vunpack.c.h.b16 %v220
      %v877 = vunpack.c.l.b16 %v221
      %v878 = vunpack.c.h.b16 %v221
      %v879 = vunpack.c.l.b16 %v222
      %v880 = vunpack.c.h.b16 %v222
      %v881 = vunpack.c.l.b16 %v223
      %v882 = vunpack.c.h.b16 %v223
      %v883 = vunpack.c.l.b16 %v224
      %v884 = vunpack.c.h.b16 %v224
      %v885 = vunpack.c.l.b16 %v225
      %v886 = vunpack.c.h.b16 %v225
      %v887 = vunpack.c.l.b16 %v226
      %v888 = vunpack.c.h.b16 %v226
      %v889 = vunpack.c.l.b16 %v227
      %v890 = vunpack.c.h.b16 %v227
      %v891 = vunpack.c.l.b16 %v228
      %v892 = vunpack.c.h.b16 %v228
      %v893 = vunpack.c.l.b16 %v229
      %v894 = vunpack.c.h.b16 %v229
      %v895 = vunpack.c.l.b16 %v230
      %v896 = vunpack.c.h.b16 %v230
      %v897 = vunpack.c.l.b16 %v231
      %v898 = vunpack.c.h.b16 %v231
      %v899 = vunpack.c.l.b16 %v232
      %v900 = vunpack.c.h.b16 %v232
      %v901 = vunpack.c.l.b16 %v233
      %v902 = vunpack.c.h.b16 %v233
      %v903 = vunpack.c.l.b16 %v234
      %v904 = vunpack.c.h.b16 %v234
      %v905 = vunpack.c.l.b16 %v235
      %v906 = vunpack.c.h.b16 %v235
      %v907 = vunpack.c.l.b16 %v236
      %v908 = vunpack.c.h.b16 %v236
      %v909 = vunpack.c.l.b16 %v237
      %v910 = vunpack.c.h.b16 %v237
      %v911 = vunpack.c.l.b16 %v238
      %v912 = vunpack.c.h.b16 %v238
      %v913 = vunpack.c.l.b16 %v239
      %v914 = vunpack.c.h.b16 %v239
      %v915 = vunpack.c.l.b16 %v240
      %v916 = vunpack.c.h.b16 %v240
      %v917 = vunpack.c.l.b16 %v241
      %v918 = vunpack.c.h.b16 %v241
      %v919 = vunpack.c.l.b16 %v242
      %v920 = vunpack.c.h.b16 %v242
      %v921 = vunpack.c.l.b16 %v243
      %v922 = vunpack.c.h.b16 %v243
      %v923 = vunpack.c.l.b16 %v244
      %v924 = vunpack.c.h.b16 %v244
      %v925 = vunpack.c.l.b16 %v245
      %v926 = vunpack.c.h.b16 %v245
      %v927 = vunpack.c.l.b16 %v246
      %v928 = vunpack.c.h.b16 %v246
      %v929 = vunpack.c.l.b16 %v247
      %v930 = vunpack.c.h.b16 %v247
      %v931 = vunpack.c.l.b16 %v248
      %v932 = vunpack.c.h.b16 %v248
      %v933 = vunpack.c.l.b16 %v249
      %v934 = vunpack.c.h.b16 %v249
      %v935 = vunpack.c.l.b16 %v250
      %v936 = vunpack.c.h.b16 %v250
      %v937 = vunpack.c.l.b16 %v251
      %v938 = vunpack.c.h.b16 %v251
      %v939 = vunpack.c.l.b16 %v252
      %v940 = vunpack.c.h.b16 %v252
      %v941 = vunpack.c.l.b16 %v253
      %v942 = vunpack.c.h.b16 %v253
      %v943 = vunpack.c.l.b16 %v254
      %v944 = vunpack.c.h.b16 %v254
      %v945 = vunpack.c.l.b16 %v255
      %v946 = vunpack.c.h.b16 %v255
      %v947 = vunpack.c.l.b16 %v256
      %v948 = vunpack.c.h.b16 %v256
      %v949 = vunpack.c.l.b16 %v257
      %v950 = vunpack.c.h.b16 %v257
      %v951 = vunpack.c.l.b16 %v258
      %v952 = vunpack.c.h.b16 %v258
      %v953 = vunpack.c.l.b16 %v259
      %v954 = vunpack.c.h.b16 %v259
      %v955 = vunpack.c.l.b16 %v260
      %v956 = vunpack.c.h.b16 %v260
      %v957 = vunpack.c.l.b16 %v261
      %v958 = vunpack.c.h.b16 %v261
      %v959 = vpack.c.b16 %v869, %v863
      %v960 = vpack.c.b16 %v870, %v864
      %v961 = vpack.c.b16 %v871, %v865
      %v962 = vpack.c.b16 %v872, %v866
      %v963 = vpack.c.b16 %v873, %v867
      %v964 = vpack.c.b16 %v874, %v868
      %v965 = vpack.c.b16 %v881, %v875
      %v966 = vpack.c.b16 %v882, %v876
      %v967 = vpack.c.b16 %v883, %v877
      %v968 = vpack.c.b16 %v884, %v878
      %v969 = vpack.c.b16 %v885, %v879
      %v970 = vpack.c.b16 %v886, %v880
      %v971 = vpack.c.b16 %v893, %v887
      %v972 = vpack.c.b16 %v894, %v888
      %v973 = vpack.c.b16 %v895, %v889
      %v974 = vpack.c.b16 %v896, %v890
      %v975 = vpack.c.b16 %v897, %v891
      %v976 = vpack.c.b16 %v898, %v892
      %v977 = vpack.c.b16 %v905, %v899
      %v978 = vpack.c.b16 %v906, %v900
      %v979 = vpack.c.b16 %v907, %v901
      %v980 = vpack.c.b16 %v908, %v902
      %v981 = vpack.c.b16 %v909, %v903
      %v982 = vpack.c.b16 %v910, %v904
      %v983 = vpack.c.b16 %v917, %v911
      %v984 = vpack.c.b16 %v918, %v912
      %v985 = vpack.c.b16 %v919, %v913
      %v986 = vpack.c.b16 %v920, %v914
      %v987 = vpack.c.b16 %v921, %v915
      %v988 = vpack.c.b16 %v922, %v916
      %v989 = vpack.c.b16 %v929, %v923
      %v990 = vpack.c.b16 %v930, %v924
      %v991 = vpack.c.b16 %v931, %v925
      %v992 = vpack.c.b16 %v932, %v926
      %v993 = vpack.c.b16 %v933, %v927
      %v994 = vpack.c.b16 %v934, %v928
      %v995 = vpack.c.b16 %v941, %v935
      %v996 = vpack.c.b16 %v942, %v936
      %v997 = vpack.c.b16 %v943, %v937
      %v998 = vpack.c.b16 %v944, %v938
      %v999 = vpack.c.b16 %v945, %v939
      %v1000 = vpack.c.b16 %v946, %v940
      %v1001 = vpack.c.b16 %v953, %v947
      %v1002 = vpack.c.b16 %v954, %v948
      %v1003 = vpack.c.b16 %v955, %v949
      %v1004 = vpack.c.b16 %v956, %v950
      %v1005 = vpack.c.b16 %v957, %v951
      %v1006 = vpack.c.b16 %v958, %v952
      %1055 = vmatprep.subr.bf16.mxu0 %v960
      %1056 = vmatpush1.bf16.msra.mxu0 %v959
      %1057 = vmatprep.subr.bf16.mxu0 %v966
      %1058 = vmatpush1.bf16.msra.mxu0 %v965
      %1059 = vmatprep.subr.bf16.mxu0 %v972
      %1060 = vmatpush1.bf16.msra.mxu0 %v971
      %1061 = vmatprep.subr.bf16.mxu0 %v978
      %1062 = vmatpush1.bf16.msra.mxu0 %v977
      %1063 = vmatprep.subr.bf16.mxu0 %v984
      %1064 = vmatpush1.bf16.msra.mxu0 %v983
      %1065 = vmatprep.subr.bf16.mxu0 %v990
      %1066 = vmatpush1.bf16.msra.mxu0 %v989
      %1067 = vmatprep.subr.bf16.mxu0 %v996
      %1068 = vmatpush1.bf16.msra.mxu0 %v995
      %1069 = vmatprep.subr.bf16.mxu0 %v1002
      %1070 = vmatpush1.bf16.msra.mxu0 %v1001
      %1071 = vmatprep.subr.bf16.mxu0 0
      %1072 = vmatpush1.bf16.msra.mxu0 0
      %1073 = vmatprep.subr.bf16.mxu0 0
      %1074 = vmatpush1.bf16.msra.mxu0 0
      %1075 = vmatprep.subr.bf16.mxu0 0
      %1076 = vmatpush1.bf16.msra.mxu0 0
      %1077 = vmatprep.subr.bf16.mxu0 0
      %1078 = vmatpush1.bf16.msra.mxu0 0
      %1079 = vmatprep.subr.bf16.mxu0 0
      %1080 = vmatpush1.bf16.msra.mxu0 0
      %1081 = vmatprep.subr.bf16.mxu0 0
      %1082 = vmatpush1.bf16.msra.mxu0 0
      %1083 = vmatprep.subr.bf16.mxu0 0
      %1084 = vmatpush1.bf16.msra.mxu0 0
      %1085 = vmatprep.subr.bf16.mxu0 0
      %1086 = vmatpush1.bf16.msra.mxu0 0
      %1087 = vmatprep.mubr.bf16.mxu0 0
      %1088 = vmatmul.mubr.bf16.gmra.mrb[0].mxu0 %v209
      %v1089 = vpop.f32.mrb[0].mxu0
      %v1090 = vadd.f32 %v601, %v1089
      %v1091 = vpop.f32.mrb[0].mxu0
      %v1092 = vadd.f32 %v603, %v1091
      %v1093 = vpop.f32.mrb[0].mxu0
      %v1094 = vadd.f32 %v605, %v1093
      %v1095 = vpop.f32.mrb[0].mxu0
      %v1096 = vadd.f32 %v607, %v1095
      %1097 = vmatprep.mubr.bf16.mxu0 0
      %1098 = vmatmul.mubr.bf16.gmra.mrb[0].mxu0 %v210
      %v1099 = vpop.f32.mrb[0].mxu0
      %v1100 = vadd.f32 %v611, %v1099
      %v1101 = vpop.f32.mrb[0].mxu0
      %v1102 = vadd.f32 %v613, %v1101
      %v1103 = vpop.f32.mrb[0].mxu0
      %v1104 = vadd.f32 %v615, %v1103
      %v1105 = vpop.f32.mrb[0].mxu0
      %v1106 = vadd.f32 %v617, %v1105
      %1107 = vmatprep.mubr.bf16.mxu0 0
      %1108 = vmatmul.mubr.bf16.gmra.mrb[0].mxu0 %v211
      %v1109 = vpop.f32.mrb[0].mxu0
      %v1110 = vadd.f32 %v621, %v1109
      %v1111 = vpop.f32.mrb[0].mxu0
      %v1112 = vadd.f32 %v623, %v1111
      %v1113 = vpop.f32.mrb[0].mxu0
      %v1114 = vadd.f32 %v625, %v1113
      %v1115 = vpop.f32.mrb[0].mxu0
      %v1116 = vadd.f32 %v627, %v1115
      %1117 = vmatprep.mubr.bf16.mxu0 0
      %1118 = vmatmul.mubr.bf16.gmra.mrb[0].mxu0 %v212
      %v1119 = vpop.f32.mrb[0].mxu0
      %v1120 = vadd.f32 %v631, %v1119
      %v1121 = vpop.f32.mrb[0].mxu0
      %v1122 = vadd.f32 %v633, %v1121
      %v1123 = vpop.f32.mrb[0].mxu0
      %v1124 = vadd.f32 %v635, %v1123
      %v1125 = vpop.f32.mrb[0].mxu0
      %v1126 = vadd.f32 %v637, %v1125
      %1127 = vmatprep.mubr.bf16.mxu0 0
      %1128 = vmatmul.mubr.bf16.gmra.mrb[0].mxu0 %v213
      %v1129 = vpop.f32.mrb[0].mxu0
      %v1130 = vadd.f32 %v641, %v1129
      %v1131 = vpop.f32.mrb[0].mxu0
      %v1132 = vadd.f32 %v643, %v1131
      %v1133 = vpop.f32.mrb[0].mxu0
      %v1134 = vadd.f32 %v645, %v1133
      %v1135 = vpop.f32.mrb[0].mxu0
      %v1136 = vadd.f32 %v647, %v1135
      %1137 = vdwg.mxu0
      %1138 = vmatprep.subr.bf16.mxu0 %v962
      %1139 = vmatpush1.bf16.msra.mxu0 %v961
      %1140 = vmatprep.subr.bf16.mxu0 %v968
      %1141 = vmatpush1.bf16.msra.mxu0 %v967
      %1142 = vmatprep.subr.bf16.mxu0 %v974
      %1143 = vmatpush1.bf16.msra.mxu0 %v973
      %1144 = vmatprep.subr.bf16.mxu0 %v980
      %1145 = vmatpush1.bf16.msra.mxu0 %v979
      %1146 = vmatprep.subr.bf16.mxu0 %v986
      %1147 = vmatpush1.bf16.msra.mxu0 %v985
      %1148 = vmatprep.subr.bf16.mxu0 %v992
      %1149 = vmatpush1.bf16.msra.mxu0 %v991
      %1150 = vmatprep.subr.bf16.mxu0 %v998
      %1151 = vmatpush1.bf16.msra.mxu0 %v997
      %1152 = vmatprep.subr.bf16.mxu0 %v1004
      %1153 = vmatpush1.bf16.msra.mxu0 %v1003
      %1154 = vmatprep.subr.bf16.mxu0 0
      %1155 = vmatpush1.bf16.msra.mxu0 0
      %1156 = vmatprep.subr.bf16.mxu0 0
      %1157 = vmatpush1.bf16.msra.mxu0 0
      %1158 = vmatprep.subr.bf16.mxu0 0
      %1159 = vmatpush1.bf16.msra.mxu0 0
      %1160 = vmatprep.subr.bf16.mxu0 0
      %1161 = vmatpush1.bf16.msra.mxu0 0
      %1162 = vmatprep.subr.bf16.mxu0 0
      %1163 = vmatpush1.bf16.msra.mxu0 0
      %1164 = vmatprep.subr.bf16.mxu0 0
      %1165 = vmatpush1.bf16.msra.mxu0 0
      %1166 = vmatprep.subr.bf16.mxu0 0
      %1167 = vmatpush1.bf16.msra.mxu0 0
      %1168 = vmatprep.subr.bf16.mxu0 0
      %1169 = vmatpush1.bf16.msra.mxu0 0
      %1170 = vmatprep.mubr.bf16.mxu0 0
      %1171 = vmatmul.mubr.bf16.gmra.mrb[0].mxu0 %v209
      %v1172 = vpop.f32.mrb[0].mxu0
      %v1173 = vadd.f32 %v684, %v1172
      %v1174 = vpop.f32.mrb[0].mxu0
      %v1175 = vadd.f32 %v686, %v1174
      %v1176 = vpop.f32.mrb[0].mxu0
      %v1177 = vadd.f32 %v688, %v1176
      %v1178 = vpop.f32.mrb[0].mxu0
      %v1179 = vadd.f32 %v690, %v1178
      %1180 = vmatprep.mubr.bf16.mxu0 0
      %1181 = vmatmul.mubr.bf16.gmra.mrb[0].mxu0 %v210
      %v1182 = vpop.f32.mrb[0].mxu0
      %v1183 = vadd.f32 %v694, %v1182
      %v1184 = vpop.f32.mrb[0].mxu0
      %v1185 = vadd.f32 %v696, %v1184
      %v1186 = vpop.f32.mrb[0].mxu0
      %v1187 = vadd.f32 %v698, %v1186
      %v1188 = vpop.f32.mrb[0].mxu0
      %v1189 = vadd.f32 %v700, %v1188
      %1190 = vmatprep.mubr.bf16.mxu0 0
      %1191 = vmatmul.mubr.bf16.gmra.mrb[0].mxu0 %v211
      %v1192 = vpop.f32.mrb[0].mxu0
      %v1193 = vadd.f32 %v704, %v1192
      %v1194 = vpop.f32.mrb[0].mxu0
      %v1195 = vadd.f32 %v706, %v1194
      %v1196 = vpop.f32.mrb[0].mxu0
      %v1197 = vadd.f32 %v708, %v1196
      %v1198 = vpop.f32.mrb[0].mxu0
      %v1199 = vadd.f32 %v710, %v1198
      %1200 = vmatprep.mubr.bf16.mxu0 0
      %1201 = vmatmul.mubr.bf16.gmra.mrb[0].mxu0 %v212
      %v1202 = vpop.f32.mrb[0].mxu0
      %v1203 = vadd.f32 %v714, %v1202
      %v1204 = vpop.f32.mrb[0].mxu0
      %v1205 = vadd.f32 %v716, %v1204
      %v1206 = vpop.f32.mrb[0].mxu0
      %v1207 = vadd.f32 %v718, %v1206
      %v1208 = vpop.f32.mrb[0].mxu0
      %v1209 = vadd.f32 %v720, %v1208
      %1210 = vmatprep.mubr.bf16.mxu0 0
      %1211 = vmatmul.mubr.bf16.gmra.mrb[0].mxu0 %v213
      %v1212 = vpop.f32.mrb[0].mxu0
      %v1213 = vadd.f32 %v724, %v1212
      %v1214 = vpop.f32.mrb[0].mxu0
      %v1215 = vadd.f32 %v726, %v1214
      %v1216 = vpop.f32.mrb[0].mxu0
      %v1217 = vadd.f32 %v728, %v1216
      %v1218 = vpop.f32.mrb[0].mxu0
      %v1219 = vadd.f32 %v730, %v1218
      %1220 = vdwg.mxu0
      %1221 = vmatprep.subr.bf16.mxu0 %v964
      %1222 = vmatpush1.bf16.msra.mxu0 %v963
      %1223 = vmatprep.subr.bf16.mxu0 %v970
      %1224 = vmatpush1.bf16.msra.mxu0 %v969
      %1225 = vmatprep.subr.bf16.mxu0 %v976
      %1226 = vmatpush1.bf16.msra.mxu0 %v975
      %1227 = vmatprep.subr.bf16.mxu0 %v982
      %1228 = vmatpush1.bf16.msra.mxu0 %v981
      %1229 = vmatprep.subr.bf16.mxu0 %v988
      %1230 = vmatpush1.bf16.msra.mxu0 %v987
      %1231 = vmatprep.subr.bf16.mxu0 %v994
      %1232 = vmatpush1.bf16.msra.mxu0 %v993
      %1233 = vmatprep.subr.bf16.mxu0 %v1000
      %1234 = vmatpush1.bf16.msra.mxu0 %v999
      %1235 = vmatprep.subr.bf16.mxu0 %v1006
      %1236 = vmatpush1.bf16.msra.mxu0 %v1005
      %1237 = vmatprep.subr.bf16.mxu0 0
      %1238 = vmatpush1.bf16.msra.mxu0 0
      %1239 = vmatprep.subr.bf16.mxu0 0
      %1240 = vmatpush1.bf16.msra.mxu0 0
      %1241 = vmatprep.subr.bf16.mxu0 0
      %1242 = vmatpush1.bf16.msra.mxu0 0
      %1243 = vmatprep.subr.bf16.mxu0 0
      %1244 = vmatpush1.bf16.msra.mxu0 0
      %1245 = vmatprep.subr.bf16.mxu0 0
      %1246 = vmatpush1.bf16.msra.mxu0 0
      %1247 = vmatprep.subr.bf16.mxu0 0
      %1248 = vmatpush1.bf16.msra.mxu0 0
      %1249 = vmatprep.subr.bf16.mxu0 0
      %1250 = vmatpush1.bf16.msra.mxu0 0
      %1251 = vmatprep.subr.bf16.mxu0 0
      %1252 = vmatpush1.bf16.msra.mxu0 0
      %1253 = vmatprep.mubr.bf16.mxu0 0
      %1254 = vmatmul.mubr.bf16.gmra.mrb[0].mxu0 %v209
      %v1255 = vpop.f32.mrb[0].mxu0
      %v1256 = vadd.f32 %v767, %v1255
      %v1257 = vpop.f32.mrb[0].mxu0
      %v1258 = vadd.f32 %v769, %v1257
      %v1259 = vpop.f32.mrb[0].mxu0
      %v1260 = vadd.f32 %v771, %v1259
      %v1261 = vpop.f32.mrb[0].mxu0
      %v1262 = vadd.f32 %v773, %v1261
      %1263 = vmatprep.mubr.bf16.mxu0 0
      %1264 = vmatmul.mubr.bf16.gmra.mrb[0].mxu0 %v210
      %v1265 = vpop.f32.mrb[0].mxu0
      %v1266 = vadd.f32 %v777, %v1265
      %v1267 = vpop.f32.mrb[0].mxu0
      %v1268 = vadd.f32 %v779, %v1267
      %v1269 = vpop.f32.mrb[0].mxu0
      %v1270 = vadd.f32 %v781, %v1269
      %v1271 = vpop.f32.mrb[0].mxu0
      %v1272 = vadd.f32 %v783, %v1271
      %1273 = vmatprep.mubr.bf16.mxu0 0
      %1274 = vmatmul.mubr.bf16.gmra.mrb[0].mxu0 %v211
      %v1275 = vpop.f32.mrb[0].mxu0
      %v1276 = vadd.f32 %v787, %v1275
      %v1277 = vpop.f32.mrb[0].mxu0
      %v1278 = vadd.f32 %v789, %v1277
      %v1279 = vpop.f32.mrb[0].mxu0
      %v1280 = vadd.f32 %v791, %v1279
      %v1281 = vpop.f32.mrb[0].mxu0
      %v1282 = vadd.f32 %v793, %v1281
      %1283 = vmatprep.mubr.bf16.mxu0 0
      %1284 = vmatmul.mubr.bf16.gmra.mrb[0].mxu0 %v212
      %v1285 = vpop.f32.mrb[0].mxu0
      %v1286 = vadd.f32 %v797, %v1285
      %v1287 = vpop.f32.mrb[0].mxu0
      %v1288 = vadd.f32 %v799, %v1287
      %v1289 = vpop.f32.mrb[0].mxu0
      %v1290 = vadd.f32 %v801, %v1289
      %v1291 = vpop.f32.mrb[0].mxu0
      %v1292 = vadd.f32 %v803, %v1291
      %1293 = vmatprep.mubr.bf16.mxu0 0
      %1294 = vmatmul.mubr.bf16.gmra.mrb[0].mxu0 %v213
      %v1295 = vpop.f32.mrb[0].mxu0
      %v1296 = vadd.f32 %v807, %v1295
      %v1297 = vpop.f32.mrb[0].mxu0
      %v1298 = vadd.f32 %v809, %v1297
      %v1299 = vpop.f32.mrb[0].mxu0
      %v1300 = vadd.f32 %v811, %v1299
      %v1301 = vpop.f32.mrb[0].mxu0
      %v1302 = vadd.f32 %v813, %v1301
      %1303 = vdwg.mxu0
      %v1304 = vld [vmem:[%s192 + $0x2] sm:$0xff]
      %v1305 = vld [vmem:[%s192 + $0xa] sm:$0xff]
      %v1306 = vld [vmem:[%s192 + $0x12] sm:$0xff]
      %v1307 = vld [vmem:[%s192 + $0x1a] sm:$0xff]
      %v1308 = vld [vmem:[%s192 + $0x22] sm:$0xff]
      %v1309 = vld [vmem:[%s192 + $0x2a] sm:$0xff]
      %v1310 = vld [vmem:[%s192 + $0x32] sm:$0xff]
      %v1311 = vld [vmem:[%s192 + $0x3a] sm:$0xff]
      %v1312 = vld [vmem:[%s192 + $0x42] sm:$0xff]
      %v1313 = vld [vmem:[%s192 + $0x4a] sm:$0xff]
      %v1314 = vpack.c.bf16 %v1305, %v1304
      %v1315 = vpack.c.bf16 %v1307, %v1306
      %v1316 = vpack.c.bf16 %v1309, %v1308
      %v1317 = vpack.c.bf16 %v1311, %v1310
      %v1318 = vpack.c.bf16 %v1313, %v1312
      %s1319 = scalar_lea.vmem %s1, 768
      %v1320 = vld [vmem:[%s1319] sm:$0xff]
      %v1321 = vld [vmem:[%s1319 + $0x8] sm:$0xff]
      %v1322 = vld [vmem:[%s1319 + $0x10] sm:$0xff]
      %v1323 = vld [vmem:[%s1319 + $0x18] sm:$0xff]
      %v1324 = vld [vmem:[%s1319 + $0x20] sm:$0xff]
      %v1325 = vld [vmem:[%s1319 + $0x28] sm:$0xff]
      %v1326 = vld [vmem:[%s1319 + $0x30] sm:$0xff]
      %v1327 = vld [vmem:[%s1319 + $0x38] sm:$0xff]
      %v1328 = vld [vmem:[%s1319 + $0x40] sm:$0xff]
      %v1329 = vld [vmem:[%s1319 + $0x48] sm:$0xff]
      %v1330 = vld [vmem:[%s1319 + $0x50] sm:$0xff]
      %v1331 = vld [vmem:[%s1319 + $0x58] sm:$0xff]
      %v1332 = vld [vmem:[%s1319 + $0x60] sm:$0xff]
      %v1333 = vld [vmem:[%s1319 + $0x68] sm:$0xff]
      %v1334 = vld [vmem:[%s1319 + $0x70] sm:$0xff]
      %v1335 = vld [vmem:[%s1319 + $0x78] sm:$0xff]
      %v1336 = vld [vmem:[%s1319 + $0x80] sm:$0xff]
      %v1337 = vld [vmem:[%s1319 + $0x88] sm:$0xff]
      %v1338 = vld [vmem:[%s1319 + $0x90] sm:$0xff]
      %v1339 = vld [vmem:[%s1319 + $0x98] sm:$0xff]
      %v1340 = vld [vmem:[%s1319 + $0xa0] sm:$0xff]
      %v1341 = vld [vmem:[%s1319 + $0xa8] sm:$0xff]
      %v1342 = vld [vmem:[%s1319 + $0xb0] sm:$0xff]
      %v1343 = vld [vmem:[%s1319 + $0xb8] sm:$0xff]
      %v1344 = vld [vmem:[%s1319 + $0xc0] sm:$0xff]
      %v1345 = vld [vmem:[%s1319 + $0xc8] sm:$0xff]
      %v1346 = vld [vmem:[%s1319 + $0xd0] sm:$0xff]
      %v1347 = vld [vmem:[%s1319 + $0xd8] sm:$0xff]
      %v1348 = vld [vmem:[%s1319 + $0xe0] sm:$0xff]
      %v1349 = vld [vmem:[%s1319 + $0xe8] sm:$0xff]
      %v1350 = vld [vmem:[%s1319 + $0xf0] sm:$0xff]
      %v1351 = vld [vmem:[%s1319 + $0xf8] sm:$0xff]
      %v1352 = vld [vmem:[%s1319 + $0x100] sm:$0xff]
      %v1353 = vld [vmem:[%s1319 + $0x108] sm:$0xff]
      %v1354 = vld [vmem:[%s1319 + $0x110] sm:$0xff]
      %v1355 = vld [vmem:[%s1319 + $0x118] sm:$0xff]
      %v1356 = vld [vmem:[%s1319 + $0x120] sm:$0xff]
      %v1357 = vld [vmem:[%s1319 + $0x128] sm:$0xff]
      %v1358 = vld [vmem:[%s1319 + $0x130] sm:$0xff]
      %v1359 = vld [vmem:[%s1319 + $0x138] sm:$0xff]
      %v1360 = vld [vmem:[%s1319 + $0x140] sm:$0xff]
      %v1361 = vld [vmem:[%s1319 + $0x148] sm:$0xff]
      %v1362 = vld [vmem:[%s1319 + $0x150] sm:$0xff]
      %v1363 = vld [vmem:[%s1319 + $0x158] sm:$0xff]
      %v1364 = vld [vmem:[%s1319 + $0x160] sm:$0xff]
      %v1365 = vld [vmem:[%s1319 + $0x168] sm:$0xff]
      %v1366 = vld [vmem:[%s1319 + $0x170] sm:$0xff]
      %v1367 = vld [vmem:[%s1319 + $0x178] sm:$0xff]
      %v1416 = vunpack.c.l.b16 %v1320
      %v1417 = vunpack.c.h.b16 %v1320
      %v1418 = vunpack.c.l.b16 %v1321
      %v1419 = vunpack.c.h.b16 %v1321
      %v1420 = vunpack.c.l.b16 %v1322
      %v1421 = vunpack.c.h.b16 %v1322
      %v1422 = vunpack.c.l.b16 %v1323
      %v1423 = vunpack.c.h.b16 %v1323
      %v1424 = vunpack.c.l.b16 %v1324
      %v1425 = vunpack.c.h.b16 %v1324
      %v1426 = vunpack.c.l.b16 %v1325
      %v1427 = vunpack.c.h.b16 %v1325
      %v1428 = vunpack.c.l.b16 %v1326
      %v1429 = vunpack.c.h.b16 %v1326
      %v1430 = vunpack.c.l.b16 %v1327
      %v1431 = vunpack.c.h.b16 %v1327
      %v1432 = vunpack.c.l.b16 %v1328
      %v1433 = vunpack.c.h.b16 %v1328
      %v1434 = vunpack.c.l.b16 %v1329
      %v1435 = vunpack.c.h.b16 %v1329
      %v1436 = vunpack.c.l.b16 %v1330
      %v1437 = vunpack.c.h.b16 %v1330
      %v1438 = vunpack.c.l.b16 %v1331
      %v1439 = vunpack.c.h.b16 %v1331
      %v1440 = vunpack.c.l.b16 %v1332
      %v1441 = vunpack.c.h.b16 %v1332
      %v1442 = vunpack.c.l.b16 %v1333
      %v1443 = vunpack.c.h.b16 %v1333
      %v1444 = vunpack.c.l.b16 %v1334
      %v1445 = vunpack.c.h.b16 %v1334
      %v1446 = vunpack.c.l.b16 %v1335
      %v1447 = vunpack.c.h.b16 %v1335
      %v1448 = vunpack.c.l.b16 %v1336
      %v1449 = vunpack.c.h.b16 %v1336
      %v1450 = vunpack.c.l.b16 %v1337
      %v1451 = vunpack.c.h.b16 %v1337
      %v1452 = vunpack.c.l.b16 %v1338
      %v1453 = vunpack.c.h.b16 %v1338
      %v1454 = vunpack.c.l.b16 %v1339
      %v1455 = vunpack.c.h.b16 %v1339
      %v1456 = vunpack.c.l.b16 %v1340
      %v1457 = vunpack.c.h.b16 %v1340
      %v1458 = vunpack.c.l.b16 %v1341
      %v1459 = vunpack.c.h.b16 %v1341
      %v1460 = vunpack.c.l.b16 %v1342
      %v1461 = vunpack.c.h.b16 %v1342
      %v1462 = vunpack.c.l.b16 %v1343
      %v1463 = vunpack.c.h.b16 %v1343
      %v1464 = vunpack.c.l.b16 %v1344
      %v1465 = vunpack.c.h.b16 %v1344
      %v1466 = vunpack.c.l.b16 %v1345
      %v1467 = vunpack.c.h.b16 %v1345
      %v1468 = vunpack.c.l.b16 %v1346
      %v1469 = vunpack.c.h.b16 %v1346
      %v1470 = vunpack.c.l.b16 %v1347
      %v1471 = vunpack.c.h.b16 %v1347
      %v1472 = vunpack.c.l.b16 %v1348
      %v1473 = vunpack.c.h.b16 %v1348
      %v1474 = vunpack.c.l.b16 %v1349
      %v1475 = vunpack.c.h.b16 %v1349
      %v1476 = vunpack.c.l.b16 %v1350
      %v1477 = vunpack.c.h.b16 %v1350
      %v1478 = vunpack.c.l.b16 %v1351
      %v1479 = vunpack.c.h.b16 %v1351
      %v1480 = vunpack.c.l.b16 %v1352
      %v1481 = vunpack.c.h.b16 %v1352
      %v1482 = vunpack.c.l.b16 %v1353
      %v1483 = vunpack.c.h.b16 %v1353
      %v1484 = vunpack.c.l.b16 %v1354
      %v1485 = vunpack.c.h.b16 %v1354
      %v1486 = vunpack.c.l.b16 %v1355
      %v1487 = vunpack.c.h.b16 %v1355
      %v1488 = vunpack.c.l.b16 %v1356
      %v1489 = vunpack.c.h.b16 %v1356
      %v1490 = vunpack.c.l.b16 %v1357
      %v1491 = vunpack.c.h.b16 %v1357
      %v1492 = vunpack.c.l.b16 %v1358
      %v1493 = vunpack.c.h.b16 %v1358
      %v1494 = vunpack.c.l.b16 %v1359
      %v1495 = vunpack.c.h.b16 %v1359
      %v1496 = vunpack.c.l.b16 %v1360
      %v1497 = vunpack.c.h.b16 %v1360
      %v1498 = vunpack.c.l.b16 %v1361
      %v1499 = vunpack.c.h.b16 %v1361
      %v1500 = vunpack.c.l.b16 %v1362
      %v1501 = vunpack.c.h.b16 %v1362
      %v1502 = vunpack.c.l.b16 %v1363
      %v1503 = vunpack.c.h.b16 %v1363
      %v1504 = vunpack.c.l.b16 %v1364
      %v1505 = vunpack.c.h.b16 %v1364
      %v1506 = vunpack.c.l.b16 %v1365
      %v1507 = vunpack.c.h.b16 %v1365
      %v1508 = vunpack.c.l.b16 %v1366
      %v1509 = vunpack.c.h.b16 %v1366
      %v1510 = vunpack.c.l.b16 %v1367
      %v1511 = vunpack.c.h.b16 %v1367
      %v1512 = vpack.c.b16 %v1422, %v1416
      %v1513 = vpack.c.b16 %v1423, %v1417
      %v1514 = vpack.c.b16 %v1424, %v1418
      %v1515 = vpack.c.b16 %v1425, %v1419
      %v1516 = vpack.c.b16 %v1426, %v1420
      %v1517 = vpack.c.b16 %v1427, %v1421
      %v1518 = vpack.c.b16 %v1434, %v1428
      %v1519 = vpack.c.b16 %v1435, %v1429
      %v1520 = vpack.c.b16 %v1436, %v1430
      %v1521 = vpack.c.b16 %v1437, %v1431
      %v1522 = vpack.c.b16 %v1438, %v1432
      %v1523 = vpack.c.b16 %v1439, %v1433
      %v1524 = vpack.c.b16 %v1446, %v1440
      %v1525 = vpack.c.b16 %v1447, %v1441
      %v1526 = vpack.c.b16 %v1448, %v1442
      %v1527 = vpack.c.b16 %v1449, %v1443
      %v1528 = vpack.c.b16 %v1450, %v1444
      %v1529 = vpack.c.b16 %v1451, %v1445
      %v1530 = vpack.c.b16 %v1458, %v1452
      %v1531 = vpack.c.b16 %v1459, %v1453
      %v1532 = vpack.c.b16 %v1460, %v1454
      %v1533 = vpack.c.b16 %v1461, %v1455
      %v1534 = vpack.c.b16 %v1462, %v1456
      %v1535 = vpack.c.b16 %v1463, %v1457
      %v1536 = vpack.c.b16 %v1470, %v1464
      %v1537 = vpack.c.b16 %v1471, %v1465
      %v1538 = vpack.c.b16 %v1472, %v1466
      %v1539 = vpack.c.b16 %v1473, %v1467
      %v1540 = vpack.c.b16 %v1474, %v1468
      %v1541 = vpack.c.b16 %v1475, %v1469
      %v1542 = vpack.c.b16 %v1482, %v1476
      %v1543 = vpack.c.b16 %v1483, %v1477
      %v1544 = vpack.c.b16 %v1484, %v1478
      %v1545 = vpack.c.b16 %v1485, %v1479
      %v1546 = vpack.c.b16 %v1486, %v1480
      %v1547 = vpack.c.b16 %v1487, %v1481
      %v1548 = vpack.c.b16 %v1494, %v1488
      %v1549 = vpack.c.b16 %v1495, %v1489
      %v1550 = vpack.c.b16 %v1496, %v1490
      %v1551 = vpack.c.b16 %v1497, %v1491
      %v1552 = vpack.c.b16 %v1498, %v1492
      %v1553 = vpack.c.b16 %v1499, %v1493
      %v1554 = vpack.c.b16 %v1506, %v1500
      %v1555 = vpack.c.b16 %v1507, %v1501
      %v1556 = vpack.c.b16 %v1508, %v1502
      %v1557 = vpack.c.b16 %v1509, %v1503
      %v1558 = vpack.c.b16 %v1510, %v1504
      %v1559 = vpack.c.b16 %v1511, %v1505
      %1608 = vmatprep.subr.bf16.mxu0 %v1513
      %1609 = vmatpush1.bf16.msra.mxu0 %v1512
      %1610 = vmatprep.subr.bf16.mxu0 %v1519
      %1611 = vmatpush1.bf16.msra.mxu0 %v1518
      %1612 = vmatprep.subr.bf16.mxu0 %v1525
      %1613 = vmatpush1.bf16.msra.mxu0 %v1524
      %1614 = vmatprep.subr.bf16.mxu0 %v1531
      %1615 = vmatpush1.bf16.msra.mxu0 %v1530
      %1616 = vmatprep.subr.bf16.mxu0 %v1537
      %1617 = vmatpush1.bf16.msra.mxu0 %v1536
      %1618 = vmatprep.subr.bf16.mxu0 %v1543
      %1619 = vmatpush1.bf16.msra.mxu0 %v1542
      %1620 = vmatprep.subr.bf16.mxu0 %v1549
      %1621 = vmatpush1.bf16.msra.mxu0 %v1548
      %1622 = vmatprep.subr.bf16.mxu0 %v1555
      %1623 = vmatpush1.bf16.msra.mxu0 %v1554
      %1624 = vmatprep.subr.bf16.mxu0 0
      %1625 = vmatpush1.bf16.msra.mxu0 0
      %1626 = vmatprep.subr.bf16.mxu0 0
      %1627 = vmatpush1.bf16.msra.mxu0 0
      %1628 = vmatprep.subr.bf16.mxu0 0
      %1629 = vmatpush1.bf16.msra.mxu0 0
      %1630 = vmatprep.subr.bf16.mxu0 0
      %1631 = vmatpush1.bf16.msra.mxu0 0
      %1632 = vmatprep.subr.bf16.mxu0 0
      %1633 = vmatpush1.bf16.msra.mxu0 0
      %1634 = vmatprep.subr.bf16.mxu0 0
      %1635 = vmatpush1.bf16.msra.mxu0 0
      %1636 = vmatprep.subr.bf16.mxu0 0
      %1637 = vmatpush1.bf16.msra.mxu0 0
      %1638 = vmatprep.subr.bf16.mxu0 0
      %1639 = vmatpush1.bf16.msra.mxu0 0
      %1640 = vmatprep.mubr.bf16.mxu0 0
      %1641 = vmatmul.mubr.bf16.gmra.mrb[0].mxu0 %v1314
      %v1642 = vpop.f32.mrb[0].mxu0
      %v1643 = vadd.f32 0.0, %v1642
      %v1644 = vpop.f32.mrb[0].mxu0
      %v1645 = vadd.f32 0.0, %v1644
      %v1646 = vpop.f32.mrb[0].mxu0
      %v1647 = vadd.f32 0.0, %v1646
      %v1648 = vpop.f32.mrb[0].mxu0
      %v1649 = vadd.f32 0.0, %v1648
      %1650 = vmatprep.mubr.bf16.mxu0 0
      %1651 = vmatmul.mubr.bf16.gmra.mrb[0].mxu0 %v1315
      %v1652 = vpop.f32.mrb[0].mxu0
      %v1653 = vadd.f32 0.0, %v1652
      %v1654 = vpop.f32.mrb[0].mxu0
      %v1655 = vadd.f32 0.0, %v1654
      %v1656 = vpop.f32.mrb[0].mxu0
      %v1657 = vadd.f32 0.0, %v1656
      %v1658 = vpop.f32.mrb[0].mxu0
      %v1659 = vadd.f32 0.0, %v1658
      %1660 = vmatprep.mubr.bf16.mxu0 0
      %1661 = vmatmul.mubr.bf16.gmra.mrb[0].mxu0 %v1316
      %v1662 = vpop.f32.mrb[0].mxu0
      %v1663 = vadd.f32 0.0, %v1662
      %v1664 = vpop.f32.mrb[0].mxu0
      %v1665 = vadd.f32 0.0, %v1664
      %v1666 = vpop.f32.mrb[0].mxu0
      %v1667 = vadd.f32 0.0, %v1666
      %v1668 = vpop.f32.mrb[0].mxu0
      %v1669 = vadd.f32 0.0, %v1668
      %1670 = vmatprep.mubr.bf16.mxu0 0
      %1671 = vmatmul.mubr.bf16.gmra.mrb[0].mxu0 %v1317
      %v1672 = vpop.f32.mrb[0].mxu0
      %v1673 = vadd.f32 0.0, %v1672
      %v1674 = vpop.f32.mrb[0].mxu0
      %v1675 = vadd.f32 0.0, %v1674
      %v1676 = vpop.f32.mrb[0].mxu0
      %v1677 = vadd.f32 0.0, %v1676
      %v1678 = vpop.f32.mrb[0].mxu0
      %v1679 = vadd.f32 0.0, %v1678
      %1680 = vmatprep.mubr.bf16.mxu0 0
      %1681 = vmatmul.mubr.bf16.gmra.mrb[0].mxu0 %v1318
      %v1682 = vpop.f32.mrb[0].mxu0
      %v1683 = vadd.f32 0.0, %v1682
      %v1684 = vpop.f32.mrb[0].mxu0
      %v1685 = vadd.f32 0.0, %v1684
      %v1686 = vpop.f32.mrb[0].mxu0
      %v1687 = vadd.f32 0.0, %v1686
      %v1688 = vpop.f32.mrb[0].mxu0
      %v1689 = vadd.f32 0.0, %v1688
      %1690 = vdwg.mxu0
      %1691 = vmatprep.subr.bf16.mxu0 %v1515
      %1692 = vmatpush1.bf16.msra.mxu0 %v1514
      %1693 = vmatprep.subr.bf16.mxu0 %v1521
      %1694 = vmatpush1.bf16.msra.mxu0 %v1520
      %1695 = vmatprep.subr.bf16.mxu0 %v1527
      %1696 = vmatpush1.bf16.msra.mxu0 %v1526
      %1697 = vmatprep.subr.bf16.mxu0 %v1533
      %1698 = vmatpush1.bf16.msra.mxu0 %v1532
      %1699 = vmatprep.subr.bf16.mxu0 %v1539
      %1700 = vmatpush1.bf16.msra.mxu0 %v1538
      %1701 = vmatprep.subr.bf16.mxu0 %v1545
      %1702 = vmatpush1.bf16.msra.mxu0 %v1544
      %1703 = vmatprep.subr.bf16.mxu0 %v1551
      %1704 = vmatpush1.bf16.msra.mxu0 %v1550
      %1705 = vmatprep.subr.bf16.mxu0 %v1557
      %1706 = vmatpush1.bf16.msra.mxu0 %v1556
      %1707 = vmatprep.subr.bf16.mxu0 0
      %1708 = vmatpush1.bf16.msra.mxu0 0
      %1709 = vmatprep.subr.bf16.mxu0 0
      %1710 = vmatpush1.bf16.msra.mxu0 0
      %1711 = vmatprep.subr.bf16.mxu0 0
      %1712 = vmatpush1.bf16.msra.mxu0 0
      %1713 = vmatprep.subr.bf16.mxu0 0
      %1714 = vmatpush1.bf16.msra.mxu0 0
      %1715 = vmatprep.subr.bf16.mxu0 0
      %1716 = vmatpush1.bf16.msra.mxu0 0
      %1717 = vmatprep.subr.bf16.mxu0 0
      %1718 = vmatpush1.bf16.msra.mxu0 0
      %1719 = vmatprep.subr.bf16.mxu0 0
      %1720 = vmatpush1.bf16.msra.mxu0 0
      %1721 = vmatprep.subr.bf16.mxu0 0
      %1722 = vmatpush1.bf16.msra.mxu0 0
      %1723 = vmatprep.mubr.bf16.mxu0 0
      %1724 = vmatmul.mubr.bf16.gmra.mrb[0].mxu0 %v1314
      %v1725 = vpop.f32.mrb[0].mxu0
      %v1726 = vadd.f32 0.0, %v1725
      %v1727 = vpop.f32.mrb[0].mxu0
      %v1728 = vadd.f32 0.0, %v1727
      %v1729 = vpop.f32.mrb[0].mxu0
      %v1730 = vadd.f32 0.0, %v1729
      %v1731 = vpop.f32.mrb[0].mxu0
      %v1732 = vadd.f32 0.0, %v1731
      %1733 = vmatprep.mubr.bf16.mxu0 0
      %1734 = vmatmul.mubr.bf16.gmra.mrb[0].mxu0 %v1315
      %v1735 = vpop.f32.mrb[0].mxu0
      %v1736 = vadd.f32 0.0, %v1735
      %v1737 = vpop.f32.mrb[0].mxu0
      %v1738 = vadd.f32 0.0, %v1737
      %v1739 = vpop.f32.mrb[0].mxu0
      %v1740 = vadd.f32 0.0, %v1739
      %v1741 = vpop.f32.mrb[0].mxu0
      %v1742 = vadd.f32 0.0, %v1741
      %1743 = vmatprep.mubr.bf16.mxu0 0
      %1744 = vmatmul.mubr.bf16.gmra.mrb[0].mxu0 %v1316
      %v1745 = vpop.f32.mrb[0].mxu0
      %v1746 = vadd.f32 0.0, %v1745
      %v1747 = vpop.f32.mrb[0].mxu0
      %v1748 = vadd.f32 0.0, %v1747
      %v1749 = vpop.f32.mrb[0].mxu0
      %v1750 = vadd.f32 0.0, %v1749
      %v1751 = vpop.f32.mrb[0].mxu0
      %v1752 = vadd.f32 0.0, %v1751
      %1753 = vmatprep.mubr.bf16.mxu0 0
      %1754 = vmatmul.mubr.bf16.gmra.mrb[0].mxu0 %v1317
      %v1755 = vpop.f32.mrb[0].mxu0
      %v1756 = vadd.f32 0.0, %v1755
      %v1757 = vpop.f32.mrb[0].mxu0
      %v1758 = vadd.f32 0.0, %v1757
      %v1759 = vpop.f32.mrb[0].mxu0
      %v1760 = vadd.f32 0.0, %v1759
      %v1761 = vpop.f32.mrb[0].mxu0
      %v1762 = vadd.f32 0.0, %v1761
      %1763 = vmatprep.mubr.bf16.mxu0 0
      %1764 = vmatmul.mubr.bf16.gmra.mrb[0].mxu0 %v1318
      %v1765 = vpop.f32.mrb[0].mxu0
      %v1766 = vadd.f32 0.0, %v1765
      %v1767 = vpop.f32.mrb[0].mxu0
      %v1768 = vadd.f32 0.0, %v1767
      %v1769 = vpop.f32.mrb[0].mxu0
      %v1770 = vadd.f32 0.0, %v1769
      %v1771 = vpop.f32.mrb[0].mxu0
      %v1772 = vadd.f32 0.0, %v1771
      %1773 = vdwg.mxu0
      %1774 = vmatprep.subr.bf16.mxu0 %v1517
      %1775 = vmatpush1.bf16.msra.mxu0 %v1516
      %1776 = vmatprep.subr.bf16.mxu0 %v1523
      %1777 = vmatpush1.bf16.msra.mxu0 %v1522
      %1778 = vmatprep.subr.bf16.mxu0 %v1529
      %1779 = vmatpush1.bf16.msra.mxu0 %v1528
      %1780 = vmatprep.subr.bf16.mxu0 %v1535
      %1781 = vmatpush1.bf16.msra.mxu0 %v1534
      %1782 = vmatprep.subr.bf16.mxu0 %v1541
      %1783 = vmatpush1.bf16.msra.mxu0 %v1540
      %1784 = vmatprep.subr.bf16.mxu0 %v1547
      %1785 = vmatpush1.bf16.msra.mxu0 %v1546
      %1786 = vmatprep.subr.bf16.mxu0 %v1553
      %1787 = vmatpush1.bf16.msra.mxu0 %v1552
      %1788 = vmatprep.subr.bf16.mxu0 %v1559
      %1789 = vmatpush1.bf16.msra.mxu0 %v1558
      %1790 = vmatprep.subr.bf16.mxu0 0
      %1791 = vmatpush1.bf16.msra.mxu0 0
      %1792 = vmatprep.subr.bf16.mxu0 0
      %1793 = vmatpush1.bf16.msra.mxu0 0
      %1794 = vmatprep.subr.bf16.mxu0 0
      %1795 = vmatpush1.bf16.msra.mxu0 0
      %1796 = vmatprep.subr.bf16.mxu0 0
      %1797 = vmatpush1.bf16.msra.mxu0 0
      %1798 = vmatprep.subr.bf16.mxu0 0
      %1799 = vmatpush1.bf16.msra.mxu0 0
      %1800 = vmatprep.subr.bf16.mxu0 0
      %1801 = vmatpush1.bf16.msra.mxu0 0
      %1802 = vmatprep.subr.bf16.mxu0 0
      %1803 = vmatpush1.bf16.msra.mxu0 0
      %1804 = vmatprep.subr.bf16.mxu0 0
      %1805 = vmatpush1.bf16.msra.mxu0 0
      %1806 = vmatprep.mubr.bf16.mxu0 0
      %1807 = vmatmul.mubr.bf16.gmra.mrb[0].mxu0 %v1314
      %v1808 = vpop.f32.mrb[0].mxu0
      %v1809 = vadd.f32 0.0, %v1808
      %v1810 = vpop.f32.mrb[0].mxu0
      %v1811 = vadd.f32 0.0, %v1810
      %v1812 = vpop.f32.mrb[0].mxu0
      %v1813 = vadd.f32 0.0, %v1812
      %v1814 = vpop.f32.mrb[0].mxu0
      %v1815 = vadd.f32 0.0, %v1814
      %1816 = vmatprep.mubr.bf16.mxu0 0
      %1817 = vmatmul.mubr.bf16.gmra.mrb[0].mxu0 %v1315
      %v1818 = vpop.f32.mrb[0].mxu0
      %v1819 = vadd.f32 0.0, %v1818
      %v1820 = vpop.f32.mrb[0].mxu0
      %v1821 = vadd.f32 0.0, %v1820
      %v1822 = vpop.f32.mrb[0].mxu0
      %v1823 = vadd.f32 0.0, %v1822
      %v1824 = vpop.f32.mrb[0].mxu0
      %v1825 = vadd.f32 0.0, %v1824
      %1826 = vmatprep.mubr.bf16.mxu0 0
      %1827 = vmatmul.mubr.bf16.gmra.mrb[0].mxu0 %v1316
      %v1828 = vpop.f32.mrb[0].mxu0
      %v1829 = vadd.f32 0.0, %v1828
      %v1830 = vpop.f32.mrb[0].mxu0
      %v1831 = vadd.f32 0.0, %v1830
      %v1832 = vpop.f32.mrb[0].mxu0
      %v1833 = vadd.f32 0.0, %v1832
      %v1834 = vpop.f32.mrb[0].mxu0
      %v1835 = vadd.f32 0.0, %v1834
      %1836 = vmatprep.mubr.bf16.mxu0 0
      %1837 = vmatmul.mubr.bf16.gmra.mrb[0].mxu0 %v1317
      %v1838 = vpop.f32.mrb[0].mxu0
      %v1839 = vadd.f32 0.0, %v1838
      %v1840 = vpop.f32.mrb[0].mxu0
      %v1841 = vadd.f32 0.0, %v1840
      %v1842 = vpop.f32.mrb[0].mxu0
      %v1843 = vadd.f32 0.0, %v1842
      %v1844 = vpop.f32.mrb[0].mxu0
      %v1845 = vadd.f32 0.0, %v1844
      %1846 = vmatprep.mubr.bf16.mxu0 0
      %1847 = vmatmul.mubr.bf16.gmra.mrb[0].mxu0 %v1318
      %v1848 = vpop.f32.mrb[0].mxu0
      %v1849 = vadd.f32 0.0, %v1848
      %v1850 = vpop.f32.mrb[0].mxu0
      %v1851 = vadd.f32 0.0, %v1850
      %v1852 = vpop.f32.mrb[0].mxu0
      %v1853 = vadd.f32 0.0, %v1852
      %v1854 = vpop.f32.mrb[0].mxu0
      %v1855 = vadd.f32 0.0, %v1854
      %1856 = vdwg.mxu0
      %v1857 = vadd.f32 %v1090, %v1643
      %v1858 = vadd.f32 %v1092, %v1645
      %v1859 = vadd.f32 %v1173, %v1726
      %v1860 = vadd.f32 %v1175, %v1728
      %v1861 = vadd.f32 %v1256, %v1809
      %v1862 = vadd.f32 %v1258, %v1811
      %v1863 = vadd.f32 %v1094, %v1647
      %v1864 = vadd.f32 %v1096, %v1649
      %v1865 = vadd.f32 %v1177, %v1730
      %v1866 = vadd.f32 %v1179, %v1732
      %v1867 = vadd.f32 %v1260, %v1813
      %v1868 = vadd.f32 %v1262, %v1815
      %v1869 = vadd.f32 %v1100, %v1653
      %v1870 = vadd.f32 %v1102, %v1655
      %v1871 = vadd.f32 %v1183, %v1736
      %v1872 = vadd.f32 %v1185, %v1738
      %v1873 = vadd.f32 %v1266, %v1819
      %v1874 = vadd.f32 %v1268, %v1821
      %v1875 = vadd.f32 %v1104, %v1657
      %v1876 = vadd.f32 %v1106, %v1659
      %v1877 = vadd.f32 %v1187, %v1740
      %v1878 = vadd.f32 %v1189, %v1742
      %v1879 = vadd.f32 %v1270, %v1823
      %v1880 = vadd.f32 %v1272, %v1825
      %v1881 = vadd.f32 %v1110, %v1663
      %v1882 = vadd.f32 %v1112, %v1665
      %v1883 = vadd.f32 %v1193, %v1746
      %v1884 = vadd.f32 %v1195, %v1748
      %v1885 = vadd.f32 %v1276, %v1829
      %v1886 = vadd.f32 %v1278, %v1831
      %v1887 = vadd.f32 %v1114, %v1667
      %v1888 = vadd.f32 %v1116, %v1669
      %v1889 = vadd.f32 %v1197, %v1750
      %v1890 = vadd.f32 %v1199, %v1752
      %v1891 = vadd.f32 %v1280, %v1833
      %v1892 = vadd.f32 %v1282, %v1835
      %v1893 = vadd.f32 %v1120, %v1673
      %v1894 = vadd.f32 %v1122, %v1675
      %v1895 = vadd.f32 %v1203, %v1756
      %v1896 = vadd.f32 %v1205, %v1758
      %v1897 = vadd.f32 %v1286, %v1839
      %v1898 = vadd.f32 %v1288, %v1841
      %v1899 = vadd.f32 %v1124, %v1677
      %v1900 = vadd.f32 %v1126, %v1679
      %v1901 = vadd.f32 %v1207, %v1760
      %v1902 = vadd.f32 %v1209, %v1762
      %v1903 = vadd.f32 %v1290, %v1843
      %v1904 = vadd.f32 %v1292, %v1845
      %v1905 = vadd.f32 %v1130, %v1683
      %v1906 = vadd.f32 %v1132, %v1685
      %v1907 = vadd.f32 %v1213, %v1766
      %v1908 = vadd.f32 %v1215, %v1768
      %v1909 = vadd.f32 %v1296, %v1849
      %v1910 = vadd.f32 %v1298, %v1851
      %v1911 = vadd.f32 %v1134, %v1687
      %v1912 = vadd.f32 %v1136, %v1689
      %v1913 = vadd.f32 %v1217, %v1770
      %v1914 = vadd.f32 %v1219, %v1772
      %v1915 = vadd.f32 %v1300, %v1853
      %v1916 = vadd.f32 %v1302, %v1855
      %v1917 = vld [vmem:[%s192 + $0x3] sm:$0xff]
      %v1918 = vld [vmem:[%s192 + $0xb] sm:$0xff]
      %v1919 = vld [vmem:[%s192 + $0x13] sm:$0xff]
      %v1920 = vld [vmem:[%s192 + $0x1b] sm:$0xff]
      %v1921 = vld [vmem:[%s192 + $0x23] sm:$0xff]
      %v1922 = vld [vmem:[%s192 + $0x2b] sm:$0xff]
      %v1923 = vld [vmem:[%s192 + $0x33] sm:$0xff]
      %v1924 = vld [vmem:[%s192 + $0x3b] sm:$0xff]
      %v1925 = vld [vmem:[%s192 + $0x43] sm:$0xff]
      %v1926 = vld [vmem:[%s192 + $0x4b] sm:$0xff]
      %v1927 = vpack.c.bf16 %v1918, %v1917
      %v1928 = vpack.c.bf16 %v1920, %v1919
      %v1929 = vpack.c.bf16 %v1922, %v1921
      %v1930 = vpack.c.bf16 %v1924, %v1923
      %v1931 = vpack.c.bf16 %v1926, %v1925
      %s1932 = scalar_lea.vmem %s1, 1152
      %v1933 = vld [vmem:[%s1932] sm:$0xff]
      %v1934 = vld [vmem:[%s1932 + $0x8] sm:$0xff]
      %v1935 = vld [vmem:[%s1932 + $0x10] sm:$0xff]
      %v1936 = vld [vmem:[%s1932 + $0x18] sm:$0xff]
      %v1937 = vld [vmem:[%s1932 + $0x20] sm:$0xff]
      %v1938 = vld [vmem:[%s1932 + $0x28] sm:$0xff]
      %v1939 = vld [vmem:[%s1932 + $0x30] sm:$0xff]
      %v1940 = vld [vmem:[%s1932 + $0x38] sm:$0xff]
      %v1941 = vld [vmem:[%s1932 + $0x40] sm:$0xff]
      %v1942 = vld [vmem:[%s1932 + $0x48] sm:$0xff]
      %v1943 = vld [vmem:[%s1932 + $0x50] sm:$0xff]
      %v1944 = vld [vmem:[%s1932 + $0x58] sm:$0xff]
      %v1945 = vld [vmem:[%s1932 + $0x60] sm:$0xff]
      %v1946 = vld [vmem:[%s1932 + $0x68] sm:$0xff]
      %v1947 = vld [vmem:[%s1932 + $0x70] sm:$0xff]
      %v1948 = vld [vmem:[%s1932 + $0x78] sm:$0xff]
      %v1949 = vld [vmem:[%s1932 + $0x80] sm:$0xff]
      %v1950 = vld [vmem:[%s1932 + $0x88] sm:$0xff]
      %v1951 = vld [vmem:[%s1932 + $0x90] sm:$0xff]
      %v1952 = vld [vmem:[%s1932 + $0x98] sm:$0xff]
      %v1953 = vld [vmem:[%s1932 + $0xa0] sm:$0xff]
      %v1954 = vld [vmem:[%s1932 + $0xa8] sm:$0xff]
      %v1955 = vld [vmem:[%s1932 + $0xb0] sm:$0xff]
      %v1956 = vld [vmem:[%s1932 + $0xb8] sm:$0xff]
      %v1957 = vld [vmem:[%s1932 + $0xc0] sm:$0xff]
      %v1958 = vld [vmem:[%s1932 + $0xc8] sm:$0xff]
      %v1959 = vld [vmem:[%s1932 + $0xd0] sm:$0xff]
      %v1960 = vld [vmem:[%s1932 + $0xd8] sm:$0xff]
      %v1961 = vld [vmem:[%s1932 + $0xe0] sm:$0xff]
      %v1962 = vld [vmem:[%s1932 + $0xe8] sm:$0xff]
      %v1963 = vld [vmem:[%s1932 + $0xf0] sm:$0xff]
      %v1964 = vld [vmem:[%s1932 + $0xf8] sm:$0xff]
      %v1965 = vld [vmem:[%s1932 + $0x100] sm:$0xff]
      %v1966 = vld [vmem:[%s1932 + $0x108] sm:$0xff]
      %v1967 = vld [vmem:[%s1932 + $0x110] sm:$0xff]
      %v1968 = vld [vmem:[%s1932 + $0x118] sm:$0xff]
      %v1969 = vld [vmem:[%s1932 + $0x120] sm:$0xff]
      %v1970 = vld [vmem:[%s1932 + $0x128] sm:$0xff]
      %v1971 = vld [vmem:[%s1932 + $0x130] sm:$0xff]
      %v1972 = vld [vmem:[%s1932 + $0x138] sm:$0xff]
      %v1973 = vld [vmem:[%s1932 + $0x140] sm:$0xff]
      %v1974 = vld [vmem:[%s1932 + $0x148] sm:$0xff]
      %v1975 = vld [vmem:[%s1932 + $0x150] sm:$0xff]
      %v1976 = vld [vmem:[%s1932 + $0x158] sm:$0xff]
      %v1977 = vld [vmem:[%s1932 + $0x160] sm:$0xff]
      %v1978 = vld [vmem:[%s1932 + $0x168] sm:$0xff]
      %v1979 = vld [vmem:[%s1932 + $0x170] sm:$0xff]
      %v1980 = vld [vmem:[%s1932 + $0x178] sm:$0xff]
      %v2029 = vunpack.c.l.b16 %v1933
      %v2030 = vunpack.c.h.b16 %v1933
      %v2031 = vunpack.c.l.b16 %v1934
      %v2032 = vunpack.c.h.b16 %v1934
      %v2033 = vunpack.c.l.b16 %v1935
      %v2034 = vunpack.c.h.b16 %v1935
      %v2035 = vunpack.c.l.b16 %v1936
      %v2036 = vunpack.c.h.b16 %v1936
      %v2037 = vunpack.c.l.b16 %v1937
      %v2038 = vunpack.c.h.b16 %v1937
      %v2039 = vunpack.c.l.b16 %v1938
      %v2040 = vunpack.c.h.b16 %v1938
      %v2041 = vunpack.c.l.b16 %v1939
      %v2042 = vunpack.c.h.b16 %v1939
      %v2043 = vunpack.c.l.b16 %v1940
      %v2044 = vunpack.c.h.b16 %v1940
      %v2045 = vunpack.c.l.b16 %v1941
      %v2046 = vunpack.c.h.b16 %v1941
      %v2047 = vunpack.c.l.b16 %v1942
      %v2048 = vunpack.c.h.b16 %v1942
      %v2049 = vunpack.c.l.b16 %v1943
      %v2050 = vunpack.c.h.b16 %v1943
      %v2051 = vunpack.c.l.b16 %v1944
      %v2052 = vunpack.c.h.b16 %v1944
      %v2053 = vunpack.c.l.b16 %v1945
      %v2054 = vunpack.c.h.b16 %v1945
      %v2055 = vunpack.c.l.b16 %v1946
      %v2056 = vunpack.c.h.b16 %v1946
      %v2057 = vunpack.c.l.b16 %v1947
      %v2058 = vunpack.c.h.b16 %v1947
      %v2059 = vunpack.c.l.b16 %v1948
      %v2060 = vunpack.c.h.b16 %v1948
      %v2061 = vunpack.c.l.b16 %v1949
      %v2062 = vunpack.c.h.b16 %v1949
      %v2063 = vunpack.c.l.b16 %v1950
      %v2064 = vunpack.c.h.b16 %v1950
      %v2065 = vunpack.c.l.b16 %v1951
      %v2066 = vunpack.c.h.b16 %v1951
      %v2067 = vunpack.c.l.b16 %v1952
      %v2068 = vunpack.c.h.b16 %v1952
      %v2069 = vunpack.c.l.b16 %v1953
      %v2070 = vunpack.c.h.b16 %v1953
      %v2071 = vunpack.c.l.b16 %v1954
      %v2072 = vunpack.c.h.b16 %v1954
      %v2073 = vunpack.c.l.b16 %v1955
      %v2074 = vunpack.c.h.b16 %v1955
      %v2075 = vunpack.c.l.b16 %v1956
      %v2076 = vunpack.c.h.b16 %v1956
      %v2077 = vunpack.c.l.b16 %v1957
      %v2078 = vunpack.c.h.b16 %v1957
      %v2079 = vunpack.c.l.b16 %v1958
      %v2080 = vunpack.c.h.b16 %v1958
      %v2081 = vunpack.c.l.b16 %v1959
      %v2082 = vunpack.c.h.b16 %v1959
      %v2083 = vunpack.c.l.b16 %v1960
      %v2084 = vunpack.c.h.b16 %v1960
      %v2085 = vunpack.c.l.b16 %v1961
      %v2086 = vunpack.c.h.b16 %v1961
      %v2087 = vunpack.c.l.b16 %v1962
      %v2088 = vunpack.c.h.b16 %v1962
      %v2089 = vunpack.c.l.b16 %v1963
      %v2090 = vunpack.c.h.b16 %v1963
      %v2091 = vunpack.c.l.b16 %v1964
      %v2092 = vunpack.c.h.b16 %v1964
      %v2093 = vunpack.c.l.b16 %v1965
      %v2094 = vunpack.c.h.b16 %v1965
      %v2095 = vunpack.c.l.b16 %v1966
      %v2096 = vunpack.c.h.b16 %v1966
      %v2097 = vunpack.c.l.b16 %v1967
      %v2098 = vunpack.c.h.b16 %v1967
      %v2099 = vunpack.c.l.b16 %v1968
      %v2100 = vunpack.c.h.b16 %v1968
      %v2101 = vunpack.c.l.b16 %v1969
      %v2102 = vunpack.c.h.b16 %v1969
      %v2103 = vunpack.c.l.b16 %v1970
      %v2104 = vunpack.c.h.b16 %v1970
      %v2105 = vunpack.c.l.b16 %v1971
      %v2106 = vunpack.c.h.b16 %v1971
      %v2107 = vunpack.c.l.b16 %v1972
      %v2108 = vunpack.c.h.b16 %v1972
      %v2109 = vunpack.c.l.b16 %v1973
      %v2110 = vunpack.c.h.b16 %v1973
      %v2111 = vunpack.c.l.b16 %v1974
      %v2112 = vunpack.c.h.b16 %v1974
      %v2113 = vunpack.c.l.b16 %v1975
      %v2114 = vunpack.c.h.b16 %v1975
      %v2115 = vunpack.c.l.b16 %v1976
      %v2116 = vunpack.c.h.b16 %v1976
      %v2117 = vunpack.c.l.b16 %v1977
      %v2118 = vunpack.c.h.b16 %v1977
      %v2119 = vunpack.c.l.b16 %v1978
      %v2120 = vunpack.c.h.b16 %v1978
      %v2121 = vunpack.c.l.b16 %v1979
      %v2122 = vunpack.c.h.b16 %v1979
      %v2123 = vunpack.c.l.b16 %v1980
      %v2124 = vunpack.c.h.b16 %v1980
      %v2125 = vpack.c.b16 %v2035, %v2029
      %v2126 = vpack.c.b16 %v2036, %v2030
      %v2127 = vpack.c.b16 %v2037, %v2031
      %v2128 = vpack.c.b16 %v2038, %v2032
      %v2129 = vpack.c.b16 %v2039, %v2033
      %v2130 = vpack.c.b16 %v2040, %v2034
      %v2131 = vpack.c.b16 %v2047, %v2041
      %v2132 = vpack.c.b16 %v2048, %v2042
      %v2133 = vpack.c.b16 %v2049, %v2043
      %v2134 = vpack.c.b16 %v2050, %v2044
      %v2135 = vpack.c.b16 %v2051, %v2045
      %v2136 = vpack.c.b16 %v2052, %v2046
      %v2137 = vpack.c.b16 %v2059, %v2053
      %v2138 = vpack.c.b16 %v2060, %v2054
      %v2139 = vpack.c.b16 %v2061, %v2055
      %v2140 = vpack.c.b16 %v2062, %v2056
      %v2141 = vpack.c.b16 %v2063, %v2057
      %v2142 = vpack.c.b16 %v2064, %v2058
      %v2143 = vpack.c.b16 %v2071, %v2065
      %v2144 = vpack.c.b16 %v2072, %v2066
      %v2145 = vpack.c.b16 %v2073, %v2067
      %v2146 = vpack.c.b16 %v2074, %v2068
      %v2147 = vpack.c.b16 %v2075, %v2069
      %v2148 = vpack.c.b16 %v2076, %v2070
      %v2149 = vpack.c.b16 %v2083, %v2077
      %v2150 = vpack.c.b16 %v2084, %v2078
      %v2151 = vpack.c.b16 %v2085, %v2079
      %v2152 = vpack.c.b16 %v2086, %v2080
      %v2153 = vpack.c.b16 %v2087, %v2081
      %v2154 = vpack.c.b16 %v2088, %v2082
      %v2155 = vpack.c.b16 %v2095, %v2089
      %v2156 = vpack.c.b16 %v2096, %v2090
      %v2157 = vpack.c.b16 %v2097, %v2091
      %v2158 = vpack.c.b16 %v2098, %v2092
      %v2159 = vpack.c.b16 %v2099, %v2093
      %v2160 = vpack.c.b16 %v2100, %v2094
      %v2161 = vpack.c.b16 %v2107, %v2101
      %v2162 = vpack.c.b16 %v2108, %v2102
      %v2163 = vpack.c.b16 %v2109, %v2103
      %v2164 = vpack.c.b16 %v2110, %v2104
      %v2165 = vpack.c.b16 %v2111, %v2105
      %v2166 = vpack.c.b16 %v2112, %v2106
      %v2167 = vpack.c.b16 %v2119, %v2113
      %v2168 = vpack.c.b16 %v2120, %v2114
      %v2169 = vpack.c.b16 %v2121, %v2115
      %v2170 = vpack.c.b16 %v2122, %v2116
      %v2171 = vpack.c.b16 %v2123, %v2117
      %v2172 = vpack.c.b16 %v2124, %v2118
      %2221 = vmatprep.subr.bf16.mxu0 %v2126
      %2222 = vmatpush1.bf16.msra.mxu0 %v2125
      %2223 = vmatprep.subr.bf16.mxu0 %v2132
      %2224 = vmatpush1.bf16.msra.mxu0 %v2131
      %2225 = vmatprep.subr.bf16.mxu0 %v2138
      %2226 = vmatpush1.bf16.msra.mxu0 %v2137
      %2227 = vmatprep.subr.bf16.mxu0 %v2144
      %2228 = vmatpush1.bf16.msra.mxu0 %v2143
      %2229 = vmatprep.subr.bf16.mxu0 %v2150
      %2230 = vmatpush1.bf16.msra.mxu0 %v2149
      %2231 = vmatprep.subr.bf16.mxu0 %v2156
      %2232 = vmatpush1.bf16.msra.mxu0 %v2155
      %2233 = vmatprep.subr.bf16.mxu0 %v2162
      %2234 = vmatpush1.bf16.msra.mxu0 %v2161
      %2235 = vmatprep.subr.bf16.mxu0 %v2168
      %2236 = vmatpush1.bf16.msra.mxu0 %v2167
      %2237 = vmatprep.subr.bf16.mxu0 0
      %2238 = vmatpush1.bf16.msra.mxu0 0
      %2239 = vmatprep.subr.bf16.mxu0 0
      %2240 = vmatpush1.bf16.msra.mxu0 0
      %2241 = vmatprep.subr.bf16.mxu0 0
      %2242 = vmatpush1.bf16.msra.mxu0 0
      %2243 = vmatprep.subr.bf16.mxu0 0
      %2244 = vmatpush1.bf16.msra.mxu0 0
      %2245 = vmatprep.subr.bf16.mxu0 0
      %2246 = vmatpush1.bf16.msra.mxu0 0
      %2247 = vmatprep.subr.bf16.mxu0 0
      %2248 = vmatpush1.bf16.msra.mxu0 0
      %2249 = vmatprep.subr.bf16.mxu0 0
      %2250 = vmatpush1.bf16.msra.mxu0 0
      %2251 = vmatprep.subr.bf16.mxu0 0
      %2252 = vmatpush1.bf16.msra.mxu0 0
      %2253 = vmatprep.mubr.bf16.mxu0 0
      %2254 = vmatmul.mubr.bf16.gmra.mrb[0].mxu0 %v1927
      %v2255 = vpop.f32.mrb[0].mxu0
      %v2256 = vadd.f32 0.0, %v2255
      %v2257 = vpop.f32.mrb[0].mxu0
      %v2258 = vadd.f32 0.0, %v2257
      %v2259 = vpop.f32.mrb[0].mxu0
      %v2260 = vadd.f32 0.0, %v2259
      %v2261 = vpop.f32.mrb[0].mxu0
      %v2262 = vadd.f32 0.0, %v2261
      %2263 = vmatprep.mubr.bf16.mxu0 0
      %2264 = vmatmul.mubr.bf16.gmra.mrb[0].mxu0 %v1928
      %v2265 = vpop.f32.mrb[0].mxu0
      %v2266 = vadd.f32 0.0, %v2265
      %v2267 = vpop.f32.mrb[0].mxu0
      %v2268 = vadd.f32 0.0, %v2267
      %v2269 = vpop.f32.mrb[0].mxu0
      %v2270 = vadd.f32 0.0, %v2269
      %v2271 = vpop.f32.mrb[0].mxu0
      %v2272 = vadd.f32 0.0, %v2271
      %2273 = vmatprep.mubr.bf16.mxu0 0
      %2274 = vmatmul.mubr.bf16.gmra.mrb[0].mxu0 %v1929
      %v2275 = vpop.f32.mrb[0].mxu0
      %v2276 = vadd.f32 0.0, %v2275
      %v2277 = vpop.f32.mrb[0].mxu0
      %v2278 = vadd.f32 0.0, %v2277
      %v2279 = vpop.f32.mrb[0].mxu0
      %v2280 = vadd.f32 0.0, %v2279
      %v2281 = vpop.f32.mrb[0].mxu0
      %v2282 = vadd.f32 0.0, %v2281
      %2283 = vmatprep.mubr.bf16.mxu0 0
      %2284 = vmatmul.mubr.bf16.gmra.mrb[0].mxu0 %v1930
      %v2285 = vpop.f32.mrb[0].mxu0
      %v2286 = vadd.f32 0.0, %v2285
      %v2287 = vpop.f32.mrb[0].mxu0
      %v2288 = vadd.f32 0.0, %v2287
      %v2289 = vpop.f32.mrb[0].mxu0
      %v2290 = vadd.f32 0.0, %v2289
      %v2291 = vpop.f32.mrb[0].mxu0
      %v2292 = vadd.f32 0.0, %v2291
      %2293 = vmatprep.mubr.bf16.mxu0 0
      %2294 = vmatmul.mubr.bf16.gmra.mrb[0].mxu0 %v1931
      %v2295 = vpop.f32.mrb[0].mxu0
      %v2296 = vadd.f32 0.0, %v2295
      %v2297 = vpop.f32.mrb[0].mxu0
      %v2298 = vadd.f32 0.0, %v2297
      %v2299 = vpop.f32.mrb[0].mxu0
      %v2300 = vadd.f32 0.0, %v2299
      %v2301 = vpop.f32.mrb[0].mxu0
      %v2302 = vadd.f32 0.0, %v2301
      %2303 = vdwg.mxu0
      %2304 = vmatprep.subr.bf16.mxu0 %v2128
      %2305 = vmatpush1.bf16.msra.mxu0 %v2127
      %2306 = vmatprep.subr.bf16.mxu0 %v2134
      %2307 = vmatpush1.bf16.msra.mxu0 %v2133
      %2308 = vmatprep.subr.bf16.mxu0 %v2140
      %2309 = vmatpush1.bf16.msra.mxu0 %v2139
      %2310 = vmatprep.subr.bf16.mxu0 %v2146
      %2311 = vmatpush1.bf16.msra.mxu0 %v2145
      %2312 = vmatprep.subr.bf16.mxu0 %v2152
      %2313 = vmatpush1.bf16.msra.mxu0 %v2151
      %2314 = vmatprep.subr.bf16.mxu0 %v2158
      %2315 = vmatpush1.bf16.msra.mxu0 %v2157
      %2316 = vmatprep.subr.bf16.mxu0 %v2164
      %2317 = vmatpush1.bf16.msra.mxu0 %v2163
      %2318 = vmatprep.subr.bf16.mxu0 %v2170
      %2319 = vmatpush1.bf16.msra.mxu0 %v2169
      %2320 = vmatprep.subr.bf16.mxu0 0
      %2321 = vmatpush1.bf16.msra.mxu0 0
      %2322 = vmatprep.subr.bf16.mxu0 0
      %2323 = vmatpush1.bf16.msra.mxu0 0
      %2324 = vmatprep.subr.bf16.mxu0 0
      %2325 = vmatpush1.bf16.msra.mxu0 0
      %2326 = vmatprep.subr.bf16.mxu0 0
      %2327 = vmatpush1.bf16.msra.mxu0 0
      %2328 = vmatprep.subr.bf16.mxu0 0
      %2329 = vmatpush1.bf16.msra.mxu0 0
      %2330 = vmatprep.subr.bf16.mxu0 0
      %2331 = vmatpush1.bf16.msra.mxu0 0
      %2332 = vmatprep.subr.bf16.mxu0 0
      %2333 = vmatpush1.bf16.msra.mxu0 0
      %2334 = vmatprep.subr.bf16.mxu0 0
      %2335 = vmatpush1.bf16.msra.mxu0 0
      %2336 = vmatprep.mubr.bf16.mxu0 0
      %2337 = vmatmul.mubr.bf16.gmra.mrb[0].mxu0 %v1927
      %v2338 = vpop.f32.mrb[0].mxu0
      %v2339 = vadd.f32 0.0, %v2338
      %v2340 = vpop.f32.mrb[0].mxu0
      %v2341 = vadd.f32 0.0, %v2340
      %v2342 = vpop.f32.mrb[0].mxu0
      %v2343 = vadd.f32 0.0, %v2342
      %v2344 = vpop.f32.mrb[0].mxu0
      %v2345 = vadd.f32 0.0, %v2344
      %2346 = vmatprep.mubr.bf16.mxu0 0
      %2347 = vmatmul.mubr.bf16.gmra.mrb[0].mxu0 %v1928
      %v2348 = vpop.f32.mrb[0].mxu0
      %v2349 = vadd.f32 0.0, %v2348
      %v2350 = vpop.f32.mrb[0].mxu0
      %v2351 = vadd.f32 0.0, %v2350
      %v2352 = vpop.f32.mrb[0].mxu0
      %v2353 = vadd.f32 0.0, %v2352
      %v2354 = vpop.f32.mrb[0].mxu0
      %v2355 = vadd.f32 0.0, %v2354
      %2356 = vmatprep.mubr.bf16.mxu0 0
      %2357 = vmatmul.mubr.bf16.gmra.mrb[0].mxu0 %v1929
      %v2358 = vpop.f32.mrb[0].mxu0
      %v2359 = vadd.f32 0.0, %v2358
      %v2360 = vpop.f32.mrb[0].mxu0
      %v2361 = vadd.f32 0.0, %v2360
      %v2362 = vpop.f32.mrb[0].mxu0
      %v2363 = vadd.f32 0.0, %v2362
      %v2364 = vpop.f32.mrb[0].mxu0
      %v2365 = vadd.f32 0.0, %v2364
      %2366 = vmatprep.mubr.bf16.mxu0 0
      %2367 = vmatmul.mubr.bf16.gmra.mrb[0].mxu0 %v1930
      %v2368 = vpop.f32.mrb[0].mxu0
      %v2369 = vadd.f32 0.0, %v2368
      %v2370 = vpop.f32.mrb[0].mxu0
      %v2371 = vadd.f32 0.0, %v2370
      %v2372 = vpop.f32.mrb[0].mxu0
      %v2373 = vadd.f32 0.0, %v2372
      %v2374 = vpop.f32.mrb[0].mxu0
      %v2375 = vadd.f32 0.0, %v2374
      %2376 = vmatprep.mubr.bf16.mxu0 0
      %2377 = vmatmul.mubr.bf16.gmra.mrb[0].mxu0 %v1931
      %v2378 = vpop.f32.mrb[0].mxu0
      %v2379 = vadd.f32 0.0, %v2378
      %v2380 = vpop.f32.mrb[0].mxu0
      %v2381 = vadd.f32 0.0, %v2380
      %v2382 = vpop.f32.mrb[0].mxu0
      %v2383 = vadd.f32 0.0, %v2382
      %v2384 = vpop.f32.mrb[0].mxu0
      %v2385 = vadd.f32 0.0, %v2384
      %2386 = vdwg.mxu0
      %2387 = vmatprep.subr.bf16.mxu0 %v2130
      %2388 = vmatpush1.bf16.msra.mxu0 %v2129
      %2389 = vmatprep.subr.bf16.mxu0 %v2136
      %2390 = vmatpush1.bf16.msra.mxu0 %v2135
      %2391 = vmatprep.subr.bf16.mxu0 %v2142
      %2392 = vmatpush1.bf16.msra.mxu0 %v2141
      %2393 = vmatprep.subr.bf16.mxu0 %v2148
      %2394 = vmatpush1.bf16.msra.mxu0 %v2147
      %2395 = vmatprep.subr.bf16.mxu0 %v2154
      %2396 = vmatpush1.bf16.msra.mxu0 %v2153
      %2397 = vmatprep.subr.bf16.mxu0 %v2160
      %2398 = vmatpush1.bf16.msra.mxu0 %v2159
      %2399 = vmatprep.subr.bf16.mxu0 %v2166
      %2400 = vmatpush1.bf16.msra.mxu0 %v2165
      %2401 = vmatprep.subr.bf16.mxu0 %v2172
      %2402 = vmatpush1.bf16.msra.mxu0 %v2171
      %2403 = vmatprep.subr.bf16.mxu0 0
      %2404 = vmatpush1.bf16.msra.mxu0 0
      %2405 = vmatprep.subr.bf16.mxu0 0
      %2406 = vmatpush1.bf16.msra.mxu0 0
      %2407 = vmatprep.subr.bf16.mxu0 0
      %2408 = vmatpush1.bf16.msra.mxu0 0
      %2409 = vmatprep.subr.bf16.mxu0 0
      %2410 = vmatpush1.bf16.msra.mxu0 0
      %2411 = vmatprep.subr.bf16.mxu0 0
      %2412 = vmatpush1.bf16.msra.mxu0 0
      %2413 = vmatprep.subr.bf16.mxu0 0
      %2414 = vmatpush1.bf16.msra.mxu0 0
      %2415 = vmatprep.subr.bf16.mxu0 0
      %2416 = vmatpush1.bf16.msra.mxu0 0
      %2417 = vmatprep.subr.bf16.mxu0 0
      %2418 = vmatpush1.bf16.msra.mxu0 0
      %2419 = vmatprep.mubr.bf16.mxu0 0
      %2420 = vmatmul.mubr.bf16.gmra.mrb[0].mxu0 %v1927
      %v2421 = vpop.f32.mrb[0].mxu0
      %v2422 = vadd.f32 0.0, %v2421
      %v2423 = vpop.f32.mrb[0].mxu0
      %v2424 = vadd.f32 0.0, %v2423
      %v2425 = vpop.f32.mrb[0].mxu0
      %v2426 = vadd.f32 0.0, %v2425
      %v2427 = vpop.f32.mrb[0].mxu0
      %v2428 = vadd.f32 0.0, %v2427
      %2429 = vmatprep.mubr.bf16.mxu0 0
      %2430 = vmatmul.mubr.bf16.gmra.mrb[0].mxu0 %v1928
      %v2431 = vpop.f32.mrb[0].mxu0
      %v2432 = vadd.f32 0.0, %v2431
      %v2433 = vpop.f32.mrb[0].mxu0
      %v2434 = vadd.f32 0.0, %v2433
      %v2435 = vpop.f32.mrb[0].mxu0
      %v2436 = vadd.f32 0.0, %v2435
      %v2437 = vpop.f32.mrb[0].mxu0
      %v2438 = vadd.f32 0.0, %v2437
      %2439 = vmatprep.mubr.bf16.mxu0 0
      %2440 = vmatmul.mubr.bf16.gmra.mrb[0].mxu0 %v1929
      %v2441 = vpop.f32.mrb[0].mxu0
      %v2442 = vadd.f32 0.0, %v2441
      %v2443 = vpop.f32.mrb[0].mxu0
      %v2444 = vadd.f32 0.0, %v2443
      %v2445 = vpop.f32.mrb[0].mxu0
      %v2446 = vadd.f32 0.0, %v2445
      %v2447 = vpop.f32.mrb[0].mxu0
      %v2448 = vadd.f32 0.0, %v2447
      %2449 = vmatprep.mubr.bf16.mxu0 0
      %2450 = vmatmul.mubr.bf16.gmra.mrb[0].mxu0 %v1930
      %v2451 = vpop.f32.mrb[0].mxu0
      %v2452 = vadd.f32 0.0, %v2451
      %v2453 = vpop.f32.mrb[0].mxu0
      %v2454 = vadd.f32 0.0, %v2453
      %v2455 = vpop.f32.mrb[0].mxu0
      %v2456 = vadd.f32 0.0, %v2455
      %v2457 = vpop.f32.mrb[0].mxu0
      %v2458 = vadd.f32 0.0, %v2457
      %2459 = vmatprep.mubr.bf16.mxu0 0
      %2460 = vmatmul.mubr.bf16.gmra.mrb[0].mxu0 %v1931
      %v2461 = vpop.f32.mrb[0].mxu0
      %v2462 = vadd.f32 0.0, %v2461
      %v2463 = vpop.f32.mrb[0].mxu0
      %v2464 = vadd.f32 0.0, %v2463
      %v2465 = vpop.f32.mrb[0].mxu0
      %v2466 = vadd.f32 0.0, %v2465
      %v2467 = vpop.f32.mrb[0].mxu0
      %v2468 = vadd.f32 0.0, %v2467
      %2469 = vdwg.mxu0
      %v2470 = vadd.f32 %v1857, %v2256
      %v2471 = vadd.f32 %v1858, %v2258
      %v2472 = vadd.f32 %v1859, %v2339
      %v2473 = vadd.f32 %v1860, %v2341
      %v2474 = vadd.f32 %v1861, %v2422
      %v2475 = vadd.f32 %v1862, %v2424
      %v2476 = vadd.f32 %v1863, %v2260
      %v2477 = vadd.f32 %v1864, %v2262
      %v2478 = vadd.f32 %v1865, %v2343
      %v2479 = vadd.f32 %v1866, %v2345
      %v2480 = vadd.f32 %v1867, %v2426
      %v2481 = vadd.f32 %v1868, %v2428
      %v2482 = vadd.f32 %v1869, %v2266
      %v2483 = vadd.f32 %v1870, %v2268
      %v2484 = vadd.f32 %v1871, %v2349
      %v2485 = vadd.f32 %v1872, %v2351
      %v2486 = vadd.f32 %v1873, %v2432
      %v2487 = vadd.f32 %v1874, %v2434
      %v2488 = vadd.f32 %v1875, %v2270
      %v2489 = vadd.f32 %v1876, %v2272
      %v2490 = vadd.f32 %v1877, %v2353
      %v2491 = vadd.f32 %v1878, %v2355
      %v2492 = vadd.f32 %v1879, %v2436
      %v2493 = vadd.f32 %v1880, %v2438
      %v2494 = vadd.f32 %v1881, %v2276
      %v2495 = vadd.f32 %v1882, %v2278
      %v2496 = vadd.f32 %v1883, %v2359
      %v2497 = vadd.f32 %v1884, %v2361
      %v2498 = vadd.f32 %v1885, %v2442
      %v2499 = vadd.f32 %v1886, %v2444
      %v2500 = vadd.f32 %v1887, %v2280
      %v2501 = vadd.f32 %v1888, %v2282
      %v2502 = vadd.f32 %v1889, %v2363
      %v2503 = vadd.f32 %v1890, %v2365
      %v2504 = vadd.f32 %v1891, %v2446
      %v2505 = vadd.f32 %v1892, %v2448
      %v2506 = vadd.f32 %v1893, %v2286
      %v2507 = vadd.f32 %v1894, %v2288
      %v2508 = vadd.f32 %v1895, %v2369
      %v2509 = vadd.f32 %v1896, %v2371
      %v2510 = vadd.f32 %v1897, %v2452
      %v2511 = vadd.f32 %v1898, %v2454
      %v2512 = vadd.f32 %v1899, %v2290
      %v2513 = vadd.f32 %v1900, %v2292
      %v2514 = vadd.f32 %v1901, %v2373
      %v2515 = vadd.f32 %v1902, %v2375
      %v2516 = vadd.f32 %v1903, %v2456
      %v2517 = vadd.f32 %v1904, %v2458
      %v2518 = vadd.f32 %v1905, %v2296
      %v2519 = vadd.f32 %v1906, %v2298
      %v2520 = vadd.f32 %v1907, %v2379
      %v2521 = vadd.f32 %v1908, %v2381
      %v2522 = vadd.f32 %v1909, %v2462
      %v2523 = vadd.f32 %v1910, %v2464
      %v2524 = vadd.f32 %v1911, %v2300
      %v2525 = vadd.f32 %v1912, %v2302
      %v2526 = vadd.f32 %v1913, %v2383
      %v2527 = vadd.f32 %v1914, %v2385
      %v2528 = vadd.f32 %v1915, %v2466
      %v2529 = vadd.f32 %v1916, %v2468
      %v2530 = vld [vmem:[%s192 + $0x4] sm:$0xff]
      %v2531 = vld [vmem:[%s192 + $0xc] sm:$0xff]
      %v2532 = vld [vmem:[%s192 + $0x14] sm:$0xff]
      %v2533 = vld [vmem:[%s192 + $0x1c] sm:$0xff]
      %v2534 = vld [vmem:[%s192 + $0x24] sm:$0xff]
      %v2535 = vld [vmem:[%s192 + $0x2c] sm:$0xff]
      %v2536 = vld [vmem:[%s192 + $0x34] sm:$0xff]
      %v2537 = vld [vmem:[%s192 + $0x3c] sm:$0xff]
      %v2538 = vld [vmem:[%s192 + $0x44] sm:$0xff]
      %v2539 = vld [vmem:[%s192 + $0x4c] sm:$0xff]
      %v2540 = vpack.c.bf16 %v2531, %v2530
      %v2541 = vpack.c.bf16 %v2533, %v2532
      %v2542 = vpack.c.bf16 %v2535, %v2534
      %v2543 = vpack.c.bf16 %v2537, %v2536
      %v2544 = vpack.c.bf16 %v2539, %v2538
      %s2545 = scalar_lea.vmem %s1, 1536
      %v2546 = vld [vmem:[%s2545] sm:$0xff]
      %v2547 = vld [vmem:[%s2545 + $0x8] sm:$0xff]
      %v2548 = vld [vmem:[%s2545 + $0x10] sm:$0xff]
      %v2549 = vld [vmem:[%s2545 + $0x18] sm:$0xff]
      %v2550 = vld [vmem:[%s2545 + $0x20] sm:$0xff]
      %v2551 = vld [vmem:[%s2545 + $0x28] sm:$0xff]
      %v2552 = vld [vmem:[%s2545 + $0x30] sm:$0xff]
      %v2553 = vld [vmem:[%s2545 + $0x38] sm:$0xff]
      %v2554 = vld [vmem:[%s2545 + $0x40] sm:$0xff]
      %v2555 = vld [vmem:[%s2545 + $0x48] sm:$0xff]
      %v2556 = vld [vmem:[%s2545 + $0x50] sm:$0xff]
      %v2557 = vld [vmem:[%s2545 + $0x58] sm:$0xff]
      %v2558 = vld [vmem:[%s2545 + $0x60] sm:$0xff]
      %v2559 = vld [vmem:[%s2545 + $0x68] sm:$0xff]
      %v2560 = vld [vmem:[%s2545 + $0x70] sm:$0xff]
      %v2561 = vld [vmem:[%s2545 + $0x78] sm:$0xff]
      %v2562 = vld [vmem:[%s2545 + $0x80] sm:$0xff]
      %v2563 = vld [vmem:[%s2545 + $0x88] sm:$0xff]
      %v2564 = vld [vmem:[%s2545 + $0x90] sm:$0xff]
      %v2565 = vld [vmem:[%s2545 + $0x98] sm:$0xff]
      %v2566 = vld [vmem:[%s2545 + $0xa0] sm:$0xff]
      %v2567 = vld [vmem:[%s2545 + $0xa8] sm:$0xff]
      %v2568 = vld [vmem:[%s2545 + $0xb0] sm:$0xff]
      %v2569 = vld [vmem:[%s2545 + $0xb8] sm:$0xff]
      %v2570 = vld [vmem:[%s2545 + $0xc0] sm:$0xff]
      %v2571 = vld [vmem:[%s2545 + $0xc8] sm:$0xff]
      %v2572 = vld [vmem:[%s2545 + $0xd0] sm:$0xff]
      %v2573 = vld [vmem:[%s2545 + $0xd8] sm:$0xff]
      %v2574 = vld [vmem:[%s2545 + $0xe0] sm:$0xff]
      %v2575 = vld [vmem:[%s2545 + $0xe8] sm:$0xff]
      %v2576 = vld [vmem:[%s2545 + $0xf0] sm:$0xff]
      %v2577 = vld [vmem:[%s2545 + $0xf8] sm:$0xff]
      %v2578 = vld [vmem:[%s2545 + $0x100] sm:$0xff]
      %v2579 = vld [vmem:[%s2545 + $0x108] sm:$0xff]
      %v2580 = vld [vmem:[%s2545 + $0x110] sm:$0xff]
      %v2581 = vld [vmem:[%s2545 + $0x118] sm:$0xff]
      %v2582 = vld [vmem:[%s2545 + $0x120] sm:$0xff]
      %v2583 = vld [vmem:[%s2545 + $0x128] sm:$0xff]
      %v2584 = vld [vmem:[%s2545 + $0x130] sm:$0xff]
      %v2585 = vld [vmem:[%s2545 + $0x138] sm:$0xff]
      %v2586 = vld [vmem:[%s2545 + $0x140] sm:$0xff]
      %v2587 = vld [vmem:[%s2545 + $0x148] sm:$0xff]
      %v2588 = vld [vmem:[%s2545 + $0x150] sm:$0xff]
      %v2589 = vld [vmem:[%s2545 + $0x158] sm:$0xff]
      %v2590 = vld [vmem:[%s2545 + $0x160] sm:$0xff]
      %v2591 = vld [vmem:[%s2545 + $0x168] sm:$0xff]
      %v2592 = vld [vmem:[%s2545 + $0x170] sm:$0xff]
      %v2593 = vld [vmem:[%s2545 + $0x178] sm:$0xff]
      %v2642 = vunpack.c.l.b16 %v2546
      %v2643 = vunpack.c.h.b16 %v2546
      %v2644 = vunpack.c.l.b16 %v2547
      %v2645 = vunpack.c.h.b16 %v2547
      %v2646 = vunpack.c.l.b16 %v2548
      %v2647 = vunpack.c.h.b16 %v2548
      %v2648 = vunpack.c.l.b16 %v2549
      %v2649 = vunpack.c.h.b16 %v2549
      %v2650 = vunpack.c.l.b16 %v2550
      %v2651 = vunpack.c.h.b16 %v2550
      %v2652 = vunpack.c.l.b16 %v2551
      %v2653 = vunpack.c.h.b16 %v2551
      %v2654 = vunpack.c.l.b16 %v2552
      %v2655 = vunpack.c.h.b16 %v2552
      %v2656 = vunpack.c.l.b16 %v2553
      %v2657 = vunpack.c.h.b16 %v2553
      %v2658 = vunpack.c.l.b16 %v2554
      %v2659 = vunpack.c.h.b16 %v2554
      %v2660 = vunpack.c.l.b16 %v2555
      %v2661 = vunpack.c.h.b16 %v2555
      %v2662 = vunpack.c.l.b16 %v2556
      %v2663 = vunpack.c.h.b16 %v2556
      %v2664 = vunpack.c.l.b16 %v2557
      %v2665 = vunpack.c.h.b16 %v2557
      %v2666 = vunpack.c.l.b16 %v2558
      %v2667 = vunpack.c.h.b16 %v2558
      %v2668 = vunpack.c.l.b16 %v2559
      %v2669 = vunpack.c.h.b16 %v2559
      %v2670 = vunpack.c.l.b16 %v2560
      %v2671 = vunpack.c.h.b16 %v2560
      %v2672 = vunpack.c.l.b16 %v2561
      %v2673 = vunpack.c.h.b16 %v2561
      %v2674 = vunpack.c.l.b16 %v2562
      %v2675 = vunpack.c.h.b16 %v2562
      %v2676 = vunpack.c.l.b16 %v2563
      %v2677 = vunpack.c.h.b16 %v2563
      %v2678 = vunpack.c.l.b16 %v2564
      %v2679 = vunpack.c.h.b16 %v2564
      %v2680 = vunpack.c.l.b16 %v2565
      %v2681 = vunpack.c.h.b16 %v2565
      %v2682 = vunpack.c.l.b16 %v2566
      %v2683 = vunpack.c.h.b16 %v2566
      %v2684 = vunpack.c.l.b16 %v2567
      %v2685 = vunpack.c.h.b16 %v2567
      %v2686 = vunpack.c.l.b16 %v2568
      %v2687 = vunpack.c.h.b16 %v2568
      %v2688 = vunpack.c.l.b16 %v2569
      %v2689 = vunpack.c.h.b16 %v2569
      %v2690 = vunpack.c.l.b16 %v2570
      %v2691 = vunpack.c.h.b16 %v2570
      %v2692 = vunpack.c.l.b16 %v2571
      %v2693 = vunpack.c.h.b16 %v2571
      %v2694 = vunpack.c.l.b16 %v2572
      %v2695 = vunpack.c.h.b16 %v2572
      %v2696 = vunpack.c.l.b16 %v2573
      %v2697 = vunpack.c.h.b16 %v2573
      %v2698 = vunpack.c.l.b16 %v2574
      %v2699 = vunpack.c.h.b16 %v2574
      %v2700 = vunpack.c.l.b16 %v2575
      %v2701 = vunpack.c.h.b16 %v2575
      %v2702 = vunpack.c.l.b16 %v2576
      %v2703 = vunpack.c.h.b16 %v2576
      %v2704 = vunpack.c.l.b16 %v2577
      %v2705 = vunpack.c.h.b16 %v2577
      %v2706 = vunpack.c.l.b16 %v2578
      %v2707 = vunpack.c.h.b16 %v2578
      %v2708 = vunpack.c.l.b16 %v2579
      %v2709 = vunpack.c.h.b16 %v2579
      %v2710 = vunpack.c.l.b16 %v2580
      %v2711 = vunpack.c.h.b16 %v2580
      %v2712 = vunpack.c.l.b16 %v2581
      %v2713 = vunpack.c.h.b16 %v2581
      %v2714 = vunpack.c.l.b16 %v2582
      %v2715 = vunpack.c.h.b16 %v2582
      %v2716 = vunpack.c.l.b16 %v2583
      %v2717 = vunpack.c.h.b16 %v2583
      %v2718 = vunpack.c.l.b16 %v2584
      %v2719 = vunpack.c.h.b16 %v2584
      %v2720 = vunpack.c.l.b16 %v2585
      %v2721 = vunpack.c.h.b16 %v2585
      %v2722 = vunpack.c.l.b16 %v2586
      %v2723 = vunpack.c.h.b16 %v2586
      %v2724 = vunpack.c.l.b16 %v2587
      %v2725 = vunpack.c.h.b16 %v2587
      %v2726 = vunpack.c.l.b16 %v2588
      %v2727 = vunpack.c.h.b16 %v2588
      %v2728 = vunpack.c.l.b16 %v2589
      %v2729 = vunpack.c.h.b16 %v2589
      %v2730 = vunpack.c.l.b16 %v2590
      %v2731 = vunpack.c.h.b16 %v2590
      %v2732 = vunpack.c.l.b16 %v2591
      %v2733 = vunpack.c.h.b16 %v2591
      %v2734 = vunpack.c.l.b16 %v2592
      %v2735 = vunpack.c.h.b16 %v2592
      %v2736 = vunpack.c.l.b16 %v2593
      %v2737 = vunpack.c.h.b16 %v2593
      %v2738 = vpack.c.b16 %v2648, %v2642
      %v2739 = vpack.c.b16 %v2649, %v2643
      %v2740 = vpack.c.b16 %v2650, %v2644
      %v2741 = vpack.c.b16 %v2651, %v2645
      %v2742 = vpack.c.b16 %v2652, %v2646
      %v2743 = vpack.c.b16 %v2653, %v2647
      %v2744 = vpack.c.b16 %v2660, %v2654
      %v2745 = vpack.c.b16 %v2661, %v2655
      %v2746 = vpack.c.b16 %v2662, %v2656
      %v2747 = vpack.c.b16 %v2663, %v2657
      %v2748 = vpack.c.b16 %v2664, %v2658
      %v2749 = vpack.c.b16 %v2665, %v2659
      %v2750 = vpack.c.b16 %v2672, %v2666
      %v2751 = vpack.c.b16 %v2673, %v2667
      %v2752 = vpack.c.b16 %v2674, %v2668
      %v2753 = vpack.c.b16 %v2675, %v2669
      %v2754 = vpack.c.b16 %v2676, %v2670
      %v2755 = vpack.c.b16 %v2677, %v2671
      %v2756 = vpack.c.b16 %v2684, %v2678
      %v2757 = vpack.c.b16 %v2685, %v2679
      %v2758 = vpack.c.b16 %v2686, %v2680
      %v2759 = vpack.c.b16 %v2687, %v2681
      %v2760 = vpack.c.b16 %v2688, %v2682
      %v2761 = vpack.c.b16 %v2689, %v2683
      %v2762 = vpack.c.b16 %v2696, %v2690
      %v2763 = vpack.c.b16 %v2697, %v2691
      %v2764 = vpack.c.b16 %v2698, %v2692
      %v2765 = vpack.c.b16 %v2699, %v2693
      %v2766 = vpack.c.b16 %v2700, %v2694
      %v2767 = vpack.c.b16 %v2701, %v2695
      %v2768 = vpack.c.b16 %v2708, %v2702
      %v2769 = vpack.c.b16 %v2709, %v2703
      %v2770 = vpack.c.b16 %v2710, %v2704
      %v2771 = vpack.c.b16 %v2711, %v2705
      %v2772 = vpack.c.b16 %v2712, %v2706
      %v2773 = vpack.c.b16 %v2713, %v2707
      %v2774 = vpack.c.b16 %v2720, %v2714
      %v2775 = vpack.c.b16 %v2721, %v2715
      %v2776 = vpack.c.b16 %v2722, %v2716
      %v2777 = vpack.c.b16 %v2723, %v2717
      %v2778 = vpack.c.b16 %v2724, %v2718
      %v2779 = vpack.c.b16 %v2725, %v2719
      %v2780 = vpack.c.b16 %v2732, %v2726
      %v2781 = vpack.c.b16 %v2733, %v2727
      %v2782 = vpack.c.b16 %v2734, %v2728
      %v2783 = vpack.c.b16 %v2735, %v2729
      %v2784 = vpack.c.b16 %v2736, %v2730
      %v2785 = vpack.c.b16 %v2737, %v2731
      %2834 = vmatprep.subr.bf16.mxu0 %v2739
      %2835 = vmatpush1.bf16.msra.mxu0 %v2738
      %2836 = vmatprep.subr.bf16.mxu0 %v2745
      %2837 = vmatpush1.bf16.msra.mxu0 %v2744
      %2838 = vmatprep.subr.bf16.mxu0 %v2751
      %2839 = vmatpush1.bf16.msra.mxu0 %v2750
      %2840 = vmatprep.subr.bf16.mxu0 %v2757
      %2841 = vmatpush1.bf16.msra.mxu0 %v2756
      %2842 = vmatprep.subr.bf16.mxu0 %v2763
      %2843 = vmatpush1.bf16.msra.mxu0 %v2762
      %2844 = vmatprep.subr.bf16.mxu0 %v2769
      %2845 = vmatpush1.bf16.msra.mxu0 %v2768
      %2846 = vmatprep.subr.bf16.mxu0 %v2775
      %2847 = vmatpush1.bf16.msra.mxu0 %v2774
      %2848 = vmatprep.subr.bf16.mxu0 %v2781
      %2849 = vmatpush1.bf16.msra.mxu0 %v2780
      %2850 = vmatprep.subr.bf16.mxu0 0
      %2851 = vmatpush1.bf16.msra.mxu0 0
      %2852 = vmatprep.subr.bf16.mxu0 0
      %2853 = vmatpush1.bf16.msra.mxu0 0
      %2854 = vmatprep.subr.bf16.mxu0 0
      %2855 = vmatpush1.bf16.msra.mxu0 0
      %2856 = vmatprep.subr.bf16.mxu0 0
      %2857 = vmatpush1.bf16.msra.mxu0 0
      %2858 = vmatprep.subr.bf16.mxu0 0
      %2859 = vmatpush1.bf16.msra.mxu0 0
      %2860 = vmatprep.subr.bf16.mxu0 0
      %2861 = vmatpush1.bf16.msra.mxu0 0
      %2862 = vmatprep.subr.bf16.mxu0 0
      %2863 = vmatpush1.bf16.msra.mxu0 0
      %2864 = vmatprep.subr.bf16.mxu0 0
      %2865 = vmatpush1.bf16.msra.mxu0 0
      %2866 = vmatprep.mubr.bf16.mxu0 0
      %2867 = vmatmul.mubr.bf16.gmra.mrb[0].mxu0 %v2540
      %v2868 = vpop.f32.mrb[0].mxu0
      %v2869 = vadd.f32 0.0, %v2868
      %v2870 = vpop.f32.mrb[0].mxu0
      %v2871 = vadd.f32 0.0, %v2870
      %v2872 = vpop.f32.mrb[0].mxu0
      %v2873 = vadd.f32 0.0, %v2872
      %v2874 = vpop.f32.mrb[0].mxu0
      %v2875 = vadd.f32 0.0, %v2874
      %2876 = vmatprep.mubr.bf16.mxu0 0
      %2877 = vmatmul.mubr.bf16.gmra.mrb[0].mxu0 %v2541
      %v2878 = vpop.f32.mrb[0].mxu0
      %v2879 = vadd.f32 0.0, %v2878
      %v2880 = vpop.f32.mrb[0].mxu0
      %v2881 = vadd.f32 0.0, %v2880
      %v2882 = vpop.f32.mrb[0].mxu0
      %v2883 = vadd.f32 0.0, %v2882
      %v2884 = vpop.f32.mrb[0].mxu0
      %v2885 = vadd.f32 0.0, %v2884
      %2886 = vmatprep.mubr.bf16.mxu0 0
      %2887 = vmatmul.mubr.bf16.gmra.mrb[0].mxu0 %v2542
      %v2888 = vpop.f32.mrb[0].mxu0
      %v2889 = vadd.f32 0.0, %v2888
      %v2890 = vpop.f32.mrb[0].mxu0
      %v2891 = vadd.f32 0.0, %v2890
      %v2892 = vpop.f32.mrb[0].mxu0
      %v2893 = vadd.f32 0.0, %v2892
      %v2894 = vpop.f32.mrb[0].mxu0
      %v2895 = vadd.f32 0.0, %v2894
      %2896 = vmatprep.mubr.bf16.mxu0 0
      %2897 = vmatmul.mubr.bf16.gmra.mrb[0].mxu0 %v2543
      %v2898 = vpop.f32.mrb[0].mxu0
      %v2899 = vadd.f32 0.0, %v2898
      %v2900 = vpop.f32.mrb[0].mxu0
      %v2901 = vadd.f32 0.0, %v2900
      %v2902 = vpop.f32.mrb[0].mxu0
      %v2903 = vadd.f32 0.0, %v2902
      %v2904 = vpop.f32.mrb[0].mxu0
      %v2905 = vadd.f32 0.0, %v2904
      %2906 = vmatprep.mubr.bf16.mxu0 0
      %2907 = vmatmul.mubr.bf16.gmra.mrb[0].mxu0 %v2544
      %v2908 = vpop.f32.mrb[0].mxu0
      %v2909 = vadd.f32 0.0, %v2908
      %v2910 = vpop.f32.mrb[0].mxu0
      %v2911 = vadd.f32 0.0, %v2910
      %v2912 = vpop.f32.mrb[0].mxu0
      %v2913 = vadd.f32 0.0, %v2912
      %v2914 = vpop.f32.mrb[0].mxu0
      %v2915 = vadd.f32 0.0, %v2914
      %2916 = vdwg.mxu0
      %2917 = vmatprep.subr.bf16.mxu0 %v2741
      %2918 = vmatpush1.bf16.msra.mxu0 %v2740
      %2919 = vmatprep.subr.bf16.mxu0 %v2747
      %2920 = vmatpush1.bf16.msra.mxu0 %v2746
      %2921 = vmatprep.subr.bf16.mxu0 %v2753
      %2922 = vmatpush1.bf16.msra.mxu0 %v2752
      %2923 = vmatprep.subr.bf16.mxu0 %v2759
      %2924 = vmatpush1.bf16.msra.mxu0 %v2758
      %2925 = vmatprep.subr.bf16.mxu0 %v2765
      %2926 = vmatpush1.bf16.msra.mxu0 %v2764
      %2927 = vmatprep.subr.bf16.mxu0 %v2771
      %2928 = vmatpush1.bf16.msra.mxu0 %v2770
      %2929 = vmatprep.subr.bf16.mxu0 %v2777
      %2930 = vmatpush1.bf16.msra.mxu0 %v2776
      %2931 = vmatprep.subr.bf16.mxu0 %v2783
      %2932 = vmatpush1.bf16.msra.mxu0 %v2782
      %2933 = vmatprep.subr.bf16.mxu0 0
      %2934 = vmatpush1.bf16.msra.mxu0 0
      %2935 = vmatprep.subr.bf16.mxu0 0
      %2936 = vmatpush1.bf16.msra.mxu0 0
      %2937 = vmatprep.subr.bf16.mxu0 0
      %2938 = vmatpush1.bf16.msra.mxu0 0
      %2939 = vmatprep.subr.bf16.mxu0 0
      %2940 = vmatpush1.bf16.msra.mxu0 0
      %2941 = vmatprep.subr.bf16.mxu0 0
      %2942 = vmatpush1.bf16.msra.mxu0 0
      %2943 = vmatprep.subr.bf16.mxu0 0
      %2944 = vmatpush1.bf16.msra.mxu0 0
      %2945 = vmatprep.subr.bf16.mxu0 0
      %2946 = vmatpush1.bf16.msra.mxu0 0
      %2947 = vmatprep.subr.bf16.mxu0 0
      %2948 = vmatpush1.bf16.msra.mxu0 0
      %2949 = vmatprep.mubr.bf16.mxu0 0
      %2950 = vmatmul.mubr.bf16.gmra.mrb[0].mxu0 %v2540
      %v2951 = vpop.f32.mrb[0].mxu0
      %v2952 = vadd.f32 0.0, %v2951
      %v2953 = vpop.f32.mrb[0].mxu0
      %v2954 = vadd.f32 0.0, %v2953
      %v2955 = vpop.f32.mrb[0].mxu0
      %v2956 = vadd.f32 0.0, %v2955
      %v2957 = vpop.f32.mrb[0].mxu0
      %v2958 = vadd.f32 0.0, %v2957
      %2959 = vmatprep.mubr.bf16.mxu0 0
      %2960 = vmatmul.mubr.bf16.gmra.mrb[0].mxu0 %v2541
      %v2961 = vpop.f32.mrb[0].mxu0
      %v2962 = vadd.f32 0.0, %v2961
      %v2963 = vpop.f32.mrb[0].mxu0
      %v2964 = vadd.f32 0.0, %v2963
      %v2965 = vpop.f32.mrb[0].mxu0
      %v2966 = vadd.f32 0.0, %v2965
      %v2967 = vpop.f32.mrb[0].mxu0
      %v2968 = vadd.f32 0.0, %v2967
      %2969 = vmatprep.mubr.bf16.mxu0 0
      %2970 = vmatmul.mubr.bf16.gmra.mrb[0].mxu0 %v2542
      %v2971 = vpop.f32.mrb[0].mxu0
      %v2972 = vadd.f32 0.0, %v2971
      %v2973 = vpop.f32.mrb[0].mxu0
      %v2974 = vadd.f32 0.0, %v2973
      %v2975 = vpop.f32.mrb[0].mxu0
      %v2976 = vadd.f32 0.0, %v2975
      %v2977 = vpop.f32.mrb[0].mxu0
      %v2978 = vadd.f32 0.0, %v2977
      %2979 = vmatprep.mubr.bf16.mxu0 0
      %2980 = vmatmul.mubr.bf16.gmra.mrb[0].mxu0 %v2543
      %v2981 = vpop.f32.mrb[0].mxu0
      %v2982 = vadd.f32 0.0, %v2981
      %v2983 = vpop.f32.mrb[0].mxu0
      %v2984 = vadd.f32 0.0, %v2983
      %v2985 = vpop.f32.mrb[0].mxu0
      %v2986 = vadd.f32 0.0, %v2985
      %v2987 = vpop.f32.mrb[0].mxu0
      %v2988 = vadd.f32 0.0, %v2987
      %2989 = vmatprep.mubr.bf16.mxu0 0
      %2990 = vmatmul.mubr.bf16.gmra.mrb[0].mxu0 %v2544
      %v2991 = vpop.f32.mrb[0].mxu0
      %v2992 = vadd.f32 0.0, %v2991
      %v2993 = vpop.f32.mrb[0].mxu0
      %v2994 = vadd.f32 0.0, %v2993
      %v2995 = vpop.f32.mrb[0].mxu0
      %v2996 = vadd.f32 0.0, %v2995
      %v2997 = vpop.f32.mrb[0].mxu0
      %v2998 = vadd.f32 0.0, %v2997
      %2999 = vdwg.mxu0
      %3000 = vmatprep.subr.bf16.mxu0 %v2743
      %3001 = vmatpush1.bf16.msra.mxu0 %v2742
      %3002 = vmatprep.subr.bf16.mxu0 %v2749
      %3003 = vmatpush1.bf16.msra.mxu0 %v2748
      %3004 = vmatprep.subr.bf16.mxu0 %v2755
      %3005 = vmatpush1.bf16.msra.mxu0 %v2754
      %3006 = vmatprep.subr.bf16.mxu0 %v2761
      %3007 = vmatpush1.bf16.msra.mxu0 %v2760
      %3008 = vmatprep.subr.bf16.mxu0 %v2767
      %3009 = vmatpush1.bf16.msra.mxu0 %v2766
      %3010 = vmatprep.subr.bf16.mxu0 %v2773
      %3011 = vmatpush1.bf16.msra.mxu0 %v2772
      %3012 = vmatprep.subr.bf16.mxu0 %v2779
      %3013 = vmatpush1.bf16.msra.mxu0 %v2778
      %3014 = vmatprep.subr.bf16.mxu0 %v2785
      %3015 = vmatpush1.bf16.msra.mxu0 %v2784
      %3016 = vmatprep.subr.bf16.mxu0 0
      %3017 = vmatpush1.bf16.msra.mxu0 0
      %3018 = vmatprep.subr.bf16.mxu0 0
      %3019 = vmatpush1.bf16.msra.mxu0 0
      %3020 = vmatprep.subr.bf16.mxu0 0
      %3021 = vmatpush1.bf16.msra.mxu0 0
      %3022 = vmatprep.subr.bf16.mxu0 0
      %3023 = vmatpush1.bf16.msra.mxu0 0
      %3024 = vmatprep.subr.bf16.mxu0 0
      %3025 = vmatpush1.bf16.msra.mxu0 0
      %3026 = vmatprep.subr.bf16.mxu0 0
      %3027 = vmatpush1.bf16.msra.mxu0 0
      %3028 = vmatprep.subr.bf16.mxu0 0
      %3029 = vmatpush1.bf16.msra.mxu0 0
      %3030 = vmatprep.subr.bf16.mxu0 0
      %3031 = vmatpush1.bf16.msra.mxu0 0
      %3032 = vmatprep.mubr.bf16.mxu0 0
      %3033 = vmatmul.mubr.bf16.gmra.mrb[0].mxu0 %v2540
      %v3034 = vpop.f32.mrb[0].mxu0
      %v3035 = vadd.f32 0.0, %v3034
      %v3036 = vpop.f32.mrb[0].mxu0
      %v3037 = vadd.f32 0.0, %v3036
      %v3038 = vpop.f32.mrb[0].mxu0
      %v3039 = vadd.f32 0.0, %v3038
      %v3040 = vpop.f32.mrb[0].mxu0
      %v3041 = vadd.f32 0.0, %v3040
      %3042 = vmatprep.mubr.bf16.mxu0 0
      %3043 = vmatmul.mubr.bf16.gmra.mrb[0].mxu0 %v2541
      %v3044 = vpop.f32.mrb[0].mxu0
      %v3045 = vadd.f32 0.0, %v3044
      %v3046 = vpop.f32.mrb[0].mxu0
      %v3047 = vadd.f32 0.0, %v3046
      %v3048 = vpop.f32.mrb[0].mxu0
      %v3049 = vadd.f32 0.0, %v3048
      %v3050 = vpop.f32.mrb[0].mxu0
      %v3051 = vadd.f32 0.0, %v3050
      %3052 = vmatprep.mubr.bf16.mxu0 0
      %3053 = vmatmul.mubr.bf16.gmra.mrb[0].mxu0 %v2542
      %v3054 = vpop.f32.mrb[0].mxu0
      %v3055 = vadd.f32 0.0, %v3054
      %v3056 = vpop.f32.mrb[0].mxu0
      %v3057 = vadd.f32 0.0, %v3056
      %v3058 = vpop.f32.mrb[0].mxu0
      %v3059 = vadd.f32 0.0, %v3058
      %v3060 = vpop.f32.mrb[0].mxu0
      %v3061 = vadd.f32 0.0, %v3060
      %3062 = vmatprep.mubr.bf16.mxu0 0
      %3063 = vmatmul.mubr.bf16.gmra.mrb[0].mxu0 %v2543
      %v3064 = vpop.f32.mrb[0].mxu0
      %v3065 = vadd.f32 0.0, %v3064
      %v3066 = vpop.f32.mrb[0].mxu0
      %v3067 = vadd.f32 0.0, %v3066
      %v3068 = vpop.f32.mrb[0].mxu0
      %v3069 = vadd.f32 0.0, %v3068
      %v3070 = vpop.f32.mrb[0].mxu0
      %v3071 = vadd.f32 0.0, %v3070
      %3072 = vmatprep.mubr.bf16.mxu0 0
      %3073 = vmatmul.mubr.bf16.gmra.mrb[0].mxu0 %v2544
      %v3074 = vpop.f32.mrb[0].mxu0
      %v3075 = vadd.f32 0.0, %v3074
      %v3076 = vpop.f32.mrb[0].mxu0
      %v3077 = vadd.f32 0.0, %v3076
      %v3078 = vpop.f32.mrb[0].mxu0
      %v3079 = vadd.f32 0.0, %v3078
      %v3080 = vpop.f32.mrb[0].mxu0
      %v3081 = vadd.f32 0.0, %v3080
      %3082 = vdwg.mxu0
      %v3083 = vadd.f32 %v2470, %v2869
      %v3084 = vadd.f32 %v2471, %v2871
      %v3085 = vadd.f32 %v2472, %v2952
      %v3086 = vadd.f32 %v2473, %v2954
      %v3087 = vadd.f32 %v2474, %v3035
      %v3088 = vadd.f32 %v2475, %v3037
      %v3089 = vadd.f32 %v2476, %v2873
      %v3090 = vadd.f32 %v2477, %v2875
      %v3091 = vadd.f32 %v2478, %v2956
      %v3092 = vadd.f32 %v2479, %v2958
      %v3093 = vadd.f32 %v2480, %v3039
      %v3094 = vadd.f32 %v2481, %v3041
      %v3095 = vadd.f32 %v2482, %v2879
      %v3096 = vadd.f32 %v2483, %v2881
      %v3097 = vadd.f32 %v2484, %v2962
      %v3098 = vadd.f32 %v2485, %v2964
      %v3099 = vadd.f32 %v2486, %v3045
      %v3100 = vadd.f32 %v2487, %v3047
      %v3101 = vadd.f32 %v2488, %v2883
      %v3102 = vadd.f32 %v2489, %v2885
      %v3103 = vadd.f32 %v2490, %v2966
      %v3104 = vadd.f32 %v2491, %v2968
      %v3105 = vadd.f32 %v2492, %v3049
      %v3106 = vadd.f32 %v2493, %v3051
      %v3107 = vadd.f32 %v2494, %v2889
      %v3108 = vadd.f32 %v2495, %v2891
      %v3109 = vadd.f32 %v2496, %v2972
      %v3110 = vadd.f32 %v2497, %v2974
      %v3111 = vadd.f32 %v2498, %v3055
      %v3112 = vadd.f32 %v2499, %v3057
      %v3113 = vadd.f32 %v2500, %v2893
      %v3114 = vadd.f32 %v2501, %v2895
      %v3115 = vadd.f32 %v2502, %v2976
      %v3116 = vadd.f32 %v2503, %v2978
      %v3117 = vadd.f32 %v2504, %v3059
      %v3118 = vadd.f32 %v2505, %v3061
      %v3119 = vadd.f32 %v2506, %v2899
      %v3120 = vadd.f32 %v2507, %v2901
      %v3121 = vadd.f32 %v2508, %v2982
      %v3122 = vadd.f32 %v2509, %v2984
      %v3123 = vadd.f32 %v2510, %v3065
      %v3124 = vadd.f32 %v2511, %v3067
      %v3125 = vadd.f32 %v2512, %v2903
      %v3126 = vadd.f32 %v2513, %v2905
      %v3127 = vadd.f32 %v2514, %v2986
      %v3128 = vadd.f32 %v2515, %v2988
      %v3129 = vadd.f32 %v2516, %v3069
      %v3130 = vadd.f32 %v2517, %v3071
      %v3131 = vadd.f32 %v2518, %v2909
      %v3132 = vadd.f32 %v2519, %v2911
      %v3133 = vadd.f32 %v2520, %v2992
      %v3134 = vadd.f32 %v2521, %v2994
      %v3135 = vadd.f32 %v2522, %v3075
      %v3136 = vadd.f32 %v2523, %v3077
      %v3137 = vadd.f32 %v2524, %v2913
      %v3138 = vadd.f32 %v2525, %v2915
      %v3139 = vadd.f32 %v2526, %v2996
      %v3140 = vadd.f32 %v2527, %v2998
      %v3141 = vadd.f32 %v2528, %v3079
      %v3142 = vadd.f32 %v2529, %v3081
      %v3143 = vld [vmem:[%s2] sm:$0x3f]
      %v3145 = vlaneseq
      %v3146 = vshrl.u32 %v3145, 7
      %v3147 = vsub.s32 0, %v3146
      %v3148 = vrot.slane %v3143, %v3147
      %v3149 = vlaneseq
      %v3150 = vshrl.u32 %v3149, 7
      %v3151 = vsub.s32 1, %v3150
      %v3152 = vrot.slane %v3143, %v3151
      %v3153 = vlaneseq
      %v3154 = vshrl.u32 %v3153, 7
      %v3155 = vsub.s32 2, %v3154
      %v3156 = vrot.slane %v3143, %v3155
      %v3157 = vlaneseq
      %v3158 = vshrl.u32 %v3157, 7
      %v3159 = vsub.s32 3, %v3158
      %v3160 = vrot.slane %v3143, %v3159
      %v3161 = vlaneseq
      %v3162 = vshrl.u32 %v3161, 7
      %v3163 = vsub.s32 4, %v3162
      %v3164 = vrot.slane %v3143, %v3163
      %v3165 = vlaneseq
      %v3166 = vshrl.u32 %v3165, 7
      %v3167 = vsub.s32 5, %v3166
      %v3168 = vrot.slane %v3143, %v3167
      %v3175 = vmul.f32 %v3083, %v3148
      %v3176 = vmul.f32 %v3084, %v3152
      %v3177 = vmul.f32 %v3085, %v3156
      %v3178 = vmul.f32 %v3086, %v3160
      %v3179 = vmul.f32 %v3087, %v3164
      %v3180 = vmul.f32 %v3088, %v3168
      %v3181 = vmul.f32 %v3089, %v3148
      %v3182 = vmul.f32 %v3090, %v3152
      %v3183 = vmul.f32 %v3091, %v3156
      %v3184 = vmul.f32 %v3092, %v3160
      %v3185 = vmul.f32 %v3093, %v3164
      %v3186 = vmul.f32 %v3094, %v3168
      %v3187 = vmul.f32 %v3095, %v3148
      %v3188 = vmul.f32 %v3096, %v3152
      %v3189 = vmul.f32 %v3097, %v3156
      %v3190 = vmul.f32 %v3098, %v3160
      %v3191 = vmul.f32 %v3099, %v3164
      %v3192 = vmul.f32 %v3100, %v3168
      %v3193 = vmul.f32 %v3101, %v3148
      %v3194 = vmul.f32 %v3102, %v3152
      %v3195 = vmul.f32 %v3103, %v3156
      %v3196 = vmul.f32 %v3104, %v3160
      %v3197 = vmul.f32 %v3105, %v3164
      %v3198 = vmul.f32 %v3106, %v3168
      %v3199 = vmul.f32 %v3107, %v3148
      %v3200 = vmul.f32 %v3108, %v3152
      %v3201 = vmul.f32 %v3109, %v3156
      %v3202 = vmul.f32 %v3110, %v3160
      %v3203 = vmul.f32 %v3111, %v3164
      %v3204 = vmul.f32 %v3112, %v3168
      %v3205 = vmul.f32 %v3113, %v3148
      %v3206 = vmul.f32 %v3114, %v3152
      %v3207 = vmul.f32 %v3115, %v3156
      %v3208 = vmul.f32 %v3116, %v3160
      %v3209 = vmul.f32 %v3117, %v3164
      %v3210 = vmul.f32 %v3118, %v3168
      %v3211 = vmul.f32 %v3119, %v3148
      %v3212 = vmul.f32 %v3120, %v3152
      %v3213 = vmul.f32 %v3121, %v3156
      %v3214 = vmul.f32 %v3122, %v3160
      %v3215 = vmul.f32 %v3123, %v3164
      %v3216 = vmul.f32 %v3124, %v3168
      %v3217 = vmul.f32 %v3125, %v3148
      %v3218 = vmul.f32 %v3126, %v3152
      %v3219 = vmul.f32 %v3127, %v3156
      %v3220 = vmul.f32 %v3128, %v3160
      %v3221 = vmul.f32 %v3129, %v3164
      %v3222 = vmul.f32 %v3130, %v3168
      %v3223 = vmul.f32 %v3131, %v3148
      %v3224 = vmul.f32 %v3132, %v3152
      %v3225 = vmul.f32 %v3133, %v3156
      %v3226 = vmul.f32 %v3134, %v3160
      %v3227 = vmul.f32 %v3135, %v3164
      %v3228 = vmul.f32 %v3136, %v3168
      %v3229 = vmul.f32 %v3137, %v3148
      %v3230 = vmul.f32 %v3138, %v3152
      %v3231 = vmul.f32 %v3139, %v3156
      %v3232 = vmul.f32 %v3140, %v3160
      %v3233 = vmul.f32 %v3141, %v3164
      %v3234 = vmul.f32 %v3142, %v3168
      %v3235 = vld [vmem:[%s3] sm:$0x3f]
      %v3237 = vlaneseq
      %v3238 = vshrl.u32 %v3237, 7
      %v3239 = vsub.s32 0, %v3238
      %v3240 = vrot.slane %v3235, %v3239
      %v3241 = vlaneseq
      %v3242 = vshrl.u32 %v3241, 7
      %v3243 = vsub.s32 1, %v3242
      %v3244 = vrot.slane %v3235, %v3243
      %v3245 = vlaneseq
      %v3246 = vshrl.u32 %v3245, 7
      %v3247 = vsub.s32 2, %v3246
      %v3248 = vrot.slane %v3235, %v3247
      %v3249 = vlaneseq
      %v3250 = vshrl.u32 %v3249, 7
      %v3251 = vsub.s32 3, %v3250
      %v3252 = vrot.slane %v3235, %v3251
      %v3253 = vlaneseq
      %v3254 = vshrl.u32 %v3253, 7
      %v3255 = vsub.s32 4, %v3254
      %v3256 = vrot.slane %v3235, %v3255
      %v3257 = vlaneseq
      %v3258 = vshrl.u32 %v3257, 7
      %v3259 = vsub.s32 5, %v3258
      %v3260 = vrot.slane %v3235, %v3259
      %v3267 = vadd.f32 %v3175, %v3240
      %v3268 = vadd.f32 %v3176, %v3244
      %v3269 = vadd.f32 %v3177, %v3248
      %v3270 = vadd.f32 %v3178, %v3252
      %v3271 = vadd.f32 %v3179, %v3256
      %v3272 = vadd.f32 %v3180, %v3260
      %v3273 = vadd.f32 %v3181, %v3240
      %v3274 = vadd.f32 %v3182, %v3244
      %v3275 = vadd.f32 %v3183, %v3248
      %v3276 = vadd.f32 %v3184, %v3252
      %v3277 = vadd.f32 %v3185, %v3256
      %v3278 = vadd.f32 %v3186, %v3260
      %v3279 = vadd.f32 %v3187, %v3240
      %v3280 = vadd.f32 %v3188, %v3244
      %v3281 = vadd.f32 %v3189, %v3248
      %v3282 = vadd.f32 %v3190, %v3252
      %v3283 = vadd.f32 %v3191, %v3256
      %v3284 = vadd.f32 %v3192, %v3260
      %v3285 = vadd.f32 %v3193, %v3240
      %v3286 = vadd.f32 %v3194, %v3244
      %v3287 = vadd.f32 %v3195, %v3248
      %v3288 = vadd.f32 %v3196, %v3252
      %v3289 = vadd.f32 %v3197, %v3256
      %v3290 = vadd.f32 %v3198, %v3260
      %v3291 = vadd.f32 %v3199, %v3240
      %v3292 = vadd.f32 %v3200, %v3244
      %v3293 = vadd.f32 %v3201, %v3248
      %v3294 = vadd.f32 %v3202, %v3252
      %v3295 = vadd.f32 %v3203, %v3256
      %v3296 = vadd.f32 %v3204, %v3260
      %v3297 = vadd.f32 %v3205, %v3240
      %v3298 = vadd.f32 %v3206, %v3244
      %v3299 = vadd.f32 %v3207, %v3248
      %v3300 = vadd.f32 %v3208, %v3252
      %v3301 = vadd.f32 %v3209, %v3256
      %v3302 = vadd.f32 %v3210, %v3260
      %v3303 = vadd.f32 %v3211, %v3240
      %v3304 = vadd.f32 %v3212, %v3244
      %v3305 = vadd.f32 %v3213, %v3248
      %v3306 = vadd.f32 %v3214, %v3252
      %v3307 = vadd.f32 %v3215, %v3256
      %v3308 = vadd.f32 %v3216, %v3260
      %v3309 = vadd.f32 %v3217, %v3240
      %v3310 = vadd.f32 %v3218, %v3244
      %v3311 = vadd.f32 %v3219, %v3248
      %v3312 = vadd.f32 %v3220, %v3252
      %v3313 = vadd.f32 %v3221, %v3256
      %v3314 = vadd.f32 %v3222, %v3260
      %v3315 = vadd.f32 %v3223, %v3240
      %v3316 = vadd.f32 %v3224, %v3244
      %v3317 = vadd.f32 %v3225, %v3248
      %v3318 = vadd.f32 %v3226, %v3252
      %v3319 = vadd.f32 %v3227, %v3256
      %v3320 = vadd.f32 %v3228, %v3260
      %v3321 = vadd.f32 %v3229, %v3240
      %v3322 = vadd.f32 %v3230, %v3244
      %v3323 = vadd.f32 %v3231, %v3248
      %v3324 = vadd.f32 %v3232, %v3252
      %v3325 = vadd.f32 %v3233, %v3256
      %v3326 = vadd.f32 %v3234, %v3260
      %v3327 = vmax.f32 %v3267, 0.0
      %v3328 = vmax.f32 %v3268, 0.0
      %v3329 = vmax.f32 %v3269, 0.0
      %v3330 = vmax.f32 %v3270, 0.0
      %v3331 = vmax.f32 %v3271, 0.0
      %v3332 = vmax.f32 %v3272, 0.0
      %v3333 = vmax.f32 %v3273, 0.0
      %v3334 = vmax.f32 %v3274, 0.0
      %v3335 = vmax.f32 %v3275, 0.0
      %v3336 = vmax.f32 %v3276, 0.0
      %v3337 = vmax.f32 %v3277, 0.0
      %v3338 = vmax.f32 %v3278, 0.0
      %v3339 = vmax.f32 %v3279, 0.0
      %v3340 = vmax.f32 %v3280, 0.0
      %v3341 = vmax.f32 %v3281, 0.0
      %v3342 = vmax.f32 %v3282, 0.0
      %v3343 = vmax.f32 %v3283, 0.0
      %v3344 = vmax.f32 %v3284, 0.0
      %v3345 = vmax.f32 %v3285, 0.0
      %v3346 = vmax.f32 %v3286, 0.0
      %v3347 = vmax.f32 %v3287, 0.0
      %v3348 = vmax.f32 %v3288, 0.0
      %v3349 = vmax.f32 %v3289, 0.0
      %v3350 = vmax.f32 %v3290, 0.0
      %v3351 = vmax.f32 %v3291, 0.0
      %v3352 = vmax.f32 %v3292, 0.0
      %v3353 = vmax.f32 %v3293, 0.0
      %v3354 = vmax.f32 %v3294, 0.0
      %v3355 = vmax.f32 %v3295, 0.0
      %v3356 = vmax.f32 %v3296, 0.0
      %v3357 = vmax.f32 %v3297, 0.0
      %v3358 = vmax.f32 %v3298, 0.0
      %v3359 = vmax.f32 %v3299, 0.0
      %v3360 = vmax.f32 %v3300, 0.0
      %v3361 = vmax.f32 %v3301, 0.0
      %v3362 = vmax.f32 %v3302, 0.0
      %v3363 = vmax.f32 %v3303, 0.0
      %v3364 = vmax.f32 %v3304, 0.0
      %v3365 = vmax.f32 %v3305, 0.0
      %v3366 = vmax.f32 %v3306, 0.0
      %v3367 = vmax.f32 %v3307, 0.0
      %v3368 = vmax.f32 %v3308, 0.0
      %v3369 = vmax.f32 %v3309, 0.0
      %v3370 = vmax.f32 %v3310, 0.0
      %v3371 = vmax.f32 %v3311, 0.0
      %v3372 = vmax.f32 %v3312, 0.0
      %v3373 = vmax.f32 %v3313, 0.0
      %v3374 = vmax.f32 %v3314, 0.0
      %v3375 = vmax.f32 %v3315, 0.0
      %v3376 = vmax.f32 %v3316, 0.0
      %v3377 = vmax.f32 %v3317, 0.0
      %v3378 = vmax.f32 %v3318, 0.0
      %v3379 = vmax.f32 %v3319, 0.0
      %v3380 = vmax.f32 %v3320, 0.0
      %v3381 = vmax.f32 %v3321, 0.0
      %v3382 = vmax.f32 %v3322, 0.0
      %v3383 = vmax.f32 %v3323, 0.0
      %v3384 = vmax.f32 %v3324, 0.0
      %v3385 = vmax.f32 %v3325, 0.0
      %v3386 = vmax.f32 %v3326, 0.0
      %3387 = vst [vmem:[%s197] sm:$0xff] %v3327
      %3388 = vst [vmem:[%s197 + $0x8] sm:$0xff] %v3328
      %3389 = vst [vmem:[%s197 + $0x10] sm:$0xff] %v3329
      %3390 = vst [vmem:[%s197 + $0x18] sm:$0xff] %v3330
      %3391 = vst [vmem:[%s197 + $0x20] sm:$0xff] %v3331
      %3392 = vst [vmem:[%s197 + $0x28] sm:$0xff] %v3332
      %3393 = vst [vmem:[%s197 + $0x30] sm:$0xff] %v3333
      %3394 = vst [vmem:[%s197 + $0x38] sm:$0xff] %v3334
      %3395 = vst [vmem:[%s197 + $0x40] sm:$0xff] %v3335
      %3396 = vst [vmem:[%s197 + $0x48] sm:$0xff] %v3336
      %3397 = vst [vmem:[%s197 + $0x50] sm:$0xff] %v3337
      %3398 = vst [vmem:[%s197 + $0x58] sm:$0xff] %v3338
      %3399 = vst [vmem:[%s197 + $0x60] sm:$0xff] %v3339
      %3400 = vst [vmem:[%s197 + $0x68] sm:$0xff] %v3340
      %3401 = vst [vmem:[%s197 + $0x70] sm:$0xff] %v3341
      %3402 = vst [vmem:[%s197 + $0x78] sm:$0xff] %v3342
      %3403 = vst [vmem:[%s197 + $0x80] sm:$0xff] %v3343
      %3404 = vst [vmem:[%s197 + $0x88] sm:$0xff] %v3344
      %3405 = vst [vmem:[%s197 + $0x90] sm:$0xff] %v3345
      %3406 = vst [vmem:[%s197 + $0x98] sm:$0xff] %v3346
      %3407 = vst [vmem:[%s197 + $0xa0] sm:$0xff] %v3347
      %3408 = vst [vmem:[%s197 + $0xa8] sm:$0xff] %v3348
      %3409 = vst [vmem:[%s197 + $0xb0] sm:$0xff] %v3349
      %3410 = vst [vmem:[%s197 + $0xb8] sm:$0xff] %v3350
      %3411 = vst [vmem:[%s197 + $0xc0] sm:$0xff] %v3351
      %3412 = vst [vmem:[%s197 + $0xc8] sm:$0xff] %v3352
      %3413 = vst [vmem:[%s197 + $0xd0] sm:$0xff] %v3353
      %3414 = vst [vmem:[%s197 + $0xd8] sm:$0xff] %v3354
      %3415 = vst [vmem:[%s197 + $0xe0] sm:$0xff] %v3355
      %3416 = vst [vmem:[%s197 + $0xe8] sm:$0xff] %v3356
      %3417 = vst [vmem:[%s197 + $0xf0] sm:$0xff] %v3357
      %3418 = vst [vmem:[%s197 + $0xf8] sm:$0xff] %v3358
      %3419 = vst [vmem:[%s197 + $0x100] sm:$0xff] %v3359
      %3420 = vst [vmem:[%s197 + $0x108] sm:$0xff] %v3360
      %3421 = vst [vmem:[%s197 + $0x110] sm:$0xff] %v3361
      %3422 = vst [vmem:[%s197 + $0x118] sm:$0xff] %v3362
      %3423 = vst [vmem:[%s197 + $0x120] sm:$0xff] %v3363
      %3424 = vst [vmem:[%s197 + $0x128] sm:$0xff] %v3364
      %3425 = vst [vmem:[%s197 + $0x130] sm:$0xff] %v3365
      %3426 = vst [vmem:[%s197 + $0x138] sm:$0xff] %v3366
      %3427 = vst [vmem:[%s197 + $0x140] sm:$0xff] %v3367
      %3428 = vst [vmem:[%s197 + $0x148] sm:$0xff] %v3368
      %3429 = vst [vmem:[%s197 + $0x150] sm:$0xff] %v3369
      %3430 = vst [vmem:[%s197 + $0x158] sm:$0xff] %v3370
      %3431 = vst [vmem:[%s197 + $0x160] sm:$0xff] %v3371
      %3432 = vst [vmem:[%s197 + $0x168] sm:$0xff] %v3372
      %3433 = vst [vmem:[%s197 + $0x170] sm:$0xff] %v3373
      %3434 = vst [vmem:[%s197 + $0x178] sm:$0xff] %v3374
      %3435 = vst [vmem:[%s197 + $0x180] sm:$0xff] %v3375
      %3436 = vst [vmem:[%s197 + $0x188] sm:$0xff] %v3376
      %3437 = vst [vmem:[%s197 + $0x190] sm:$0xff] %v3377
      %3438 = vst [vmem:[%s197 + $0x198] sm:$0xff] %v3378
      %3439 = vst [vmem:[%s197 + $0x1a0] sm:$0xff] %v3379
      %3440 = vst [vmem:[%s197 + $0x1a8] sm:$0xff] %v3380
      %3441 = vst [vmem:[%s197 + $0x1b0] sm:$0xff] %v3381
      %3442 = vst [vmem:[%s197 + $0x1b8] sm:$0xff] %v3382
      %3443 = vst [vmem:[%s197 + $0x1c0] sm:$0xff] %v3383
      %3444 = vst [vmem:[%s197 + $0x1c8] sm:$0xff] %v3384
      %3445 = vst [vmem:[%s197 + $0x1d0] sm:$0xff] %v3385
      %3446 = vst [vmem:[%s197 + $0x1d8] sm:$0xff] %v3386
      %p3447 = scmp.lt.s32.totalorder %s15, 4
      %s3448 = scalar_select %p3447, %s15, 4
      %s3449 = smul.addr %s3448, 60
      %s3450 = smul.addr %s3449, 8
      %s3451 = scalar_lea.vmem %s4, %s3450
      // Predicated region
      $region37: #{multi_decoder_forward.6} parent=35 // pred_check
        %p3452 = pneg %p122
      $region38: #{multi_decoder_forward.6} parent=35 // pred_check_branch
        %3454 = sbr.rel (%p3452) target = $region40
      $region39: #{multi_decoder_forward.6} parent=35 // pred_region
        _
      $region40: #{multi_decoder_forward.6} parent=35 // pred_fallthru
        _
    $region36: #{multi_decoder_forward.6} parent=5 // pred_fallthru
      _
    %p3455 = scmp.le.s32.totalorder 2, %s10
    // Predicated region
    $region41: #{multi_decoder_forward.6} parent=5 // pred_check
      %p3456 = pneg %p3455
    $region42: #{multi_decoder_forward.6} parent=5 // pred_check_branch
      %3458 = sbr.rel (%p3456) target = $region44
    $region43: #{multi_decoder_forward.6} parent=5 // pred_region
      %s3459 = ssub.s32 %s10, 2
      // Predicated region
      $region45: #{multi_decoder_forward.6} parent=43 // pred_check
        %p3460 = pneg %p128
      $region46: #{multi_decoder_forward.6} parent=43 // pred_check_branch
        %3462 = sbr.rel (%p3460) target = $region48
      $region47: #{multi_decoder_forward.6} parent=43 // pred_region
        %p3463 = scmp.lt.s32.totalorder %s16, 4
        %s3464 = scalar_select %p3463, %s16, 4
        %s3465 = smul.addr %s3464, 60
        %s3466 = smul.addr %s3465, 8
        %s3467 = scalar_lea.vmem %s4, %s3466
      $region48: #{multi_decoder_forward.6} parent=43 // pred_fallthru
        _
    $region44: #{multi_decoder_forward.6} parent=5 // pred_fallthru
      _
  $region6: #{multi_decoder_forward.6} parent=0 // loop_footer
    %s14 = sadd.s32 1, %s10
  $region7: #{multi_decoder_forward.6} parent=0 // loop_footer_branch
    %9 = sbr.rel target = $region3
  $region8: #{multi_decoder_forward.6} parent=0 // loop_exit
    _

</llo_original>
